<compile_context>
chip_gen: v7x
topology: tpu7x:2x2x1
jax: 0.10.0
libtpu: 0.0.40
codegen_flags: <defaults>
</compile_context>

<pallas_src>
from functools import partial

import jax
import jax.numpy as jnp
from jax.experimental import pallas as pl
from jax.experimental.pallas import tpu as pltpu

ALPHA = 4  # fast/slow temporal frame-rate ratio (SLOWFAST_8x8_R50: alpha = 4)

# Small-scale analogue of the SlowFast R50 channel plan.
SLOW_IN = [3, 24, 48, 96, 192]
SLOW_OUT = [16, 32, 64, 128, 256]
FAST_IN = [3, 4, 8, 16, 32]
FAST_OUT = [4, 8, 16, 32, 64]
SPATIAL_STRIDE = [4, 1, 2, 2, 2]

_COMPILER_PARAMS = pltpu.CompilerParams(
    # Every grid step writes disjoint output blocks -> truly parallel; lets Mosaic shard the
    # grid across both TensorCores on v7x (8 steps -> 4/4), neutral on v5e/v6e (1 TC).
    dimension_semantics=("parallel",),
    # Per-step VMEM footprint is ~5 MiB at these sizes (double-buffered inputs incl. the
    # stage-1 selection matrix), comfortably inside v7x's 32 MiB scoped / 64 MiB physical.
    vmem_limit_bytes=32 * 1024 * 1024,
)


# ----------------------------------------------------------------------------
# Pallas kernel: one fused backbone stage.
#   spatial subsample (selection matmul) + slow conv + batched fast conv (ALPHA frames in one
#   matmul) + lateral fuse written into the tail channel rows + get_pool spatial means.
# Grid: one step per slow frame g; that step also owns its ALPHA fast frames (on lanes).
# ----------------------------------------------------------------------------
def _stage_kernel(*refs, alpha, hw_in, hw_out, has_lateral, has_sel, store_features):
    it = iter(refs)
    slow_ref = next(it)
    fast_ref = next(it)
    sel_ref = next(it) if has_sel else None
    ws_ref, bs_ref = next(it), next(it)
    wf_ref, bf_ref = next(it), next(it)
    if has_lateral:
        wl_ref, bl_ref = next(it), next(it)
    if store_features:
        fused_ref, fast_out_ref = next(it), next(it)
    smean_ref, fmean_ref = next(it), next(it)

    # --- spatial subsample (stage stride) folded into the kernel as an exact 0/1 selection
    #     matmul; no full-res copy ever hits HBM.  The fast block is subsampled per frame chunk.
    if has_sel:
        sel = sel_ref[...]
        slow_x = jnp.dot(slow_ref[...], sel,
                         preferred_element_type=jnp.float32).astype(jnp.bfloat16)
        fast_x = jnp.concatenate(
            [jnp.dot(fast_ref[:, a * hw_in:(a + 1) * hw_in], sel,
                     preferred_element_type=jnp.float32).astype(jnp.bfloat16)
             for a in range(alpha)],
            axis=-1)
    else:
        slow_x = slow_ref[...]
        fast_x = fast_ref[...]

    # --- slow pathway: pointwise conv (MXU, f32 acc) + bias + ReLU.
    s = jnp.maximum(
        jnp.dot(ws_ref[...], slow_x, preferred_element_type=jnp.float32) + bs_ref[...], 0.0)
    s_q = s.astype(jnp.bfloat16)

    # --- fast pathway: ALL alpha frames in a single matmul (N = alpha*hw_out) and ONE store.
    f = jnp.maximum(
        jnp.dot(wf_ref[...], fast_x, preferred_element_type=jnp.float32) + bf_ref[...], 0.0)
    f_q = f.astype(jnp.bfloat16)
    if store_features:
        fast_out_ref[...] = f_q

    # --- lateral fuse: project fast frame a=0 (== temporal ::alpha subsample) and append it as
    #     the tail channel rows; build the fused slab in registers -> one full-block store.
    if has_lateral:
        lat = jnp.maximum(
            jnp.dot(wl_ref[...], f_q[:, 0:hw_out], preferred_element_type=jnp.float32)
            + bl_ref[...], 0.0)
        fused_q = jnp.concatenate([s_q, lat.astype(jnp.bfloat16)], axis=0)
    else:
        fused_q = s_q
    if store_features:
        fused_ref[...] = fused_q

    # --- get_pool spatial means, fused here so the feature maps are never re-read from HBM.
    inv = jnp.float32(1.0 / hw_out)
    smean_ref[...] = jnp.sum(fused_q.astype(jnp.float32), axis=-1, keepdims=True) * inv
    fmean_ref[...] = jnp.concatenate(
        [jnp.sum(f_q[:, a * hw_out:(a + 1) * hw_out].astype(jnp.float32),
                 axis=-1, keepdims=True) * inv
         for a in range(alpha)],
        axis=-1)


def _make_subsample_selector(h, w, stride):
    """(h*w, (h//s)*(w//s)) 0/1 column-selection matrix for a top-left nearest subsample."""
    ho, wo = h // stride, w // stride
    rows = jnp.arange(h * w, dtype=jnp.int32)[:, None]
    keep = (jnp.arange(ho, dtype=jnp.int32)[:, None] * (stride * w)
            + jnp.arange(wo, dtype=jnp.int32)[None, :] * stride).reshape(-1)
    return (rows == keep[None, :]).astype(jnp.bfloat16)   # exact 0/1 in bf16


def stage_pallas(slow, fast, p, h, w, stride, *, has_lateral, store_features):
    """slow: (B*T_s, Cs_in, H*W) bf16, fast: (B*T_s, Cf_in, ALPHA*H*W) bf16.

    Returns (fused (B*T_s, Cs_out[+2*Cf_out], HWo) bf16 or None,
             fast_out (B*T_s, Cf_out, ALPHA*HWo) bf16 or None,
             slow_mean (B*T_s, C_fused, 1) f32,
             fast_mean (B*T_s, Cf_out, ALPHA) f32).
    """
    bts, cs_in, hw_in = slow.shape
    btf, cf_in, a_hw_in = fast.shape
    assert hw_in == h * w and btf == bts and a_hw_in == ALPHA * hw_in
    assert h % stride == 0 and w % stride == 0
    hw_out = (h // stride) * (w // stride)

    ws, bs = p["slow"]["w"], p["slow"]["b"]
    wf, bf = p["fast"]["w"], p["fast"]["b"]
    cs_out, cf_out = ws.shape[0], wf.shape[0]
    has_sel = stride > 1

    args = [slow, fast]
    in_specs = [
        pl.BlockSpec((None, cs_in, hw_in), lambda g: (g, 0, 0)),          # one slow frame
        pl.BlockSpec((None, cf_in, ALPHA * hw_in), lambda g: (g, 0, 0)),  # its ALPHA fast frames
    ]
    if has_sel:
        args.append(_make_subsample_selector(h, w, stride))
        in_specs.append(pl.BlockSpec((hw_in, hw_out), lambda g: (0, 0)))  # constant -> no re-DMA
    args += [ws, bs, wf, bf]
    in_specs += [
        pl.BlockSpec((cs_out, cs_in), lambda g: (0, 0)),
        pl.BlockSpec((cs_out, 1), lambda g: (0, 0)),
        pl.BlockSpec((cf_out, cf_in), lambda g: (0, 0)),
        pl.BlockSpec((cf_out, 1), lambda g: (0, 0)),
    ]
    c_fused = cs_out
    if has_lateral:
        wl, bl = p["lat"]["w"], p["lat"]["b"]
        c_lat = wl.shape[0]
        c_fused = cs_out + c_lat
        args += [wl, bl]
        in_specs += [
            pl.BlockSpec((c_lat, cf_out), lambda g: (0, 0)),
            pl.BlockSpec((c_lat, 1), lambda g: (0, 0)),
        ]

    out_shape, out_specs = [], []
    if store_features:
        out_shape += [jax.ShapeDtypeStruct((bts, c_fused, hw_out), jnp.bfloat16),
                      jax.ShapeDtypeStruct((bts, cf_out, ALPHA * hw_out), jnp.bfloat16)]
        out_specs += [pl.BlockSpec((None, c_fused, hw_out), lambda g: (g, 0, 0)),
                      pl.BlockSpec((None, cf_out, ALPHA * hw_out), lambda g: (g, 0, 0))]
    out_shape += [jax.ShapeDtypeStruct((bts, c_fused, 1), jnp.float32),
                  jax.ShapeDtypeStruct((bts, cf_out, ALPHA), jnp.float32)]
    out_specs += [pl.BlockSpec((None, c_fused, 1), lambda g: (g, 0, 0)),
                  pl.BlockSpec((None, cf_out, ALPHA), lambda g: (g, 0, 0))]

    outs = pl.pallas_call(
        partial(_stage_kernel, alpha=ALPHA, hw_in=hw_in, hw_out=hw_out,
                has_lateral=has_lateral, has_sel=has_sel, store_features=store_features),
        out_shape=tuple(out_shape),
        grid=(bts,),                              # one grid step per slow frame
        in_specs=in_specs,
        out_specs=tuple(out_specs),
        compiler_params=_COMPILER_PARAMS,
    )(*args)

    if store_features:
        fused, f_out, smean, fmean = outs
    else:
        smean, fmean = outs
        fused, f_out = None, None
    return fused, f_out, smean, fmean


# ----------------------------------------------------------------------------
# Pure-JAX reference (same bf16 quantization points; for correctness checking only)
# ----------------------------------------------------------------------------
def _subsample_ref(x, h, w, stride):
    """(N, C, k*h*w) -> (N, C, k*(h//s)*(w//s)) per-chunk top-left nearest subsample."""
    if stride == 1:
        return x
    n, c, khw = x.shape
    k = khw // (h * w)
    x = x.reshape(n, c, k, h, w)[:, :, :, ::stride, ::stride]
    return x.reshape(n, c, k * (h // stride) * (w // stride))


def stage_ref(slow, fast, p, h, w, stride, *, has_lateral, store_features):
    hw_out = (h // stride) * (w // stride)

    def pw(x, wgt, b):
        y = jnp.einsum("oc,ncp->nop", wgt.astype(jnp.float32), x.astype(jnp.float32)) + b
        return jnp.maximum(y, 0.0).astype(jnp.bfloat16)

    slow_x = _subsample_ref(slow, h, w, stride)
    fast_x = _subsample_ref(fast, h, w, stride)
    s = pw(slow_x, p["slow"]["w"], p["slow"]["b"])
    f = pw(fast_x, p["fast"]["w"], p["fast"]["b"])
    if has_lateral:
        lat = pw(f[:, :, :hw_out], p["lat"]["w"], p["lat"]["b"])   # temporal ::ALPHA subsample
        fused = jnp.concatenate([s, lat], axis=1)
    else:
        fused = s
    smean = jnp.mean(fused.astype(jnp.float32), axis=-1, keepdims=True)
    n, cf, _ = f.shape
    fmean = jnp.mean(f.astype(jnp.float32).reshape(n, cf, ALPHA, hw_out), axis=-1)
    if not store_features:
        return None, None, smean, fmean
    return fused, f, smean, fmean


# ----------------------------------------------------------------------------
# SlowFast-like backbone glue (deterministic synthetic parameters)
# ----------------------------------------------------------------------------
def _init_pw(key, cin, cout):
    kw, kb = jax.random.split(key)
    w = (jax.random.normal(kw, (cout, cin), jnp.float32) / jnp.sqrt(cin)).astype(jnp.bfloat16)
    b = jax.random.normal(kb, (cout, 1), jnp.float32) * 0.1
    return {"w": w, "b": b}


def init_params(key):
    params = {}
    keys = jax.random.split(key, 3 * 5)
    for i in range(5):
        ks, kf, kl = keys[3 * i], keys[3 * i + 1], keys[3 * i + 2]
        p = {"slow": _init_pw(ks, SLOW_IN[i], SLOW_OUT[i]),
             "fast": _init_pw(kf, FAST_IN[i], FAST_OUT[i])}
        if i < 4:
            # TODO(synk): the real FuseFastToSlow is a (5,1,1) conv with temporal stride ALPHA;
            #             stand-in = temporal subsample + pointwise projection to 2*C_fast.
            p["lat"] = _init_pw(kl, FAST_OUT[i], 2 * FAST_OUT[i])
        params[f"s{i + 1}"] = p
    return params


def to_slow_layout(x_ncthw):
    """(B, C, T_s, H, W) f32 -> (B*T_s, C, H*W) bf16."""
    b, c, t, h, w = x_ncthw.shape
    return jnp.transpose(x_ncthw, (0, 2, 1, 3, 4)).reshape(b * t, c, h * w).astype(jnp.bfloat16)


def to_fast_layout(x_ncthw, alpha):
    """(B, C, T_f, H, W) f32 -> (B*T_s, C, ALPHA*H*W) bf16, ALPHA frames lane-concatenated."""
    b, c, tf, h, w = x_ncthw.shape
    ts = tf // alpha
    x = jnp.transpose(x_ncthw.reshape(b, c, ts, alpha, h, w), (0, 2, 1, 3, 4, 5))
    return x.reshape(b * ts, c, alpha * h * w).astype(jnp.bfloat16)


def _assemble_get_pool(smean, fmean, batch):
    """Tiny (B,T,C)-scale tail of get_pool in plain JAX: nearest temporal upsample + concat."""
    bts, c_fused, _ = smean.shape
    _, cf, alpha = fmean.shape
    ts = bts // batch
    s_up = jnp.repeat(smean.reshape(batch, ts, c_fused), alpha, axis=1)        # (B, T_f, Cslow)
    f_t = jnp.transpose(fmean.reshape(batch, ts, cf, alpha), (0, 1, 3, 2))
    f_t = f_t.reshape(batch, ts * alpha, cf)                                   # (B, T_f, Cfast)
    return jnp.concatenate([s_up, f_t], axis=-1)                               # (B, T_f, C)


def layer_slowfast_forward(slow, fast, hw, params, batch, *, use_pallas=True):
    """Mirrors LayerSlowFast._forward, returning the list of 5 (B, T_fast, C) features."""
    stage_fn = stage_pallas if use_pallas else stage_ref
    h, w = hw
    means = []
    for i in range(5):
        stride = SPATIAL_STRIDE[i]
        has_lateral = i < 4        # s1..s4 fuse; s5 has no fuse
        store_features = i < 4     # s5 feature maps feed nothing but get_pool -> not stored
        # TODO(synk): the real stages are strided 3-D ResNet bottleneck blocks with pretrained
        #             weights; stand-in = in-kernel spatial subsample + pointwise conv + ReLU.
        fused, f_out, smean, fmean = stage_fn(
            slow, fast, params[f"s{i + 1}"], h, w, stride,
            has_lateral=has_lateral, store_features=store_features)
        h, w = h // stride, w // stride
        means.append((smean, fmean))
        slow, fast = fused, f_out
        # TODO(synk): pathway{0,1}_pool after s2_fuse is an identity MaxPool3d([1,1,1]) for
        #             SLOWFAST_8x8_R50, so it is omitted.
    return [_assemble_get_pool(s, f, batch) for (s, f) in means]


if __name__ == "__main__":
    key = jax.random.PRNGKey(0)
    k_slow, k_fast, k_params = jax.random.split(key, 3)

    B, T_SLOW, T_FAST, H, W = 2, 4, 16, 64, 64
    # Pathway inputs in PyTorch NCTHW layout; pathway0 = slow, pathway1 = fast.
    slow_ncthw = jax.random.normal(k_slow, (B, 3, T_SLOW, H, W), jnp.float32)
    fast_ncthw = jax.random.normal(k_fast, (B, 3, T_FAST, H, W), jnp.float32)
    params = init_params(k_params)

    slow0 = to_slow_layout(slow_ncthw)          # (B*T_s, 3, H*W) bf16
    fast0 = to_fast_layout(fast_ncthw, ALPHA)   # (B*T_s, 3, ALPHA*H*W) bf16

    outs = layer_slowfast_forward(slow0, fast0, (H, W), params, B, use_pallas=True)
    outs = jax.block_until_ready(outs)

    # Reference (pure JAX, same bf16 quantization) and checks.
    outs_ref = layer_slowfast_forward(slow0, fast0, (H, W), params, B, use_pallas=False)
    expected_channels = [28, 56, 112, 224, 320]  # small-scale analogue of [88,352,704,1408,2304]
    assert len(outs) == 5
    for o, r, c in zip(outs, outs_ref, expected_channels):
        assert o.shape == (B, T_FAST, c), (o.shape, c)
        assert o.dtype == jnp.float32
        assert bool(jnp.allclose(o, r, atol=2e-2, rtol=2e-2)), "mismatch vs reference"

    print("KERNEL_OK")
</pallas_src>

<mosaic_0001>
module attributes {stable_mosaic.version = 11 : i64} {
  func.func @_stage_kernel(%arg0: i32, %arg1: memref<1x3x4096xbf16, #tpu.memory_space<vmem>>, %arg2: memref<1x3x16384xbf16, #tpu.memory_space<vmem>>, %arg3: memref<4096x256xbf16, #tpu.memory_space<vmem>>, %arg4: memref<16x3xbf16, #tpu.memory_space<vmem>>, %arg5: memref<16x1xf32, #tpu.memory_space<vmem>>, %arg6: memref<4x3xbf16, #tpu.memory_space<vmem>>, %arg7: memref<4x1xf32, #tpu.memory_space<vmem>>, %arg8: memref<8x4xbf16, #tpu.memory_space<vmem>>, %arg9: memref<8x1xf32, #tpu.memory_space<vmem>>, %arg10: memref<1x24x256xbf16, #tpu.memory_space<vmem>>, %arg11: memref<1x4x1024xbf16, #tpu.memory_space<vmem>>, %arg12: memref<1x24x1xf32, #tpu.memory_space<vmem>>, %arg13: memref<1x4x4xf32, #tpu.memory_space<vmem>>) attributes {dimension_semantics = [#tpu.dimension_semantics<parallel>], iteration_bounds = array<i64: 8>, scalar_prefetch = 0 : i64, scratch_operands = 0 : i64, tpu.core_type = #tpu.core_type<tc>, window_params = [{transform_indices = @transform_0, window_bounds = array<i64: 1, 3, 4096>}, {transform_indices = @transform_1, window_bounds = array<i64: 1, 3, 16384>}, {pipeline_mode = #tpu.pipeline_mode<synchronous>, transform_indices = @transform_2, window_bounds = array<i64: 4096, 256>}, {pipeline_mode = #tpu.pipeline_mode<synchronous>, transform_indices = @transform_3, window_bounds = array<i64: 16, 3>}, {pipeline_mode = #tpu.pipeline_mode<synchronous>, transform_indices = @transform_4, window_bounds = array<i64: 16, 1>}, {pipeline_mode = #tpu.pipeline_mode<synchronous>, transform_indices = @transform_5, window_bounds = array<i64: 4, 3>}, {pipeline_mode = #tpu.pipeline_mode<synchronous>, transform_indices = @transform_6, window_bounds = array<i64: 4, 1>}, {pipeline_mode = #tpu.pipeline_mode<synchronous>, transform_indices = @transform_7, window_bounds = array<i64: 8, 4>}, {pipeline_mode = #tpu.pipeline_mode<synchronous>, transform_indices = @transform_8, window_bounds = array<i64: 8, 1>}, {transform_indices = @transform_9, window_bounds = array<i64: 1, 24, 256>}, {transform_indices = @transform_10, window_bounds = array<i64: 1, 4, 1024>}, {transform_indices = @transform_11, window_bounds = array<i64: 1, 24, 1>}, {transform_indices = @transform_12, window_bounds = array<i64: 1, 4, 4>}]} {
    %c0 = arith.constant 0 : index
    %c0_0 = arith.constant 0 : index
    %0 = vector.load %arg3[%c0, %c0_0] : memref<4096x256xbf16, #tpu.memory_space<vmem>>, vector<4096x256xbf16>
    %c0_1 = arith.constant 0 : index
    %c0_2 = arith.constant 0 : index
    %c0_3 = arith.constant 0 : index
    %1 = vector.load %arg1[%c0_1, %c0_2, %c0_3] : memref<1x3x4096xbf16, #tpu.memory_space<vmem>>, vector<1x3x4096xbf16>
    %2 = vector.shape_cast %1 : vector<1x3x4096xbf16> to vector<3x4096xbf16>
    %cst = arith.constant dense<0.000000e+00> : vector<3x256xf32>
    %3 = tpu.matmul %2, %0, %cst {dimension_numbers = #tpu.dot_dimension_numbers<[1], [0], [0], [1], [0, 0, 1, 1], [], []>} : vector<3x4096xbf16>, vector<4096x256xbf16>, vector<3x256xf32> -> vector<3x256xf32>
    %4 = arith.truncf %3 : vector<3x256xf32> to vector<3x256xbf16>
    %c0_4 = arith.constant 0 : index
    %c0_5 = arith.constant 0 : index
    %c0_6 = arith.constant 0 : index
    %5 = vector.load %arg2[%c0_4, %c0_5, %c0_6] : memref<1x3x16384xbf16, #tpu.memory_space<vmem>>, vector<1x3x4096xbf16>
    %6 = vector.shape_cast %5 : vector<1x3x4096xbf16> to vector<3x4096xbf16>
    %cst_7 = arith.constant dense<0.000000e+00> : vector<3x256xf32>
    %7 = tpu.matmul %6, %0, %cst_7 {dimension_numbers = #tpu.dot_dimension_numbers<[1], [0], [0], [1], [0, 0, 1, 1], [], []>} : vector<3x4096xbf16>, vector<4096x256xbf16>, vector<3x256xf32> -> vector<3x256xf32>
    %8 = arith.truncf %7 : vector<3x256xf32> to vector<3x256xbf16>
    %c0_8 = arith.constant 0 : index
    %c0_9 = arith.constant 0 : index
    %c4096 = arith.constant 4096 : index
    %9 = vector.load %arg2[%c0_8, %c0_9, %c4096] : memref<1x3x16384xbf16, #tpu.memory_space<vmem>>, vector<1x3x4096xbf16>
    %10 = vector.shape_cast %9 : vector<1x3x4096xbf16> to vector<3x4096xbf16>
    %cst_10 = arith.constant dense<0.000000e+00> : vector<3x256xf32>
    %11 = tpu.matmul %10, %0, %cst_10 {dimension_numbers = #tpu.dot_dimension_numbers<[1], [0], [0], [1], [0, 0, 1, 1], [], []>} : vector<3x4096xbf16>, vector<4096x256xbf16>, vector<3x256xf32> -> vector<3x256xf32>
    %12 = arith.truncf %11 : vector<3x256xf32> to vector<3x256xbf16>
    %c0_11 = arith.constant 0 : index
    %c0_12 = arith.constant 0 : index
    %c8192 = arith.constant 8192 : index
    %13 = vector.load %arg2[%c0_11, %c0_12, %c8192] : memref<1x3x16384xbf16, #tpu.memory_space<vmem>>, vector<1x3x4096xbf16>
    %14 = vector.shape_cast %13 : vector<1x3x4096xbf16> to vector<3x4096xbf16>
    %cst_13 = arith.constant dense<0.000000e+00> : vector<3x256xf32>
    %15 = tpu.matmul %14, %0, %cst_13 {dimension_numbers = #tpu.dot_dimension_numbers<[1], [0], [0], [1], [0, 0, 1, 1], [], []>} : vector<3x4096xbf16>, vector<4096x256xbf16>, vector<3x256xf32> -> vector<3x256xf32>
    %16 = arith.truncf %15 : vector<3x256xf32> to vector<3x256xbf16>
    %c0_14 = arith.constant 0 : index
    %c0_15 = arith.constant 0 : index
    %c12288 = arith.constant 12288 : index
    %17 = vector.load %arg2[%c0_14, %c0_15, %c12288] : memref<1x3x16384xbf16, #tpu.memory_space<vmem>>, vector<1x3x4096xbf16>
    %18 = vector.shape_cast %17 : vector<1x3x4096xbf16> to vector<3x4096xbf16>
    %cst_16 = arith.constant dense<0.000000e+00> : vector<3x256xf32>
    %19 = tpu.matmul %18, %0, %cst_16 {dimension_numbers = #tpu.dot_dimension_numbers<[1], [0], [0], [1], [0, 0, 1, 1], [], []>} : vector<3x4096xbf16>, vector<4096x256xbf16>, vector<3x256xf32> -> vector<3x256xf32>
    %20 = arith.truncf %19 : vector<3x256xf32> to vector<3x256xbf16>
    %21 = tpu.concatenate %8, %12, %16, %20 in 1 : vector<3x256xbf16>, vector<3x256xbf16>, vector<3x256xbf16>, vector<3x256xbf16> -> vector<3x1024xbf16>
    %c0_17 = arith.constant 0 : index
    %c0_18 = arith.constant 0 : index
    %22 = vector.load %arg4[%c0_17, %c0_18] : memref<16x3xbf16, #tpu.memory_space<vmem>>, vector<16x3xbf16>
    %cst_19 = arith.constant dense<0.000000e+00> : vector<16x256xf32>
    %23 = tpu.matmul %22, %4, %cst_19 {dimension_numbers = #tpu.dot_dimension_numbers<[1], [0], [0], [1], [0, 0, 1, 1], [], []>} : vector<16x3xbf16>, vector<3x256xbf16>, vector<16x256xf32> -> vector<16x256xf32>
    %c0_20 = arith.constant 0 : index
    %c0_21 = arith.constant 0 : index
    %24 = vector.load %arg5[%c0_20, %c0_21] : memref<16x1xf32, #tpu.memory_space<vmem>>, vector<16x1xf32>
    %25 = vector.broadcast %24 : vector<16x1xf32> to vector<16x256xf32>
    %26 = arith.addf %23, %25 : vector<16x256xf32>
    %cst_22 = arith.constant 0.000000e+00 : f32
    %27 = vector.broadcast %cst_22 : f32 to vector<16x256xf32>
    %28 = arith.maximumf %26, %27 : vector<16x256xf32>
    %29 = arith.truncf %28 : vector<16x256xf32> to vector<16x256xbf16>
    %c0_23 = arith.constant 0 : index
    %c0_24 = arith.constant 0 : index
    %30 = vector.load %arg6[%c0_23, %c0_24] : memref<4x3xbf16, #tpu.memory_space<vmem>>, vector<4x3xbf16>
    %cst_25 = arith.constant dense<0.000000e+00> : vector<4x1024xf32>
    %31 = tpu.matmul %30, %21, %cst_25 {dimension_numbers = #tpu.dot_dimension_numbers<[1], [0], [0], [1], [0, 0, 1, 1], [], []>} : vector<4x3xbf16>, vector<3x1024xbf16>, vector<4x1024xf32> -> vector<4x1024xf32>
    %c0_26 = arith.constant 0 : index
    %c0_27 = arith.constant 0 : index
    %32 = vector.load %arg7[%c0_26, %c0_27] : memref<4x1xf32, #tpu.memory_space<vmem>>, vector<4x1xf32>
    %33 = vector.broadcast %32 : vector<4x1xf32> to vector<4x1024xf32>
    %34 = arith.addf %31, %33 : vector<4x1024xf32>
    %cst_28 = arith.constant 0.000000e+00 : f32
    %35 = vector.broadcast %cst_28 : f32 to vector<4x1024xf32>
    %36 = arith.maximumf %34, %35 : vector<4x1024xf32>
    %37 = arith.truncf %36 : vector<4x1024xf32> to vector<4x1024xbf16>
    %c0_29 = arith.constant 0 : index
    %c0_30 = arith.constant 0 : index
    %c0_31 = arith.constant 0 : index
    %38 = vector.load %arg11[%c0_29, %c0_30, %c0_31] : memref<1x4x1024xbf16, #tpu.memory_space<vmem>>, vector<1x4x1024xbf16>
    %39 = vector.shape_cast %38 : vector<1x4x1024xbf16> to vector<4x1024xbf16>
    %40 = vector.shape_cast %37 : vector<4x1024xbf16> to vector<1x4x1024xbf16>
    tpu.vector_store %arg11[%c0_29, %c0_30, %c0_31], %40 {strides = array<i32>} : memref<1x4x1024xbf16, #tpu.memory_space<vmem>>, vector<1x4x1024xbf16>,
    %c0_32 = arith.constant 0 : index
    %c0_33 = arith.constant 0 : index
    %41 = vector.load %arg8[%c0_32, %c0_33] : memref<8x4xbf16, #tpu.memory_space<vmem>>, vector<8x4xbf16>
    %42 = vector.extract_strided_slice %37 {offsets = [0, 0], sizes = [4, 256], strides = [1, 1]} : vector<4x1024xbf16> to vector<4x256xbf16>
    %cst_34 = arith.constant dense<0.000000e+00> : vector<8x256xf32>
    %43 = tpu.matmul %41, %42, %cst_34 {dimension_numbers = #tpu.dot_dimension_numbers<[1], [0], [0], [1], [0, 0, 1, 1], [], []>} : vector<8x4xbf16>, vector<4x256xbf16>, vector<8x256xf32> -> vector<8x256xf32>
    %c0_35 = arith.constant 0 : index
    %c0_36 = arith.constant 0 : index
    %44 = vector.load %arg9[%c0_35, %c0_36] : memref<8x1xf32, #tpu.memory_space<vmem>>, vector<8x1xf32>
    %45 = vector.broadcast %44 : vector<8x1xf32> to vector<8x256xf32>
    %46 = arith.addf %43, %45 : vector<8x256xf32>
    %cst_37 = arith.constant 0.000000e+00 : f32
    %47 = vector.broadcast %cst_37 : f32 to vector<8x256xf32>
    %48 = arith.maximumf %46, %47 : vector<8x256xf32>
    %49 = arith.truncf %48 : vector<8x256xf32> to vector<8x256xbf16>
    %50 = tpu.concatenate %29, %49 in 0 : vector<16x256xbf16>, vector<8x256xbf16> -> vector<24x256xbf16>
    %c0_38 = arith.constant 0 : index
    %c0_39 = arith.constant 0 : index
    %c0_40 = arith.constant 0 : index
    %51 = vector.load %arg10[%c0_38, %c0_39, %c0_40] : memref<1x24x256xbf16, #tpu.memory_space<vmem>>, vector<1x24x256xbf16>
    %52 = vector.shape_cast %51 : vector<1x24x256xbf16> to vector<24x256xbf16>
    %53 = vector.shape_cast %50 : vector<24x256xbf16> to vector<1x24x256xbf16>
    tpu.vector_store %arg10[%c0_38, %c0_39, %c0_40], %53 {strides = array<i32>} : memref<1x24x256xbf16, #tpu.memory_space<vmem>>, vector<1x24x256xbf16>,
    %54 = arith.extf %50 : vector<24x256xbf16> to vector<24x256xf32>
    %cst_41 = arith.constant dense<0.000000e+00> : vector<24xf32>
    %55 = vector.multi_reduction <add>, %54, %cst_41 [1] : vector<24x256xf32> to vector<24xf32>
    %56 = vector.shape_cast %55 : vector<24xf32> to vector<24x1xf32>
    %cst_42 = arith.constant 3.906250e-03 : f32
    %57 = vector.broadcast %cst_42 : f32 to vector<24x1xf32>
    %58 = arith.mulf %56, %57 : vector<24x1xf32>
    %c0_43 = arith.constant 0 : index
    %c0_44 = arith.constant 0 : index
    %c0_45 = arith.constant 0 : index
    %59 = vector.load %arg12[%c0_43, %c0_44, %c0_45] : memref<1x24x1xf32, #tpu.memory_space<vmem>>, vector<1x24x1xf32>
    %60 = vector.shape_cast %59 : vector<1x24x1xf32> to vector<24x1xf32>
    %61 = vector.shape_cast %58 : vector<24x1xf32> to vector<1x24x1xf32>
    tpu.vector_store %arg12[%c0_43, %c0_44, %c0_45], %61 {strides = array<i32>} : memref<1x24x1xf32, #tpu.memory_space<vmem>>, vector<1x24x1xf32>,
    %62 = vector.extract_strided_slice %37 {offsets = [0, 0], sizes = [4, 256], strides = [1, 1]} : vector<4x1024xbf16> to vector<4x256xbf16>
    %63 = arith.extf %62 : vector<4x256xbf16> to vector<4x256xf32>
    %cst_46 = arith.constant dense<0.000000e+00> : vector<4xf32>
    %64 = vector.multi_reduction <add>, %63, %cst_46 [1] : vector<4x256xf32> to vector<4xf32>
    %65 = vector.shape_cast %64 : vector<4xf32> to vector<4x1xf32>
    %cst_47 = arith.constant 3.906250e-03 : f32
    %66 = vector.broadcast %cst_47 : f32 to vector<4x1xf32>
    %67 = arith.mulf %65, %66 : vector<4x1xf32>
    %68 = vector.extract_strided_slice %37 {offsets = [0, 256], sizes = [4, 256], strides = [1, 1]} : vector<4x1024xbf16> to vector<4x256xbf16>
    %69 = arith.extf %68 : vector<4x256xbf16> to vector<4x256xf32>
    %cst_48 = arith.constant dense<0.000000e+00> : vector<4xf32>
    %70 = vector.multi_reduction <add>, %69, %cst_48 [1] : vector<4x256xf32> to vector<4xf32>
    %71 = vector.shape_cast %70 : vector<4xf32> to vector<4x1xf32>
    %cst_49 = arith.constant 3.906250e-03 : f32
    %72 = vector.broadcast %cst_49 : f32 to vector<4x1xf32>
    %73 = arith.mulf %71, %72 : vector<4x1xf32>
    %74 = vector.extract_strided_slice %37 {offsets = [0, 512], sizes = [4, 256], strides = [1, 1]} : vector<4x1024xbf16> to vector<4x256xbf16>
    %75 = arith.extf %74 : vector<4x256xbf16> to vector<4x256xf32>
    %cst_50 = arith.constant dense<0.000000e+00> : vector<4xf32>
    %76 = vector.multi_reduction <add>, %75, %cst_50 [1] : vector<4x256xf32> to vector<4xf32>
    %77 = vector.shape_cast %76 : vector<4xf32> to vector<4x1xf32>
    %cst_51 = arith.constant 3.906250e-03 : f32
    %78 = vector.broadcast %cst_51 : f32 to vector<4x1xf32>
    %79 = arith.mulf %77, %78 : vector<4x1xf32>
    %80 = vector.extract_strided_slice %37 {offsets = [0, 768], sizes = [4, 256], strides = [1, 1]} : vector<4x1024xbf16> to vector<4x256xbf16>
    %81 = arith.extf %80 : vector<4x256xbf16> to vector<4x256xf32>
    %cst_52 = arith.constant dense<0.000000e+00> : vector<4xf32>
    %82 = vector.multi_reduction <add>, %81, %cst_52 [1] : vector<4x256xf32> to vector<4xf32>
    %83 = vector.shape_cast %82 : vector<4xf32> to vector<4x1xf32>
    %cst_53 = arith.constant 3.906250e-03 : f32
    %84 = vector.broadcast %cst_53 : f32 to vector<4x1xf32>
    %85 = arith.mulf %83, %84 : vector<4x1xf32>
    %86 = tpu.concatenate %67, %73, %79, %85 in 1 : vector<4x1xf32>, vector<4x1xf32>, vector<4x1xf32>, vector<4x1xf32> -> vector<4x4xf32>
    %c0_54 = arith.constant 0 : index
    %c0_55 = arith.constant 0 : index
    %c0_56 = arith.constant 0 : index
    %87 = vector.load %arg13[%c0_54, %c0_55, %c0_56] : memref<1x4x4xf32, #tpu.memory_space<vmem>>, vector<1x4x4xf32>
    %88 = vector.shape_cast %87 : vector<1x4x4xf32> to vector<4x4xf32>
    %89 = vector.shape_cast %86 : vector<4x4xf32> to vector<1x4x4xf32>
    tpu.vector_store %arg13[%c0_54, %c0_55, %c0_56], %89 {strides = array<i32>} : memref<1x4x4xf32, #tpu.memory_space<vmem>>, vector<1x4x4xf32>,
    return
  }
  func.func @transform_0(%arg0: i32) -> (i32, i32, i32) {
    %c0_i32 = arith.constant 0 : i32
    %c0_i32_0 = arith.constant 0 : i32
    %c0_i32_1 = arith.constant 0 : i32
    return %arg0, %c0_i32, %c0_i32_0 : i32, i32, i32
  }
  func.func @transform_1(%arg0: i32) -> (i32, i32, i32) {
    %c0_i32 = arith.constant 0 : i32
    %c0_i32_0 = arith.constant 0 : i32
    %c0_i32_1 = arith.constant 0 : i32
    return %arg0, %c0_i32, %c0_i32_0 : i32, i32, i32
  }
  func.func @transform_2(%arg0: i32) -> (i32, i32) {
    %c0_i32 = arith.constant 0 : i32
    %c0_i32_0 = arith.constant 0 : i32
    %c0_i32_1 = arith.constant 0 : i32
    return %c0_i32, %c0_i32_0 : i32, i32
  }
  func.func @transform_3(%arg0: i32) -> (i32, i32) {
    %c0_i32 = arith.constant 0 : i32
    %c0_i32_0 = arith.constant 0 : i32
    %c0_i32_1 = arith.constant 0 : i32
    return %c0_i32, %c0_i32_0 : i32, i32
  }
  func.func @transform_4(%arg0: i32) -> (i32, i32) {
    %c0_i32 = arith.constant 0 : i32
    %c0_i32_0 = arith.constant 0 : i32
    %c0_i32_1 = arith.constant 0 : i32
    return %c0_i32, %c0_i32_0 : i32, i32
  }
  func.func @transform_5(%arg0: i32) -> (i32, i32) {
    %c0_i32 = arith.constant 0 : i32
    %c0_i32_0 = arith.constant 0 : i32
    %c0_i32_1 = arith.constant 0 : i32
    return %c0_i32, %c0_i32_0 : i32, i32
  }
  func.func @transform_6(%arg0: i32) -> (i32, i32) {
    %c0_i32 = arith.constant 0 : i32
    %c0_i32_0 = arith.constant 0 : i32
    %c0_i32_1 = arith.constant 0 : i32
    return %c0_i32, %c0_i32_0 : i32, i32
  }
  func.func @transform_7(%arg0: i32) -> (i32, i32) {
    %c0_i32 = arith.constant 0 : i32
    %c0_i32_0 = arith.constant 0 : i32
    %c0_i32_1 = arith.constant 0 : i32
    return %c0_i32, %c0_i32_0 : i32, i32
  }
  func.func @transform_8(%arg0: i32) -> (i32, i32) {
    %c0_i32 = arith.constant 0 : i32
    %c0_i32_0 = arith.constant 0 : i32
    %c0_i32_1 = arith.constant 0 : i32
    return %c0_i32, %c0_i32_0 : i32, i32
  }
  func.func @transform_9(%arg0: i32) -> (i32, i32, i32) {
    %c0_i32 = arith.constant 0 : i32
    %c0_i32_0 = arith.constant 0 : i32
    %c0_i32_1 = arith.constant 0 : i32
    return %arg0, %c0_i32, %c0_i32_0 : i32, i32, i32
  }
  func.func @transform_10(%arg0: i32) -> (i32, i32, i32) {
    %c0_i32 = arith.constant 0 : i32
    %c0_i32_0 = arith.constant 0 : i32
    %c0_i32_1 = arith.constant 0 : i32
    return %arg0, %c0_i32, %c0_i32_0 : i32, i32, i32
  }
  func.func @transform_11(%arg0: i32) -> (i32, i32, i32) {
    %c0_i32 = arith.constant 0 : i32
    %c0_i32_0 = arith.constant 0 : i32
    %c0_i32_1 = arith.constant 0 : i32
    return %arg0, %c0_i32, %c0_i32_0 : i32, i32, i32
  }
  func.func @transform_12(%arg0: i32) -> (i32, i32, i32) {
    %c0_i32 = arith.constant 0 : i32
    %c0_i32_0 = arith.constant 0 : i32
    %c0_i32_1 = arith.constant 0 : i32
    return %arg0, %c0_i32, %c0_i32_0 : i32, i32, i32
  }
}

</mosaic_0001>

<llo_original>
// kernel: tpu_custom_call.1
$region0: #{tpu_custom_call.1}
  #allocation0 [shape = 'u32[]', space=smem, size = 0x4, offset = 0x4, fixed_abs, tag = 'smem constant byte address 0x4 - core index']
  #allocation1 [shape = 'u32[144,128]{1,0:T(1,128)}', space=vmem, size = 0x12000, scoped, tag = 'internal scratch']
  %s0 = inlined_call_operand.vmem [shape: bf16[8,3,4096], index: 0, kind: input, shape index: {}]
  %s1 = inlined_call_operand.vmem [shape: bf16[8,3,16384], index: 1, kind: input, shape index: {}]
  %s2 = inlined_call_operand.vmem [shape: bf16[4096,256], index: 2, kind: input, shape index: {}]
  %s3 = inlined_call_operand.vmem [shape: bf16[16,3], index: 3, kind: input, shape index: {}]
  %s4 = inlined_call_operand.vmem [shape: f32[16,1], index: 4, kind: input, shape index: {}]
  %s5 = inlined_call_operand.vmem [shape: bf16[4,3], index: 5, kind: input, shape index: {}]
  %s6 = inlined_call_operand.vmem [shape: f32[4,1], index: 6, kind: input, shape index: {}]
  %s7 = inlined_call_operand.vmem [shape: bf16[8,4], index: 7, kind: input, shape index: {}]
  %s8 = inlined_call_operand.vmem [shape: f32[8,1], index: 8, kind: input, shape index: {}]
  %s9 = inlined_call_operand.hbm [shape: bf16[8,24,256], index: 9, kind: output, shape index: {0}]
  %s10 = inlined_call_operand.hbm [shape: bf16[8,4,1024], index: 10, kind: output, shape index: {1}]
  %s11 = inlined_call_operand.vmem [shape: f32[8,24,1], index: 11, kind: output, shape index: {2}]
  %s12 = inlined_call_operand.vmem [shape: f32[8,4,4], index: 12, kind: output, shape index: {3}]
  %13 = xla_tuple %s9, %s10, %s11, %s12
  %s14 = sld [smem:[#allocation0]]
  $region93: #{tpu_custom_call.1} parent=0
    _
  %s16 = ssub.s32 1, %s14
  %s17 = scalar_select 0, %s16, %s14
  $region1: #{tpu_custom_call.1} parent=0
    #allocation2 [shape = 'u8[24576]{0}', space=vmem, size = 0x6000, scoped, tag = 'output window, operand 0']
    #allocation3 [shape = 's32[2]{0}', space=sflag, size = 0x8, scoped, tag = 'scoped memory for tpu_custom_call.1']
    #allocation4 [shape = 'u8[16384]{0}', space=vmem, size = 0x4000, scoped, tag = 'output window, operand 1']
    #allocation5 [shape = 's32[2]{0}', space=sflag, size = 0x8, scoped, tag = 'scoped memory for tpu_custom_call.1']
    %18 = vsyncpa [#allocation3], 0
    %s19 = scalar_lea.sflag [#allocation3], 1
    %20 = vsyncpa %s19, 0
    %21 = vsyncpa [#allocation5], 0
    %s22 = scalar_lea.sflag [#allocation5], 1
    %23 = vsyncpa %s22, 0
    loop: start=0, step=1, limit=10
    $region2: #{tpu_custom_call.1} parent=1 // loop_pre_header
      _
    $region3: #{tpu_custom_call.1} parent=1 // loop_header
      %s25 = sphi 0, %s29
      %p26 = scmp.ge.s32.totalorder %s25, 10
      %s35 = sphi 0, %s37
      %s38 = sphi 0, %s35
      %s39 = sphi 0, %s38
      %s55 = sphi 0, %s39
      %s61 = sphi 0, %s63
      %s64 = sphi 0, %s61
      %s65 = sphi 0, %s64
      %s81 = sphi 0, %s65
      %s85 = sphi 0, %s85
      %s87 = sphi 0, %s85
      %s88 = sphi 0, %s87
      %s102 = sphi 0, %s88
      %s106 = sphi 0, %s106
      %s108 = sphi 0, %s106
      %s109 = sphi 0, %s108
      %s123 = sphi 0, %s109
      %s127 = sphi 0, %s127
      %s129 = sphi 0, %s127
      %s130 = sphi 0, %s129
      %s144 = sphi 0, %s130
      %s148 = sphi 0, %s148
      %s150 = sphi 0, %s148
      %s151 = sphi 0, %s150
      %s165 = sphi 0, %s151
      %s169 = sphi 0, %s169
      %s171 = sphi 0, %s169
      %s172 = sphi 0, %s171
      %s186 = sphi 0, %s172
      %s190 = sphi 0, %s190
      %s192 = sphi 0, %s190
      %s193 = sphi 0, %s192
      %s207 = sphi 0, %s193
      %s211 = sphi 0, %s211
      %s213 = sphi 0, %s211
      %s214 = sphi 0, %s213
      %s228 = sphi 0, %s214
      %s234 = sphi 0, %s236
      %s237 = sphi 0, %s234
      %s238 = sphi 0, %s237
      %s254 = sphi 0, %s238
      %s260 = sphi 0, %s262
      %s263 = sphi 0, %s260
      %s264 = sphi 0, %s263
      %s280 = sphi 0, %s264
      %s286 = sphi 0, %s288
      %s289 = sphi 0, %s286
      %s290 = sphi 0, %s289
      %s306 = sphi 0, %s290
      %s312 = sphi 0, %s314
      %s315 = sphi 0, %s312
      %s316 = sphi 0, %s315
      %s332 = sphi 0, %s316
    $region4: #{tpu_custom_call.1} parent=1 // loop_header_branch
      %28 = sbr.rel (%p26) target = $region8
    $region5: #{tpu_custom_call.1} parent=1 // loop_body
      %s30 = ssub.s32 %s25, 1
      %s31 = ssub.s32 %s25, 2
      %s32 = sadd.s32 %s25, 1
      %s33 = ssub.s32 %s25, %s32
      %p34 = scmp.eq.s32.totalorder %s33, 0
      %s36 = sadd.s32 %s35, 1
      %s37 = scalar_select %p34, %s35, %s36
      %p40 = pneg %p34
      %p41 = scmp.eq.s32.totalorder %s25, 7
      %p42 = por %p40, %p41
      %p43 = scmp.ne.s32.totalorder %s35, %s38
      %p44 = scmp.eq.s32.totalorder %s25, 0
      %p45 = por %p43, %p44
      %p46 = scmp.ne.s32.totalorder %s35, %s38
      %p47 = scmp.eq.s32.totalorder %s30, 7
      %p48 = por %p46, %p47
      %p49 = scmp.ne.s32.totalorder %s38, %s39
      %p50 = scmp.eq.s32.totalorder %s30, 0
      %p51 = por %p49, %p50
      %p52 = scmp.ne.s32.totalorder %s38, %s39
      %p53 = scmp.eq.s32.totalorder %s31, 7
      %p54 = por %p52, %p53
      %p56 = scmp.ne.s32.totalorder %s39, %s55
      %p57 = scmp.eq.s32.totalorder %s31, 0
      %p58 = por %p56, %p57
      %s59 = ssub.s32 %s25, %s32
      %p60 = scmp.eq.s32.totalorder %s59, 0
      %s62 = sadd.s32 %s61, 1
      %s63 = scalar_select %p60, %s61, %s62
      %p66 = pneg %p60
      %p67 = scmp.eq.s32.totalorder %s25, 7
      %p68 = por %p66, %p67
      %p69 = scmp.ne.s32.totalorder %s61, %s64
      %p70 = scmp.eq.s32.totalorder %s25, 0
      %p71 = por %p69, %p70
      %p72 = scmp.ne.s32.totalorder %s61, %s64
      %p73 = scmp.eq.s32.totalorder %s30, 7
      %p74 = por %p72, %p73
      %p75 = scmp.ne.s32.totalorder %s64, %s65
      %p76 = scmp.eq.s32.totalorder %s30, 0
      %p77 = por %p75, %p76
      %p78 = scmp.ne.s32.totalorder %s64, %s65
      %p79 = scmp.eq.s32.totalorder %s31, 7
      %p80 = por %p78, %p79
      %p82 = scmp.ne.s32.totalorder %s65, %s81
      %p83 = scmp.eq.s32.totalorder %s31, 0
      %p84 = por %p82, %p83
      %s86 = sadd.s32 %s85, 1
      %p89 = scmp.eq.s32.totalorder %s25, 7
      %p90 = scmp.ne.s32.totalorder %s85, %s87
      %p91 = scmp.eq.s32.totalorder %s25, 0
      %p92 = por %p90, %p91
      %p93 = scmp.ne.s32.totalorder %s85, %s87
      %p94 = scmp.eq.s32.totalorder %s30, 7
      %p95 = por %p93, %p94
      %p96 = scmp.ne.s32.totalorder %s87, %s88
      %p97 = scmp.eq.s32.totalorder %s30, 0
      %p98 = por %p96, %p97
      %p99 = scmp.ne.s32.totalorder %s87, %s88
      %p100 = scmp.eq.s32.totalorder %s31, 7
      %p101 = por %p99, %p100
      %p103 = scmp.ne.s32.totalorder %s88, %s102
      %p104 = scmp.eq.s32.totalorder %s31, 0
      %p105 = por %p103, %p104
      %s107 = sadd.s32 %s106, 1
      %p110 = scmp.eq.s32.totalorder %s25, 7
      %p111 = scmp.ne.s32.totalorder %s106, %s108
      %p112 = scmp.eq.s32.totalorder %s25, 0
      %p113 = por %p111, %p112
      %p114 = scmp.ne.s32.totalorder %s106, %s108
      %p115 = scmp.eq.s32.totalorder %s30, 7
      %p116 = por %p114, %p115
      %p117 = scmp.ne.s32.totalorder %s108, %s109
      %p118 = scmp.eq.s32.totalorder %s30, 0
      %p119 = por %p117, %p118
      %p120 = scmp.ne.s32.totalorder %s108, %s109
      %p121 = scmp.eq.s32.totalorder %s31, 7
      %p122 = por %p120, %p121
      %p124 = scmp.ne.s32.totalorder %s109, %s123
      %p125 = scmp.eq.s32.totalorder %s31, 0
      %p126 = por %p124, %p125
      %s128 = sadd.s32 %s127, 1
      %p131 = scmp.eq.s32.totalorder %s25, 7
      %p132 = scmp.ne.s32.totalorder %s127, %s129
      %p133 = scmp.eq.s32.totalorder %s25, 0
      %p134 = por %p132, %p133
      %p135 = scmp.ne.s32.totalorder %s127, %s129
      %p136 = scmp.eq.s32.totalorder %s30, 7
      %p137 = por %p135, %p136
      %p138 = scmp.ne.s32.totalorder %s129, %s130
      %p139 = scmp.eq.s32.totalorder %s30, 0
      %p140 = por %p138, %p139
      %p141 = scmp.ne.s32.totalorder %s129, %s130
      %p142 = scmp.eq.s32.totalorder %s31, 7
      %p143 = por %p141, %p142
      %p145 = scmp.ne.s32.totalorder %s130, %s144
      %p146 = scmp.eq.s32.totalorder %s31, 0
      %p147 = por %p145, %p146
      %s149 = sadd.s32 %s148, 1
      %p152 = scmp.eq.s32.totalorder %s25, 7
      %p153 = scmp.ne.s32.totalorder %s148, %s150
      %p154 = scmp.eq.s32.totalorder %s25, 0
      %p155 = por %p153, %p154
      %p156 = scmp.ne.s32.totalorder %s148, %s150
      %p157 = scmp.eq.s32.totalorder %s30, 7
      %p158 = por %p156, %p157
      %p159 = scmp.ne.s32.totalorder %s150, %s151
      %p160 = scmp.eq.s32.totalorder %s30, 0
      %p161 = por %p159, %p160
      %p162 = scmp.ne.s32.totalorder %s150, %s151
      %p163 = scmp.eq.s32.totalorder %s31, 7
      %p164 = por %p162, %p163
      %p166 = scmp.ne.s32.totalorder %s151, %s165
      %p167 = scmp.eq.s32.totalorder %s31, 0
      %p168 = por %p166, %p167
      %s170 = sadd.s32 %s169, 1
      %p173 = scmp.eq.s32.totalorder %s25, 7
      %p174 = scmp.ne.s32.totalorder %s169, %s171
      %p175 = scmp.eq.s32.totalorder %s25, 0
      %p176 = por %p174, %p175
      %p177 = scmp.ne.s32.totalorder %s169, %s171
      %p178 = scmp.eq.s32.totalorder %s30, 7
      %p179 = por %p177, %p178
      %p180 = scmp.ne.s32.totalorder %s171, %s172
      %p181 = scmp.eq.s32.totalorder %s30, 0
      %p182 = por %p180, %p181
      %p183 = scmp.ne.s32.totalorder %s171, %s172
      %p184 = scmp.eq.s32.totalorder %s31, 7
      %p185 = por %p183, %p184
      %p187 = scmp.ne.s32.totalorder %s172, %s186
      %p188 = scmp.eq.s32.totalorder %s31, 0
      %p189 = por %p187, %p188
      %s191 = sadd.s32 %s190, 1
      %p194 = scmp.eq.s32.totalorder %s25, 7
      %p195 = scmp.ne.s32.totalorder %s190, %s192
      %p196 = scmp.eq.s32.totalorder %s25, 0
      %p197 = por %p195, %p196
      %p198 = scmp.ne.s32.totalorder %s190, %s192
      %p199 = scmp.eq.s32.totalorder %s30, 7
      %p200 = por %p198, %p199
      %p201 = scmp.ne.s32.totalorder %s192, %s193
      %p202 = scmp.eq.s32.totalorder %s30, 0
      %p203 = por %p201, %p202
      %p204 = scmp.ne.s32.totalorder %s192, %s193
      %p205 = scmp.eq.s32.totalorder %s31, 7
      %p206 = por %p204, %p205
      %p208 = scmp.ne.s32.totalorder %s193, %s207
      %p209 = scmp.eq.s32.totalorder %s31, 0
      %p210 = por %p208, %p209
      %s212 = sadd.s32 %s211, 1
      %p215 = scmp.eq.s32.totalorder %s25, 7
      %p216 = scmp.ne.s32.totalorder %s211, %s213
      %p217 = scmp.eq.s32.totalorder %s25, 0
      %p218 = por %p216, %p217
      %p219 = scmp.ne.s32.totalorder %s211, %s213
      %p220 = scmp.eq.s32.totalorder %s30, 7
      %p221 = por %p219, %p220
      %p222 = scmp.ne.s32.totalorder %s213, %s214
      %p223 = scmp.eq.s32.totalorder %s30, 0
      %p224 = por %p222, %p223
      %p225 = scmp.ne.s32.totalorder %s213, %s214
      %p226 = scmp.eq.s32.totalorder %s31, 7
      %p227 = por %p225, %p226
      %p229 = scmp.ne.s32.totalorder %s214, %s228
      %p230 = scmp.eq.s32.totalorder %s31, 0
      %p231 = por %p229, %p230
      %s232 = ssub.s32 %s25, %s32
      %p233 = scmp.eq.s32.totalorder %s232, 0
      %s235 = sadd.s32 %s234, 1
      %s236 = scalar_select %p233, %s234, %s235
      %p239 = pneg %p233
      %p240 = scmp.eq.s32.totalorder %s25, 7
      %p241 = por %p239, %p240
      %p242 = scmp.ne.s32.totalorder %s234, %s237
      %p243 = scmp.eq.s32.totalorder %s25, 0
      %p244 = por %p242, %p243
      %p245 = scmp.ne.s32.totalorder %s234, %s237
      %p246 = scmp.eq.s32.totalorder %s30, 7
      %p247 = por %p245, %p246
      %p248 = scmp.ne.s32.totalorder %s237, %s238
      %p249 = scmp.eq.s32.totalorder %s30, 0
      %p250 = por %p248, %p249
      %p251 = scmp.ne.s32.totalorder %s237, %s238
      %p252 = scmp.eq.s32.totalorder %s31, 7
      %p253 = por %p251, %p252
      %p255 = scmp.ne.s32.totalorder %s238, %s254
      %p256 = scmp.eq.s32.totalorder %s31, 0
      %p257 = por %p255, %p256
      %s258 = ssub.s32 %s25, %s32
      %p259 = scmp.eq.s32.totalorder %s258, 0
      %s261 = sadd.s32 %s260, 1
      %s262 = scalar_select %p259, %s260, %s261
      %p265 = pneg %p259
      %p266 = scmp.eq.s32.totalorder %s25, 7
      %p267 = por %p265, %p266
      %p268 = scmp.ne.s32.totalorder %s260, %s263
      %p269 = scmp.eq.s32.totalorder %s25, 0
      %p270 = por %p268, %p269
      %p271 = scmp.ne.s32.totalorder %s260, %s263
      %p272 = scmp.eq.s32.totalorder %s30, 7
      %p273 = por %p271, %p272
      %p274 = scmp.ne.s32.totalorder %s263, %s264
      %p275 = scmp.eq.s32.totalorder %s30, 0
      %p276 = por %p274, %p275
      %p277 = scmp.ne.s32.totalorder %s263, %s264
      %p278 = scmp.eq.s32.totalorder %s31, 7
      %p279 = por %p277, %p278
      %p281 = scmp.ne.s32.totalorder %s264, %s280
      %p282 = scmp.eq.s32.totalorder %s31, 0
      %p283 = por %p281, %p282
      %s284 = ssub.s32 %s25, %s32
      %p285 = scmp.eq.s32.totalorder %s284, 0
      %s287 = sadd.s32 %s286, 1
      %s288 = scalar_select %p285, %s286, %s287
      %p291 = pneg %p285
      %p292 = scmp.eq.s32.totalorder %s25, 7
      %p293 = por %p291, %p292
      %p294 = scmp.ne.s32.totalorder %s286, %s289
      %p295 = scmp.eq.s32.totalorder %s25, 0
      %p296 = por %p294, %p295
      %p297 = scmp.ne.s32.totalorder %s286, %s289
      %p298 = scmp.eq.s32.totalorder %s30, 7
      %p299 = por %p297, %p298
      %p300 = scmp.ne.s32.totalorder %s289, %s290
      %p301 = scmp.eq.s32.totalorder %s30, 0
      %p302 = por %p300, %p301
      %p303 = scmp.ne.s32.totalorder %s289, %s290
      %p304 = scmp.eq.s32.totalorder %s31, 7
      %p305 = por %p303, %p304
      %p307 = scmp.ne.s32.totalorder %s290, %s306
      %p308 = scmp.eq.s32.totalorder %s31, 0
      %p309 = por %p307, %p308
      %s310 = ssub.s32 %s25, %s32
      %p311 = scmp.eq.s32.totalorder %s310, 0
      %s313 = sadd.s32 %s312, 1
      %s314 = scalar_select %p311, %s312, %s313
      %p317 = pneg %p311
      %p318 = scmp.eq.s32.totalorder %s25, 7
      %p319 = por %p317, %p318
      %p320 = scmp.ne.s32.totalorder %s312, %s315
      %p321 = scmp.eq.s32.totalorder %s25, 0
      %p322 = por %p320, %p321
      %p323 = scmp.ne.s32.totalorder %s312, %s315
      %p324 = scmp.eq.s32.totalorder %s30, 7
      %p325 = por %p323, %p324
      %p326 = scmp.ne.s32.totalorder %s315, %s316
      %p327 = scmp.eq.s32.totalorder %s30, 0
      %p328 = por %p326, %p327
      %p329 = scmp.ne.s32.totalorder %s315, %s316
      %p330 = scmp.eq.s32.totalorder %s31, 7
      %p331 = por %p329, %p330
      %p333 = scmp.ne.s32.totalorder %s316, %s332
      %p334 = scmp.eq.s32.totalorder %s31, 0
      %p335 = por %p333, %p334
      %p336 = scmp.le.s32.totalorder 1, %s25
      %p337 = scmp.lt.s32.totalorder %s25, 9
      %p338 = pnand %p336, %p337
      %p339 = pneg %p338
      // Predicated region
      $region9: #{tpu_custom_call.1} parent=5 // pred_check
        _
      $region10: #{tpu_custom_call.1} parent=5 // pred_check_branch
        %341 = sbr.rel (%p338) target = $region12
      $region11: #{tpu_custom_call.1} parent=5 // pred_region
        %s342 = ssub.s32 %s25, 1
        // Predicated region
        $region13: #{tpu_custom_call.1} parent=11 // pred_check
          %p343 = pneg %p98
        $region14: #{tpu_custom_call.1} parent=11 // pred_check_branch
          %345 = sbr.rel (%p343) target = $region16
        $region15: #{tpu_custom_call.1} parent=11 // pred_region
          _
        $region16: #{tpu_custom_call.1} parent=11 // pred_fallthru
          _
        // Predicated region
        $region17: #{tpu_custom_call.1} parent=11 // pred_check
          %p346 = pneg %p119
        $region18: #{tpu_custom_call.1} parent=11 // pred_check_branch
          %348 = sbr.rel (%p346) target = $region20
        $region19: #{tpu_custom_call.1} parent=11 // pred_region
          _
        $region20: #{tpu_custom_call.1} parent=11 // pred_fallthru
          _
        // Predicated region
        $region21: #{tpu_custom_call.1} parent=11 // pred_check
          %p349 = pneg %p140
        $region22: #{tpu_custom_call.1} parent=11 // pred_check_branch
          %351 = sbr.rel (%p349) target = $region24
        $region23: #{tpu_custom_call.1} parent=11 // pred_region
          _
        $region24: #{tpu_custom_call.1} parent=11 // pred_fallthru
          _
        // Predicated region
        $region25: #{tpu_custom_call.1} parent=11 // pred_check
          %p352 = pneg %p161
        $region26: #{tpu_custom_call.1} parent=11 // pred_check_branch
          %354 = sbr.rel (%p352) target = $region28
        $region27: #{tpu_custom_call.1} parent=11 // pred_region
          _
        $region28: #{tpu_custom_call.1} parent=11 // pred_fallthru
          _
        // Predicated region
        $region29: #{tpu_custom_call.1} parent=11 // pred_check
          %p355 = pneg %p182
        $region30: #{tpu_custom_call.1} parent=11 // pred_check_branch
          %357 = sbr.rel (%p355) target = $region32
        $region31: #{tpu_custom_call.1} parent=11 // pred_region
          _
        $region32: #{tpu_custom_call.1} parent=11 // pred_fallthru
          _
        // Predicated region
        $region33: #{tpu_custom_call.1} parent=11 // pred_check
          %p358 = pneg %p203
        $region34: #{tpu_custom_call.1} parent=11 // pred_check_branch
          %360 = sbr.rel (%p358) target = $region36
        $region35: #{tpu_custom_call.1} parent=11 // pred_region
          _
        $region36: #{tpu_custom_call.1} parent=11 // pred_fallthru
          _
        // Predicated region
        $region37: #{tpu_custom_call.1} parent=11 // pred_check
          %p361 = pneg %p224
        $region38: #{tpu_custom_call.1} parent=11 // pred_check_branch
          %363 = sbr.rel (%p361) target = $region40
        $region39: #{tpu_custom_call.1} parent=11 // pred_region
          _
        $region40: #{tpu_custom_call.1} parent=11 // pred_fallthru
          _
      $region12: #{tpu_custom_call.1} parent=5 // pred_fallthru
        _
      %p364 = scmp.lt.s32.totalorder %s25, 8
      // Predicated region
      $region41: #{tpu_custom_call.1} parent=5 // pred_check
        %p365 = pneg %p364
      $region42: #{tpu_custom_call.1} parent=5 // pred_check_branch
        %367 = sbr.rel (%p365) target = $region44
      $region43: #{tpu_custom_call.1} parent=5 // pred_region
        // Predicated region
        $region45: #{tpu_custom_call.1} parent=43 // pred_check
          %p368 = pneg %p45
        $region46: #{tpu_custom_call.1} parent=43 // pred_check_branch
          %370 = sbr.rel (%p368) target = $region48
        $region47: #{tpu_custom_call.1} parent=43 // pred_region
          %p371 = scmp.lt.s32.totalorder %s25, 7
          %s372 = scalar_select %p371, %s25, 7
          %s373 = smul.addr %s372, 32
          %s374 = smul.addr %s373, 2
          %s375 = scalar_lea.vmem %s0, %s374
        $region48: #{tpu_custom_call.1} parent=43 // pred_fallthru
          _
        // Predicated region
        $region49: #{tpu_custom_call.1} parent=43 // pred_check
          %p376 = pneg %p71
        $region50: #{tpu_custom_call.1} parent=43 // pred_check_branch
          %378 = sbr.rel (%p376) target = $region52
        $region51: #{tpu_custom_call.1} parent=43 // pred_region
          %p379 = scmp.lt.s32.totalorder %s25, 7
          %s380 = scalar_select %p379, %s25, 7
          %s381 = smul.addr %s380, 128
          %s382 = smul.addr %s381, 2
          %s383 = scalar_lea.vmem %s1, %s382
        $region52: #{tpu_custom_call.1} parent=43 // pred_fallthru
          _
      $region44: #{tpu_custom_call.1} parent=5 // pred_fallthru
        _
      %p384 = scmp.le.s32.totalorder 1, %s25
      %p385 = scmp.lt.s32.totalorder %s25, 9
      %p386 = pnand %p384, %p385
      %p387 = pneg %p386
      // Predicated region
      $region53: #{tpu_custom_call.1} parent=5 // pred_check
        _
      $region54: #{tpu_custom_call.1} parent=5 // pred_check_branch
        %389 = sbr.rel (%p386) target = $region56
      $region55: #{tpu_custom_call.1} parent=5 // pred_region
        %s390 = ssub.s32 %s25, 1
        %p391 = scmp.lt.s32.totalorder %s30, 7
        %s392 = scalar_select %p391, %s30, 7
        %s393 = smul.addr %s392, 32
        %s394 = smul.addr %s393, 2
        %s395 = scalar_lea.vmem %s0, %s394
        %p396 = pneg %p51
        %p397 = pneg %p48
        %p398 = scmp.lt.s32.totalorder %s30, 7
        %s399 = scalar_select %p398, %s30, 7
        %s400 = smul.addr %s399, 128
        %s401 = smul.addr %s400, 2
        %s402 = scalar_lea.vmem %s1, %s401
        %p403 = pneg %p77
        %p404 = pneg %p74
        %p405 = pneg %p98
        %p406 = pneg %p95
        %p407 = pneg %p119
        %p408 = pneg %p116
        %p409 = pneg %p140
        %p410 = pneg %p137
        %p411 = pneg %p161
        %p412 = pneg %p158
        %p413 = pneg %p182
        %p414 = pneg %p179
        %p415 = pneg %p203
        %p416 = pneg %p200
        %p417 = pneg %p224
        %p418 = pneg %p221
        %p419 = pneg %p250
        %p420 = pneg %p247
        %s421 = sand.u32 %s237, 1
        %s422 = scalar_lea.sflag [#allocation3], %s421
        %s423 = sand.u32 %s237, 1
        %s424 = smul.addr %s423, 24
        %s425 = scalar_lea.vmem [#allocation2], %s424
        %p426 = pneg %p276
        %p427 = pneg %p273
        %s428 = sand.u32 %s263, 1
        %s429 = scalar_lea.sflag [#allocation5], %s428
        %s430 = sand.u32 %s263, 1
        %s431 = smul.addr %s430, 16
        %s432 = scalar_lea.vmem [#allocation4], %s431
        %p433 = pneg %p302
        %p434 = pneg %p299
        %p435 = scmp.lt.s32.totalorder %s30, 7
        %s436 = scalar_select %p435, %s30, 7
        %s437 = smul.addr %s436, 3
        %s438 = smul.addr %s437, 8
        %s439 = scalar_lea.vmem %s11, %s438
        %p440 = pneg %p328
        %p441 = pneg %p325
        %p442 = scmp.lt.s32.totalorder %s30, 7
        %s443 = scalar_select %p442, %s30, 7
        %s444 = smul.addr %s443, 4
        %s445 = scalar_lea.vmem %s12, %s444
        %p446 = scmp.lt.s32.totalorder %s30, 7
        %s447 = scalar_select %p446, %s30, 7
        %s448 = smul.addr %s447, 32
        %s449 = smul.addr %s448, 2
        %s450 = scalar_lea.vmem %s0, %s449
        %p451 = scmp.lt.s32.totalorder %s30, 7
        %s452 = scalar_select %p451, %s30, 7
        %s453 = smul.addr %s452, 128
        %s454 = smul.addr %s453, 2
        %s455 = scalar_lea.vmem %s1, %s454
        %p456 = scmp.lt.s32.totalorder %s30, 7
        %s457 = scalar_select %p456, %s30, 7
        %s458 = smul.addr %s457, 3
        %s459 = smul.addr %s458, 8
        %s460 = scalar_lea.vmem %s11, %s459
        %p461 = scmp.lt.s32.totalorder %s30, 7
        %s462 = scalar_select %p461, %s30, 7
        %s463 = smul.addr %s462, 4
        %s464 = scalar_lea.vmem %s12, %s463
        %v466 = vld [vmem:[%s2] sm:$0xff]
        %v467 = vld [vmem:[%s2 + $0x8] sm:$0xff]
        %v468 = vld [vmem:[%s2 + $0x10] sm:$0xff]
        %v469 = vld [vmem:[%s2 + $0x18] sm:$0xff]
        %v470 = vld [vmem:[%s2 + $0x20] sm:$0xff]
        %v471 = vld [vmem:[%s2 + $0x28] sm:$0xff]
        %v472 = vld [vmem:[%s2 + $0x30] sm:$0xff]
        %v473 = vld [vmem:[%s2 + $0x38] sm:$0xff]
        %v474 = vld [vmem:[%s2 + $0x40] sm:$0xff]
        %v475 = vld [vmem:[%s2 + $0x48] sm:$0xff]
        %v476 = vld [vmem:[%s2 + $0x50] sm:$0xff]
        %v477 = vld [vmem:[%s2 + $0x58] sm:$0xff]
        %v478 = vld [vmem:[%s2 + $0x60] sm:$0xff]
        %v479 = vld [vmem:[%s2 + $0x68] sm:$0xff]
        %v480 = vld [vmem:[%s2 + $0x70] sm:$0xff]
        %v481 = vld [vmem:[%s2 + $0x78] sm:$0xff]
        %v482 = vld [vmem:[%s2 + $0x80] sm:$0xff]
        %v483 = vld [vmem:[%s2 + $0x88] sm:$0xff]
        %v484 = vld [vmem:[%s2 + $0x90] sm:$0xff]
        %v485 = vld [vmem:[%s2 + $0x98] sm:$0xff]
        %v486 = vld [vmem:[%s2 + $0xa0] sm:$0xff]
        %v487 = vld [vmem:[%s2 + $0xa8] sm:$0xff]
        %v488 = vld [vmem:[%s2 + $0xb0] sm:$0xff]
        %v489 = vld [vmem:[%s2 + $0xb8] sm:$0xff]
        %v490 = vld [vmem:[%s2 + $0xc0] sm:$0xff]
        %v491 = vld [vmem:[%s2 + $0xc8] sm:$0xff]
        %v492 = vld [vmem:[%s2 + $0xd0] sm:$0xff]
        %v493 = vld [vmem:[%s2 + $0xd8] sm:$0xff]
        %v494 = vld [vmem:[%s2 + $0xe0] sm:$0xff]
        %v495 = vld [vmem:[%s2 + $0xe8] sm:$0xff]
        %v496 = vld [vmem:[%s2 + $0xf0] sm:$0xff]
        %v497 = vld [vmem:[%s2 + $0xf8] sm:$0xff]
        %v498 = vld [vmem:[%s2 + $0x100] sm:$0xff]
        %v499 = vld [vmem:[%s2 + $0x108] sm:$0xff]
        %v500 = vld [vmem:[%s2 + $0x110] sm:$0xff]
        %v501 = vld [vmem:[%s2 + $0x118] sm:$0xff]
        %v502 = vld [vmem:[%s2 + $0x120] sm:$0xff]
        %v503 = vld [vmem:[%s2 + $0x128] sm:$0xff]
        %v504 = vld [vmem:[%s2 + $0x130] sm:$0xff]
        %v505 = vld [vmem:[%s2 + $0x138] sm:$0xff]
        %v506 = vld [vmem:[%s2 + $0x140] sm:$0xff]
        %v507 = vld [vmem:[%s2 + $0x148] sm:$0xff]
        %v508 = vld [vmem:[%s2 + $0x150] sm:$0xff]
        %v509 = vld [vmem:[%s2 + $0x158] sm:$0xff]
        %v510 = vld [vmem:[%s2 + $0x160] sm:$0xff]
        %v511 = vld [vmem:[%s2 + $0x168] sm:$0xff]
        %v512 = vld [vmem:[%s2 + $0x170] sm:$0xff]
        %v513 = vld [vmem:[%s2 + $0x178] sm:$0xff]
        %v514 = vld [vmem:[%s2 + $0x180] sm:$0xff]
        %v515 = vld [vmem:[%s2 + $0x188] sm:$0xff]
        %v516 = vld [vmem:[%s2 + $0x190] sm:$0xff]
        %v517 = vld [vmem:[%s2 + $0x198] sm:$0xff]
        %v518 = vld [vmem:[%s2 + $0x1a0] sm:$0xff]
        %v519 = vld [vmem:[%s2 + $0x1a8] sm:$0xff]
        %v520 = vld [vmem:[%s2 + $0x1b0] sm:$0xff]
        %v521 = vld [vmem:[%s2 + $0x1b8] sm:$0xff]
        %v522 = vld [vmem:[%s2 + $0x1c0] sm:$0xff]
        %v523 = vld [vmem:[%s2 + $0x1c8] sm:$0xff]
        %v524 = vld [vmem:[%s2 + $0x1d0] sm:$0xff]
        %v525 = vld [vmem:[%s2 + $0x1d8] sm:$0xff]
        %v526 = vld [vmem:[%s2 + $0x1e0] sm:$0xff]
        %v527 = vld [vmem:[%s2 + $0x1e8] sm:$0xff]
        %v528 = vld [vmem:[%s2 + $0x1f0] sm:$0xff]
        %v529 = vld [vmem:[%s2 + $0x1f8] sm:$0xff]
        %v530 = vld [vmem:[%s2 + $0x200] sm:$0xff]
        %v531 = vld [vmem:[%s2 + $0x208] sm:$0xff]
        %v532 = vld [vmem:[%s2 + $0x210] sm:$0xff]
        %v533 = vld [vmem:[%s2 + $0x218] sm:$0xff]
        %v534 = vld [vmem:[%s2 + $0x220] sm:$0xff]
        %v535 = vld [vmem:[%s2 + $0x228] sm:$0xff]
        %v536 = vld [vmem:[%s2 + $0x230] sm:$0xff]
        %v537 = vld [vmem:[%s2 + $0x238] sm:$0xff]
        %v538 = vld [vmem:[%s2 + $0x240] sm:$0xff]
        %v539 = vld [vmem:[%s2 + $0x248] sm:$0xff]
        %v540 = vld [vmem:[%s2 + $0x250] sm:$0xff]
        %v541 = vld [vmem:[%s2 + $0x258] sm:$0xff]
        %v542 = vld [vmem:[%s2 + $0x260] sm:$0xff]
        %v543 = vld [vmem:[%s2 + $0x268] sm:$0xff]
        %v544 = vld [vmem:[%s2 + $0x270] sm:$0xff]
        %v545 = vld [vmem:[%s2 + $0x278] sm:$0xff]
        %v546 = vld [vmem:[%s2 + $0x280] sm:$0xff]
        %v547 = vld [vmem:[%s2 + $0x288] sm:$0xff]
        %v548 = vld [vmem:[%s2 + $0x290] sm:$0xff]
        %v549 = vld [vmem:[%s2 + $0x298] sm:$0xff]
        %v550 = vld [vmem:[%s2 + $0x2a0] sm:$0xff]
        %v551 = vld [vmem:[%s2 + $0x2a8] sm:$0xff]
        %v552 = vld [vmem:[%s2 + $0x2b0] sm:$0xff]
        %v553 = vld [vmem:[%s2 + $0x2b8] sm:$0xff]
        %v554 = vld [vmem:[%s2 + $0x2c0] sm:$0xff]
        %v555 = vld [vmem:[%s2 + $0x2c8] sm:$0xff]
        %v556 = vld [vmem:[%s2 + $0x2d0] sm:$0xff]
        %v557 = vld [vmem:[%s2 + $0x2d8] sm:$0xff]
        %v558 = vld [vmem:[%s2 + $0x2e0] sm:$0xff]
        %v559 = vld [vmem:[%s2 + $0x2e8] sm:$0xff]
        %v560 = vld [vmem:[%s2 + $0x2f0] sm:$0xff]
        %v561 = vld [vmem:[%s2 + $0x2f8] sm:$0xff]
        %v562 = vld [vmem:[%s2 + $0x300] sm:$0xff]
        %v563 = vld [vmem:[%s2 + $0x308] sm:$0xff]
        %v564 = vld [vmem:[%s2 + $0x310] sm:$0xff]
        %v565 = vld [vmem:[%s2 + $0x318] sm:$0xff]
        %v566 = vld [vmem:[%s2 + $0x320] sm:$0xff]
        %v567 = vld [vmem:[%s2 + $0x328] sm:$0xff]
        %v568 = vld [vmem:[%s2 + $0x330] sm:$0xff]
        %v569 = vld [vmem:[%s2 + $0x338] sm:$0xff]
        %v570 = vld [vmem:[%s2 + $0x340] sm:$0xff]
        %v571 = vld [vmem:[%s2 + $0x348] sm:$0xff]
        %v572 = vld [vmem:[%s2 + $0x350] sm:$0xff]
        %v573 = vld [vmem:[%s2 + $0x358] sm:$0xff]
        %v574 = vld [vmem:[%s2 + $0x360] sm:$0xff]
        %v575 = vld [vmem:[%s2 + $0x368] sm:$0xff]
        %v576 = vld [vmem:[%s2 + $0x370] sm:$0xff]
        %v577 = vld [vmem:[%s2 + $0x378] sm:$0xff]
        %v578 = vld [vmem:[%s2 + $0x380] sm:$0xff]
        %v579 = vld [vmem:[%s2 + $0x388] sm:$0xff]
        %v580 = vld [vmem:[%s2 + $0x390] sm:$0xff]
        %v581 = vld [vmem:[%s2 + $0x398] sm:$0xff]
        %v582 = vld [vmem:[%s2 + $0x3a0] sm:$0xff]
        %v583 = vld [vmem:[%s2 + $0x3a8] sm:$0xff]
        %v584 = vld [vmem:[%s2 + $0x3b0] sm:$0xff]
        %v585 = vld [vmem:[%s2 + $0x3b8] sm:$0xff]
        %v586 = vld [vmem:[%s2 + $0x3c0] sm:$0xff]
        %v587 = vld [vmem:[%s2 + $0x3c8] sm:$0xff]
        %v588 = vld [vmem:[%s2 + $0x3d0] sm:$0xff]
        %v589 = vld [vmem:[%s2 + $0x3d8] sm:$0xff]
        %v590 = vld [vmem:[%s2 + $0x3e0] sm:$0xff]
        %v591 = vld [vmem:[%s2 + $0x3e8] sm:$0xff]
        %v592 = vld [vmem:[%s2 + $0x3f0] sm:$0xff]
        %v593 = vld [vmem:[%s2 + $0x3f8] sm:$0xff]
        %v594 = vld [vmem:[%s2 + $0x400] sm:$0xff]
        %v595 = vld [vmem:[%s2 + $0x408] sm:$0xff]
        %v596 = vld [vmem:[%s2 + $0x410] sm:$0xff]
        %v597 = vld [vmem:[%s2 + $0x418] sm:$0xff]
        %v598 = vld [vmem:[%s2 + $0x420] sm:$0xff]
        %v599 = vld [vmem:[%s2 + $0x428] sm:$0xff]
        %v600 = vld [vmem:[%s2 + $0x430] sm:$0xff]
        %v601 = vld [vmem:[%s2 + $0x438] sm:$0xff]
        %v602 = vld [vmem:[%s2 + $0x440] sm:$0xff]
        %v603 = vld [vmem:[%s2 + $0x448] sm:$0xff]
        %v604 = vld [vmem:[%s2 + $0x450] sm:$0xff]
        %v605 = vld [vmem:[%s2 + $0x458] sm:$0xff]
        %v606 = vld [vmem:[%s2 + $0x460] sm:$0xff]
        %v607 = vld [vmem:[%s2 + $0x468] sm:$0xff]
        %v608 = vld [vmem:[%s2 + $0x470] sm:$0xff]
        %v609 = vld [vmem:[%s2 + $0x478] sm:$0xff]
        %v610 = vld [vmem:[%s2 + $0x480] sm:$0xff]
        %v611 = vld [vmem:[%s2 + $0x488] sm:$0xff]
        %v612 = vld [vmem:[%s2 + $0x490] sm:$0xff]
        %v613 = vld [vmem:[%s2 + $0x498] sm:$0xff]
        %v614 = vld [vmem:[%s2 + $0x4a0] sm:$0xff]
        %v615 = vld [vmem:[%s2 + $0x4a8] sm:$0xff]
        %v616 = vld [vmem:[%s2 + $0x4b0] sm:$0xff]
        %v617 = vld [vmem:[%s2 + $0x4b8] sm:$0xff]
        %v618 = vld [vmem:[%s2 + $0x4c0] sm:$0xff]
        %v619 = vld [vmem:[%s2 + $0x4c8] sm:$0xff]
        %v620 = vld [vmem:[%s2 + $0x4d0] sm:$0xff]
        %v621 = vld [vmem:[%s2 + $0x4d8] sm:$0xff]
        %v622 = vld [vmem:[%s2 + $0x4e0] sm:$0xff]
        %v623 = vld [vmem:[%s2 + $0x4e8] sm:$0xff]
        %v624 = vld [vmem:[%s2 + $0x4f0] sm:$0xff]
        %v625 = vld [vmem:[%s2 + $0x4f8] sm:$0xff]
        %v626 = vld [vmem:[%s2 + $0x500] sm:$0xff]
        %v627 = vld [vmem:[%s2 + $0x508] sm:$0xff]
        %v628 = vld [vmem:[%s2 + $0x510] sm:$0xff]
        %v629 = vld [vmem:[%s2 + $0x518] sm:$0xff]
        %v630 = vld [vmem:[%s2 + $0x520] sm:$0xff]
        %v631 = vld [vmem:[%s2 + $0x528] sm:$0xff]
        %v632 = vld [vmem:[%s2 + $0x530] sm:$0xff]
        %v633 = vld [vmem:[%s2 + $0x538] sm:$0xff]
        %v634 = vld [vmem:[%s2 + $0x540] sm:$0xff]
        %v635 = vld [vmem:[%s2 + $0x548] sm:$0xff]
        %v636 = vld [vmem:[%s2 + $0x550] sm:$0xff]
        %v637 = vld [vmem:[%s2 + $0x558] sm:$0xff]
        %v638 = vld [vmem:[%s2 + $0x560] sm:$0xff]
        %v639 = vld [vmem:[%s2 + $0x568] sm:$0xff]
        %v640 = vld [vmem:[%s2 + $0x570] sm:$0xff]
        %v641 = vld [vmem:[%s2 + $0x578] sm:$0xff]
        %v642 = vld [vmem:[%s2 + $0x580] sm:$0xff]
        %v643 = vld [vmem:[%s2 + $0x588] sm:$0xff]
        %v644 = vld [vmem:[%s2 + $0x590] sm:$0xff]
        %v645 = vld [vmem:[%s2 + $0x598] sm:$0xff]
        %v646 = vld [vmem:[%s2 + $0x5a0] sm:$0xff]
        %v647 = vld [vmem:[%s2 + $0x5a8] sm:$0xff]
        %v648 = vld [vmem:[%s2 + $0x5b0] sm:$0xff]
        %v649 = vld [vmem:[%s2 + $0x5b8] sm:$0xff]
        %v650 = vld [vmem:[%s2 + $0x5c0] sm:$0xff]
        %v651 = vld [vmem:[%s2 + $0x5c8] sm:$0xff]
        %v652 = vld [vmem:[%s2 + $0x5d0] sm:$0xff]
        %v653 = vld [vmem:[%s2 + $0x5d8] sm:$0xff]
        %v654 = vld [vmem:[%s2 + $0x5e0] sm:$0xff]
        %v655 = vld [vmem:[%s2 + $0x5e8] sm:$0xff]
        %v656 = vld [vmem:[%s2 + $0x5f0] sm:$0xff]
        %v657 = vld [vmem:[%s2 + $0x5f8] sm:$0xff]
        %v658 = vld [vmem:[%s2 + $0x600] sm:$0xff]
        %v659 = vld [vmem:[%s2 + $0x608] sm:$0xff]
        %v660 = vld [vmem:[%s2 + $0x610] sm:$0xff]
        %v661 = vld [vmem:[%s2 + $0x618] sm:$0xff]
        %v662 = vld [vmem:[%s2 + $0x620] sm:$0xff]
        %v663 = vld [vmem:[%s2 + $0x628] sm:$0xff]
        %v664 = vld [vmem:[%s2 + $0x630] sm:$0xff]
        %v665 = vld [vmem:[%s2 + $0x638] sm:$0xff]
        %v666 = vld [vmem:[%s2 + $0x640] sm:$0xff]
        %v667 = vld [vmem:[%s2 + $0x648] sm:$0xff]
        %v668 = vld [vmem:[%s2 + $0x650] sm:$0xff]
        %v669 = vld [vmem:[%s2 + $0x658] sm:$0xff]
        %v670 = vld [vmem:[%s2 + $0x660] sm:$0xff]
        %v671 = vld [vmem:[%s2 + $0x668] sm:$0xff]
        %v672 = vld [vmem:[%s2 + $0x670] sm:$0xff]
        %v673 = vld [vmem:[%s2 + $0x678] sm:$0xff]
        %v674 = vld [vmem:[%s2 + $0x680] sm:$0xff]
        %v675 = vld [vmem:[%s2 + $0x688] sm:$0xff]
        %v676 = vld [vmem:[%s2 + $0x690] sm:$0xff]
        %v677 = vld [vmem:[%s2 + $0x698] sm:$0xff]
        %v678 = vld [vmem:[%s2 + $0x6a0] sm:$0xff]
        %v679 = vld [vmem:[%s2 + $0x6a8] sm:$0xff]
        %v680 = vld [vmem:[%s2 + $0x6b0] sm:$0xff]
        %v681 = vld [vmem:[%s2 + $0x6b8] sm:$0xff]
        %v682 = vld [vmem:[%s2 + $0x6c0] sm:$0xff]
        %v683 = vld [vmem:[%s2 + $0x6c8] sm:$0xff]
        %v684 = vld [vmem:[%s2 + $0x6d0] sm:$0xff]
        %v685 = vld [vmem:[%s2 + $0x6d8] sm:$0xff]
        %v686 = vld [vmem:[%s2 + $0x6e0] sm:$0xff]
        %v687 = vld [vmem:[%s2 + $0x6e8] sm:$0xff]
        %v688 = vld [vmem:[%s2 + $0x6f0] sm:$0xff]
        %v689 = vld [vmem:[%s2 + $0x6f8] sm:$0xff]
        %v690 = vld [vmem:[%s2 + $0x700] sm:$0xff]
        %v691 = vld [vmem:[%s2 + $0x708] sm:$0xff]
        %v692 = vld [vmem:[%s2 + $0x710] sm:$0xff]
        %v693 = vld [vmem:[%s2 + $0x718] sm:$0xff]
        %v694 = vld [vmem:[%s2 + $0x720] sm:$0xff]
        %v695 = vld [vmem:[%s2 + $0x728] sm:$0xff]
        %v696 = vld [vmem:[%s2 + $0x730] sm:$0xff]
        %v697 = vld [vmem:[%s2 + $0x738] sm:$0xff]
        %v698 = vld [vmem:[%s2 + $0x740] sm:$0xff]
        %v699 = vld [vmem:[%s2 + $0x748] sm:$0xff]
        %v700 = vld [vmem:[%s2 + $0x750] sm:$0xff]
        %v701 = vld [vmem:[%s2 + $0x758] sm:$0xff]
        %v702 = vld [vmem:[%s2 + $0x760] sm:$0xff]
        %v703 = vld [vmem:[%s2 + $0x768] sm:$0xff]
        %v704 = vld [vmem:[%s2 + $0x770] sm:$0xff]
        %v705 = vld [vmem:[%s2 + $0x778] sm:$0xff]
        %v706 = vld [vmem:[%s2 + $0x780] sm:$0xff]
        %v707 = vld [vmem:[%s2 + $0x788] sm:$0xff]
        %v708 = vld [vmem:[%s2 + $0x790] sm:$0xff]
        %v709 = vld [vmem:[%s2 + $0x798] sm:$0xff]
        %v710 = vld [vmem:[%s2 + $0x7a0] sm:$0xff]
        %v711 = vld [vmem:[%s2 + $0x7a8] sm:$0xff]
        %v712 = vld [vmem:[%s2 + $0x7b0] sm:$0xff]
        %v713 = vld [vmem:[%s2 + $0x7b8] sm:$0xff]
        %v714 = vld [vmem:[%s2 + $0x7c0] sm:$0xff]
        %v715 = vld [vmem:[%s2 + $0x7c8] sm:$0xff]
        %v716 = vld [vmem:[%s2 + $0x7d0] sm:$0xff]
        %v717 = vld [vmem:[%s2 + $0x7d8] sm:$0xff]
        %v718 = vld [vmem:[%s2 + $0x7e0] sm:$0xff]
        %v719 = vld [vmem:[%s2 + $0x7e8] sm:$0xff]
        %v720 = vld [vmem:[%s2 + $0x7f0] sm:$0xff]
        %v721 = vld [vmem:[%s2 + $0x7f8] sm:$0xff]
        %v722 = vld [vmem:[%s2 + $0x800] sm:$0xff]
        %v723 = vld [vmem:[%s2 + $0x808] sm:$0xff]
        %v724 = vld [vmem:[%s2 + $0x810] sm:$0xff]
        %v725 = vld [vmem:[%s2 + $0x818] sm:$0xff]
        %v726 = vld [vmem:[%s2 + $0x820] sm:$0xff]
        %v727 = vld [vmem:[%s2 + $0x828] sm:$0xff]
        %v728 = vld [vmem:[%s2 + $0x830] sm:$0xff]
        %v729 = vld [vmem:[%s2 + $0x838] sm:$0xff]
        %v730 = vld [vmem:[%s2 + $0x840] sm:$0xff]
        %v731 = vld [vmem:[%s2 + $0x848] sm:$0xff]
        %v732 = vld [vmem:[%s2 + $0x850] sm:$0xff]
        %v733 = vld [vmem:[%s2 + $0x858] sm:$0xff]
        %v734 = vld [vmem:[%s2 + $0x860] sm:$0xff]
        %v735 = vld [vmem:[%s2 + $0x868] sm:$0xff]
        %v736 = vld [vmem:[%s2 + $0x870] sm:$0xff]
        %v737 = vld [vmem:[%s2 + $0x878] sm:$0xff]
        %v738 = vld [vmem:[%s2 + $0x880] sm:$0xff]
        %v739 = vld [vmem:[%s2 + $0x888] sm:$0xff]
        %v740 = vld [vmem:[%s2 + $0x890] sm:$0xff]
        %v741 = vld [vmem:[%s2 + $0x898] sm:$0xff]
        %v742 = vld [vmem:[%s2 + $0x8a0] sm:$0xff]
        %v743 = vld [vmem:[%s2 + $0x8a8] sm:$0xff]
        %v744 = vld [vmem:[%s2 + $0x8b0] sm:$0xff]
        %v745 = vld [vmem:[%s2 + $0x8b8] sm:$0xff]
        %v746 = vld [vmem:[%s2 + $0x8c0] sm:$0xff]
        %v747 = vld [vmem:[%s2 + $0x8c8] sm:$0xff]
        %v748 = vld [vmem:[%s2 + $0x8d0] sm:$0xff]
        %v749 = vld [vmem:[%s2 + $0x8d8] sm:$0xff]
        %v750 = vld [vmem:[%s2 + $0x8e0] sm:$0xff]
        %v751 = vld [vmem:[%s2 + $0x8e8] sm:$0xff]
        %v752 = vld [vmem:[%s2 + $0x8f0] sm:$0xff]
        %v753 = vld [vmem:[%s2 + $0x8f8] sm:$0xff]
        %v754 = vld [vmem:[%s2 + $0x900] sm:$0xff]
        %v755 = vld [vmem:[%s2 + $0x908] sm:$0xff]
        %v756 = vld [vmem:[%s2 + $0x910] sm:$0xff]
        %v757 = vld [vmem:[%s2 + $0x918] sm:$0xff]
        %v758 = vld [vmem:[%s2 + $0x920] sm:$0xff]
        %v759 = vld [vmem:[%s2 + $0x928] sm:$0xff]
        %v760 = vld [vmem:[%s2 + $0x930] sm:$0xff]
        %v761 = vld [vmem:[%s2 + $0x938] sm:$0xff]
        %v762 = vld [vmem:[%s2 + $0x940] sm:$0xff]
        %v763 = vld [vmem:[%s2 + $0x948] sm:$0xff]
        %v764 = vld [vmem:[%s2 + $0x950] sm:$0xff]
        %v765 = vld [vmem:[%s2 + $0x958] sm:$0xff]
        %v766 = vld [vmem:[%s2 + $0x960] sm:$0xff]
        %v767 = vld [vmem:[%s2 + $0x968] sm:$0xff]
        %v768 = vld [vmem:[%s2 + $0x970] sm:$0xff]
        %v769 = vld [vmem:[%s2 + $0x978] sm:$0xff]
        %v770 = vld [vmem:[%s2 + $0x980] sm:$0xff]
        %v771 = vld [vmem:[%s2 + $0x988] sm:$0xff]
        %v772 = vld [vmem:[%s2 + $0x990] sm:$0xff]
        %v773 = vld [vmem:[%s2 + $0x998] sm:$0xff]
        %v774 = vld [vmem:[%s2 + $0x9a0] sm:$0xff]
        %v775 = vld [vmem:[%s2 + $0x9a8] sm:$0xff]
        %v776 = vld [vmem:[%s2 + $0x9b0] sm:$0xff]
        %v777 = vld [vmem:[%s2 + $0x9b8] sm:$0xff]
        %v778 = vld [vmem:[%s2 + $0x9c0] sm:$0xff]
        %v779 = vld [vmem:[%s2 + $0x9c8] sm:$0xff]
        %v780 = vld [vmem:[%s2 + $0x9d0] sm:$0xff]
        %v781 = vld [vmem:[%s2 + $0x9d8] sm:$0xff]
        %v782 = vld [vmem:[%s2 + $0x9e0] sm:$0xff]
        %v783 = vld [vmem:[%s2 + $0x9e8] sm:$0xff]
        %v784 = vld [vmem:[%s2 + $0x9f0] sm:$0xff]
        %v785 = vld [vmem:[%s2 + $0x9f8] sm:$0xff]
        %v786 = vld [vmem:[%s2 + $0xa00] sm:$0xff]
        %v787 = vld [vmem:[%s2 + $0xa08] sm:$0xff]
        %v788 = vld [vmem:[%s2 + $0xa10] sm:$0xff]
        %v789 = vld [vmem:[%s2 + $0xa18] sm:$0xff]
        %v790 = vld [vmem:[%s2 + $0xa20] sm:$0xff]
        %v791 = vld [vmem:[%s2 + $0xa28] sm:$0xff]
        %v792 = vld [vmem:[%s2 + $0xa30] sm:$0xff]
        %v793 = vld [vmem:[%s2 + $0xa38] sm:$0xff]
        %v794 = vld [vmem:[%s2 + $0xa40] sm:$0xff]
        %v795 = vld [vmem:[%s2 + $0xa48] sm:$0xff]
        %v796 = vld [vmem:[%s2 + $0xa50] sm:$0xff]
        %v797 = vld [vmem:[%s2 + $0xa58] sm:$0xff]
        %v798 = vld [vmem:[%s2 + $0xa60] sm:$0xff]
        %v799 = vld [vmem:[%s2 + $0xa68] sm:$0xff]
        %v800 = vld [vmem:[%s2 + $0xa70] sm:$0xff]
        %v801 = vld [vmem:[%s2 + $0xa78] sm:$0xff]
        %v802 = vld [vmem:[%s2 + $0xa80] sm:$0xff]
        %v803 = vld [vmem:[%s2 + $0xa88] sm:$0xff]
        %v804 = vld [vmem:[%s2 + $0xa90] sm:$0xff]
        %v805 = vld [vmem:[%s2 + $0xa98] sm:$0xff]
        %v806 = vld [vmem:[%s2 + $0xaa0] sm:$0xff]
        %v807 = vld [vmem:[%s2 + $0xaa8] sm:$0xff]
        %v808 = vld [vmem:[%s2 + $0xab0] sm:$0xff]
        %v809 = vld [vmem:[%s2 + $0xab8] sm:$0xff]
        %v810 = vld [vmem:[%s2 + $0xac0] sm:$0xff]
        %v811 = vld [vmem:[%s2 + $0xac8] sm:$0xff]
        %v812 = vld [vmem:[%s2 + $0xad0] sm:$0xff]
        %v813 = vld [vmem:[%s2 + $0xad8] sm:$0xff]
        %v814 = vld [vmem:[%s2 + $0xae0] sm:$0xff]
        %v815 = vld [vmem:[%s2 + $0xae8] sm:$0xff]
        %v816 = vld [vmem:[%s2 + $0xaf0] sm:$0xff]
        %v817 = vld [vmem:[%s2 + $0xaf8] sm:$0xff]
        %v818 = vld [vmem:[%s2 + $0xb00] sm:$0xff]
        %v819 = vld [vmem:[%s2 + $0xb08] sm:$0xff]
        %v820 = vld [vmem:[%s2 + $0xb10] sm:$0xff]
        %v821 = vld [vmem:[%s2 + $0xb18] sm:$0xff]
        %v822 = vld [vmem:[%s2 + $0xb20] sm:$0xff]
        %v823 = vld [vmem:[%s2 + $0xb28] sm:$0xff]
        %v824 = vld [vmem:[%s2 + $0xb30] sm:$0xff]
        %v825 = vld [vmem:[%s2 + $0xb38] sm:$0xff]
        %v826 = vld [vmem:[%s2 + $0xb40] sm:$0xff]
        %v827 = vld [vmem:[%s2 + $0xb48] sm:$0xff]
        %v828 = vld [vmem:[%s2 + $0xb50] sm:$0xff]
        %v829 = vld [vmem:[%s2 + $0xb58] sm:$0xff]
        %v830 = vld [vmem:[%s2 + $0xb60] sm:$0xff]
        %v831 = vld [vmem:[%s2 + $0xb68] sm:$0xff]
        %v832 = vld [vmem:[%s2 + $0xb70] sm:$0xff]
        %v833 = vld [vmem:[%s2 + $0xb78] sm:$0xff]
        %v834 = vld [vmem:[%s2 + $0xb80] sm:$0xff]
        %v835 = vld [vmem:[%s2 + $0xb88] sm:$0xff]
        %v836 = vld [vmem:[%s2 + $0xb90] sm:$0xff]
        %v837 = vld [vmem:[%s2 + $0xb98] sm:$0xff]
        %v838 = vld [vmem:[%s2 + $0xba0] sm:$0xff]
        %v839 = vld [vmem:[%s2 + $0xba8] sm:$0xff]
        %v840 = vld [vmem:[%s2 + $0xbb0] sm:$0xff]
        %v841 = vld [vmem:[%s2 + $0xbb8] sm:$0xff]
        %v842 = vld [vmem:[%s2 + $0xbc0] sm:$0xff]
        %v843 = vld [vmem:[%s2 + $0xbc8] sm:$0xff]
        %v844 = vld [vmem:[%s2 + $0xbd0] sm:$0xff]
        %v845 = vld [vmem:[%s2 + $0xbd8] sm:$0xff]
        %v846 = vld [vmem:[%s2 + $0xbe0] sm:$0xff]
        %v847 = vld [vmem:[%s2 + $0xbe8] sm:$0xff]
        %v848 = vld [vmem:[%s2 + $0xbf0] sm:$0xff]
        %v849 = vld [vmem:[%s2 + $0xbf8] sm:$0xff]
        %v850 = vld [vmem:[%s2 + $0xc00] sm:$0xff]
        %v851 = vld [vmem:[%s2 + $0xc08] sm:$0xff]
        %v852 = vld [vmem:[%s2 + $0xc10] sm:$0xff]
        %v853 = vld [vmem:[%s2 + $0xc18] sm:$0xff]
        %v854 = vld [vmem:[%s2 + $0xc20] sm:$0xff]
        %v855 = vld [vmem:[%s2 + $0xc28] sm:$0xff]
        %v856 = vld [vmem:[%s2 + $0xc30] sm:$0xff]
        %v857 = vld [vmem:[%s2 + $0xc38] sm:$0xff]
        %v858 = vld [vmem:[%s2 + $0xc40] sm:$0xff]
        %v859 = vld [vmem:[%s2 + $0xc48] sm:$0xff]
        %v860 = vld [vmem:[%s2 + $0xc50] sm:$0xff]
        %v861 = vld [vmem:[%s2 + $0xc58] sm:$0xff]
        %v862 = vld [vmem:[%s2 + $0xc60] sm:$0xff]
        %v863 = vld [vmem:[%s2 + $0xc68] sm:$0xff]
        %v864 = vld [vmem:[%s2 + $0xc70] sm:$0xff]
        %v865 = vld [vmem:[%s2 + $0xc78] sm:$0xff]
        %v866 = vld [vmem:[%s2 + $0xc80] sm:$0xff]
        %v867 = vld [vmem:[%s2 + $0xc88] sm:$0xff]
        %v868 = vld [vmem:[%s2 + $0xc90] sm:$0xff]
        %v869 = vld [vmem:[%s2 + $0xc98] sm:$0xff]
        %v870 = vld [vmem:[%s2 + $0xca0] sm:$0xff]
        %v871 = vld [vmem:[%s2 + $0xca8] sm:$0xff]
        %v872 = vld [vmem:[%s2 + $0xcb0] sm:$0xff]
        %v873 = vld [vmem:[%s2 + $0xcb8] sm:$0xff]
        %v874 = vld [vmem:[%s2 + $0xcc0] sm:$0xff]
        %v875 = vld [vmem:[%s2 + $0xcc8] sm:$0xff]
        %v876 = vld [vmem:[%s2 + $0xcd0] sm:$0xff]
        %v877 = vld [vmem:[%s2 + $0xcd8] sm:$0xff]
        %v878 = vld [vmem:[%s2 + $0xce0] sm:$0xff]
        %v879 = vld [vmem:[%s2 + $0xce8] sm:$0xff]
        %v880 = vld [vmem:[%s2 + $0xcf0] sm:$0xff]
        %v881 = vld [vmem:[%s2 + $0xcf8] sm:$0xff]
        %v882 = vld [vmem:[%s2 + $0xd00] sm:$0xff]
        %v883 = vld [vmem:[%s2 + $0xd08] sm:$0xff]
        %v884 = vld [vmem:[%s2 + $0xd10] sm:$0xff]
        %v885 = vld [vmem:[%s2 + $0xd18] sm:$0xff]
        %v886 = vld [vmem:[%s2 + $0xd20] sm:$0xff]
        %v887 = vld [vmem:[%s2 + $0xd28] sm:$0xff]
        %v888 = vld [vmem:[%s2 + $0xd30] sm:$0xff]
        %v889 = vld [vmem:[%s2 + $0xd38] sm:$0xff]
        %v890 = vld [vmem:[%s2 + $0xd40] sm:$0xff]
        %v891 = vld [vmem:[%s2 + $0xd48] sm:$0xff]
        %v892 = vld [vmem:[%s2 + $0xd50] sm:$0xff]
        %v893 = vld [vmem:[%s2 + $0xd58] sm:$0xff]
        %v894 = vld [vmem:[%s2 + $0xd60] sm:$0xff]
        %v895 = vld [vmem:[%s2 + $0xd68] sm:$0xff]
        %v896 = vld [vmem:[%s2 + $0xd70] sm:$0xff]
        %v897 = vld [vmem:[%s2 + $0xd78] sm:$0xff]
        %v898 = vld [vmem:[%s2 + $0xd80] sm:$0xff]
        %v899 = vld [vmem:[%s2 + $0xd88] sm:$0xff]
        %v900 = vld [vmem:[%s2 + $0xd90] sm:$0xff]
        %v901 = vld [vmem:[%s2 + $0xd98] sm:$0xff]
        %v902 = vld [vmem:[%s2 + $0xda0] sm:$0xff]
        %v903 = vld [vmem:[%s2 + $0xda8] sm:$0xff]
        %v904 = vld [vmem:[%s2 + $0xdb0] sm:$0xff]
        %v905 = vld [vmem:[%s2 + $0xdb8] sm:$0xff]
        %v906 = vld [vmem:[%s2 + $0xdc0] sm:$0xff]
        %v907 = vld [vmem:[%s2 + $0xdc8] sm:$0xff]
        %v908 = vld [vmem:[%s2 + $0xdd0] sm:$0xff]
        %v909 = vld [vmem:[%s2 + $0xdd8] sm:$0xff]
        %v910 = vld [vmem:[%s2 + $0xde0] sm:$0xff]
        %v911 = vld [vmem:[%s2 + $0xde8] sm:$0xff]
        %v912 = vld [vmem:[%s2 + $0xdf0] sm:$0xff]
        %v913 = vld [vmem:[%s2 + $0xdf8] sm:$0xff]
        %v914 = vld [vmem:[%s2 + $0xe00] sm:$0xff]
        %v915 = vld [vmem:[%s2 + $0xe08] sm:$0xff]
        %v916 = vld [vmem:[%s2 + $0xe10] sm:$0xff]
        %v917 = vld [vmem:[%s2 + $0xe18] sm:$0xff]
        %v918 = vld [vmem:[%s2 + $0xe20] sm:$0xff]
        %v919 = vld [vmem:[%s2 + $0xe28] sm:$0xff]
        %v920 = vld [vmem:[%s2 + $0xe30] sm:$0xff]
        %v921 = vld [vmem:[%s2 + $0xe38] sm:$0xff]
        %v922 = vld [vmem:[%s2 + $0xe40] sm:$0xff]
        %v923 = vld [vmem:[%s2 + $0xe48] sm:$0xff]
        %v924 = vld [vmem:[%s2 + $0xe50] sm:$0xff]
        %v925 = vld [vmem:[%s2 + $0xe58] sm:$0xff]
        %v926 = vld [vmem:[%s2 + $0xe60] sm:$0xff]
        %v927 = vld [vmem:[%s2 + $0xe68] sm:$0xff]
        %v928 = vld [vmem:[%s2 + $0xe70] sm:$0xff]
        %v929 = vld [vmem:[%s2 + $0xe78] sm:$0xff]
        %v930 = vld [vmem:[%s2 + $0xe80] sm:$0xff]
        %v931 = vld [vmem:[%s2 + $0xe88] sm:$0xff]
        %v932 = vld [vmem:[%s2 + $0xe90] sm:$0xff]
        %v933 = vld [vmem:[%s2 + $0xe98] sm:$0xff]
        %v934 = vld [vmem:[%s2 + $0xea0] sm:$0xff]
        %v935 = vld [vmem:[%s2 + $0xea8] sm:$0xff]
        %v936 = vld [vmem:[%s2 + $0xeb0] sm:$0xff]
        %v937 = vld [vmem:[%s2 + $0xeb8] sm:$0xff]
        %v938 = vld [vmem:[%s2 + $0xec0] sm:$0xff]
        %v939 = vld [vmem:[%s2 + $0xec8] sm:$0xff]
        %v940 = vld [vmem:[%s2 + $0xed0] sm:$0xff]
        %v941 = vld [vmem:[%s2 + $0xed8] sm:$0xff]
        %v942 = vld [vmem:[%s2 + $0xee0] sm:$0xff]
        %v943 = vld [vmem:[%s2 + $0xee8] sm:$0xff]
        %v944 = vld [vmem:[%s2 + $0xef0] sm:$0xff]
        %v945 = vld [vmem:[%s2 + $0xef8] sm:$0xff]
        %v946 = vld [vmem:[%s2 + $0xf00] sm:$0xff]
        %v947 = vld [vmem:[%s2 + $0xf08] sm:$0xff]
        %v948 = vld [vmem:[%s2 + $0xf10] sm:$0xff]
        %v949 = vld [vmem:[%s2 + $0xf18] sm:$0xff]
        %v950 = vld [vmem:[%s2 + $0xf20] sm:$0xff]
        %v951 = vld [vmem:[%s2 + $0xf28] sm:$0xff]
        %v952 = vld [vmem:[%s2 + $0xf30] sm:$0xff]
        %v953 = vld [vmem:[%s2 + $0xf38] sm:$0xff]
        %v954 = vld [vmem:[%s2 + $0xf40] sm:$0xff]
        %v955 = vld [vmem:[%s2 + $0xf48] sm:$0xff]
        %v956 = vld [vmem:[%s2 + $0xf50] sm:$0xff]
        %v957 = vld [vmem:[%s2 + $0xf58] sm:$0xff]
        %v958 = vld [vmem:[%s2 + $0xf60] sm:$0xff]
        %v959 = vld [vmem:[%s2 + $0xf68] sm:$0xff]
        %v960 = vld [vmem:[%s2 + $0xf70] sm:$0xff]
        %v961 = vld [vmem:[%s2 + $0xf78] sm:$0xff]
        %v962 = vld [vmem:[%s2 + $0xf80] sm:$0xff]
        %v963 = vld [vmem:[%s2 + $0xf88] sm:$0xff]
        %v964 = vld [vmem:[%s2 + $0xf90] sm:$0xff]
        %v965 = vld [vmem:[%s2 + $0xf98] sm:$0xff]
        %v966 = vld [vmem:[%s2 + $0xfa0] sm:$0xff]
        %v967 = vld [vmem:[%s2 + $0xfa8] sm:$0xff]
        %v968 = vld [vmem:[%s2 + $0xfb0] sm:$0xff]
        %v969 = vld [vmem:[%s2 + $0xfb8] sm:$0xff]
        %v970 = vld [vmem:[%s2 + $0xfc0] sm:$0xff]
        %v971 = vld [vmem:[%s2 + $0xfc8] sm:$0xff]
        %v972 = vld [vmem:[%s2 + $0xfd0] sm:$0xff]
        %v973 = vld [vmem:[%s2 + $0xfd8] sm:$0xff]
        %v974 = vld [vmem:[%s2 + $0xfe0] sm:$0xff]
        %v975 = vld [vmem:[%s2 + $0xfe8] sm:$0xff]
        %v976 = vld [vmem:[%s2 + $0xff0] sm:$0xff]
        %v977 = vld [vmem:[%s2 + $0xff8] sm:$0xff]
        %v978 = vld [vmem:[%s450] sm:$0xff]
        %v979 = vld [vmem:[%s450 + $0x8] sm:$0xff]
        %v980 = vld [vmem:[%s450 + $0x10] sm:$0xff]
        %v981 = vld [vmem:[%s450 + $0x18] sm:$0xff]
        %v982 = vld [vmem:[%s450 + $0x20] sm:$0xff]
        %v983 = vld [vmem:[%s450 + $0x28] sm:$0xff]
        %v984 = vld [vmem:[%s450 + $0x30] sm:$0xff]
        %v985 = vld [vmem:[%s450 + $0x38] sm:$0xff]
        %v994 = vcombine.high %v978, %v978
        %v996 = vunpack.c.l.s4 1983009808
        %v997 = vunpack.c.0.s8 %v996
        %v998 = vlaneseq
        %v999 = vshrl.u32 %v998, 7
        %v1000 = vsub.s32 %v997, %v999
        %v1001 = vrot.slane %v978, %v1000
        %v1003 = vunpack.c.l.s4 1983009808
        %v1004 = vunpack.c.0.s8 %v1003
        %v1005 = vlaneseq
        %v1006 = vshrl.u32 %v1005, 7
        %v1007 = vsub.s32 %v1004, %v1006
        %v1008 = vrot.slane %v994, %v1007
        %v1009 = vcombine.high %v1001, %v1001
        %v1010 = vcombine.high %v1008, %v1008
        %v1011 = vcombine.high %v979, %v979
        %v1013 = vunpack.c.l.s4 1983009808
        %v1014 = vunpack.c.0.s8 %v1013
        %v1015 = vlaneseq
        %v1016 = vshrl.u32 %v1015, 7
        %v1017 = vsub.s32 %v1014, %v1016
        %v1018 = vrot.slane %v979, %v1017
        %v1020 = vunpack.c.l.s4 1983009808
        %v1021 = vunpack.c.0.s8 %v1020
        %v1022 = vlaneseq
        %v1023 = vshrl.u32 %v1022, 7
        %v1024 = vsub.s32 %v1021, %v1023
        %v1025 = vrot.slane %v1011, %v1024
        %v1026 = vcombine.high %v1018, %v1018
        %v1027 = vcombine.high %v1025, %v1025
        %v1028 = vcombine.high %v980, %v980
        %v1030 = vunpack.c.l.s4 1983009808
        %v1031 = vunpack.c.0.s8 %v1030
        %v1032 = vlaneseq
        %v1033 = vshrl.u32 %v1032, 7
        %v1034 = vsub.s32 %v1031, %v1033
        %v1035 = vrot.slane %v980, %v1034
        %v1037 = vunpack.c.l.s4 1983009808
        %v1038 = vunpack.c.0.s8 %v1037
        %v1039 = vlaneseq
        %v1040 = vshrl.u32 %v1039, 7
        %v1041 = vsub.s32 %v1038, %v1040
        %v1042 = vrot.slane %v1028, %v1041
        %v1043 = vcombine.high %v1035, %v1035
        %v1044 = vcombine.high %v1042, %v1042
        %v1045 = vcombine.high %v981, %v981
        %v1047 = vunpack.c.l.s4 1983009808
        %v1048 = vunpack.c.0.s8 %v1047
        %v1049 = vlaneseq
        %v1050 = vshrl.u32 %v1049, 7
        %v1051 = vsub.s32 %v1048, %v1050
        %v1052 = vrot.slane %v981, %v1051
        %v1054 = vunpack.c.l.s4 1983009808
        %v1055 = vunpack.c.0.s8 %v1054
        %v1056 = vlaneseq
        %v1057 = vshrl.u32 %v1056, 7
        %v1058 = vsub.s32 %v1055, %v1057
        %v1059 = vrot.slane %v1045, %v1058
        %v1060 = vcombine.high %v1052, %v1052
        %v1061 = vcombine.high %v1059, %v1059
        %v1062 = vcombine.high %v982, %v982
        %v1064 = vunpack.c.l.s4 1983009808
        %v1065 = vunpack.c.0.s8 %v1064
        %v1066 = vlaneseq
        %v1067 = vshrl.u32 %v1066, 7
        %v1068 = vsub.s32 %v1065, %v1067
        %v1069 = vrot.slane %v982, %v1068
        %v1071 = vunpack.c.l.s4 1983009808
        %v1072 = vunpack.c.0.s8 %v1071
        %v1073 = vlaneseq
        %v1074 = vshrl.u32 %v1073, 7
        %v1075 = vsub.s32 %v1072, %v1074
        %v1076 = vrot.slane %v1062, %v1075
        %v1077 = vcombine.high %v1069, %v1069
        %v1078 = vcombine.high %v1076, %v1076
        %v1079 = vcombine.high %v983, %v983
        %v1081 = vunpack.c.l.s4 1983009808
        %v1082 = vunpack.c.0.s8 %v1081
        %v1083 = vlaneseq
        %v1084 = vshrl.u32 %v1083, 7
        %v1085 = vsub.s32 %v1082, %v1084
        %v1086 = vrot.slane %v983, %v1085
        %v1088 = vunpack.c.l.s4 1983009808
        %v1089 = vunpack.c.0.s8 %v1088
        %v1090 = vlaneseq
        %v1091 = vshrl.u32 %v1090, 7
        %v1092 = vsub.s32 %v1089, %v1091
        %v1093 = vrot.slane %v1079, %v1092
        %v1094 = vcombine.high %v1086, %v1086
        %v1095 = vcombine.high %v1093, %v1093
        %v1096 = vcombine.high %v984, %v984
        %v1098 = vunpack.c.l.s4 1983009808
        %v1099 = vunpack.c.0.s8 %v1098
        %v1100 = vlaneseq
        %v1101 = vshrl.u32 %v1100, 7
        %v1102 = vsub.s32 %v1099, %v1101
        %v1103 = vrot.slane %v984, %v1102
        %v1105 = vunpack.c.l.s4 1983009808
        %v1106 = vunpack.c.0.s8 %v1105
        %v1107 = vlaneseq
        %v1108 = vshrl.u32 %v1107, 7
        %v1109 = vsub.s32 %v1106, %v1108
        %v1110 = vrot.slane %v1096, %v1109
        %v1111 = vcombine.high %v1103, %v1103
        %v1112 = vcombine.high %v1110, %v1110
        %v1113 = vcombine.high %v985, %v985
        %v1115 = vunpack.c.l.s4 1983009808
        %v1116 = vunpack.c.0.s8 %v1115
        %v1117 = vlaneseq
        %v1118 = vshrl.u32 %v1117, 7
        %v1119 = vsub.s32 %v1116, %v1118
        %v1120 = vrot.slane %v985, %v1119
        %v1122 = vunpack.c.l.s4 1983009808
        %v1123 = vunpack.c.0.s8 %v1122
        %v1124 = vlaneseq
        %v1125 = vshrl.u32 %v1124, 7
        %v1126 = vsub.s32 %v1123, %v1125
        %v1127 = vrot.slane %v1113, %v1126
        %v1128 = vcombine.high %v1120, %v1120
        %v1129 = vcombine.high %v1127, %v1127
        %v1674 = vunpack.c.l.b16 %v466
        %v1675 = vunpack.c.h.b16 %v466
        %v1676 = vunpack.c.l.b16 %v467
        %v1677 = vunpack.c.h.b16 %v467
        %v1678 = vunpack.c.l.b16 %v468
        %v1679 = vunpack.c.h.b16 %v468
        %v1680 = vunpack.c.l.b16 %v469
        %v1681 = vunpack.c.h.b16 %v469
        %v1682 = vunpack.c.l.b16 %v470
        %v1683 = vunpack.c.h.b16 %v470
        %v1684 = vunpack.c.l.b16 %v471
        %v1685 = vunpack.c.h.b16 %v471
        %v1686 = vunpack.c.l.b16 %v472
        %v1687 = vunpack.c.h.b16 %v472
        %v1688 = vunpack.c.l.b16 %v473
        %v1689 = vunpack.c.h.b16 %v473
        %v1690 = vunpack.c.l.b16 %v474
        %v1691 = vunpack.c.h.b16 %v474
        %v1692 = vunpack.c.l.b16 %v475
        %v1693 = vunpack.c.h.b16 %v475
        %v1694 = vunpack.c.l.b16 %v476
        %v1695 = vunpack.c.h.b16 %v476
        %v1696 = vunpack.c.l.b16 %v477
        %v1697 = vunpack.c.h.b16 %v477
        %v1698 = vunpack.c.l.b16 %v478
        %v1699 = vunpack.c.h.b16 %v478
        %v1700 = vunpack.c.l.b16 %v479
        %v1701 = vunpack.c.h.b16 %v479
        %v1702 = vunpack.c.l.b16 %v480
        %v1703 = vunpack.c.h.b16 %v480
        %v1704 = vunpack.c.l.b16 %v481
        %v1705 = vunpack.c.h.b16 %v481
        %v1706 = vunpack.c.l.b16 %v482
        %v1707 = vunpack.c.h.b16 %v482
        %v1708 = vunpack.c.l.b16 %v483
        %v1709 = vunpack.c.h.b16 %v483
        %v1710 = vunpack.c.l.b16 %v484
        %v1711 = vunpack.c.h.b16 %v484
        %v1712 = vunpack.c.l.b16 %v485
        %v1713 = vunpack.c.h.b16 %v485
        %v1714 = vunpack.c.l.b16 %v486
        %v1715 = vunpack.c.h.b16 %v486
        %v1716 = vunpack.c.l.b16 %v487
        %v1717 = vunpack.c.h.b16 %v487
        %v1718 = vunpack.c.l.b16 %v488
        %v1719 = vunpack.c.h.b16 %v488
        %v1720 = vunpack.c.l.b16 %v489
        %v1721 = vunpack.c.h.b16 %v489
        %v1722 = vunpack.c.l.b16 %v490
        %v1723 = vunpack.c.h.b16 %v490
        %v1724 = vunpack.c.l.b16 %v491
        %v1725 = vunpack.c.h.b16 %v491
        %v1726 = vunpack.c.l.b16 %v492
        %v1727 = vunpack.c.h.b16 %v492
        %v1728 = vunpack.c.l.b16 %v493
        %v1729 = vunpack.c.h.b16 %v493
        %v1730 = vunpack.c.l.b16 %v494
        %v1731 = vunpack.c.h.b16 %v494
        %v1732 = vunpack.c.l.b16 %v495
        %v1733 = vunpack.c.h.b16 %v495
        %v1734 = vunpack.c.l.b16 %v496
        %v1735 = vunpack.c.h.b16 %v496
        %v1736 = vunpack.c.l.b16 %v497
        %v1737 = vunpack.c.h.b16 %v497
        %v1738 = vunpack.c.l.b16 %v498
        %v1739 = vunpack.c.h.b16 %v498
        %v1740 = vunpack.c.l.b16 %v499
        %v1741 = vunpack.c.h.b16 %v499
        %v1742 = vunpack.c.l.b16 %v500
        %v1743 = vunpack.c.h.b16 %v500
        %v1744 = vunpack.c.l.b16 %v501
        %v1745 = vunpack.c.h.b16 %v501
        %v1746 = vunpack.c.l.b16 %v502
        %v1747 = vunpack.c.h.b16 %v502
        %v1748 = vunpack.c.l.b16 %v503
        %v1749 = vunpack.c.h.b16 %v503
        %v1750 = vunpack.c.l.b16 %v504
        %v1751 = vunpack.c.h.b16 %v504
        %v1752 = vunpack.c.l.b16 %v505
        %v1753 = vunpack.c.h.b16 %v505
        %v1754 = vunpack.c.l.b16 %v506
        %v1755 = vunpack.c.h.b16 %v506
        %v1756 = vunpack.c.l.b16 %v507
        %v1757 = vunpack.c.h.b16 %v507
        %v1758 = vunpack.c.l.b16 %v508
        %v1759 = vunpack.c.h.b16 %v508
        %v1760 = vunpack.c.l.b16 %v509
        %v1761 = vunpack.c.h.b16 %v509
        %v1762 = vunpack.c.l.b16 %v510
        %v1763 = vunpack.c.h.b16 %v510
        %v1764 = vunpack.c.l.b16 %v511
        %v1765 = vunpack.c.h.b16 %v511
        %v1766 = vunpack.c.l.b16 %v512
        %v1767 = vunpack.c.h.b16 %v512
        %v1768 = vunpack.c.l.b16 %v513
        %v1769 = vunpack.c.h.b16 %v513
        %v1770 = vunpack.c.l.b16 %v514
        %v1771 = vunpack.c.h.b16 %v514
        %v1772 = vunpack.c.l.b16 %v515
        %v1773 = vunpack.c.h.b16 %v515
        %v1774 = vunpack.c.l.b16 %v516
        %v1775 = vunpack.c.h.b16 %v516
        %v1776 = vunpack.c.l.b16 %v517
        %v1777 = vunpack.c.h.b16 %v517
        %v1778 = vunpack.c.l.b16 %v518
        %v1779 = vunpack.c.h.b16 %v518
        %v1780 = vunpack.c.l.b16 %v519
        %v1781 = vunpack.c.h.b16 %v519
        %v1782 = vunpack.c.l.b16 %v520
        %v1783 = vunpack.c.h.b16 %v520
        %v1784 = vunpack.c.l.b16 %v521
        %v1785 = vunpack.c.h.b16 %v521
        %v1786 = vunpack.c.l.b16 %v522
        %v1787 = vunpack.c.h.b16 %v522
        %v1788 = vunpack.c.l.b16 %v523
        %v1789 = vunpack.c.h.b16 %v523
        %v1790 = vunpack.c.l.b16 %v524
        %v1791 = vunpack.c.h.b16 %v524
        %v1792 = vunpack.c.l.b16 %v525
        %v1793 = vunpack.c.h.b16 %v525
        %v1794 = vunpack.c.l.b16 %v526
        %v1795 = vunpack.c.h.b16 %v526
        %v1796 = vunpack.c.l.b16 %v527
        %v1797 = vunpack.c.h.b16 %v527
        %v1798 = vunpack.c.l.b16 %v528
        %v1799 = vunpack.c.h.b16 %v528
        %v1800 = vunpack.c.l.b16 %v529
        %v1801 = vunpack.c.h.b16 %v529
        %v1802 = vunpack.c.l.b16 %v530
        %v1803 = vunpack.c.h.b16 %v530
        %v1804 = vunpack.c.l.b16 %v531
        %v1805 = vunpack.c.h.b16 %v531
        %v1806 = vunpack.c.l.b16 %v532
        %v1807 = vunpack.c.h.b16 %v532
        %v1808 = vunpack.c.l.b16 %v533
        %v1809 = vunpack.c.h.b16 %v533
        %v1810 = vunpack.c.l.b16 %v534
        %v1811 = vunpack.c.h.b16 %v534
        %v1812 = vunpack.c.l.b16 %v535
        %v1813 = vunpack.c.h.b16 %v535
        %v1814 = vunpack.c.l.b16 %v536
        %v1815 = vunpack.c.h.b16 %v536
        %v1816 = vunpack.c.l.b16 %v537
        %v1817 = vunpack.c.h.b16 %v537
        %v1818 = vunpack.c.l.b16 %v538
        %v1819 = vunpack.c.h.b16 %v538
        %v1820 = vunpack.c.l.b16 %v539
        %v1821 = vunpack.c.h.b16 %v539
        %v1822 = vunpack.c.l.b16 %v540
        %v1823 = vunpack.c.h.b16 %v540
        %v1824 = vunpack.c.l.b16 %v541
        %v1825 = vunpack.c.h.b16 %v541
        %v1826 = vunpack.c.l.b16 %v542
        %v1827 = vunpack.c.h.b16 %v542
        %v1828 = vunpack.c.l.b16 %v543
        %v1829 = vunpack.c.h.b16 %v543
        %v1830 = vunpack.c.l.b16 %v544
        %v1831 = vunpack.c.h.b16 %v544
        %v1832 = vunpack.c.l.b16 %v545
        %v1833 = vunpack.c.h.b16 %v545
        %v1834 = vunpack.c.l.b16 %v546
        %v1835 = vunpack.c.h.b16 %v546
        %v1836 = vunpack.c.l.b16 %v547
        %v1837 = vunpack.c.h.b16 %v547
        %v1838 = vunpack.c.l.b16 %v548
        %v1839 = vunpack.c.h.b16 %v548
        %v1840 = vunpack.c.l.b16 %v549
        %v1841 = vunpack.c.h.b16 %v549
        %v1842 = vunpack.c.l.b16 %v550
        %v1843 = vunpack.c.h.b16 %v550
        %v1844 = vunpack.c.l.b16 %v551
        %v1845 = vunpack.c.h.b16 %v551
        %v1846 = vunpack.c.l.b16 %v552
        %v1847 = vunpack.c.h.b16 %v552
        %v1848 = vunpack.c.l.b16 %v553
        %v1849 = vunpack.c.h.b16 %v553
        %v1850 = vunpack.c.l.b16 %v554
        %v1851 = vunpack.c.h.b16 %v554
        %v1852 = vunpack.c.l.b16 %v555
        %v1853 = vunpack.c.h.b16 %v555
        %v1854 = vunpack.c.l.b16 %v556
        %v1855 = vunpack.c.h.b16 %v556
        %v1856 = vunpack.c.l.b16 %v557
        %v1857 = vunpack.c.h.b16 %v557
        %v1858 = vunpack.c.l.b16 %v558
        %v1859 = vunpack.c.h.b16 %v558
        %v1860 = vunpack.c.l.b16 %v559
        %v1861 = vunpack.c.h.b16 %v559
        %v1862 = vunpack.c.l.b16 %v560
        %v1863 = vunpack.c.h.b16 %v560
        %v1864 = vunpack.c.l.b16 %v561
        %v1865 = vunpack.c.h.b16 %v561
        %v1866 = vunpack.c.l.b16 %v562
        %v1867 = vunpack.c.h.b16 %v562
        %v1868 = vunpack.c.l.b16 %v563
        %v1869 = vunpack.c.h.b16 %v563
        %v1870 = vunpack.c.l.b16 %v564
        %v1871 = vunpack.c.h.b16 %v564
        %v1872 = vunpack.c.l.b16 %v565
        %v1873 = vunpack.c.h.b16 %v565
        %v1874 = vunpack.c.l.b16 %v566
        %v1875 = vunpack.c.h.b16 %v566
        %v1876 = vunpack.c.l.b16 %v567
        %v1877 = vunpack.c.h.b16 %v567
        %v1878 = vunpack.c.l.b16 %v568
        %v1879 = vunpack.c.h.b16 %v568
        %v1880 = vunpack.c.l.b16 %v569
        %v1881 = vunpack.c.h.b16 %v569
        %v1882 = vunpack.c.l.b16 %v570
        %v1883 = vunpack.c.h.b16 %v570
        %v1884 = vunpack.c.l.b16 %v571
        %v1885 = vunpack.c.h.b16 %v571
        %v1886 = vunpack.c.l.b16 %v572
        %v1887 = vunpack.c.h.b16 %v572
        %v1888 = vunpack.c.l.b16 %v573
        %v1889 = vunpack.c.h.b16 %v573
        %v1890 = vunpack.c.l.b16 %v574
        %v1891 = vunpack.c.h.b16 %v574
        %v1892 = vunpack.c.l.b16 %v575
        %v1893 = vunpack.c.h.b16 %v575
        %v1894 = vunpack.c.l.b16 %v576
        %v1895 = vunpack.c.h.b16 %v576
        %v1896 = vunpack.c.l.b16 %v577
        %v1897 = vunpack.c.h.b16 %v577
        %v1898 = vunpack.c.l.b16 %v578
        %v1899 = vunpack.c.h.b16 %v578
        %v1900 = vunpack.c.l.b16 %v579
        %v1901 = vunpack.c.h.b16 %v579
        %v1902 = vunpack.c.l.b16 %v580
        %v1903 = vunpack.c.h.b16 %v580
        %v1904 = vunpack.c.l.b16 %v581
        %v1905 = vunpack.c.h.b16 %v581
        %v1906 = vunpack.c.l.b16 %v582
        %v1907 = vunpack.c.h.b16 %v582
        %v1908 = vunpack.c.l.b16 %v583
        %v1909 = vunpack.c.h.b16 %v583
        %v1910 = vunpack.c.l.b16 %v584
        %v1911 = vunpack.c.h.b16 %v584
        %v1912 = vunpack.c.l.b16 %v585
        %v1913 = vunpack.c.h.b16 %v585
        %v1914 = vunpack.c.l.b16 %v586
        %v1915 = vunpack.c.h.b16 %v586
        %v1916 = vunpack.c.l.b16 %v587
        %v1917 = vunpack.c.h.b16 %v587
        %v1918 = vunpack.c.l.b16 %v588
        %v1919 = vunpack.c.h.b16 %v588
        %v1920 = vunpack.c.l.b16 %v589
        %v1921 = vunpack.c.h.b16 %v589
        %v1922 = vunpack.c.l.b16 %v590
        %v1923 = vunpack.c.h.b16 %v590
        %v1924 = vunpack.c.l.b16 %v591
        %v1925 = vunpack.c.h.b16 %v591
        %v1926 = vunpack.c.l.b16 %v592
        %v1927 = vunpack.c.h.b16 %v592
        %v1928 = vunpack.c.l.b16 %v593
        %v1929 = vunpack.c.h.b16 %v593
        %v1930 = vunpack.c.l.b16 %v594
        %v1931 = vunpack.c.h.b16 %v594
        %v1932 = vunpack.c.l.b16 %v595
        %v1933 = vunpack.c.h.b16 %v595
        %v1934 = vunpack.c.l.b16 %v596
        %v1935 = vunpack.c.h.b16 %v596
        %v1936 = vunpack.c.l.b16 %v597
        %v1937 = vunpack.c.h.b16 %v597
        %v1938 = vunpack.c.l.b16 %v598
        %v1939 = vunpack.c.h.b16 %v598
        %v1940 = vunpack.c.l.b16 %v599
        %v1941 = vunpack.c.h.b16 %v599
        %v1942 = vunpack.c.l.b16 %v600
        %v1943 = vunpack.c.h.b16 %v600
        %v1944 = vunpack.c.l.b16 %v601
        %v1945 = vunpack.c.h.b16 %v601
        %v1946 = vunpack.c.l.b16 %v602
        %v1947 = vunpack.c.h.b16 %v602
        %v1948 = vunpack.c.l.b16 %v603
        %v1949 = vunpack.c.h.b16 %v603
        %v1950 = vunpack.c.l.b16 %v604
        %v1951 = vunpack.c.h.b16 %v604
        %v1952 = vunpack.c.l.b16 %v605
        %v1953 = vunpack.c.h.b16 %v605
        %v1954 = vunpack.c.l.b16 %v606
        %v1955 = vunpack.c.h.b16 %v606
        %v1956 = vunpack.c.l.b16 %v607
        %v1957 = vunpack.c.h.b16 %v607
        %v1958 = vunpack.c.l.b16 %v608
        %v1959 = vunpack.c.h.b16 %v608
        %v1960 = vunpack.c.l.b16 %v609
        %v1961 = vunpack.c.h.b16 %v609
        %v1962 = vunpack.c.l.b16 %v610
        %v1963 = vunpack.c.h.b16 %v610
        %v1964 = vunpack.c.l.b16 %v611
        %v1965 = vunpack.c.h.b16 %v611
        %v1966 = vunpack.c.l.b16 %v612
        %v1967 = vunpack.c.h.b16 %v612
        %v1968 = vunpack.c.l.b16 %v613
        %v1969 = vunpack.c.h.b16 %v613
        %v1970 = vunpack.c.l.b16 %v614
        %v1971 = vunpack.c.h.b16 %v614
        %v1972 = vunpack.c.l.b16 %v615
        %v1973 = vunpack.c.h.b16 %v615
        %v1974 = vunpack.c.l.b16 %v616
        %v1975 = vunpack.c.h.b16 %v616
        %v1976 = vunpack.c.l.b16 %v617
        %v1977 = vunpack.c.h.b16 %v617
        %v1978 = vunpack.c.l.b16 %v618
        %v1979 = vunpack.c.h.b16 %v618
        %v1980 = vunpack.c.l.b16 %v619
        %v1981 = vunpack.c.h.b16 %v619
        %v1982 = vunpack.c.l.b16 %v620
        %v1983 = vunpack.c.h.b16 %v620
        %v1984 = vunpack.c.l.b16 %v621
        %v1985 = vunpack.c.h.b16 %v621
        %v1986 = vunpack.c.l.b16 %v622
        %v1987 = vunpack.c.h.b16 %v622
        %v1988 = vunpack.c.l.b16 %v623
        %v1989 = vunpack.c.h.b16 %v623
        %v1990 = vunpack.c.l.b16 %v624
        %v1991 = vunpack.c.h.b16 %v624
        %v1992 = vunpack.c.l.b16 %v625
        %v1993 = vunpack.c.h.b16 %v625
        %v1994 = vunpack.c.l.b16 %v626
        %v1995 = vunpack.c.h.b16 %v626
        %v1996 = vunpack.c.l.b16 %v627
        %v1997 = vunpack.c.h.b16 %v627
        %v1998 = vunpack.c.l.b16 %v628
        %v1999 = vunpack.c.h.b16 %v628
        %v2000 = vunpack.c.l.b16 %v629
        %v2001 = vunpack.c.h.b16 %v629
        %v2002 = vunpack.c.l.b16 %v630
        %v2003 = vunpack.c.h.b16 %v630
        %v2004 = vunpack.c.l.b16 %v631
        %v2005 = vunpack.c.h.b16 %v631
        %v2006 = vunpack.c.l.b16 %v632
        %v2007 = vunpack.c.h.b16 %v632
        %v2008 = vunpack.c.l.b16 %v633
        %v2009 = vunpack.c.h.b16 %v633
        %v2010 = vunpack.c.l.b16 %v634
        %v2011 = vunpack.c.h.b16 %v634
        %v2012 = vunpack.c.l.b16 %v635
        %v2013 = vunpack.c.h.b16 %v635
        %v2014 = vunpack.c.l.b16 %v636
        %v2015 = vunpack.c.h.b16 %v636
        %v2016 = vunpack.c.l.b16 %v637
        %v2017 = vunpack.c.h.b16 %v637
        %v2018 = vunpack.c.l.b16 %v638
        %v2019 = vunpack.c.h.b16 %v638
        %v2020 = vunpack.c.l.b16 %v639
        %v2021 = vunpack.c.h.b16 %v639
        %v2022 = vunpack.c.l.b16 %v640
        %v2023 = vunpack.c.h.b16 %v640
        %v2024 = vunpack.c.l.b16 %v641
        %v2025 = vunpack.c.h.b16 %v641
        %v2026 = vunpack.c.l.b16 %v642
        %v2027 = vunpack.c.h.b16 %v642
        %v2028 = vunpack.c.l.b16 %v643
        %v2029 = vunpack.c.h.b16 %v643
        %v2030 = vunpack.c.l.b16 %v644
        %v2031 = vunpack.c.h.b16 %v644
        %v2032 = vunpack.c.l.b16 %v645
        %v2033 = vunpack.c.h.b16 %v645
        %v2034 = vunpack.c.l.b16 %v646
        %v2035 = vunpack.c.h.b16 %v646
        %v2036 = vunpack.c.l.b16 %v647
        %v2037 = vunpack.c.h.b16 %v647
        %v2038 = vunpack.c.l.b16 %v648
        %v2039 = vunpack.c.h.b16 %v648
        %v2040 = vunpack.c.l.b16 %v649
        %v2041 = vunpack.c.h.b16 %v649
        %v2042 = vunpack.c.l.b16 %v650
        %v2043 = vunpack.c.h.b16 %v650
        %v2044 = vunpack.c.l.b16 %v651
        %v2045 = vunpack.c.h.b16 %v651
        %v2046 = vunpack.c.l.b16 %v652
        %v2047 = vunpack.c.h.b16 %v652
        %v2048 = vunpack.c.l.b16 %v653
        %v2049 = vunpack.c.h.b16 %v653
        %v2050 = vunpack.c.l.b16 %v654
        %v2051 = vunpack.c.h.b16 %v654
        %v2052 = vunpack.c.l.b16 %v655
        %v2053 = vunpack.c.h.b16 %v655
        %v2054 = vunpack.c.l.b16 %v656
        %v2055 = vunpack.c.h.b16 %v656
        %v2056 = vunpack.c.l.b16 %v657
        %v2057 = vunpack.c.h.b16 %v657
        %v2058 = vunpack.c.l.b16 %v658
        %v2059 = vunpack.c.h.b16 %v658
        %v2060 = vunpack.c.l.b16 %v659
        %v2061 = vunpack.c.h.b16 %v659
        %v2062 = vunpack.c.l.b16 %v660
        %v2063 = vunpack.c.h.b16 %v660
        %v2064 = vunpack.c.l.b16 %v661
        %v2065 = vunpack.c.h.b16 %v661
        %v2066 = vunpack.c.l.b16 %v662
        %v2067 = vunpack.c.h.b16 %v662
        %v2068 = vunpack.c.l.b16 %v663
        %v2069 = vunpack.c.h.b16 %v663
        %v2070 = vunpack.c.l.b16 %v664
        %v2071 = vunpack.c.h.b16 %v664
        %v2072 = vunpack.c.l.b16 %v665
        %v2073 = vunpack.c.h.b16 %v665
        %v2074 = vunpack.c.l.b16 %v666
        %v2075 = vunpack.c.h.b16 %v666
        %v2076 = vunpack.c.l.b16 %v667
        %v2077 = vunpack.c.h.b16 %v667
        %v2078 = vunpack.c.l.b16 %v668
        %v2079 = vunpack.c.h.b16 %v668
        %v2080 = vunpack.c.l.b16 %v669
        %v2081 = vunpack.c.h.b16 %v669
        %v2082 = vunpack.c.l.b16 %v670
        %v2083 = vunpack.c.h.b16 %v670
        %v2084 = vunpack.c.l.b16 %v671
        %v2085 = vunpack.c.h.b16 %v671
        %v2086 = vunpack.c.l.b16 %v672
        %v2087 = vunpack.c.h.b16 %v672
        %v2088 = vunpack.c.l.b16 %v673
        %v2089 = vunpack.c.h.b16 %v673
        %v2090 = vunpack.c.l.b16 %v674
        %v2091 = vunpack.c.h.b16 %v674
        %v2092 = vunpack.c.l.b16 %v675
        %v2093 = vunpack.c.h.b16 %v675
        %v2094 = vunpack.c.l.b16 %v676
        %v2095 = vunpack.c.h.b16 %v676
        %v2096 = vunpack.c.l.b16 %v677
        %v2097 = vunpack.c.h.b16 %v677
        %v2098 = vunpack.c.l.b16 %v678
        %v2099 = vunpack.c.h.b16 %v678
        %v2100 = vunpack.c.l.b16 %v679
        %v2101 = vunpack.c.h.b16 %v679
        %v2102 = vunpack.c.l.b16 %v680
        %v2103 = vunpack.c.h.b16 %v680
        %v2104 = vunpack.c.l.b16 %v681
        %v2105 = vunpack.c.h.b16 %v681
        %v2106 = vunpack.c.l.b16 %v682
        %v2107 = vunpack.c.h.b16 %v682
        %v2108 = vunpack.c.l.b16 %v683
        %v2109 = vunpack.c.h.b16 %v683
        %v2110 = vunpack.c.l.b16 %v684
        %v2111 = vunpack.c.h.b16 %v684
        %v2112 = vunpack.c.l.b16 %v685
        %v2113 = vunpack.c.h.b16 %v685
        %v2114 = vunpack.c.l.b16 %v686
        %v2115 = vunpack.c.h.b16 %v686
        %v2116 = vunpack.c.l.b16 %v687
        %v2117 = vunpack.c.h.b16 %v687
        %v2118 = vunpack.c.l.b16 %v688
        %v2119 = vunpack.c.h.b16 %v688
        %v2120 = vunpack.c.l.b16 %v689
        %v2121 = vunpack.c.h.b16 %v689
        %v2122 = vunpack.c.l.b16 %v690
        %v2123 = vunpack.c.h.b16 %v690
        %v2124 = vunpack.c.l.b16 %v691
        %v2125 = vunpack.c.h.b16 %v691
        %v2126 = vunpack.c.l.b16 %v692
        %v2127 = vunpack.c.h.b16 %v692
        %v2128 = vunpack.c.l.b16 %v693
        %v2129 = vunpack.c.h.b16 %v693
        %v2130 = vunpack.c.l.b16 %v694
        %v2131 = vunpack.c.h.b16 %v694
        %v2132 = vunpack.c.l.b16 %v695
        %v2133 = vunpack.c.h.b16 %v695
        %v2134 = vunpack.c.l.b16 %v696
        %v2135 = vunpack.c.h.b16 %v696
        %v2136 = vunpack.c.l.b16 %v697
        %v2137 = vunpack.c.h.b16 %v697
        %v2138 = vunpack.c.l.b16 %v698
        %v2139 = vunpack.c.h.b16 %v698
        %v2140 = vunpack.c.l.b16 %v699
        %v2141 = vunpack.c.h.b16 %v699
        %v2142 = vunpack.c.l.b16 %v700
        %v2143 = vunpack.c.h.b16 %v700
        %v2144 = vunpack.c.l.b16 %v701
        %v2145 = vunpack.c.h.b16 %v701
        %v2146 = vunpack.c.l.b16 %v702
        %v2147 = vunpack.c.h.b16 %v702
        %v2148 = vunpack.c.l.b16 %v703
        %v2149 = vunpack.c.h.b16 %v703
        %v2150 = vunpack.c.l.b16 %v704
        %v2151 = vunpack.c.h.b16 %v704
        %v2152 = vunpack.c.l.b16 %v705
        %v2153 = vunpack.c.h.b16 %v705
        %v2154 = vunpack.c.l.b16 %v706
        %v2155 = vunpack.c.h.b16 %v706
        %v2156 = vunpack.c.l.b16 %v707
        %v2157 = vunpack.c.h.b16 %v707
        %v2158 = vunpack.c.l.b16 %v708
        %v2159 = vunpack.c.h.b16 %v708
        %v2160 = vunpack.c.l.b16 %v709
        %v2161 = vunpack.c.h.b16 %v709
        %v2162 = vunpack.c.l.b16 %v710
        %v2163 = vunpack.c.h.b16 %v710
        %v2164 = vunpack.c.l.b16 %v711
        %v2165 = vunpack.c.h.b16 %v711
        %v2166 = vunpack.c.l.b16 %v712
        %v2167 = vunpack.c.h.b16 %v712
        %v2168 = vunpack.c.l.b16 %v713
        %v2169 = vunpack.c.h.b16 %v713
        %v2170 = vunpack.c.l.b16 %v714
        %v2171 = vunpack.c.h.b16 %v714
        %v2172 = vunpack.c.l.b16 %v715
        %v2173 = vunpack.c.h.b16 %v715
        %v2174 = vunpack.c.l.b16 %v716
        %v2175 = vunpack.c.h.b16 %v716
        %v2176 = vunpack.c.l.b16 %v717
        %v2177 = vunpack.c.h.b16 %v717
        %v2178 = vunpack.c.l.b16 %v718
        %v2179 = vunpack.c.h.b16 %v718
        %v2180 = vunpack.c.l.b16 %v719
        %v2181 = vunpack.c.h.b16 %v719
        %v2182 = vunpack.c.l.b16 %v720
        %v2183 = vunpack.c.h.b16 %v720
        %v2184 = vunpack.c.l.b16 %v721
        %v2185 = vunpack.c.h.b16 %v721
        %v2186 = vunpack.c.l.b16 %v722
        %v2187 = vunpack.c.h.b16 %v722
        %v2188 = vunpack.c.l.b16 %v723
        %v2189 = vunpack.c.h.b16 %v723
        %v2190 = vunpack.c.l.b16 %v724
        %v2191 = vunpack.c.h.b16 %v724
        %v2192 = vunpack.c.l.b16 %v725
        %v2193 = vunpack.c.h.b16 %v725
        %v2194 = vunpack.c.l.b16 %v726
        %v2195 = vunpack.c.h.b16 %v726
        %v2196 = vunpack.c.l.b16 %v727
        %v2197 = vunpack.c.h.b16 %v727
        %v2198 = vunpack.c.l.b16 %v728
        %v2199 = vunpack.c.h.b16 %v728
        %v2200 = vunpack.c.l.b16 %v729
        %v2201 = vunpack.c.h.b16 %v729
        %v2202 = vunpack.c.l.b16 %v730
        %v2203 = vunpack.c.h.b16 %v730
        %v2204 = vunpack.c.l.b16 %v731
        %v2205 = vunpack.c.h.b16 %v731
        %v2206 = vunpack.c.l.b16 %v732
        %v2207 = vunpack.c.h.b16 %v732
        %v2208 = vunpack.c.l.b16 %v733
        %v2209 = vunpack.c.h.b16 %v733
        %v2210 = vunpack.c.l.b16 %v734
        %v2211 = vunpack.c.h.b16 %v734
        %v2212 = vunpack.c.l.b16 %v735
        %v2213 = vunpack.c.h.b16 %v735
        %v2214 = vunpack.c.l.b16 %v736
        %v2215 = vunpack.c.h.b16 %v736
        %v2216 = vunpack.c.l.b16 %v737
        %v2217 = vunpack.c.h.b16 %v737
        %v2218 = vunpack.c.l.b16 %v738
        %v2219 = vunpack.c.h.b16 %v738
        %v2220 = vunpack.c.l.b16 %v739
        %v2221 = vunpack.c.h.b16 %v739
        %v2222 = vunpack.c.l.b16 %v740
        %v2223 = vunpack.c.h.b16 %v740
        %v2224 = vunpack.c.l.b16 %v741
        %v2225 = vunpack.c.h.b16 %v741
        %v2226 = vunpack.c.l.b16 %v742
        %v2227 = vunpack.c.h.b16 %v742
        %v2228 = vunpack.c.l.b16 %v743
        %v2229 = vunpack.c.h.b16 %v743
        %v2230 = vunpack.c.l.b16 %v744
        %v2231 = vunpack.c.h.b16 %v744
        %v2232 = vunpack.c.l.b16 %v745
        %v2233 = vunpack.c.h.b16 %v745
        %v2234 = vunpack.c.l.b16 %v746
        %v2235 = vunpack.c.h.b16 %v746
        %v2236 = vunpack.c.l.b16 %v747
        %v2237 = vunpack.c.h.b16 %v747
        %v2238 = vunpack.c.l.b16 %v748
        %v2239 = vunpack.c.h.b16 %v748
        %v2240 = vunpack.c.l.b16 %v749
        %v2241 = vunpack.c.h.b16 %v749
        %v2242 = vunpack.c.l.b16 %v750
        %v2243 = vunpack.c.h.b16 %v750
        %v2244 = vunpack.c.l.b16 %v751
        %v2245 = vunpack.c.h.b16 %v751
        %v2246 = vunpack.c.l.b16 %v752
        %v2247 = vunpack.c.h.b16 %v752
        %v2248 = vunpack.c.l.b16 %v753
        %v2249 = vunpack.c.h.b16 %v753
        %v2250 = vunpack.c.l.b16 %v754
        %v2251 = vunpack.c.h.b16 %v754
        %v2252 = vunpack.c.l.b16 %v755
        %v2253 = vunpack.c.h.b16 %v755
        %v2254 = vunpack.c.l.b16 %v756
        %v2255 = vunpack.c.h.b16 %v756
        %v2256 = vunpack.c.l.b16 %v757
        %v2257 = vunpack.c.h.b16 %v757
        %v2258 = vunpack.c.l.b16 %v758
        %v2259 = vunpack.c.h.b16 %v758
        %v2260 = vunpack.c.l.b16 %v759
        %v2261 = vunpack.c.h.b16 %v759
        %v2262 = vunpack.c.l.b16 %v760
        %v2263 = vunpack.c.h.b16 %v760
        %v2264 = vunpack.c.l.b16 %v761
        %v2265 = vunpack.c.h.b16 %v761
        %v2266 = vunpack.c.l.b16 %v762
        %v2267 = vunpack.c.h.b16 %v762
        %v2268 = vunpack.c.l.b16 %v763
        %v2269 = vunpack.c.h.b16 %v763
        %v2270 = vunpack.c.l.b16 %v764
        %v2271 = vunpack.c.h.b16 %v764
        %v2272 = vunpack.c.l.b16 %v765
        %v2273 = vunpack.c.h.b16 %v765
        %v2274 = vunpack.c.l.b16 %v766
        %v2275 = vunpack.c.h.b16 %v766
        %v2276 = vunpack.c.l.b16 %v767
        %v2277 = vunpack.c.h.b16 %v767
        %v2278 = vunpack.c.l.b16 %v768
        %v2279 = vunpack.c.h.b16 %v768
        %v2280 = vunpack.c.l.b16 %v769
        %v2281 = vunpack.c.h.b16 %v769
        %v2282 = vunpack.c.l.b16 %v770
        %v2283 = vunpack.c.h.b16 %v770
        %v2284 = vunpack.c.l.b16 %v771
        %v2285 = vunpack.c.h.b16 %v771
        %v2286 = vunpack.c.l.b16 %v772
        %v2287 = vunpack.c.h.b16 %v772
        %v2288 = vunpack.c.l.b16 %v773
        %v2289 = vunpack.c.h.b16 %v773
        %v2290 = vunpack.c.l.b16 %v774
        %v2291 = vunpack.c.h.b16 %v774
        %v2292 = vunpack.c.l.b16 %v775
        %v2293 = vunpack.c.h.b16 %v775
        %v2294 = vunpack.c.l.b16 %v776
        %v2295 = vunpack.c.h.b16 %v776
        %v2296 = vunpack.c.l.b16 %v777
        %v2297 = vunpack.c.h.b16 %v777
        %v2298 = vunpack.c.l.b16 %v778
        %v2299 = vunpack.c.h.b16 %v778
        %v2300 = vunpack.c.l.b16 %v779
        %v2301 = vunpack.c.h.b16 %v779
        %v2302 = vunpack.c.l.b16 %v780
        %v2303 = vunpack.c.h.b16 %v780
        %v2304 = vunpack.c.l.b16 %v781
        %v2305 = vunpack.c.h.b16 %v781
        %v2306 = vunpack.c.l.b16 %v782
        %v2307 = vunpack.c.h.b16 %v782
        %v2308 = vunpack.c.l.b16 %v783
        %v2309 = vunpack.c.h.b16 %v783
        %v2310 = vunpack.c.l.b16 %v784
        %v2311 = vunpack.c.h.b16 %v784
        %v2312 = vunpack.c.l.b16 %v785
        %v2313 = vunpack.c.h.b16 %v785
        %v2314 = vunpack.c.l.b16 %v786
        %v2315 = vunpack.c.h.b16 %v786
        %v2316 = vunpack.c.l.b16 %v787
        %v2317 = vunpack.c.h.b16 %v787
        %v2318 = vunpack.c.l.b16 %v788
        %v2319 = vunpack.c.h.b16 %v788
        %v2320 = vunpack.c.l.b16 %v789
        %v2321 = vunpack.c.h.b16 %v789
        %v2322 = vunpack.c.l.b16 %v790
        %v2323 = vunpack.c.h.b16 %v790
        %v2324 = vunpack.c.l.b16 %v791
        %v2325 = vunpack.c.h.b16 %v791
        %v2326 = vunpack.c.l.b16 %v792
        %v2327 = vunpack.c.h.b16 %v792
        %v2328 = vunpack.c.l.b16 %v793
        %v2329 = vunpack.c.h.b16 %v793
        %v2330 = vunpack.c.l.b16 %v794
        %v2331 = vunpack.c.h.b16 %v794
        %v2332 = vunpack.c.l.b16 %v795
        %v2333 = vunpack.c.h.b16 %v795
        %v2334 = vunpack.c.l.b16 %v796
        %v2335 = vunpack.c.h.b16 %v796
        %v2336 = vunpack.c.l.b16 %v797
        %v2337 = vunpack.c.h.b16 %v797
        %v2338 = vunpack.c.l.b16 %v798
        %v2339 = vunpack.c.h.b16 %v798
        %v2340 = vunpack.c.l.b16 %v799
        %v2341 = vunpack.c.h.b16 %v799
        %v2342 = vunpack.c.l.b16 %v800
        %v2343 = vunpack.c.h.b16 %v800
        %v2344 = vunpack.c.l.b16 %v801
        %v2345 = vunpack.c.h.b16 %v801
        %v2346 = vunpack.c.l.b16 %v802
        %v2347 = vunpack.c.h.b16 %v802
        %v2348 = vunpack.c.l.b16 %v803
        %v2349 = vunpack.c.h.b16 %v803
        %v2350 = vunpack.c.l.b16 %v804
        %v2351 = vunpack.c.h.b16 %v804
        %v2352 = vunpack.c.l.b16 %v805
        %v2353 = vunpack.c.h.b16 %v805
        %v2354 = vunpack.c.l.b16 %v806
        %v2355 = vunpack.c.h.b16 %v806
        %v2356 = vunpack.c.l.b16 %v807
        %v2357 = vunpack.c.h.b16 %v807
        %v2358 = vunpack.c.l.b16 %v808
        %v2359 = vunpack.c.h.b16 %v808
        %v2360 = vunpack.c.l.b16 %v809
        %v2361 = vunpack.c.h.b16 %v809
        %v2362 = vunpack.c.l.b16 %v810
        %v2363 = vunpack.c.h.b16 %v810
        %v2364 = vunpack.c.l.b16 %v811
        %v2365 = vunpack.c.h.b16 %v811
        %v2366 = vunpack.c.l.b16 %v812
        %v2367 = vunpack.c.h.b16 %v812
        %v2368 = vunpack.c.l.b16 %v813
        %v2369 = vunpack.c.h.b16 %v813
        %v2370 = vunpack.c.l.b16 %v814
        %v2371 = vunpack.c.h.b16 %v814
        %v2372 = vunpack.c.l.b16 %v815
        %v2373 = vunpack.c.h.b16 %v815
        %v2374 = vunpack.c.l.b16 %v816
        %v2375 = vunpack.c.h.b16 %v816
        %v2376 = vunpack.c.l.b16 %v817
        %v2377 = vunpack.c.h.b16 %v817
        %v2378 = vunpack.c.l.b16 %v818
        %v2379 = vunpack.c.h.b16 %v818
        %v2380 = vunpack.c.l.b16 %v819
        %v2381 = vunpack.c.h.b16 %v819
        %v2382 = vunpack.c.l.b16 %v820
        %v2383 = vunpack.c.h.b16 %v820
        %v2384 = vunpack.c.l.b16 %v821
        %v2385 = vunpack.c.h.b16 %v821
        %v2386 = vunpack.c.l.b16 %v822
        %v2387 = vunpack.c.h.b16 %v822
        %v2388 = vunpack.c.l.b16 %v823
        %v2389 = vunpack.c.h.b16 %v823
        %v2390 = vunpack.c.l.b16 %v824
        %v2391 = vunpack.c.h.b16 %v824
        %v2392 = vunpack.c.l.b16 %v825
        %v2393 = vunpack.c.h.b16 %v825
        %v2394 = vunpack.c.l.b16 %v826
        %v2395 = vunpack.c.h.b16 %v826
        %v2396 = vunpack.c.l.b16 %v827
        %v2397 = vunpack.c.h.b16 %v827
        %v2398 = vunpack.c.l.b16 %v828
        %v2399 = vunpack.c.h.b16 %v828
        %v2400 = vunpack.c.l.b16 %v829
        %v2401 = vunpack.c.h.b16 %v829
        %v2402 = vunpack.c.l.b16 %v830
        %v2403 = vunpack.c.h.b16 %v830
        %v2404 = vunpack.c.l.b16 %v831
        %v2405 = vunpack.c.h.b16 %v831
        %v2406 = vunpack.c.l.b16 %v832
        %v2407 = vunpack.c.h.b16 %v832
        %v2408 = vunpack.c.l.b16 %v833
        %v2409 = vunpack.c.h.b16 %v833
        %v2410 = vunpack.c.l.b16 %v834
        %v2411 = vunpack.c.h.b16 %v834
        %v2412 = vunpack.c.l.b16 %v835
        %v2413 = vunpack.c.h.b16 %v835
        %v2414 = vunpack.c.l.b16 %v836
        %v2415 = vunpack.c.h.b16 %v836
        %v2416 = vunpack.c.l.b16 %v837
        %v2417 = vunpack.c.h.b16 %v837
        %v2418 = vunpack.c.l.b16 %v838
        %v2419 = vunpack.c.h.b16 %v838
        %v2420 = vunpack.c.l.b16 %v839
        %v2421 = vunpack.c.h.b16 %v839
        %v2422 = vunpack.c.l.b16 %v840
        %v2423 = vunpack.c.h.b16 %v840
        %v2424 = vunpack.c.l.b16 %v841
        %v2425 = vunpack.c.h.b16 %v841
        %v2426 = vunpack.c.l.b16 %v842
        %v2427 = vunpack.c.h.b16 %v842
        %v2428 = vunpack.c.l.b16 %v843
        %v2429 = vunpack.c.h.b16 %v843
        %v2430 = vunpack.c.l.b16 %v844
        %v2431 = vunpack.c.h.b16 %v844
        %v2432 = vunpack.c.l.b16 %v845
        %v2433 = vunpack.c.h.b16 %v845
        %v2434 = vunpack.c.l.b16 %v846
        %v2435 = vunpack.c.h.b16 %v846
        %v2436 = vunpack.c.l.b16 %v847
        %v2437 = vunpack.c.h.b16 %v847
        %v2438 = vunpack.c.l.b16 %v848
        %v2439 = vunpack.c.h.b16 %v848
        %v2440 = vunpack.c.l.b16 %v849
        %v2441 = vunpack.c.h.b16 %v849
        %v2442 = vunpack.c.l.b16 %v850
        %v2443 = vunpack.c.h.b16 %v850
        %v2444 = vunpack.c.l.b16 %v851
        %v2445 = vunpack.c.h.b16 %v851
        %v2446 = vunpack.c.l.b16 %v852
        %v2447 = vunpack.c.h.b16 %v852
        %v2448 = vunpack.c.l.b16 %v853
        %v2449 = vunpack.c.h.b16 %v853
        %v2450 = vunpack.c.l.b16 %v854
        %v2451 = vunpack.c.h.b16 %v854
        %v2452 = vunpack.c.l.b16 %v855
        %v2453 = vunpack.c.h.b16 %v855
        %v2454 = vunpack.c.l.b16 %v856
        %v2455 = vunpack.c.h.b16 %v856
        %v2456 = vunpack.c.l.b16 %v857
        %v2457 = vunpack.c.h.b16 %v857
        %v2458 = vunpack.c.l.b16 %v858
        %v2459 = vunpack.c.h.b16 %v858
        %v2460 = vunpack.c.l.b16 %v859
        %v2461 = vunpack.c.h.b16 %v859
        %v2462 = vunpack.c.l.b16 %v860
        %v2463 = vunpack.c.h.b16 %v860
        %v2464 = vunpack.c.l.b16 %v861
        %v2465 = vunpack.c.h.b16 %v861
        %v2466 = vunpack.c.l.b16 %v862
        %v2467 = vunpack.c.h.b16 %v862
        %v2468 = vunpack.c.l.b16 %v863
        %v2469 = vunpack.c.h.b16 %v863
        %v2470 = vunpack.c.l.b16 %v864
        %v2471 = vunpack.c.h.b16 %v864
        %v2472 = vunpack.c.l.b16 %v865
        %v2473 = vunpack.c.h.b16 %v865
        %v2474 = vunpack.c.l.b16 %v866
        %v2475 = vunpack.c.h.b16 %v866
        %v2476 = vunpack.c.l.b16 %v867
        %v2477 = vunpack.c.h.b16 %v867
        %v2478 = vunpack.c.l.b16 %v868
        %v2479 = vunpack.c.h.b16 %v868
        %v2480 = vunpack.c.l.b16 %v869
        %v2481 = vunpack.c.h.b16 %v869
        %v2482 = vunpack.c.l.b16 %v870
        %v2483 = vunpack.c.h.b16 %v870
        %v2484 = vunpack.c.l.b16 %v871
        %v2485 = vunpack.c.h.b16 %v871
        %v2486 = vunpack.c.l.b16 %v872
        %v2487 = vunpack.c.h.b16 %v872
        %v2488 = vunpack.c.l.b16 %v873
        %v2489 = vunpack.c.h.b16 %v873
        %v2490 = vunpack.c.l.b16 %v874
        %v2491 = vunpack.c.h.b16 %v874
        %v2492 = vunpack.c.l.b16 %v875
        %v2493 = vunpack.c.h.b16 %v875
        %v2494 = vunpack.c.l.b16 %v876
        %v2495 = vunpack.c.h.b16 %v876
        %v2496 = vunpack.c.l.b16 %v877
        %v2497 = vunpack.c.h.b16 %v877
        %v2498 = vunpack.c.l.b16 %v878
        %v2499 = vunpack.c.h.b16 %v878
        %v2500 = vunpack.c.l.b16 %v879
        %v2501 = vunpack.c.h.b16 %v879
        %v2502 = vunpack.c.l.b16 %v880
        %v2503 = vunpack.c.h.b16 %v880
        %v2504 = vunpack.c.l.b16 %v881
        %v2505 = vunpack.c.h.b16 %v881
        %v2506 = vunpack.c.l.b16 %v882
        %v2507 = vunpack.c.h.b16 %v882
        %v2508 = vunpack.c.l.b16 %v883
        %v2509 = vunpack.c.h.b16 %v883
        %v2510 = vunpack.c.l.b16 %v884
        %v2511 = vunpack.c.h.b16 %v884
        %v2512 = vunpack.c.l.b16 %v885
        %v2513 = vunpack.c.h.b16 %v885
        %v2514 = vunpack.c.l.b16 %v886
        %v2515 = vunpack.c.h.b16 %v886
        %v2516 = vunpack.c.l.b16 %v887
        %v2517 = vunpack.c.h.b16 %v887
        %v2518 = vunpack.c.l.b16 %v888
        %v2519 = vunpack.c.h.b16 %v888
        %v2520 = vunpack.c.l.b16 %v889
        %v2521 = vunpack.c.h.b16 %v889
        %v2522 = vunpack.c.l.b16 %v890
        %v2523 = vunpack.c.h.b16 %v890
        %v2524 = vunpack.c.l.b16 %v891
        %v2525 = vunpack.c.h.b16 %v891
        %v2526 = vunpack.c.l.b16 %v892
        %v2527 = vunpack.c.h.b16 %v892
        %v2528 = vunpack.c.l.b16 %v893
        %v2529 = vunpack.c.h.b16 %v893
        %v2530 = vunpack.c.l.b16 %v894
        %v2531 = vunpack.c.h.b16 %v894
        %v2532 = vunpack.c.l.b16 %v895
        %v2533 = vunpack.c.h.b16 %v895
        %v2534 = vunpack.c.l.b16 %v896
        %v2535 = vunpack.c.h.b16 %v896
        %v2536 = vunpack.c.l.b16 %v897
        %v2537 = vunpack.c.h.b16 %v897
        %v2538 = vunpack.c.l.b16 %v898
        %v2539 = vunpack.c.h.b16 %v898
        %v2540 = vunpack.c.l.b16 %v899
        %v2541 = vunpack.c.h.b16 %v899
        %v2542 = vunpack.c.l.b16 %v900
        %v2543 = vunpack.c.h.b16 %v900
        %v2544 = vunpack.c.l.b16 %v901
        %v2545 = vunpack.c.h.b16 %v901
        %v2546 = vunpack.c.l.b16 %v902
        %v2547 = vunpack.c.h.b16 %v902
        %v2548 = vunpack.c.l.b16 %v903
        %v2549 = vunpack.c.h.b16 %v903
        %v2550 = vunpack.c.l.b16 %v904
        %v2551 = vunpack.c.h.b16 %v904
        %v2552 = vunpack.c.l.b16 %v905
        %v2553 = vunpack.c.h.b16 %v905
        %v2554 = vunpack.c.l.b16 %v906
        %v2555 = vunpack.c.h.b16 %v906
        %v2556 = vunpack.c.l.b16 %v907
        %v2557 = vunpack.c.h.b16 %v907
        %v2558 = vunpack.c.l.b16 %v908
        %v2559 = vunpack.c.h.b16 %v908
        %v2560 = vunpack.c.l.b16 %v909
        %v2561 = vunpack.c.h.b16 %v909
        %v2562 = vunpack.c.l.b16 %v910
        %v2563 = vunpack.c.h.b16 %v910
        %v2564 = vunpack.c.l.b16 %v911
        %v2565 = vunpack.c.h.b16 %v911
        %v2566 = vunpack.c.l.b16 %v912
        %v2567 = vunpack.c.h.b16 %v912
        %v2568 = vunpack.c.l.b16 %v913
        %v2569 = vunpack.c.h.b16 %v913
        %v2570 = vunpack.c.l.b16 %v914
        %v2571 = vunpack.c.h.b16 %v914
        %v2572 = vunpack.c.l.b16 %v915
        %v2573 = vunpack.c.h.b16 %v915
        %v2574 = vunpack.c.l.b16 %v916
        %v2575 = vunpack.c.h.b16 %v916
        %v2576 = vunpack.c.l.b16 %v917
        %v2577 = vunpack.c.h.b16 %v917
        %v2578 = vunpack.c.l.b16 %v918
        %v2579 = vunpack.c.h.b16 %v918
        %v2580 = vunpack.c.l.b16 %v919
        %v2581 = vunpack.c.h.b16 %v919
        %v2582 = vunpack.c.l.b16 %v920
        %v2583 = vunpack.c.h.b16 %v920
        %v2584 = vunpack.c.l.b16 %v921
        %v2585 = vunpack.c.h.b16 %v921
        %v2586 = vunpack.c.l.b16 %v922
        %v2587 = vunpack.c.h.b16 %v922
        %v2588 = vunpack.c.l.b16 %v923
        %v2589 = vunpack.c.h.b16 %v923
        %v2590 = vunpack.c.l.b16 %v924
        %v2591 = vunpack.c.h.b16 %v924
        %v2592 = vunpack.c.l.b16 %v925
        %v2593 = vunpack.c.h.b16 %v925
        %v2594 = vunpack.c.l.b16 %v926
        %v2595 = vunpack.c.h.b16 %v926
        %v2596 = vunpack.c.l.b16 %v927
        %v2597 = vunpack.c.h.b16 %v927
        %v2598 = vunpack.c.l.b16 %v928
        %v2599 = vunpack.c.h.b16 %v928
        %v2600 = vunpack.c.l.b16 %v929
        %v2601 = vunpack.c.h.b16 %v929
        %v2602 = vunpack.c.l.b16 %v930
        %v2603 = vunpack.c.h.b16 %v930
        %v2604 = vunpack.c.l.b16 %v931
        %v2605 = vunpack.c.h.b16 %v931
        %v2606 = vunpack.c.l.b16 %v932
        %v2607 = vunpack.c.h.b16 %v932
        %v2608 = vunpack.c.l.b16 %v933
        %v2609 = vunpack.c.h.b16 %v933
        %v2610 = vunpack.c.l.b16 %v934
        %v2611 = vunpack.c.h.b16 %v934
        %v2612 = vunpack.c.l.b16 %v935
        %v2613 = vunpack.c.h.b16 %v935
        %v2614 = vunpack.c.l.b16 %v936
        %v2615 = vunpack.c.h.b16 %v936
        %v2616 = vunpack.c.l.b16 %v937
        %v2617 = vunpack.c.h.b16 %v937
        %v2618 = vunpack.c.l.b16 %v938
        %v2619 = vunpack.c.h.b16 %v938
        %v2620 = vunpack.c.l.b16 %v939
        %v2621 = vunpack.c.h.b16 %v939
        %v2622 = vunpack.c.l.b16 %v940
        %v2623 = vunpack.c.h.b16 %v940
        %v2624 = vunpack.c.l.b16 %v941
        %v2625 = vunpack.c.h.b16 %v941
        %v2626 = vunpack.c.l.b16 %v942
        %v2627 = vunpack.c.h.b16 %v942
        %v2628 = vunpack.c.l.b16 %v943
        %v2629 = vunpack.c.h.b16 %v943
        %v2630 = vunpack.c.l.b16 %v944
        %v2631 = vunpack.c.h.b16 %v944
        %v2632 = vunpack.c.l.b16 %v945
        %v2633 = vunpack.c.h.b16 %v945
        %v2634 = vunpack.c.l.b16 %v946
        %v2635 = vunpack.c.h.b16 %v946
        %v2636 = vunpack.c.l.b16 %v947
        %v2637 = vunpack.c.h.b16 %v947
        %v2638 = vunpack.c.l.b16 %v948
        %v2639 = vunpack.c.h.b16 %v948
        %v2640 = vunpack.c.l.b16 %v949
        %v2641 = vunpack.c.h.b16 %v949
        %v2642 = vunpack.c.l.b16 %v950
        %v2643 = vunpack.c.h.b16 %v950
        %v2644 = vunpack.c.l.b16 %v951
        %v2645 = vunpack.c.h.b16 %v951
        %v2646 = vunpack.c.l.b16 %v952
        %v2647 = vunpack.c.h.b16 %v952
        %v2648 = vunpack.c.l.b16 %v953
        %v2649 = vunpack.c.h.b16 %v953
        %v2650 = vunpack.c.l.b16 %v954
        %v2651 = vunpack.c.h.b16 %v954
        %v2652 = vunpack.c.l.b16 %v955
        %v2653 = vunpack.c.h.b16 %v955
        %v2654 = vunpack.c.l.b16 %v956
        %v2655 = vunpack.c.h.b16 %v956
        %v2656 = vunpack.c.l.b16 %v957
        %v2657 = vunpack.c.h.b16 %v957
        %v2658 = vunpack.c.l.b16 %v958
        %v2659 = vunpack.c.h.b16 %v958
        %v2660 = vunpack.c.l.b16 %v959
        %v2661 = vunpack.c.h.b16 %v959
        %v2662 = vunpack.c.l.b16 %v960
        %v2663 = vunpack.c.h.b16 %v960
        %v2664 = vunpack.c.l.b16 %v961
        %v2665 = vunpack.c.h.b16 %v961
        %v2666 = vunpack.c.l.b16 %v962
        %v2667 = vunpack.c.h.b16 %v962
        %v2668 = vunpack.c.l.b16 %v963
        %v2669 = vunpack.c.h.b16 %v963
        %v2670 = vunpack.c.l.b16 %v964
        %v2671 = vunpack.c.h.b16 %v964
        %v2672 = vunpack.c.l.b16 %v965
        %v2673 = vunpack.c.h.b16 %v965
        %v2674 = vunpack.c.l.b16 %v966
        %v2675 = vunpack.c.h.b16 %v966
        %v2676 = vunpack.c.l.b16 %v967
        %v2677 = vunpack.c.h.b16 %v967
        %v2678 = vunpack.c.l.b16 %v968
        %v2679 = vunpack.c.h.b16 %v968
        %v2680 = vunpack.c.l.b16 %v969
        %v2681 = vunpack.c.h.b16 %v969
        %v2682 = vunpack.c.l.b16 %v970
        %v2683 = vunpack.c.h.b16 %v970
        %v2684 = vunpack.c.l.b16 %v971
        %v2685 = vunpack.c.h.b16 %v971
        %v2686 = vunpack.c.l.b16 %v972
        %v2687 = vunpack.c.h.b16 %v972
        %v2688 = vunpack.c.l.b16 %v973
        %v2689 = vunpack.c.h.b16 %v973
        %v2690 = vunpack.c.l.b16 %v974
        %v2691 = vunpack.c.h.b16 %v974
        %v2692 = vunpack.c.l.b16 %v975
        %v2693 = vunpack.c.h.b16 %v975
        %v2694 = vunpack.c.l.b16 %v976
        %v2695 = vunpack.c.h.b16 %v976
        %v2696 = vunpack.c.l.b16 %v977
        %v2697 = vunpack.c.h.b16 %v977
        %v2698 = vpack.c.b16 %v1676, %v1674
        %v2699 = vpack.c.b16 %v1677, %v1675
        %v2700 = vpack.c.b16 %v1680, %v1678
        %v2701 = vpack.c.b16 %v1681, %v1679
        %v2702 = vpack.c.b16 %v1684, %v1682
        %v2703 = vpack.c.b16 %v1685, %v1683
        %v2704 = vpack.c.b16 %v1688, %v1686
        %v2705 = vpack.c.b16 %v1689, %v1687
        %v2706 = vpack.c.b16 %v1692, %v1690
        %v2707 = vpack.c.b16 %v1693, %v1691
        %v2708 = vpack.c.b16 %v1696, %v1694
        %v2709 = vpack.c.b16 %v1697, %v1695
        %v2710 = vpack.c.b16 %v1700, %v1698
        %v2711 = vpack.c.b16 %v1701, %v1699
        %v2712 = vpack.c.b16 %v1704, %v1702
        %v2713 = vpack.c.b16 %v1705, %v1703
        %v2714 = vpack.c.b16 %v1708, %v1706
        %v2715 = vpack.c.b16 %v1709, %v1707
        %v2716 = vpack.c.b16 %v1712, %v1710
        %v2717 = vpack.c.b16 %v1713, %v1711
        %v2718 = vpack.c.b16 %v1716, %v1714
        %v2719 = vpack.c.b16 %v1717, %v1715
        %v2720 = vpack.c.b16 %v1720, %v1718
        %v2721 = vpack.c.b16 %v1721, %v1719
        %v2722 = vpack.c.b16 %v1724, %v1722
        %v2723 = vpack.c.b16 %v1725, %v1723
        %v2724 = vpack.c.b16 %v1728, %v1726
        %v2725 = vpack.c.b16 %v1729, %v1727
        %v2726 = vpack.c.b16 %v1732, %v1730
        %v2727 = vpack.c.b16 %v1733, %v1731
        %v2728 = vpack.c.b16 %v1736, %v1734
        %v2729 = vpack.c.b16 %v1737, %v1735
        %v2730 = vpack.c.b16 %v1740, %v1738
        %v2731 = vpack.c.b16 %v1741, %v1739
        %v2732 = vpack.c.b16 %v1744, %v1742
        %v2733 = vpack.c.b16 %v1745, %v1743
        %v2734 = vpack.c.b16 %v1748, %v1746
        %v2735 = vpack.c.b16 %v1749, %v1747
        %v2736 = vpack.c.b16 %v1752, %v1750
        %v2737 = vpack.c.b16 %v1753, %v1751
        %v2738 = vpack.c.b16 %v1756, %v1754
        %v2739 = vpack.c.b16 %v1757, %v1755
        %v2740 = vpack.c.b16 %v1760, %v1758
        %v2741 = vpack.c.b16 %v1761, %v1759
        %v2742 = vpack.c.b16 %v1764, %v1762
        %v2743 = vpack.c.b16 %v1765, %v1763
        %v2744 = vpack.c.b16 %v1768, %v1766
        %v2745 = vpack.c.b16 %v1769, %v1767
        %v2746 = vpack.c.b16 %v1772, %v1770
        %v2747 = vpack.c.b16 %v1773, %v1771
        %v2748 = vpack.c.b16 %v1776, %v1774
        %v2749 = vpack.c.b16 %v1777, %v1775
        %v2750 = vpack.c.b16 %v1780, %v1778
        %v2751 = vpack.c.b16 %v1781, %v1779
        %v2752 = vpack.c.b16 %v1784, %v1782
        %v2753 = vpack.c.b16 %v1785, %v1783
        %v2754 = vpack.c.b16 %v1788, %v1786
        %v2755 = vpack.c.b16 %v1789, %v1787
        %v2756 = vpack.c.b16 %v1792, %v1790
        %v2757 = vpack.c.b16 %v1793, %v1791
        %v2758 = vpack.c.b16 %v1796, %v1794
        %v2759 = vpack.c.b16 %v1797, %v1795
        %v2760 = vpack.c.b16 %v1800, %v1798
        %v2761 = vpack.c.b16 %v1801, %v1799
        %v2762 = vpack.c.b16 %v1804, %v1802
        %v2763 = vpack.c.b16 %v1805, %v1803
        %v2764 = vpack.c.b16 %v1808, %v1806
        %v2765 = vpack.c.b16 %v1809, %v1807
        %v2766 = vpack.c.b16 %v1812, %v1810
        %v2767 = vpack.c.b16 %v1813, %v1811
        %v2768 = vpack.c.b16 %v1816, %v1814
        %v2769 = vpack.c.b16 %v1817, %v1815
        %v2770 = vpack.c.b16 %v1820, %v1818
        %v2771 = vpack.c.b16 %v1821, %v1819
        %v2772 = vpack.c.b16 %v1824, %v1822
        %v2773 = vpack.c.b16 %v1825, %v1823
        %v2774 = vpack.c.b16 %v1828, %v1826
        %v2775 = vpack.c.b16 %v1829, %v1827
        %v2776 = vpack.c.b16 %v1832, %v1830
        %v2777 = vpack.c.b16 %v1833, %v1831
        %v2778 = vpack.c.b16 %v1836, %v1834
        %v2779 = vpack.c.b16 %v1837, %v1835
        %v2780 = vpack.c.b16 %v1840, %v1838
        %v2781 = vpack.c.b16 %v1841, %v1839
        %v2782 = vpack.c.b16 %v1844, %v1842
        %v2783 = vpack.c.b16 %v1845, %v1843
        %v2784 = vpack.c.b16 %v1848, %v1846
        %v2785 = vpack.c.b16 %v1849, %v1847
        %v2786 = vpack.c.b16 %v1852, %v1850
        %v2787 = vpack.c.b16 %v1853, %v1851
        %v2788 = vpack.c.b16 %v1856, %v1854
        %v2789 = vpack.c.b16 %v1857, %v1855
        %v2790 = vpack.c.b16 %v1860, %v1858
        %v2791 = vpack.c.b16 %v1861, %v1859
        %v2792 = vpack.c.b16 %v1864, %v1862
        %v2793 = vpack.c.b16 %v1865, %v1863
        %v2794 = vpack.c.b16 %v1868, %v1866
        %v2795 = vpack.c.b16 %v1869, %v1867
        %v2796 = vpack.c.b16 %v1872, %v1870
        %v2797 = vpack.c.b16 %v1873, %v1871
        %v2798 = vpack.c.b16 %v1876, %v1874
        %v2799 = vpack.c.b16 %v1877, %v1875
        %v2800 = vpack.c.b16 %v1880, %v1878
        %v2801 = vpack.c.b16 %v1881, %v1879
        %v2802 = vpack.c.b16 %v1884, %v1882
        %v2803 = vpack.c.b16 %v1885, %v1883
        %v2804 = vpack.c.b16 %v1888, %v1886
        %v2805 = vpack.c.b16 %v1889, %v1887
        %v2806 = vpack.c.b16 %v1892, %v1890
        %v2807 = vpack.c.b16 %v1893, %v1891
        %v2808 = vpack.c.b16 %v1896, %v1894
        %v2809 = vpack.c.b16 %v1897, %v1895
        %v2810 = vpack.c.b16 %v1900, %v1898
        %v2811 = vpack.c.b16 %v1901, %v1899
        %v2812 = vpack.c.b16 %v1904, %v1902
        %v2813 = vpack.c.b16 %v1905, %v1903
        %v2814 = vpack.c.b16 %v1908, %v1906
        %v2815 = vpack.c.b16 %v1909, %v1907
        %v2816 = vpack.c.b16 %v1912, %v1910
        %v2817 = vpack.c.b16 %v1913, %v1911
        %v2818 = vpack.c.b16 %v1916, %v1914
        %v2819 = vpack.c.b16 %v1917, %v1915
        %v2820 = vpack.c.b16 %v1920, %v1918
        %v2821 = vpack.c.b16 %v1921, %v1919
        %v2822 = vpack.c.b16 %v1924, %v1922
        %v2823 = vpack.c.b16 %v1925, %v1923
        %v2824 = vpack.c.b16 %v1928, %v1926
        %v2825 = vpack.c.b16 %v1929, %v1927
        %v2826 = vpack.c.b16 %v1932, %v1930
        %v2827 = vpack.c.b16 %v1933, %v1931
        %v2828 = vpack.c.b16 %v1936, %v1934
        %v2829 = vpack.c.b16 %v1937, %v1935
        %v2830 = vpack.c.b16 %v1940, %v1938
        %v2831 = vpack.c.b16 %v1941, %v1939
        %v2832 = vpack.c.b16 %v1944, %v1942
        %v2833 = vpack.c.b16 %v1945, %v1943
        %v2834 = vpack.c.b16 %v1948, %v1946
        %v2835 = vpack.c.b16 %v1949, %v1947
        %v2836 = vpack.c.b16 %v1952, %v1950
        %v2837 = vpack.c.b16 %v1953, %v1951
        %v2838 = vpack.c.b16 %v1956, %v1954
        %v2839 = vpack.c.b16 %v1957, %v1955
        %v2840 = vpack.c.b16 %v1960, %v1958
        %v2841 = vpack.c.b16 %v1961, %v1959
        %v2842 = vpack.c.b16 %v1964, %v1962
        %v2843 = vpack.c.b16 %v1965, %v1963
        %v2844 = vpack.c.b16 %v1968, %v1966
        %v2845 = vpack.c.b16 %v1969, %v1967
        %v2846 = vpack.c.b16 %v1972, %v1970
        %v2847 = vpack.c.b16 %v1973, %v1971
        %v2848 = vpack.c.b16 %v1976, %v1974
        %v2849 = vpack.c.b16 %v1977, %v1975
        %v2850 = vpack.c.b16 %v1980, %v1978
        %v2851 = vpack.c.b16 %v1981, %v1979
        %v2852 = vpack.c.b16 %v1984, %v1982
        %v2853 = vpack.c.b16 %v1985, %v1983
        %v2854 = vpack.c.b16 %v1988, %v1986
        %v2855 = vpack.c.b16 %v1989, %v1987
        %v2856 = vpack.c.b16 %v1992, %v1990
        %v2857 = vpack.c.b16 %v1993, %v1991
        %v2858 = vpack.c.b16 %v1996, %v1994
        %v2859 = vpack.c.b16 %v1997, %v1995
        %v2860 = vpack.c.b16 %v2000, %v1998
        %v2861 = vpack.c.b16 %v2001, %v1999
        %v2862 = vpack.c.b16 %v2004, %v2002
        %v2863 = vpack.c.b16 %v2005, %v2003
        %v2864 = vpack.c.b16 %v2008, %v2006
        %v2865 = vpack.c.b16 %v2009, %v2007
        %v2866 = vpack.c.b16 %v2012, %v2010
        %v2867 = vpack.c.b16 %v2013, %v2011
        %v2868 = vpack.c.b16 %v2016, %v2014
        %v2869 = vpack.c.b16 %v2017, %v2015
        %v2870 = vpack.c.b16 %v2020, %v2018
        %v2871 = vpack.c.b16 %v2021, %v2019
        %v2872 = vpack.c.b16 %v2024, %v2022
        %v2873 = vpack.c.b16 %v2025, %v2023
        %v2874 = vpack.c.b16 %v2028, %v2026
        %v2875 = vpack.c.b16 %v2029, %v2027
        %v2876 = vpack.c.b16 %v2032, %v2030
        %v2877 = vpack.c.b16 %v2033, %v2031
        %v2878 = vpack.c.b16 %v2036, %v2034
        %v2879 = vpack.c.b16 %v2037, %v2035
        %v2880 = vpack.c.b16 %v2040, %v2038
        %v2881 = vpack.c.b16 %v2041, %v2039
        %v2882 = vpack.c.b16 %v2044, %v2042
        %v2883 = vpack.c.b16 %v2045, %v2043
        %v2884 = vpack.c.b16 %v2048, %v2046
        %v2885 = vpack.c.b16 %v2049, %v2047
        %v2886 = vpack.c.b16 %v2052, %v2050
        %v2887 = vpack.c.b16 %v2053, %v2051
        %v2888 = vpack.c.b16 %v2056, %v2054
        %v2889 = vpack.c.b16 %v2057, %v2055
        %v2890 = vpack.c.b16 %v2060, %v2058
        %v2891 = vpack.c.b16 %v2061, %v2059
        %v2892 = vpack.c.b16 %v2064, %v2062
        %v2893 = vpack.c.b16 %v2065, %v2063
        %v2894 = vpack.c.b16 %v2068, %v2066
        %v2895 = vpack.c.b16 %v2069, %v2067
        %v2896 = vpack.c.b16 %v2072, %v2070
        %v2897 = vpack.c.b16 %v2073, %v2071
        %v2898 = vpack.c.b16 %v2076, %v2074
        %v2899 = vpack.c.b16 %v2077, %v2075
        %v2900 = vpack.c.b16 %v2080, %v2078
        %v2901 = vpack.c.b16 %v2081, %v2079
        %v2902 = vpack.c.b16 %v2084, %v2082
        %v2903 = vpack.c.b16 %v2085, %v2083
        %v2904 = vpack.c.b16 %v2088, %v2086
        %v2905 = vpack.c.b16 %v2089, %v2087
        %v2906 = vpack.c.b16 %v2092, %v2090
        %v2907 = vpack.c.b16 %v2093, %v2091
        %v2908 = vpack.c.b16 %v2096, %v2094
        %v2909 = vpack.c.b16 %v2097, %v2095
        %v2910 = vpack.c.b16 %v2100, %v2098
        %v2911 = vpack.c.b16 %v2101, %v2099
        %v2912 = vpack.c.b16 %v2104, %v2102
        %v2913 = vpack.c.b16 %v2105, %v2103
        %v2914 = vpack.c.b16 %v2108, %v2106
        %v2915 = vpack.c.b16 %v2109, %v2107
        %v2916 = vpack.c.b16 %v2112, %v2110
        %v2917 = vpack.c.b16 %v2113, %v2111
        %v2918 = vpack.c.b16 %v2116, %v2114
        %v2919 = vpack.c.b16 %v2117, %v2115
        %v2920 = vpack.c.b16 %v2120, %v2118
        %v2921 = vpack.c.b16 %v2121, %v2119
        %v2922 = vpack.c.b16 %v2124, %v2122
        %v2923 = vpack.c.b16 %v2125, %v2123
        %v2924 = vpack.c.b16 %v2128, %v2126
        %v2925 = vpack.c.b16 %v2129, %v2127
        %v2926 = vpack.c.b16 %v2132, %v2130
        %v2927 = vpack.c.b16 %v2133, %v2131
        %v2928 = vpack.c.b16 %v2136, %v2134
        %v2929 = vpack.c.b16 %v2137, %v2135
        %v2930 = vpack.c.b16 %v2140, %v2138
        %v2931 = vpack.c.b16 %v2141, %v2139
        %v2932 = vpack.c.b16 %v2144, %v2142
        %v2933 = vpack.c.b16 %v2145, %v2143
        %v2934 = vpack.c.b16 %v2148, %v2146
        %v2935 = vpack.c.b16 %v2149, %v2147
        %v2936 = vpack.c.b16 %v2152, %v2150
        %v2937 = vpack.c.b16 %v2153, %v2151
        %v2938 = vpack.c.b16 %v2156, %v2154
        %v2939 = vpack.c.b16 %v2157, %v2155
        %v2940 = vpack.c.b16 %v2160, %v2158
        %v2941 = vpack.c.b16 %v2161, %v2159
        %v2942 = vpack.c.b16 %v2164, %v2162
        %v2943 = vpack.c.b16 %v2165, %v2163
        %v2944 = vpack.c.b16 %v2168, %v2166
        %v2945 = vpack.c.b16 %v2169, %v2167
        %v2946 = vpack.c.b16 %v2172, %v2170
        %v2947 = vpack.c.b16 %v2173, %v2171
        %v2948 = vpack.c.b16 %v2176, %v2174
        %v2949 = vpack.c.b16 %v2177, %v2175
        %v2950 = vpack.c.b16 %v2180, %v2178
        %v2951 = vpack.c.b16 %v2181, %v2179
        %v2952 = vpack.c.b16 %v2184, %v2182
        %v2953 = vpack.c.b16 %v2185, %v2183
        %v2954 = vpack.c.b16 %v2188, %v2186
        %v2955 = vpack.c.b16 %v2189, %v2187
        %v2956 = vpack.c.b16 %v2192, %v2190
        %v2957 = vpack.c.b16 %v2193, %v2191
        %v2958 = vpack.c.b16 %v2196, %v2194
        %v2959 = vpack.c.b16 %v2197, %v2195
        %v2960 = vpack.c.b16 %v2200, %v2198
        %v2961 = vpack.c.b16 %v2201, %v2199
        %v2962 = vpack.c.b16 %v2204, %v2202
        %v2963 = vpack.c.b16 %v2205, %v2203
        %v2964 = vpack.c.b16 %v2208, %v2206
        %v2965 = vpack.c.b16 %v2209, %v2207
        %v2966 = vpack.c.b16 %v2212, %v2210
        %v2967 = vpack.c.b16 %v2213, %v2211
        %v2968 = vpack.c.b16 %v2216, %v2214
        %v2969 = vpack.c.b16 %v2217, %v2215
        %v2970 = vpack.c.b16 %v2220, %v2218
        %v2971 = vpack.c.b16 %v2221, %v2219
        %v2972 = vpack.c.b16 %v2224, %v2222
        %v2973 = vpack.c.b16 %v2225, %v2223
        %v2974 = vpack.c.b16 %v2228, %v2226
        %v2975 = vpack.c.b16 %v2229, %v2227
        %v2976 = vpack.c.b16 %v2232, %v2230
        %v2977 = vpack.c.b16 %v2233, %v2231
        %v2978 = vpack.c.b16 %v2236, %v2234
        %v2979 = vpack.c.b16 %v2237, %v2235
        %v2980 = vpack.c.b16 %v2240, %v2238
        %v2981 = vpack.c.b16 %v2241, %v2239
        %v2982 = vpack.c.b16 %v2244, %v2242
        %v2983 = vpack.c.b16 %v2245, %v2243
        %v2984 = vpack.c.b16 %v2248, %v2246
        %v2985 = vpack.c.b16 %v2249, %v2247
        %v2986 = vpack.c.b16 %v2252, %v2250
        %v2987 = vpack.c.b16 %v2253, %v2251
        %v2988 = vpack.c.b16 %v2256, %v2254
        %v2989 = vpack.c.b16 %v2257, %v2255
        %v2990 = vpack.c.b16 %v2260, %v2258
        %v2991 = vpack.c.b16 %v2261, %v2259
        %v2992 = vpack.c.b16 %v2264, %v2262
        %v2993 = vpack.c.b16 %v2265, %v2263
        %v2994 = vpack.c.b16 %v2268, %v2266
        %v2995 = vpack.c.b16 %v2269, %v2267
        %v2996 = vpack.c.b16 %v2272, %v2270
        %v2997 = vpack.c.b16 %v2273, %v2271
        %v2998 = vpack.c.b16 %v2276, %v2274
        %v2999 = vpack.c.b16 %v2277, %v2275
        %v3000 = vpack.c.b16 %v2280, %v2278
        %v3001 = vpack.c.b16 %v2281, %v2279
        %v3002 = vpack.c.b16 %v2284, %v2282
        %v3003 = vpack.c.b16 %v2285, %v2283
        %v3004 = vpack.c.b16 %v2288, %v2286
        %v3005 = vpack.c.b16 %v2289, %v2287
        %v3006 = vpack.c.b16 %v2292, %v2290
        %v3007 = vpack.c.b16 %v2293, %v2291
        %v3008 = vpack.c.b16 %v2296, %v2294
        %v3009 = vpack.c.b16 %v2297, %v2295
        %v3010 = vpack.c.b16 %v2300, %v2298
        %v3011 = vpack.c.b16 %v2301, %v2299
        %v3012 = vpack.c.b16 %v2304, %v2302
        %v3013 = vpack.c.b16 %v2305, %v2303
        %v3014 = vpack.c.b16 %v2308, %v2306
        %v3015 = vpack.c.b16 %v2309, %v2307
        %v3016 = vpack.c.b16 %v2312, %v2310
        %v3017 = vpack.c.b16 %v2313, %v2311
        %v3018 = vpack.c.b16 %v2316, %v2314
        %v3019 = vpack.c.b16 %v2317, %v2315
        %v3020 = vpack.c.b16 %v2320, %v2318
        %v3021 = vpack.c.b16 %v2321, %v2319
        %v3022 = vpack.c.b16 %v2324, %v2322
        %v3023 = vpack.c.b16 %v2325, %v2323
        %v3024 = vpack.c.b16 %v2328, %v2326
        %v3025 = vpack.c.b16 %v2329, %v2327
        %v3026 = vpack.c.b16 %v2332, %v2330
        %v3027 = vpack.c.b16 %v2333, %v2331
        %v3028 = vpack.c.b16 %v2336, %v2334
        %v3029 = vpack.c.b16 %v2337, %v2335
        %v3030 = vpack.c.b16 %v2340, %v2338
        %v3031 = vpack.c.b16 %v2341, %v2339
        %v3032 = vpack.c.b16 %v2344, %v2342
        %v3033 = vpack.c.b16 %v2345, %v2343
        %v3034 = vpack.c.b16 %v2348, %v2346
        %v3035 = vpack.c.b16 %v2349, %v2347
        %v3036 = vpack.c.b16 %v2352, %v2350
        %v3037 = vpack.c.b16 %v2353, %v2351
        %v3038 = vpack.c.b16 %v2356, %v2354
        %v3039 = vpack.c.b16 %v2357, %v2355
        %v3040 = vpack.c.b16 %v2360, %v2358
        %v3041 = vpack.c.b16 %v2361, %v2359
        %v3042 = vpack.c.b16 %v2364, %v2362
        %v3043 = vpack.c.b16 %v2365, %v2363
        %v3044 = vpack.c.b16 %v2368, %v2366
        %v3045 = vpack.c.b16 %v2369, %v2367
        %v3046 = vpack.c.b16 %v2372, %v2370
        %v3047 = vpack.c.b16 %v2373, %v2371
        %v3048 = vpack.c.b16 %v2376, %v2374
        %v3049 = vpack.c.b16 %v2377, %v2375
        %v3050 = vpack.c.b16 %v2380, %v2378
        %v3051 = vpack.c.b16 %v2381, %v2379
        %v3052 = vpack.c.b16 %v2384, %v2382
        %v3053 = vpack.c.b16 %v2385, %v2383
        %v3054 = vpack.c.b16 %v2388, %v2386
        %v3055 = vpack.c.b16 %v2389, %v2387
        %v3056 = vpack.c.b16 %v2392, %v2390
        %v3057 = vpack.c.b16 %v2393, %v2391
        %v3058 = vpack.c.b16 %v2396, %v2394
        %v3059 = vpack.c.b16 %v2397, %v2395
        %v3060 = vpack.c.b16 %v2400, %v2398
        %v3061 = vpack.c.b16 %v2401, %v2399
        %v3062 = vpack.c.b16 %v2404, %v2402
        %v3063 = vpack.c.b16 %v2405, %v2403
        %v3064 = vpack.c.b16 %v2408, %v2406
        %v3065 = vpack.c.b16 %v2409, %v2407
        %v3066 = vpack.c.b16 %v2412, %v2410
        %v3067 = vpack.c.b16 %v2413, %v2411
        %v3068 = vpack.c.b16 %v2416, %v2414
        %v3069 = vpack.c.b16 %v2417, %v2415
        %v3070 = vpack.c.b16 %v2420, %v2418
        %v3071 = vpack.c.b16 %v2421, %v2419
        %v3072 = vpack.c.b16 %v2424, %v2422
        %v3073 = vpack.c.b16 %v2425, %v2423
        %v3074 = vpack.c.b16 %v2428, %v2426
        %v3075 = vpack.c.b16 %v2429, %v2427
        %v3076 = vpack.c.b16 %v2432, %v2430
        %v3077 = vpack.c.b16 %v2433, %v2431
        %v3078 = vpack.c.b16 %v2436, %v2434
        %v3079 = vpack.c.b16 %v2437, %v2435
        %v3080 = vpack.c.b16 %v2440, %v2438
        %v3081 = vpack.c.b16 %v2441, %v2439
        %v3082 = vpack.c.b16 %v2444, %v2442
        %v3083 = vpack.c.b16 %v2445, %v2443
        %v3084 = vpack.c.b16 %v2448, %v2446
        %v3085 = vpack.c.b16 %v2449, %v2447
        %v3086 = vpack.c.b16 %v2452, %v2450
        %v3087 = vpack.c.b16 %v2453, %v2451
        %v3088 = vpack.c.b16 %v2456, %v2454
        %v3089 = vpack.c.b16 %v2457, %v2455
        %v3090 = vpack.c.b16 %v2460, %v2458
        %v3091 = vpack.c.b16 %v2461, %v2459
        %v3092 = vpack.c.b16 %v2464, %v2462
        %v3093 = vpack.c.b16 %v2465, %v2463
        %v3094 = vpack.c.b16 %v2468, %v2466
        %v3095 = vpack.c.b16 %v2469, %v2467
        %v3096 = vpack.c.b16 %v2472, %v2470
        %v3097 = vpack.c.b16 %v2473, %v2471
        %v3098 = vpack.c.b16 %v2476, %v2474
        %v3099 = vpack.c.b16 %v2477, %v2475
        %v3100 = vpack.c.b16 %v2480, %v2478
        %v3101 = vpack.c.b16 %v2481, %v2479
        %v3102 = vpack.c.b16 %v2484, %v2482
        %v3103 = vpack.c.b16 %v2485, %v2483
        %v3104 = vpack.c.b16 %v2488, %v2486
        %v3105 = vpack.c.b16 %v2489, %v2487
        %v3106 = vpack.c.b16 %v2492, %v2490
        %v3107 = vpack.c.b16 %v2493, %v2491
        %v3108 = vpack.c.b16 %v2496, %v2494
        %v3109 = vpack.c.b16 %v2497, %v2495
        %v3110 = vpack.c.b16 %v2500, %v2498
        %v3111 = vpack.c.b16 %v2501, %v2499
        %v3112 = vpack.c.b16 %v2504, %v2502
        %v3113 = vpack.c.b16 %v2505, %v2503
        %v3114 = vpack.c.b16 %v2508, %v2506
        %v3115 = vpack.c.b16 %v2509, %v2507
        %v3116 = vpack.c.b16 %v2512, %v2510
        %v3117 = vpack.c.b16 %v2513, %v2511
        %v3118 = vpack.c.b16 %v2516, %v2514
        %v3119 = vpack.c.b16 %v2517, %v2515
        %v3120 = vpack.c.b16 %v2520, %v2518
        %v3121 = vpack.c.b16 %v2521, %v2519
        %v3122 = vpack.c.b16 %v2524, %v2522
        %v3123 = vpack.c.b16 %v2525, %v2523
        %v3124 = vpack.c.b16 %v2528, %v2526
        %v3125 = vpack.c.b16 %v2529, %v2527
        %v3126 = vpack.c.b16 %v2532, %v2530
        %v3127 = vpack.c.b16 %v2533, %v2531
        %v3128 = vpack.c.b16 %v2536, %v2534
        %v3129 = vpack.c.b16 %v2537, %v2535
        %v3130 = vpack.c.b16 %v2540, %v2538
        %v3131 = vpack.c.b16 %v2541, %v2539
        %v3132 = vpack.c.b16 %v2544, %v2542
        %v3133 = vpack.c.b16 %v2545, %v2543
        %v3134 = vpack.c.b16 %v2548, %v2546
        %v3135 = vpack.c.b16 %v2549, %v2547
        %v3136 = vpack.c.b16 %v2552, %v2550
        %v3137 = vpack.c.b16 %v2553, %v2551
        %v3138 = vpack.c.b16 %v2556, %v2554
        %v3139 = vpack.c.b16 %v2557, %v2555
        %v3140 = vpack.c.b16 %v2560, %v2558
        %v3141 = vpack.c.b16 %v2561, %v2559
        %v3142 = vpack.c.b16 %v2564, %v2562
        %v3143 = vpack.c.b16 %v2565, %v2563
        %v3144 = vpack.c.b16 %v2568, %v2566
        %v3145 = vpack.c.b16 %v2569, %v2567
        %v3146 = vpack.c.b16 %v2572, %v2570
        %v3147 = vpack.c.b16 %v2573, %v2571
        %v3148 = vpack.c.b16 %v2576, %v2574
        %v3149 = vpack.c.b16 %v2577, %v2575
        %v3150 = vpack.c.b16 %v2580, %v2578
        %v3151 = vpack.c.b16 %v2581, %v2579
        %v3152 = vpack.c.b16 %v2584, %v2582
        %v3153 = vpack.c.b16 %v2585, %v2583
        %v3154 = vpack.c.b16 %v2588, %v2586
        %v3155 = vpack.c.b16 %v2589, %v2587
        %v3156 = vpack.c.b16 %v2592, %v2590
        %v3157 = vpack.c.b16 %v2593, %v2591
        %v3158 = vpack.c.b16 %v2596, %v2594
        %v3159 = vpack.c.b16 %v2597, %v2595
        %v3160 = vpack.c.b16 %v2600, %v2598
        %v3161 = vpack.c.b16 %v2601, %v2599
        %v3162 = vpack.c.b16 %v2604, %v2602
        %v3163 = vpack.c.b16 %v2605, %v2603
        %v3164 = vpack.c.b16 %v2608, %v2606
        %v3165 = vpack.c.b16 %v2609, %v2607
        %v3166 = vpack.c.b16 %v2612, %v2610
        %v3167 = vpack.c.b16 %v2613, %v2611
        %v3168 = vpack.c.b16 %v2616, %v2614
        %v3169 = vpack.c.b16 %v2617, %v2615
        %v3170 = vpack.c.b16 %v2620, %v2618
        %v3171 = vpack.c.b16 %v2621, %v2619
        %v3172 = vpack.c.b16 %v2624, %v2622
        %v3173 = vpack.c.b16 %v2625, %v2623
        %v3174 = vpack.c.b16 %v2628, %v2626
        %v3175 = vpack.c.b16 %v2629, %v2627
        %v3176 = vpack.c.b16 %v2632, %v2630
        %v3177 = vpack.c.b16 %v2633, %v2631
        %v3178 = vpack.c.b16 %v2636, %v2634
        %v3179 = vpack.c.b16 %v2637, %v2635
        %v3180 = vpack.c.b16 %v2640, %v2638
        %v3181 = vpack.c.b16 %v2641, %v2639
        %v3182 = vpack.c.b16 %v2644, %v2642
        %v3183 = vpack.c.b16 %v2645, %v2643
        %v3184 = vpack.c.b16 %v2648, %v2646
        %v3185 = vpack.c.b16 %v2649, %v2647
        %v3186 = vpack.c.b16 %v2652, %v2650
        %v3187 = vpack.c.b16 %v2653, %v2651
        %v3188 = vpack.c.b16 %v2656, %v2654
        %v3189 = vpack.c.b16 %v2657, %v2655
        %v3190 = vpack.c.b16 %v2660, %v2658
        %v3191 = vpack.c.b16 %v2661, %v2659
        %v3192 = vpack.c.b16 %v2664, %v2662
        %v3193 = vpack.c.b16 %v2665, %v2663
        %v3194 = vpack.c.b16 %v2668, %v2666
        %v3195 = vpack.c.b16 %v2669, %v2667
        %v3196 = vpack.c.b16 %v2672, %v2670
        %v3197 = vpack.c.b16 %v2673, %v2671
        %v3198 = vpack.c.b16 %v2676, %v2674
        %v3199 = vpack.c.b16 %v2677, %v2675
        %v3200 = vpack.c.b16 %v2680, %v2678
        %v3201 = vpack.c.b16 %v2681, %v2679
        %v3202 = vpack.c.b16 %v2684, %v2682
        %v3203 = vpack.c.b16 %v2685, %v2683
        %v3204 = vpack.c.b16 %v2688, %v2686
        %v3205 = vpack.c.b16 %v2689, %v2687
        %v3206 = vpack.c.b16 %v2692, %v2690
        %v3207 = vpack.c.b16 %v2693, %v2691
        %v3208 = vpack.c.b16 %v2696, %v2694
        %v3209 = vpack.c.b16 %v2697, %v2695
        %3722 = vmatprep.subr.bf16.mxu0 %v2699
        %3723 = vmatpush1.bf16.msra.mxu0 %v2698
        %3724 = vmatprep.subr.bf16.mxu0 %v2701
        %3725 = vmatpush1.bf16.msra.mxu0 %v2700
        %3726 = vmatprep.subr.bf16.mxu0 %v2703
        %3727 = vmatpush1.bf16.msra.mxu0 %v2702
        %3728 = vmatprep.subr.bf16.mxu0 %v2705
        %3729 = vmatpush1.bf16.msra.mxu0 %v2704
        %3730 = vmatprep.subr.bf16.mxu0 %v2707
        %3731 = vmatpush1.bf16.msra.mxu0 %v2706
        %3732 = vmatprep.subr.bf16.mxu0 %v2709
        %3733 = vmatpush1.bf16.msra.mxu0 %v2708
        %3734 = vmatprep.subr.bf16.mxu0 %v2711
        %3735 = vmatpush1.bf16.msra.mxu0 %v2710
        %3736 = vmatprep.subr.bf16.mxu0 %v2713
        %3737 = vmatpush1.bf16.msra.mxu0 %v2712
        %3738 = vmatprep.subr.bf16.mxu0 %v2715
        %3739 = vmatpush1.bf16.msra.mxu0 %v2714
        %3740 = vmatprep.subr.bf16.mxu0 %v2717
        %3741 = vmatpush1.bf16.msra.mxu0 %v2716
        %3742 = vmatprep.subr.bf16.mxu0 %v2719
        %3743 = vmatpush1.bf16.msra.mxu0 %v2718
        %3744 = vmatprep.subr.bf16.mxu0 %v2721
        %3745 = vmatpush1.bf16.msra.mxu0 %v2720
        %3746 = vmatprep.subr.bf16.mxu0 %v2723
        %3747 = vmatpush1.bf16.msra.mxu0 %v2722
        %3748 = vmatprep.subr.bf16.mxu0 %v2725
        %3749 = vmatpush1.bf16.msra.mxu0 %v2724
        %3750 = vmatprep.subr.bf16.mxu0 %v2727
        %3751 = vmatpush1.bf16.msra.mxu0 %v2726
        %3752 = vmatprep.subr.bf16.mxu0 %v2729
        %3753 = vmatpush1.bf16.msra.mxu0 %v2728
        %3754 = vmatprep.mubr.bf16.mxu0 %v1009
        %3755 = vmatmul.mubr.bf16.gmra.mrb[0].mxu0 %v1001
        %v3756 = vpop.f32.mrb[0].mxu0
        %v3757 = vadd.f32 0.0, %v3756
        %v3758 = vpop.f32.mrb[0].mxu0
        %v3759 = vadd.f32 0.0, %v3758
        %v3760 = vpop.f32.mrb[0].mxu0
        %v3761 = vpop.f32.mrb[0].mxu0
        %3762 = vdwg.mxu0
        %3763 = vmatprep.subr.bf16.mxu0 %v2731
        %3764 = vmatpush1.bf16.msra.mxu0 %v2730
        %3765 = vmatprep.subr.bf16.mxu0 %v2733
        %3766 = vmatpush1.bf16.msra.mxu0 %v2732
        %3767 = vmatprep.subr.bf16.mxu0 %v2735
        %3768 = vmatpush1.bf16.msra.mxu0 %v2734
        %3769 = vmatprep.subr.bf16.mxu0 %v2737
        %3770 = vmatpush1.bf16.msra.mxu0 %v2736
        %3771 = vmatprep.subr.bf16.mxu0 %v2739
        %3772 = vmatpush1.bf16.msra.mxu0 %v2738
        %3773 = vmatprep.subr.bf16.mxu0 %v2741
        %3774 = vmatpush1.bf16.msra.mxu0 %v2740
        %3775 = vmatprep.subr.bf16.mxu0 %v2743
        %3776 = vmatpush1.bf16.msra.mxu0 %v2742
        %3777 = vmatprep.subr.bf16.mxu0 %v2745
        %3778 = vmatpush1.bf16.msra.mxu0 %v2744
        %3779 = vmatprep.subr.bf16.mxu0 %v2747
        %3780 = vmatpush1.bf16.msra.mxu0 %v2746
        %3781 = vmatprep.subr.bf16.mxu0 %v2749
        %3782 = vmatpush1.bf16.msra.mxu0 %v2748
        %3783 = vmatprep.subr.bf16.mxu0 %v2751
        %3784 = vmatpush1.bf16.msra.mxu0 %v2750
        %3785 = vmatprep.subr.bf16.mxu0 %v2753
        %3786 = vmatpush1.bf16.msra.mxu0 %v2752
        %3787 = vmatprep.subr.bf16.mxu0 %v2755
        %3788 = vmatpush1.bf16.msra.mxu0 %v2754
        %3789 = vmatprep.subr.bf16.mxu0 %v2757
        %3790 = vmatpush1.bf16.msra.mxu0 %v2756
        %3791 = vmatprep.subr.bf16.mxu0 %v2759
        %3792 = vmatpush1.bf16.msra.mxu0 %v2758
        %3793 = vmatprep.subr.bf16.mxu0 %v2761
        %3794 = vmatpush1.bf16.msra.mxu0 %v2760
        %3795 = vmatprep.mubr.bf16.mxu0 %v1010
        %3796 = vmatmul.mubr.bf16.gmra.mrb[0].mxu0 %v1008
        %v3797 = vpop.f32.mrb[0].mxu0
        %v3798 = vadd.f32 %v3757, %v3797
        %v3799 = vpop.f32.mrb[0].mxu0
        %v3800 = vadd.f32 %v3759, %v3799
        %v3801 = vpop.f32.mrb[0].mxu0
        %v3802 = vpop.f32.mrb[0].mxu0
        %3803 = vdwg.mxu0
        %3804 = vmatprep.subr.bf16.mxu0 %v2763
        %3805 = vmatpush1.bf16.msra.mxu0 %v2762
        %3806 = vmatprep.subr.bf16.mxu0 %v2765
        %3807 = vmatpush1.bf16.msra.mxu0 %v2764
        %3808 = vmatprep.subr.bf16.mxu0 %v2767
        %3809 = vmatpush1.bf16.msra.mxu0 %v2766
        %3810 = vmatprep.subr.bf16.mxu0 %v2769
        %3811 = vmatpush1.bf16.msra.mxu0 %v2768
        %3812 = vmatprep.subr.bf16.mxu0 %v2771
        %3813 = vmatpush1.bf16.msra.mxu0 %v2770
        %3814 = vmatprep.subr.bf16.mxu0 %v2773
        %3815 = vmatpush1.bf16.msra.mxu0 %v2772
        %3816 = vmatprep.subr.bf16.mxu0 %v2775
        %3817 = vmatpush1.bf16.msra.mxu0 %v2774
        %3818 = vmatprep.subr.bf16.mxu0 %v2777
        %3819 = vmatpush1.bf16.msra.mxu0 %v2776
        %3820 = vmatprep.subr.bf16.mxu0 %v2779
        %3821 = vmatpush1.bf16.msra.mxu0 %v2778
        %3822 = vmatprep.subr.bf16.mxu0 %v2781
        %3823 = vmatpush1.bf16.msra.mxu0 %v2780
        %3824 = vmatprep.subr.bf16.mxu0 %v2783
        %3825 = vmatpush1.bf16.msra.mxu0 %v2782
        %3826 = vmatprep.subr.bf16.mxu0 %v2785
        %3827 = vmatpush1.bf16.msra.mxu0 %v2784
        %3828 = vmatprep.subr.bf16.mxu0 %v2787
        %3829 = vmatpush1.bf16.msra.mxu0 %v2786
        %3830 = vmatprep.subr.bf16.mxu0 %v2789
        %3831 = vmatpush1.bf16.msra.mxu0 %v2788
        %3832 = vmatprep.subr.bf16.mxu0 %v2791
        %3833 = vmatpush1.bf16.msra.mxu0 %v2790
        %3834 = vmatprep.subr.bf16.mxu0 %v2793
        %3835 = vmatpush1.bf16.msra.mxu0 %v2792
        %3836 = vmatprep.mubr.bf16.mxu0 %v1026
        %3837 = vmatmul.mubr.bf16.gmra.mrb[0].mxu0 %v1018
        %v3838 = vpop.f32.mrb[0].mxu0
        %v3839 = vadd.f32 %v3798, %v3838
        %v3840 = vpop.f32.mrb[0].mxu0
        %v3841 = vadd.f32 %v3800, %v3840
        %v3842 = vpop.f32.mrb[0].mxu0
        %v3843 = vpop.f32.mrb[0].mxu0
        %3844 = vdwg.mxu0
        %3845 = vmatprep.subr.bf16.mxu0 %v2795
        %3846 = vmatpush1.bf16.msra.mxu0 %v2794
        %3847 = vmatprep.subr.bf16.mxu0 %v2797
        %3848 = vmatpush1.bf16.msra.mxu0 %v2796
        %3849 = vmatprep.subr.bf16.mxu0 %v2799
        %3850 = vmatpush1.bf16.msra.mxu0 %v2798
        %3851 = vmatprep.subr.bf16.mxu0 %v2801
        %3852 = vmatpush1.bf16.msra.mxu0 %v2800
        %3853 = vmatprep.subr.bf16.mxu0 %v2803
        %3854 = vmatpush1.bf16.msra.mxu0 %v2802
        %3855 = vmatprep.subr.bf16.mxu0 %v2805
        %3856 = vmatpush1.bf16.msra.mxu0 %v2804
        %3857 = vmatprep.subr.bf16.mxu0 %v2807
        %3858 = vmatpush1.bf16.msra.mxu0 %v2806
        %3859 = vmatprep.subr.bf16.mxu0 %v2809
        %3860 = vmatpush1.bf16.msra.mxu0 %v2808
        %3861 = vmatprep.subr.bf16.mxu0 %v2811
        %3862 = vmatpush1.bf16.msra.mxu0 %v2810
        %3863 = vmatprep.subr.bf16.mxu0 %v2813
        %3864 = vmatpush1.bf16.msra.mxu0 %v2812
        %3865 = vmatprep.subr.bf16.mxu0 %v2815
        %3866 = vmatpush1.bf16.msra.mxu0 %v2814
        %3867 = vmatprep.subr.bf16.mxu0 %v2817
        %3868 = vmatpush1.bf16.msra.mxu0 %v2816
        %3869 = vmatprep.subr.bf16.mxu0 %v2819
        %3870 = vmatpush1.bf16.msra.mxu0 %v2818
        %3871 = vmatprep.subr.bf16.mxu0 %v2821
        %3872 = vmatpush1.bf16.msra.mxu0 %v2820
        %3873 = vmatprep.subr.bf16.mxu0 %v2823
        %3874 = vmatpush1.bf16.msra.mxu0 %v2822
        %3875 = vmatprep.subr.bf16.mxu0 %v2825
        %3876 = vmatpush1.bf16.msra.mxu0 %v2824
        %3877 = vmatprep.mubr.bf16.mxu0 %v1027
        %3878 = vmatmul.mubr.bf16.gmra.mrb[0].mxu0 %v1025
        %v3879 = vpop.f32.mrb[0].mxu0
        %v3880 = vadd.f32 %v3839, %v3879
        %v3881 = vpop.f32.mrb[0].mxu0
        %v3882 = vadd.f32 %v3841, %v3881
        %v3883 = vpop.f32.mrb[0].mxu0
        %v3884 = vpop.f32.mrb[0].mxu0
        %3885 = vdwg.mxu0
        %3886 = vmatprep.subr.bf16.mxu0 %v2827
        %3887 = vmatpush1.bf16.msra.mxu0 %v2826
        %3888 = vmatprep.subr.bf16.mxu0 %v2829
        %3889 = vmatpush1.bf16.msra.mxu0 %v2828
        %3890 = vmatprep.subr.bf16.mxu0 %v2831
        %3891 = vmatpush1.bf16.msra.mxu0 %v2830
        %3892 = vmatprep.subr.bf16.mxu0 %v2833
        %3893 = vmatpush1.bf16.msra.mxu0 %v2832
        %3894 = vmatprep.subr.bf16.mxu0 %v2835
        %3895 = vmatpush1.bf16.msra.mxu0 %v2834
        %3896 = vmatprep.subr.bf16.mxu0 %v2837
        %3897 = vmatpush1.bf16.msra.mxu0 %v2836
        %3898 = vmatprep.subr.bf16.mxu0 %v2839
        %3899 = vmatpush1.bf16.msra.mxu0 %v2838
        %3900 = vmatprep.subr.bf16.mxu0 %v2841
        %3901 = vmatpush1.bf16.msra.mxu0 %v2840
        %3902 = vmatprep.subr.bf16.mxu0 %v2843
        %3903 = vmatpush1.bf16.msra.mxu0 %v2842
        %3904 = vmatprep.subr.bf16.mxu0 %v2845
        %3905 = vmatpush1.bf16.msra.mxu0 %v2844
        %3906 = vmatprep.subr.bf16.mxu0 %v2847
        %3907 = vmatpush1.bf16.msra.mxu0 %v2846
        %3908 = vmatprep.subr.bf16.mxu0 %v2849
        %3909 = vmatpush1.bf16.msra.mxu0 %v2848
        %3910 = vmatprep.subr.bf16.mxu0 %v2851
        %3911 = vmatpush1.bf16.msra.mxu0 %v2850
        %3912 = vmatprep.subr.bf16.mxu0 %v2853
        %3913 = vmatpush1.bf16.msra.mxu0 %v2852
        %3914 = vmatprep.subr.bf16.mxu0 %v2855
        %3915 = vmatpush1.bf16.msra.mxu0 %v2854
        %3916 = vmatprep.subr.bf16.mxu0 %v2857
        %3917 = vmatpush1.bf16.msra.mxu0 %v2856
        %3918 = vmatprep.mubr.bf16.mxu0 %v1043
        %3919 = vmatmul.mubr.bf16.gmra.mrb[0].mxu0 %v1035
        %v3920 = vpop.f32.mrb[0].mxu0
        %v3921 = vadd.f32 %v3880, %v3920
        %v3922 = vpop.f32.mrb[0].mxu0
        %v3923 = vadd.f32 %v3882, %v3922
        %v3924 = vpop.f32.mrb[0].mxu0
        %v3925 = vpop.f32.mrb[0].mxu0
        %3926 = vdwg.mxu0
        %3927 = vmatprep.subr.bf16.mxu0 %v2859
        %3928 = vmatpush1.bf16.msra.mxu0 %v2858
        %3929 = vmatprep.subr.bf16.mxu0 %v2861
        %3930 = vmatpush1.bf16.msra.mxu0 %v2860
        %3931 = vmatprep.subr.bf16.mxu0 %v2863
        %3932 = vmatpush1.bf16.msra.mxu0 %v2862
        %3933 = vmatprep.subr.bf16.mxu0 %v2865
        %3934 = vmatpush1.bf16.msra.mxu0 %v2864
        %3935 = vmatprep.subr.bf16.mxu0 %v2867
        %3936 = vmatpush1.bf16.msra.mxu0 %v2866
        %3937 = vmatprep.subr.bf16.mxu0 %v2869
        %3938 = vmatpush1.bf16.msra.mxu0 %v2868
        %3939 = vmatprep.subr.bf16.mxu0 %v2871
        %3940 = vmatpush1.bf16.msra.mxu0 %v2870
        %3941 = vmatprep.subr.bf16.mxu0 %v2873
        %3942 = vmatpush1.bf16.msra.mxu0 %v2872
        %3943 = vmatprep.subr.bf16.mxu0 %v2875
        %3944 = vmatpush1.bf16.msra.mxu0 %v2874
        %3945 = vmatprep.subr.bf16.mxu0 %v2877
        %3946 = vmatpush1.bf16.msra.mxu0 %v2876
        %3947 = vmatprep.subr.bf16.mxu0 %v2879
        %3948 = vmatpush1.bf16.msra.mxu0 %v2878
        %3949 = vmatprep.subr.bf16.mxu0 %v2881
        %3950 = vmatpush1.bf16.msra.mxu0 %v2880
        %3951 = vmatprep.subr.bf16.mxu0 %v2883
        %3952 = vmatpush1.bf16.msra.mxu0 %v2882
        %3953 = vmatprep.subr.bf16.mxu0 %v2885
        %3954 = vmatpush1.bf16.msra.mxu0 %v2884
        %3955 = vmatprep.subr.bf16.mxu0 %v2887
        %3956 = vmatpush1.bf16.msra.mxu0 %v2886
        %3957 = vmatprep.subr.bf16.mxu0 %v2889
        %3958 = vmatpush1.bf16.msra.mxu0 %v2888
        %3959 = vmatprep.mubr.bf16.mxu0 %v1044
        %3960 = vmatmul.mubr.bf16.gmra.mrb[0].mxu0 %v1042
        %v3961 = vpop.f32.mrb[0].mxu0
        %v3962 = vadd.f32 %v3921, %v3961
        %v3963 = vpop.f32.mrb[0].mxu0
        %v3964 = vadd.f32 %v3923, %v3963
        %v3965 = vpop.f32.mrb[0].mxu0
        %v3966 = vpop.f32.mrb[0].mxu0
        %3967 = vdwg.mxu0
        %3968 = vmatprep.subr.bf16.mxu0 %v2891
        %3969 = vmatpush1.bf16.msra.mxu0 %v2890
        %3970 = vmatprep.subr.bf16.mxu0 %v2893
        %3971 = vmatpush1.bf16.msra.mxu0 %v2892
        %3972 = vmatprep.subr.bf16.mxu0 %v2895
        %3973 = vmatpush1.bf16.msra.mxu0 %v2894
        %3974 = vmatprep.subr.bf16.mxu0 %v2897
        %3975 = vmatpush1.bf16.msra.mxu0 %v2896
        %3976 = vmatprep.subr.bf16.mxu0 %v2899
        %3977 = vmatpush1.bf16.msra.mxu0 %v2898
        %3978 = vmatprep.subr.bf16.mxu0 %v2901
        %3979 = vmatpush1.bf16.msra.mxu0 %v2900
        %3980 = vmatprep.subr.bf16.mxu0 %v2903
        %3981 = vmatpush1.bf16.msra.mxu0 %v2902
        %3982 = vmatprep.subr.bf16.mxu0 %v2905
        %3983 = vmatpush1.bf16.msra.mxu0 %v2904
        %3984 = vmatprep.subr.bf16.mxu0 %v2907
        %3985 = vmatpush1.bf16.msra.mxu0 %v2906
        %3986 = vmatprep.subr.bf16.mxu0 %v2909
        %3987 = vmatpush1.bf16.msra.mxu0 %v2908
        %3988 = vmatprep.subr.bf16.mxu0 %v2911
        %3989 = vmatpush1.bf16.msra.mxu0 %v2910
        %3990 = vmatprep.subr.bf16.mxu0 %v2913
        %3991 = vmatpush1.bf16.msra.mxu0 %v2912
        %3992 = vmatprep.subr.bf16.mxu0 %v2915
        %3993 = vmatpush1.bf16.msra.mxu0 %v2914
        %3994 = vmatprep.subr.bf16.mxu0 %v2917
        %3995 = vmatpush1.bf16.msra.mxu0 %v2916
        %3996 = vmatprep.subr.bf16.mxu0 %v2919
        %3997 = vmatpush1.bf16.msra.mxu0 %v2918
        %3998 = vmatprep.subr.bf16.mxu0 %v2921
        %3999 = vmatpush1.bf16.msra.mxu0 %v2920
        %4000 = vmatprep.mubr.bf16.mxu0 %v1060
        %4001 = vmatmul.mubr.bf16.gmra.mrb[0].mxu0 %v1052
        %v4002 = vpop.f32.mrb[0].mxu0
        %v4003 = vadd.f32 %v3962, %v4002
        %v4004 = vpop.f32.mrb[0].mxu0
        %v4005 = vadd.f32 %v3964, %v4004
        %v4006 = vpop.f32.mrb[0].mxu0
        %v4007 = vpop.f32.mrb[0].mxu0
        %4008 = vdwg.mxu0
        %4009 = vmatprep.subr.bf16.mxu0 %v2923
        %4010 = vmatpush1.bf16.msra.mxu0 %v2922
        %4011 = vmatprep.subr.bf16.mxu0 %v2925
        %4012 = vmatpush1.bf16.msra.mxu0 %v2924
        %4013 = vmatprep.subr.bf16.mxu0 %v2927
        %4014 = vmatpush1.bf16.msra.mxu0 %v2926
        %4015 = vmatprep.subr.bf16.mxu0 %v2929
        %4016 = vmatpush1.bf16.msra.mxu0 %v2928
        %4017 = vmatprep.subr.bf16.mxu0 %v2931
        %4018 = vmatpush1.bf16.msra.mxu0 %v2930
        %4019 = vmatprep.subr.bf16.mxu0 %v2933
        %4020 = vmatpush1.bf16.msra.mxu0 %v2932
        %4021 = vmatprep.subr.bf16.mxu0 %v2935
        %4022 = vmatpush1.bf16.msra.mxu0 %v2934
        %4023 = vmatprep.subr.bf16.mxu0 %v2937
        %4024 = vmatpush1.bf16.msra.mxu0 %v2936
        %4025 = vmatprep.subr.bf16.mxu0 %v2939
        %4026 = vmatpush1.bf16.msra.mxu0 %v2938
        %4027 = vmatprep.subr.bf16.mxu0 %v2941
        %4028 = vmatpush1.bf16.msra.mxu0 %v2940
        %4029 = vmatprep.subr.bf16.mxu0 %v2943
        %4030 = vmatpush1.bf16.msra.mxu0 %v2942
        %4031 = vmatprep.subr.bf16.mxu0 %v2945
        %4032 = vmatpush1.bf16.msra.mxu0 %v2944
        %4033 = vmatprep.subr.bf16.mxu0 %v2947
        %4034 = vmatpush1.bf16.msra.mxu0 %v2946
        %4035 = vmatprep.subr.bf16.mxu0 %v2949
        %4036 = vmatpush1.bf16.msra.mxu0 %v2948
        %4037 = vmatprep.subr.bf16.mxu0 %v2951
        %4038 = vmatpush1.bf16.msra.mxu0 %v2950
        %4039 = vmatprep.subr.bf16.mxu0 %v2953
        %4040 = vmatpush1.bf16.msra.mxu0 %v2952
        %4041 = vmatprep.mubr.bf16.mxu0 %v1061
        %4042 = vmatmul.mubr.bf16.gmra.mrb[0].mxu0 %v1059
        %v4043 = vpop.f32.mrb[0].mxu0
        %v4044 = vadd.f32 %v4003, %v4043
        %v4045 = vpop.f32.mrb[0].mxu0
        %v4046 = vadd.f32 %v4005, %v4045
        %v4047 = vpop.f32.mrb[0].mxu0
        %v4048 = vpop.f32.mrb[0].mxu0
        %4049 = vdwg.mxu0
        %4050 = vmatprep.subr.bf16.mxu0 %v2955
        %4051 = vmatpush1.bf16.msra.mxu0 %v2954
        %4052 = vmatprep.subr.bf16.mxu0 %v2957
        %4053 = vmatpush1.bf16.msra.mxu0 %v2956
        %4054 = vmatprep.subr.bf16.mxu0 %v2959
        %4055 = vmatpush1.bf16.msra.mxu0 %v2958
        %4056 = vmatprep.subr.bf16.mxu0 %v2961
        %4057 = vmatpush1.bf16.msra.mxu0 %v2960
        %4058 = vmatprep.subr.bf16.mxu0 %v2963
        %4059 = vmatpush1.bf16.msra.mxu0 %v2962
        %4060 = vmatprep.subr.bf16.mxu0 %v2965
        %4061 = vmatpush1.bf16.msra.mxu0 %v2964
        %4062 = vmatprep.subr.bf16.mxu0 %v2967
        %4063 = vmatpush1.bf16.msra.mxu0 %v2966
        %4064 = vmatprep.subr.bf16.mxu0 %v2969
        %4065 = vmatpush1.bf16.msra.mxu0 %v2968
        %4066 = vmatprep.subr.bf16.mxu0 %v2971
        %4067 = vmatpush1.bf16.msra.mxu0 %v2970
        %4068 = vmatprep.subr.bf16.mxu0 %v2973
        %4069 = vmatpush1.bf16.msra.mxu0 %v2972
        %4070 = vmatprep.subr.bf16.mxu0 %v2975
        %4071 = vmatpush1.bf16.msra.mxu0 %v2974
        %4072 = vmatprep.subr.bf16.mxu0 %v2977
        %4073 = vmatpush1.bf16.msra.mxu0 %v2976
        %4074 = vmatprep.subr.bf16.mxu0 %v2979
        %4075 = vmatpush1.bf16.msra.mxu0 %v2978
        %4076 = vmatprep.subr.bf16.mxu0 %v2981
        %4077 = vmatpush1.bf16.msra.mxu0 %v2980
        %4078 = vmatprep.subr.bf16.mxu0 %v2983
        %4079 = vmatpush1.bf16.msra.mxu0 %v2982
        %4080 = vmatprep.subr.bf16.mxu0 %v2985
        %4081 = vmatpush1.bf16.msra.mxu0 %v2984
        %4082 = vmatprep.mubr.bf16.mxu0 %v1077
        %4083 = vmatmul.mubr.bf16.gmra.mrb[0].mxu0 %v1069
        %v4084 = vpop.f32.mrb[0].mxu0
        %v4085 = vadd.f32 %v4044, %v4084
        %v4086 = vpop.f32.mrb[0].mxu0
        %v4087 = vadd.f32 %v4046, %v4086
        %v4088 = vpop.f32.mrb[0].mxu0
        %v4089 = vpop.f32.mrb[0].mxu0
        %4090 = vdwg.mxu0
        %4091 = vmatprep.subr.bf16.mxu0 %v2987
        %4092 = vmatpush1.bf16.msra.mxu0 %v2986
        %4093 = vmatprep.subr.bf16.mxu0 %v2989
        %4094 = vmatpush1.bf16.msra.mxu0 %v2988
        %4095 = vmatprep.subr.bf16.mxu0 %v2991
        %4096 = vmatpush1.bf16.msra.mxu0 %v2990
        %4097 = vmatprep.subr.bf16.mxu0 %v2993
        %4098 = vmatpush1.bf16.msra.mxu0 %v2992
        %4099 = vmatprep.subr.bf16.mxu0 %v2995
        %4100 = vmatpush1.bf16.msra.mxu0 %v2994
        %4101 = vmatprep.subr.bf16.mxu0 %v2997
        %4102 = vmatpush1.bf16.msra.mxu0 %v2996
        %4103 = vmatprep.subr.bf16.mxu0 %v2999
        %4104 = vmatpush1.bf16.msra.mxu0 %v2998
        %4105 = vmatprep.subr.bf16.mxu0 %v3001
        %4106 = vmatpush1.bf16.msra.mxu0 %v3000
        %4107 = vmatprep.subr.bf16.mxu0 %v3003
        %4108 = vmatpush1.bf16.msra.mxu0 %v3002
        %4109 = vmatprep.subr.bf16.mxu0 %v3005
        %4110 = vmatpush1.bf16.msra.mxu0 %v3004
        %4111 = vmatprep.subr.bf16.mxu0 %v3007
        %4112 = vmatpush1.bf16.msra.mxu0 %v3006
        %4113 = vmatprep.subr.bf16.mxu0 %v3009
        %4114 = vmatpush1.bf16.msra.mxu0 %v3008
        %4115 = vmatprep.subr.bf16.mxu0 %v3011
        %4116 = vmatpush1.bf16.msra.mxu0 %v3010
        %4117 = vmatprep.subr.bf16.mxu0 %v3013
        %4118 = vmatpush1.bf16.msra.mxu0 %v3012
        %4119 = vmatprep.subr.bf16.mxu0 %v3015
        %4120 = vmatpush1.bf16.msra.mxu0 %v3014
        %4121 = vmatprep.subr.bf16.mxu0 %v3017
        %4122 = vmatpush1.bf16.msra.mxu0 %v3016
        %4123 = vmatprep.mubr.bf16.mxu0 %v1078
        %4124 = vmatmul.mubr.bf16.gmra.mrb[0].mxu0 %v1076
        %v4125 = vpop.f32.mrb[0].mxu0
        %v4126 = vadd.f32 %v4085, %v4125
        %v4127 = vpop.f32.mrb[0].mxu0
        %v4128 = vadd.f32 %v4087, %v4127
        %v4129 = vpop.f32.mrb[0].mxu0
        %v4130 = vpop.f32.mrb[0].mxu0
        %4131 = vdwg.mxu0
        %4132 = vmatprep.subr.bf16.mxu0 %v3019
        %4133 = vmatpush1.bf16.msra.mxu0 %v3018
        %4134 = vmatprep.subr.bf16.mxu0 %v3021
        %4135 = vmatpush1.bf16.msra.mxu0 %v3020
        %4136 = vmatprep.subr.bf16.mxu0 %v3023
        %4137 = vmatpush1.bf16.msra.mxu0 %v3022
        %4138 = vmatprep.subr.bf16.mxu0 %v3025
        %4139 = vmatpush1.bf16.msra.mxu0 %v3024
        %4140 = vmatprep.subr.bf16.mxu0 %v3027
        %4141 = vmatpush1.bf16.msra.mxu0 %v3026
        %4142 = vmatprep.subr.bf16.mxu0 %v3029
        %4143 = vmatpush1.bf16.msra.mxu0 %v3028
        %4144 = vmatprep.subr.bf16.mxu0 %v3031
        %4145 = vmatpush1.bf16.msra.mxu0 %v3030
        %4146 = vmatprep.subr.bf16.mxu0 %v3033
        %4147 = vmatpush1.bf16.msra.mxu0 %v3032
        %4148 = vmatprep.subr.bf16.mxu0 %v3035
        %4149 = vmatpush1.bf16.msra.mxu0 %v3034
        %4150 = vmatprep.subr.bf16.mxu0 %v3037
        %4151 = vmatpush1.bf16.msra.mxu0 %v3036
        %4152 = vmatprep.subr.bf16.mxu0 %v3039
        %4153 = vmatpush1.bf16.msra.mxu0 %v3038
        %4154 = vmatprep.subr.bf16.mxu0 %v3041
        %4155 = vmatpush1.bf16.msra.mxu0 %v3040
        %4156 = vmatprep.subr.bf16.mxu0 %v3043
        %4157 = vmatpush1.bf16.msra.mxu0 %v3042
        %4158 = vmatprep.subr.bf16.mxu0 %v3045
        %4159 = vmatpush1.bf16.msra.mxu0 %v3044
        %4160 = vmatprep.subr.bf16.mxu0 %v3047
        %4161 = vmatpush1.bf16.msra.mxu0 %v3046
        %4162 = vmatprep.subr.bf16.mxu0 %v3049
        %4163 = vmatpush1.bf16.msra.mxu0 %v3048
        %4164 = vmatprep.mubr.bf16.mxu0 %v1094
        %4165 = vmatmul.mubr.bf16.gmra.mrb[0].mxu0 %v1086
        %v4166 = vpop.f32.mrb[0].mxu0
        %v4167 = vadd.f32 %v4126, %v4166
        %v4168 = vpop.f32.mrb[0].mxu0
        %v4169 = vadd.f32 %v4128, %v4168
        %v4170 = vpop.f32.mrb[0].mxu0
        %v4171 = vpop.f32.mrb[0].mxu0
        %4172 = vdwg.mxu0
        %4173 = vmatprep.subr.bf16.mxu0 %v3051
        %4174 = vmatpush1.bf16.msra.mxu0 %v3050
        %4175 = vmatprep.subr.bf16.mxu0 %v3053
        %4176 = vmatpush1.bf16.msra.mxu0 %v3052
        %4177 = vmatprep.subr.bf16.mxu0 %v3055
        %4178 = vmatpush1.bf16.msra.mxu0 %v3054
        %4179 = vmatprep.subr.bf16.mxu0 %v3057
        %4180 = vmatpush1.bf16.msra.mxu0 %v3056
        %4181 = vmatprep.subr.bf16.mxu0 %v3059
        %4182 = vmatpush1.bf16.msra.mxu0 %v3058
        %4183 = vmatprep.subr.bf16.mxu0 %v3061
        %4184 = vmatpush1.bf16.msra.mxu0 %v3060
        %4185 = vmatprep.subr.bf16.mxu0 %v3063
        %4186 = vmatpush1.bf16.msra.mxu0 %v3062
        %4187 = vmatprep.subr.bf16.mxu0 %v3065
        %4188 = vmatpush1.bf16.msra.mxu0 %v3064
        %4189 = vmatprep.subr.bf16.mxu0 %v3067
        %4190 = vmatpush1.bf16.msra.mxu0 %v3066
        %4191 = vmatprep.subr.bf16.mxu0 %v3069
        %4192 = vmatpush1.bf16.msra.mxu0 %v3068
        %4193 = vmatprep.subr.bf16.mxu0 %v3071
        %4194 = vmatpush1.bf16.msra.mxu0 %v3070
        %4195 = vmatprep.subr.bf16.mxu0 %v3073
        %4196 = vmatpush1.bf16.msra.mxu0 %v3072
        %4197 = vmatprep.subr.bf16.mxu0 %v3075
        %4198 = vmatpush1.bf16.msra.mxu0 %v3074
        %4199 = vmatprep.subr.bf16.mxu0 %v3077
        %4200 = vmatpush1.bf16.msra.mxu0 %v3076
        %4201 = vmatprep.subr.bf16.mxu0 %v3079
        %4202 = vmatpush1.bf16.msra.mxu0 %v3078
        %4203 = vmatprep.subr.bf16.mxu0 %v3081
        %4204 = vmatpush1.bf16.msra.mxu0 %v3080
        %4205 = vmatprep.mubr.bf16.mxu0 %v1095
        %4206 = vmatmul.mubr.bf16.gmra.mrb[0].mxu0 %v1093
        %v4207 = vpop.f32.mrb[0].mxu0
        %v4208 = vadd.f32 %v4167, %v4207
        %v4209 = vpop.f32.mrb[0].mxu0
        %v4210 = vadd.f32 %v4169, %v4209
        %v4211 = vpop.f32.mrb[0].mxu0
        %v4212 = vpop.f32.mrb[0].mxu0
        %4213 = vdwg.mxu0
        %4214 = vmatprep.subr.bf16.mxu0 %v3083
        %4215 = vmatpush1.bf16.msra.mxu0 %v3082
        %4216 = vmatprep.subr.bf16.mxu0 %v3085
        %4217 = vmatpush1.bf16.msra.mxu0 %v3084
        %4218 = vmatprep.subr.bf16.mxu0 %v3087
        %4219 = vmatpush1.bf16.msra.mxu0 %v3086
        %4220 = vmatprep.subr.bf16.mxu0 %v3089
        %4221 = vmatpush1.bf16.msra.mxu0 %v3088
        %4222 = vmatprep.subr.bf16.mxu0 %v3091
        %4223 = vmatpush1.bf16.msra.mxu0 %v3090
        %4224 = vmatprep.subr.bf16.mxu0 %v3093
        %4225 = vmatpush1.bf16.msra.mxu0 %v3092
        %4226 = vmatprep.subr.bf16.mxu0 %v3095
        %4227 = vmatpush1.bf16.msra.mxu0 %v3094
        %4228 = vmatprep.subr.bf16.mxu0 %v3097
        %4229 = vmatpush1.bf16.msra.mxu0 %v3096
        %4230 = vmatprep.subr.bf16.mxu0 %v3099
        %4231 = vmatpush1.bf16.msra.mxu0 %v3098
        %4232 = vmatprep.subr.bf16.mxu0 %v3101
        %4233 = vmatpush1.bf16.msra.mxu0 %v3100
        %4234 = vmatprep.subr.bf16.mxu0 %v3103
        %4235 = vmatpush1.bf16.msra.mxu0 %v3102
        %4236 = vmatprep.subr.bf16.mxu0 %v3105
        %4237 = vmatpush1.bf16.msra.mxu0 %v3104
        %4238 = vmatprep.subr.bf16.mxu0 %v3107
        %4239 = vmatpush1.bf16.msra.mxu0 %v3106
        %4240 = vmatprep.subr.bf16.mxu0 %v3109
        %4241 = vmatpush1.bf16.msra.mxu0 %v3108
        %4242 = vmatprep.subr.bf16.mxu0 %v3111
        %4243 = vmatpush1.bf16.msra.mxu0 %v3110
        %4244 = vmatprep.subr.bf16.mxu0 %v3113
        %4245 = vmatpush1.bf16.msra.mxu0 %v3112
        %4246 = vmatprep.mubr.bf16.mxu0 %v1111
        %4247 = vmatmul.mubr.bf16.gmra.mrb[0].mxu0 %v1103
        %v4248 = vpop.f32.mrb[0].mxu0
        %v4249 = vadd.f32 %v4208, %v4248
        %v4250 = vpop.f32.mrb[0].mxu0
        %v4251 = vadd.f32 %v4210, %v4250
        %v4252 = vpop.f32.mrb[0].mxu0
        %v4253 = vpop.f32.mrb[0].mxu0
        %4254 = vdwg.mxu0
        %4255 = vmatprep.subr.bf16.mxu0 %v3115
        %4256 = vmatpush1.bf16.msra.mxu0 %v3114
        %4257 = vmatprep.subr.bf16.mxu0 %v3117
        %4258 = vmatpush1.bf16.msra.mxu0 %v3116
        %4259 = vmatprep.subr.bf16.mxu0 %v3119
        %4260 = vmatpush1.bf16.msra.mxu0 %v3118
        %4261 = vmatprep.subr.bf16.mxu0 %v3121
        %4262 = vmatpush1.bf16.msra.mxu0 %v3120
        %4263 = vmatprep.subr.bf16.mxu0 %v3123
        %4264 = vmatpush1.bf16.msra.mxu0 %v3122
        %4265 = vmatprep.subr.bf16.mxu0 %v3125
        %4266 = vmatpush1.bf16.msra.mxu0 %v3124
        %4267 = vmatprep.subr.bf16.mxu0 %v3127
        %4268 = vmatpush1.bf16.msra.mxu0 %v3126
        %4269 = vmatprep.subr.bf16.mxu0 %v3129
        %4270 = vmatpush1.bf16.msra.mxu0 %v3128
        %4271 = vmatprep.subr.bf16.mxu0 %v3131
        %4272 = vmatpush1.bf16.msra.mxu0 %v3130
        %4273 = vmatprep.subr.bf16.mxu0 %v3133
        %4274 = vmatpush1.bf16.msra.mxu0 %v3132
        %4275 = vmatprep.subr.bf16.mxu0 %v3135
        %4276 = vmatpush1.bf16.msra.mxu0 %v3134
        %4277 = vmatprep.subr.bf16.mxu0 %v3137
        %4278 = vmatpush1.bf16.msra.mxu0 %v3136
        %4279 = vmatprep.subr.bf16.mxu0 %v3139
        %4280 = vmatpush1.bf16.msra.mxu0 %v3138
        %4281 = vmatprep.subr.bf16.mxu0 %v3141
        %4282 = vmatpush1.bf16.msra.mxu0 %v3140
        %4283 = vmatprep.subr.bf16.mxu0 %v3143
        %4284 = vmatpush1.bf16.msra.mxu0 %v3142
        %4285 = vmatprep.subr.bf16.mxu0 %v3145
        %4286 = vmatpush1.bf16.msra.mxu0 %v3144
        %4287 = vmatprep.mubr.bf16.mxu0 %v1112
        %4288 = vmatmul.mubr.bf16.gmra.mrb[0].mxu0 %v1110
        %v4289 = vpop.f32.mrb[0].mxu0
        %v4290 = vadd.f32 %v4249, %v4289
        %v4291 = vpop.f32.mrb[0].mxu0
        %v4292 = vadd.f32 %v4251, %v4291
        %v4293 = vpop.f32.mrb[0].mxu0
        %v4294 = vpop.f32.mrb[0].mxu0
        %4295 = vdwg.mxu0
        %4296 = vmatprep.subr.bf16.mxu0 %v3147
        %4297 = vmatpush1.bf16.msra.mxu0 %v3146
        %4298 = vmatprep.subr.bf16.mxu0 %v3149
        %4299 = vmatpush1.bf16.msra.mxu0 %v3148
        %4300 = vmatprep.subr.bf16.mxu0 %v3151
        %4301 = vmatpush1.bf16.msra.mxu0 %v3150
        %4302 = vmatprep.subr.bf16.mxu0 %v3153
        %4303 = vmatpush1.bf16.msra.mxu0 %v3152
        %4304 = vmatprep.subr.bf16.mxu0 %v3155
        %4305 = vmatpush1.bf16.msra.mxu0 %v3154
        %4306 = vmatprep.subr.bf16.mxu0 %v3157
        %4307 = vmatpush1.bf16.msra.mxu0 %v3156
        %4308 = vmatprep.subr.bf16.mxu0 %v3159
        %4309 = vmatpush1.bf16.msra.mxu0 %v3158
        %4310 = vmatprep.subr.bf16.mxu0 %v3161
        %4311 = vmatpush1.bf16.msra.mxu0 %v3160
        %4312 = vmatprep.subr.bf16.mxu0 %v3163
        %4313 = vmatpush1.bf16.msra.mxu0 %v3162
        %4314 = vmatprep.subr.bf16.mxu0 %v3165
        %4315 = vmatpush1.bf16.msra.mxu0 %v3164
        %4316 = vmatprep.subr.bf16.mxu0 %v3167
        %4317 = vmatpush1.bf16.msra.mxu0 %v3166
        %4318 = vmatprep.subr.bf16.mxu0 %v3169
        %4319 = vmatpush1.bf16.msra.mxu0 %v3168
        %4320 = vmatprep.subr.bf16.mxu0 %v3171
        %4321 = vmatpush1.bf16.msra.mxu0 %v3170
        %4322 = vmatprep.subr.bf16.mxu0 %v3173
        %4323 = vmatpush1.bf16.msra.mxu0 %v3172
        %4324 = vmatprep.subr.bf16.mxu0 %v3175
        %4325 = vmatpush1.bf16.msra.mxu0 %v3174
        %4326 = vmatprep.subr.bf16.mxu0 %v3177
        %4327 = vmatpush1.bf16.msra.mxu0 %v3176
        %4328 = vmatprep.mubr.bf16.mxu0 %v1128
        %4329 = vmatmul.mubr.bf16.gmra.mrb[0].mxu0 %v1120
        %v4330 = vpop.f32.mrb[0].mxu0
        %v4331 = vadd.f32 %v4290, %v4330
        %v4332 = vpop.f32.mrb[0].mxu0
        %v4333 = vadd.f32 %v4292, %v4332
        %v4334 = vpop.f32.mrb[0].mxu0
        %v4335 = vpop.f32.mrb[0].mxu0
        %4336 = vdwg.mxu0
        %4337 = vmatprep.subr.bf16.mxu0 %v3179
        %4338 = vmatpush1.bf16.msra.mxu0 %v3178
        %4339 = vmatprep.subr.bf16.mxu0 %v3181
        %4340 = vmatpush1.bf16.msra.mxu0 %v3180
        %4341 = vmatprep.subr.bf16.mxu0 %v3183
        %4342 = vmatpush1.bf16.msra.mxu0 %v3182
        %4343 = vmatprep.subr.bf16.mxu0 %v3185
        %4344 = vmatpush1.bf16.msra.mxu0 %v3184
        %4345 = vmatprep.subr.bf16.mxu0 %v3187
        %4346 = vmatpush1.bf16.msra.mxu0 %v3186
        %4347 = vmatprep.subr.bf16.mxu0 %v3189
        %4348 = vmatpush1.bf16.msra.mxu0 %v3188
        %4349 = vmatprep.subr.bf16.mxu0 %v3191
        %4350 = vmatpush1.bf16.msra.mxu0 %v3190
        %4351 = vmatprep.subr.bf16.mxu0 %v3193
        %4352 = vmatpush1.bf16.msra.mxu0 %v3192
        %4353 = vmatprep.subr.bf16.mxu0 %v3195
        %4354 = vmatpush1.bf16.msra.mxu0 %v3194
        %4355 = vmatprep.subr.bf16.mxu0 %v3197
        %4356 = vmatpush1.bf16.msra.mxu0 %v3196
        %4357 = vmatprep.subr.bf16.mxu0 %v3199
        %4358 = vmatpush1.bf16.msra.mxu0 %v3198
        %4359 = vmatprep.subr.bf16.mxu0 %v3201
        %4360 = vmatpush1.bf16.msra.mxu0 %v3200
        %4361 = vmatprep.subr.bf16.mxu0 %v3203
        %4362 = vmatpush1.bf16.msra.mxu0 %v3202
        %4363 = vmatprep.subr.bf16.mxu0 %v3205
        %4364 = vmatpush1.bf16.msra.mxu0 %v3204
        %4365 = vmatprep.subr.bf16.mxu0 %v3207
        %4366 = vmatpush1.bf16.msra.mxu0 %v3206
        %4367 = vmatprep.subr.bf16.mxu0 %v3209
        %4368 = vmatpush1.bf16.msra.mxu0 %v3208
        %4369 = vmatprep.mubr.bf16.mxu0 %v1129
        %4370 = vmatmul.mubr.bf16.gmra.mrb[0].mxu0 %v1127
        %v4371 = vpop.f32.mrb[0].mxu0
        %v4372 = vadd.f32 %v4331, %v4371
        %v4373 = vpop.f32.mrb[0].mxu0
        %v4374 = vadd.f32 %v4333, %v4373
        %v4375 = vpop.f32.mrb[0].mxu0
        %v4376 = vpop.f32.mrb[0].mxu0
        %4377 = vdwg.mxu0
        %v4378 = vpack.c.bf16 %v4372, %v4372
        %v4379 = vpack.c.bf16 %v4374, %v4374
        %v4380 = vld [vmem:[%s455] sm:$0xff]
        %v4381 = vld [vmem:[%s455 + $0x8] sm:$0xff]
        %v4382 = vld [vmem:[%s455 + $0x10] sm:$0xff]
        %v4383 = vld [vmem:[%s455 + $0x18] sm:$0xff]
        %v4384 = vld [vmem:[%s455 + $0x20] sm:$0xff]
        %v4385 = vld [vmem:[%s455 + $0x28] sm:$0xff]
        %v4386 = vld [vmem:[%s455 + $0x30] sm:$0xff]
        %v4387 = vld [vmem:[%s455 + $0x38] sm:$0xff]
        %v4396 = vcombine.high %v4380, %v4380
        %v4398 = vunpack.c.l.s4 1983009808
        %v4399 = vunpack.c.0.s8 %v4398
        %v4400 = vlaneseq
        %v4401 = vshrl.u32 %v4400, 7
        %v4402 = vsub.s32 %v4399, %v4401
        %v4403 = vrot.slane %v4380, %v4402
        %v4405 = vunpack.c.l.s4 1983009808
        %v4406 = vunpack.c.0.s8 %v4405
        %v4407 = vlaneseq
        %v4408 = vshrl.u32 %v4407, 7
        %v4409 = vsub.s32 %v4406, %v4408
        %v4410 = vrot.slane %v4396, %v4409
        %v4411 = vcombine.high %v4403, %v4403
        %v4412 = vcombine.high %v4410, %v4410
        %v4413 = vcombine.high %v4381, %v4381
        %v4415 = vunpack.c.l.s4 1983009808
        %v4416 = vunpack.c.0.s8 %v4415
        %v4417 = vlaneseq
        %v4418 = vshrl.u32 %v4417, 7
        %v4419 = vsub.s32 %v4416, %v4418
        %v4420 = vrot.slane %v4381, %v4419
        %v4422 = vunpack.c.l.s4 1983009808
        %v4423 = vunpack.c.0.s8 %v4422
        %v4424 = vlaneseq
        %v4425 = vshrl.u32 %v4424, 7
        %v4426 = vsub.s32 %v4423, %v4425
        %v4427 = vrot.slane %v4413, %v4426
        %v4428 = vcombine.high %v4420, %v4420
        %v4429 = vcombine.high %v4427, %v4427
        %v4430 = vcombine.high %v4382, %v4382
        %v4432 = vunpack.c.l.s4 1983009808
        %v4433 = vunpack.c.0.s8 %v4432
        %v4434 = vlaneseq
        %v4435 = vshrl.u32 %v4434, 7
        %v4436 = vsub.s32 %v4433, %v4435
        %v4437 = vrot.slane %v4382, %v4436
        %v4439 = vunpack.c.l.s4 1983009808
        %v4440 = vunpack.c.0.s8 %v4439
        %v4441 = vlaneseq
        %v4442 = vshrl.u32 %v4441, 7
        %v4443 = vsub.s32 %v4440, %v4442
        %v4444 = vrot.slane %v4430, %v4443
        %v4445 = vcombine.high %v4437, %v4437
        %v4446 = vcombine.high %v4444, %v4444
        %v4447 = vcombine.high %v4383, %v4383
        %v4449 = vunpack.c.l.s4 1983009808
        %v4450 = vunpack.c.0.s8 %v4449
        %v4451 = vlaneseq
        %v4452 = vshrl.u32 %v4451, 7
        %v4453 = vsub.s32 %v4450, %v4452
        %v4454 = vrot.slane %v4383, %v4453
        %v4456 = vunpack.c.l.s4 1983009808
        %v4457 = vunpack.c.0.s8 %v4456
        %v4458 = vlaneseq
        %v4459 = vshrl.u32 %v4458, 7
        %v4460 = vsub.s32 %v4457, %v4459
        %v4461 = vrot.slane %v4447, %v4460
        %v4462 = vcombine.high %v4454, %v4454
        %v4463 = vcombine.high %v4461, %v4461
        %v4464 = vcombine.high %v4384, %v4384
        %v4466 = vunpack.c.l.s4 1983009808
        %v4467 = vunpack.c.0.s8 %v4466
        %v4468 = vlaneseq
        %v4469 = vshrl.u32 %v4468, 7
        %v4470 = vsub.s32 %v4467, %v4469
        %v4471 = vrot.slane %v4384, %v4470
        %v4473 = vunpack.c.l.s4 1983009808
        %v4474 = vunpack.c.0.s8 %v4473
        %v4475 = vlaneseq
        %v4476 = vshrl.u32 %v4475, 7
        %v4477 = vsub.s32 %v4474, %v4476
        %v4478 = vrot.slane %v4464, %v4477
        %v4479 = vcombine.high %v4471, %v4471
        %v4480 = vcombine.high %v4478, %v4478
        %v4481 = vcombine.high %v4385, %v4385
        %v4483 = vunpack.c.l.s4 1983009808
        %v4484 = vunpack.c.0.s8 %v4483
        %v4485 = vlaneseq
        %v4486 = vshrl.u32 %v4485, 7
        %v4487 = vsub.s32 %v4484, %v4486
        %v4488 = vrot.slane %v4385, %v4487
        %v4490 = vunpack.c.l.s4 1983009808
        %v4491 = vunpack.c.0.s8 %v4490
        %v4492 = vlaneseq
        %v4493 = vshrl.u32 %v4492, 7
        %v4494 = vsub.s32 %v4491, %v4493
        %v4495 = vrot.slane %v4481, %v4494
        %v4496 = vcombine.high %v4488, %v4488
        %v4497 = vcombine.high %v4495, %v4495
        %v4498 = vcombine.high %v4386, %v4386
        %v4500 = vunpack.c.l.s4 1983009808
        %v4501 = vunpack.c.0.s8 %v4500
        %v4502 = vlaneseq
        %v4503 = vshrl.u32 %v4502, 7
        %v4504 = vsub.s32 %v4501, %v4503
        %v4505 = vrot.slane %v4386, %v4504
        %v4507 = vunpack.c.l.s4 1983009808
        %v4508 = vunpack.c.0.s8 %v4507
        %v4509 = vlaneseq
        %v4510 = vshrl.u32 %v4509, 7
        %v4511 = vsub.s32 %v4508, %v4510
        %v4512 = vrot.slane %v4498, %v4511
        %v4513 = vcombine.high %v4505, %v4505
        %v4514 = vcombine.high %v4512, %v4512
        %v4515 = vcombine.high %v4387, %v4387
        %v4517 = vunpack.c.l.s4 1983009808
        %v4518 = vunpack.c.0.s8 %v4517
        %v4519 = vlaneseq
        %v4520 = vshrl.u32 %v4519, 7
        %v4521 = vsub.s32 %v4518, %v4520
        %v4522 = vrot.slane %v4387, %v4521
        %v4524 = vunpack.c.l.s4 1983009808
        %v4525 = vunpack.c.0.s8 %v4524
        %v4526 = vlaneseq
        %v4527 = vshrl.u32 %v4526, 7
        %v4528 = vsub.s32 %v4525, %v4527
        %v4529 = vrot.slane %v4515, %v4528
        %v4530 = vcombine.high %v4522, %v4522
        %v4531 = vcombine.high %v4529, %v4529
        %4564 = vmatprep.subr.bf16.mxu0 %v2699
        %4565 = vmatpush1.bf16.msra.mxu0 %v2698
        %4566 = vmatprep.subr.bf16.mxu0 %v2701
        %4567 = vmatpush1.bf16.msra.mxu0 %v2700
        %4568 = vmatprep.subr.bf16.mxu0 %v2703
        %4569 = vmatpush1.bf16.msra.mxu0 %v2702
        %4570 = vmatprep.subr.bf16.mxu0 %v2705
        %4571 = vmatpush1.bf16.msra.mxu0 %v2704
        %4572 = vmatprep.subr.bf16.mxu0 %v2707
        %4573 = vmatpush1.bf16.msra.mxu0 %v2706
        %4574 = vmatprep.subr.bf16.mxu0 %v2709
        %4575 = vmatpush1.bf16.msra.mxu0 %v2708
        %4576 = vmatprep.subr.bf16.mxu0 %v2711
        %4577 = vmatpush1.bf16.msra.mxu0 %v2710
        %4578 = vmatprep.subr.bf16.mxu0 %v2713
        %4579 = vmatpush1.bf16.msra.mxu0 %v2712
        %4580 = vmatprep.subr.bf16.mxu0 %v2715
        %4581 = vmatpush1.bf16.msra.mxu0 %v2714
        %4582 = vmatprep.subr.bf16.mxu0 %v2717
        %4583 = vmatpush1.bf16.msra.mxu0 %v2716
        %4584 = vmatprep.subr.bf16.mxu0 %v2719
        %4585 = vmatpush1.bf16.msra.mxu0 %v2718
        %4586 = vmatprep.subr.bf16.mxu0 %v2721
        %4587 = vmatpush1.bf16.msra.mxu0 %v2720
        %4588 = vmatprep.subr.bf16.mxu0 %v2723
        %4589 = vmatpush1.bf16.msra.mxu0 %v2722
        %4590 = vmatprep.subr.bf16.mxu0 %v2725
        %4591 = vmatpush1.bf16.msra.mxu0 %v2724
        %4592 = vmatprep.subr.bf16.mxu0 %v2727
        %4593 = vmatpush1.bf16.msra.mxu0 %v2726
        %4594 = vmatprep.subr.bf16.mxu0 %v2729
        %4595 = vmatpush1.bf16.msra.mxu0 %v2728
        %4596 = vmatprep.mubr.bf16.mxu0 %v4411
        %4597 = vmatmul.mubr.bf16.gmra.mrb[0].mxu0 %v4403
        %v4598 = vpop.f32.mrb[0].mxu0
        %v4599 = vadd.f32 0.0, %v4598
        %v4600 = vpop.f32.mrb[0].mxu0
        %v4601 = vadd.f32 0.0, %v4600
        %v4602 = vpop.f32.mrb[0].mxu0
        %v4603 = vpop.f32.mrb[0].mxu0
        %4604 = vdwg.mxu0
        %4605 = vmatprep.subr.bf16.mxu0 %v2731
        %4606 = vmatpush1.bf16.msra.mxu0 %v2730
        %4607 = vmatprep.subr.bf16.mxu0 %v2733
        %4608 = vmatpush1.bf16.msra.mxu0 %v2732
        %4609 = vmatprep.subr.bf16.mxu0 %v2735
        %4610 = vmatpush1.bf16.msra.mxu0 %v2734
        %4611 = vmatprep.subr.bf16.mxu0 %v2737
        %4612 = vmatpush1.bf16.msra.mxu0 %v2736
        %4613 = vmatprep.subr.bf16.mxu0 %v2739
        %4614 = vmatpush1.bf16.msra.mxu0 %v2738
        %4615 = vmatprep.subr.bf16.mxu0 %v2741
        %4616 = vmatpush1.bf16.msra.mxu0 %v2740
        %4617 = vmatprep.subr.bf16.mxu0 %v2743
        %4618 = vmatpush1.bf16.msra.mxu0 %v2742
        %4619 = vmatprep.subr.bf16.mxu0 %v2745
        %4620 = vmatpush1.bf16.msra.mxu0 %v2744
        %4621 = vmatprep.subr.bf16.mxu0 %v2747
        %4622 = vmatpush1.bf16.msra.mxu0 %v2746
        %4623 = vmatprep.subr.bf16.mxu0 %v2749
        %4624 = vmatpush1.bf16.msra.mxu0 %v2748
        %4625 = vmatprep.subr.bf16.mxu0 %v2751
        %4626 = vmatpush1.bf16.msra.mxu0 %v2750
        %4627 = vmatprep.subr.bf16.mxu0 %v2753
        %4628 = vmatpush1.bf16.msra.mxu0 %v2752
        %4629 = vmatprep.subr.bf16.mxu0 %v2755
        %4630 = vmatpush1.bf16.msra.mxu0 %v2754
        %4631 = vmatprep.subr.bf16.mxu0 %v2757
        %4632 = vmatpush1.bf16.msra.mxu0 %v2756
        %4633 = vmatprep.subr.bf16.mxu0 %v2759
        %4634 = vmatpush1.bf16.msra.mxu0 %v2758
        %4635 = vmatprep.subr.bf16.mxu0 %v2761
        %4636 = vmatpush1.bf16.msra.mxu0 %v2760
        %4637 = vmatprep.mubr.bf16.mxu0 %v4412
        %4638 = vmatmul.mubr.bf16.gmra.mrb[0].mxu0 %v4410
        %v4639 = vpop.f32.mrb[0].mxu0
        %v4640 = vadd.f32 %v4599, %v4639
        %v4641 = vpop.f32.mrb[0].mxu0
        %v4642 = vadd.f32 %v4601, %v4641
        %v4643 = vpop.f32.mrb[0].mxu0
        %v4644 = vpop.f32.mrb[0].mxu0
        %4645 = vdwg.mxu0
        %4646 = vmatprep.subr.bf16.mxu0 %v2763
        %4647 = vmatpush1.bf16.msra.mxu0 %v2762
        %4648 = vmatprep.subr.bf16.mxu0 %v2765
        %4649 = vmatpush1.bf16.msra.mxu0 %v2764
        %4650 = vmatprep.subr.bf16.mxu0 %v2767
        %4651 = vmatpush1.bf16.msra.mxu0 %v2766
        %4652 = vmatprep.subr.bf16.mxu0 %v2769
        %4653 = vmatpush1.bf16.msra.mxu0 %v2768
        %4654 = vmatprep.subr.bf16.mxu0 %v2771
        %4655 = vmatpush1.bf16.msra.mxu0 %v2770
        %4656 = vmatprep.subr.bf16.mxu0 %v2773
        %4657 = vmatpush1.bf16.msra.mxu0 %v2772
        %4658 = vmatprep.subr.bf16.mxu0 %v2775
        %4659 = vmatpush1.bf16.msra.mxu0 %v2774
        %4660 = vmatprep.subr.bf16.mxu0 %v2777
        %4661 = vmatpush1.bf16.msra.mxu0 %v2776
        %4662 = vmatprep.subr.bf16.mxu0 %v2779
        %4663 = vmatpush1.bf16.msra.mxu0 %v2778
        %4664 = vmatprep.subr.bf16.mxu0 %v2781
        %4665 = vmatpush1.bf16.msra.mxu0 %v2780
        %4666 = vmatprep.subr.bf16.mxu0 %v2783
        %4667 = vmatpush1.bf16.msra.mxu0 %v2782
        %4668 = vmatprep.subr.bf16.mxu0 %v2785
        %4669 = vmatpush1.bf16.msra.mxu0 %v2784
        %4670 = vmatprep.subr.bf16.mxu0 %v2787
        %4671 = vmatpush1.bf16.msra.mxu0 %v2786
        %4672 = vmatprep.subr.bf16.mxu0 %v2789
        %4673 = vmatpush1.bf16.msra.mxu0 %v2788
        %4674 = vmatprep.subr.bf16.mxu0 %v2791
        %4675 = vmatpush1.bf16.msra.mxu0 %v2790
        %4676 = vmatprep.subr.bf16.mxu0 %v2793
        %4677 = vmatpush1.bf16.msra.mxu0 %v2792
        %4678 = vmatprep.mubr.bf16.mxu0 %v4428
        %4679 = vmatmul.mubr.bf16.gmra.mrb[0].mxu0 %v4420
        %v4680 = vpop.f32.mrb[0].mxu0
        %v4681 = vadd.f32 %v4640, %v4680
        %v4682 = vpop.f32.mrb[0].mxu0
        %v4683 = vadd.f32 %v4642, %v4682
        %v4684 = vpop.f32.mrb[0].mxu0
        %v4685 = vpop.f32.mrb[0].mxu0
        %4686 = vdwg.mxu0
        %4687 = vmatprep.subr.bf16.mxu0 %v2795
        %4688 = vmatpush1.bf16.msra.mxu0 %v2794
        %4689 = vmatprep.subr.bf16.mxu0 %v2797
        %4690 = vmatpush1.bf16.msra.mxu0 %v2796
        %4691 = vmatprep.subr.bf16.mxu0 %v2799
        %4692 = vmatpush1.bf16.msra.mxu0 %v2798
        %4693 = vmatprep.subr.bf16.mxu0 %v2801
        %4694 = vmatpush1.bf16.msra.mxu0 %v2800
        %4695 = vmatprep.subr.bf16.mxu0 %v2803
        %4696 = vmatpush1.bf16.msra.mxu0 %v2802
        %4697 = vmatprep.subr.bf16.mxu0 %v2805
        %4698 = vmatpush1.bf16.msra.mxu0 %v2804
        %4699 = vmatprep.subr.bf16.mxu0 %v2807
        %4700 = vmatpush1.bf16.msra.mxu0 %v2806
        %4701 = vmatprep.subr.bf16.mxu0 %v2809
        %4702 = vmatpush1.bf16.msra.mxu0 %v2808
        %4703 = vmatprep.subr.bf16.mxu0 %v2811
        %4704 = vmatpush1.bf16.msra.mxu0 %v2810
        %4705 = vmatprep.subr.bf16.mxu0 %v2813
        %4706 = vmatpush1.bf16.msra.mxu0 %v2812
        %4707 = vmatprep.subr.bf16.mxu0 %v2815
        %4708 = vmatpush1.bf16.msra.mxu0 %v2814
        %4709 = vmatprep.subr.bf16.mxu0 %v2817
        %4710 = vmatpush1.bf16.msra.mxu0 %v2816
        %4711 = vmatprep.subr.bf16.mxu0 %v2819
        %4712 = vmatpush1.bf16.msra.mxu0 %v2818
        %4713 = vmatprep.subr.bf16.mxu0 %v2821
        %4714 = vmatpush1.bf16.msra.mxu0 %v2820
        %4715 = vmatprep.subr.bf16.mxu0 %v2823
        %4716 = vmatpush1.bf16.msra.mxu0 %v2822
        %4717 = vmatprep.subr.bf16.mxu0 %v2825
        %4718 = vmatpush1.bf16.msra.mxu0 %v2824
        %4719 = vmatprep.mubr.bf16.mxu0 %v4429
        %4720 = vmatmul.mubr.bf16.gmra.mrb[0].mxu0 %v4427
        %v4721 = vpop.f32.mrb[0].mxu0
        %v4722 = vadd.f32 %v4681, %v4721
        %v4723 = vpop.f32.mrb[0].mxu0
        %v4724 = vadd.f32 %v4683, %v4723
        %v4725 = vpop.f32.mrb[0].mxu0
        %v4726 = vpop.f32.mrb[0].mxu0
        %4727 = vdwg.mxu0
        %4728 = vmatprep.subr.bf16.mxu0 %v2827
        %4729 = vmatpush1.bf16.msra.mxu0 %v2826
        %4730 = vmatprep.subr.bf16.mxu0 %v2829
        %4731 = vmatpush1.bf16.msra.mxu0 %v2828
        %4732 = vmatprep.subr.bf16.mxu0 %v2831
        %4733 = vmatpush1.bf16.msra.mxu0 %v2830
        %4734 = vmatprep.subr.bf16.mxu0 %v2833
        %4735 = vmatpush1.bf16.msra.mxu0 %v2832
        %4736 = vmatprep.subr.bf16.mxu0 %v2835
        %4737 = vmatpush1.bf16.msra.mxu0 %v2834
        %4738 = vmatprep.subr.bf16.mxu0 %v2837
        %4739 = vmatpush1.bf16.msra.mxu0 %v2836
        %4740 = vmatprep.subr.bf16.mxu0 %v2839
        %4741 = vmatpush1.bf16.msra.mxu0 %v2838
        %4742 = vmatprep.subr.bf16.mxu0 %v2841
        %4743 = vmatpush1.bf16.msra.mxu0 %v2840
        %4744 = vmatprep.subr.bf16.mxu0 %v2843
        %4745 = vmatpush1.bf16.msra.mxu0 %v2842
        %4746 = vmatprep.subr.bf16.mxu0 %v2845
        %4747 = vmatpush1.bf16.msra.mxu0 %v2844
        %4748 = vmatprep.subr.bf16.mxu0 %v2847
        %4749 = vmatpush1.bf16.msra.mxu0 %v2846
        %4750 = vmatprep.subr.bf16.mxu0 %v2849
        %4751 = vmatpush1.bf16.msra.mxu0 %v2848
        %4752 = vmatprep.subr.bf16.mxu0 %v2851
        %4753 = vmatpush1.bf16.msra.mxu0 %v2850
        %4754 = vmatprep.subr.bf16.mxu0 %v2853
        %4755 = vmatpush1.bf16.msra.mxu0 %v2852
        %4756 = vmatprep.subr.bf16.mxu0 %v2855
        %4757 = vmatpush1.bf16.msra.mxu0 %v2854
        %4758 = vmatprep.subr.bf16.mxu0 %v2857
        %4759 = vmatpush1.bf16.msra.mxu0 %v2856
        %4760 = vmatprep.mubr.bf16.mxu0 %v4445
        %4761 = vmatmul.mubr.bf16.gmra.mrb[0].mxu0 %v4437
        %v4762 = vpop.f32.mrb[0].mxu0
        %v4763 = vadd.f32 %v4722, %v4762
        %v4764 = vpop.f32.mrb[0].mxu0
        %v4765 = vadd.f32 %v4724, %v4764
        %v4766 = vpop.f32.mrb[0].mxu0
        %v4767 = vpop.f32.mrb[0].mxu0
        %4768 = vdwg.mxu0
        %4769 = vmatprep.subr.bf16.mxu0 %v2859
        %4770 = vmatpush1.bf16.msra.mxu0 %v2858
        %4771 = vmatprep.subr.bf16.mxu0 %v2861
        %4772 = vmatpush1.bf16.msra.mxu0 %v2860
        %4773 = vmatprep.subr.bf16.mxu0 %v2863
        %4774 = vmatpush1.bf16.msra.mxu0 %v2862
        %4775 = vmatprep.subr.bf16.mxu0 %v2865
        %4776 = vmatpush1.bf16.msra.mxu0 %v2864
        %4777 = vmatprep.subr.bf16.mxu0 %v2867
        %4778 = vmatpush1.bf16.msra.mxu0 %v2866
        %4779 = vmatprep.subr.bf16.mxu0 %v2869
        %4780 = vmatpush1.bf16.msra.mxu0 %v2868
        %4781 = vmatprep.subr.bf16.mxu0 %v2871
        %4782 = vmatpush1.bf16.msra.mxu0 %v2870
        %4783 = vmatprep.subr.bf16.mxu0 %v2873
        %4784 = vmatpush1.bf16.msra.mxu0 %v2872
        %4785 = vmatprep.subr.bf16.mxu0 %v2875
        %4786 = vmatpush1.bf16.msra.mxu0 %v2874
        %4787 = vmatprep.subr.bf16.mxu0 %v2877
        %4788 = vmatpush1.bf16.msra.mxu0 %v2876
        %4789 = vmatprep.subr.bf16.mxu0 %v2879
        %4790 = vmatpush1.bf16.msra.mxu0 %v2878
        %4791 = vmatprep.subr.bf16.mxu0 %v2881
        %4792 = vmatpush1.bf16.msra.mxu0 %v2880
        %4793 = vmatprep.subr.bf16.mxu0 %v2883
        %4794 = vmatpush1.bf16.msra.mxu0 %v2882
        %4795 = vmatprep.subr.bf16.mxu0 %v2885
        %4796 = vmatpush1.bf16.msra.mxu0 %v2884
        %4797 = vmatprep.subr.bf16.mxu0 %v2887
        %4798 = vmatpush1.bf16.msra.mxu0 %v2886
        %4799 = vmatprep.subr.bf16.mxu0 %v2889
        %4800 = vmatpush1.bf16.msra.mxu0 %v2888
        %4801 = vmatprep.mubr.bf16.mxu0 %v4446
        %4802 = vmatmul.mubr.bf16.gmra.mrb[0].mxu0 %v4444
        %v4803 = vpop.f32.mrb[0].mxu0
        %v4804 = vadd.f32 %v4763, %v4803
        %v4805 = vpop.f32.mrb[0].mxu0
        %v4806 = vadd.f32 %v4765, %v4805
        %v4807 = vpop.f32.mrb[0].mxu0
        %v4808 = vpop.f32.mrb[0].mxu0
        %4809 = vdwg.mxu0
        %4810 = vmatprep.subr.bf16.mxu0 %v2891
        %4811 = vmatpush1.bf16.msra.mxu0 %v2890
        %4812 = vmatprep.subr.bf16.mxu0 %v2893
        %4813 = vmatpush1.bf16.msra.mxu0 %v2892
        %4814 = vmatprep.subr.bf16.mxu0 %v2895
        %4815 = vmatpush1.bf16.msra.mxu0 %v2894
        %4816 = vmatprep.subr.bf16.mxu0 %v2897
        %4817 = vmatpush1.bf16.msra.mxu0 %v2896
        %4818 = vmatprep.subr.bf16.mxu0 %v2899
        %4819 = vmatpush1.bf16.msra.mxu0 %v2898
        %4820 = vmatprep.subr.bf16.mxu0 %v2901
        %4821 = vmatpush1.bf16.msra.mxu0 %v2900
        %4822 = vmatprep.subr.bf16.mxu0 %v2903
        %4823 = vmatpush1.bf16.msra.mxu0 %v2902
        %4824 = vmatprep.subr.bf16.mxu0 %v2905
        %4825 = vmatpush1.bf16.msra.mxu0 %v2904
        %4826 = vmatprep.subr.bf16.mxu0 %v2907
        %4827 = vmatpush1.bf16.msra.mxu0 %v2906
        %4828 = vmatprep.subr.bf16.mxu0 %v2909
        %4829 = vmatpush1.bf16.msra.mxu0 %v2908
        %4830 = vmatprep.subr.bf16.mxu0 %v2911
        %4831 = vmatpush1.bf16.msra.mxu0 %v2910
        %4832 = vmatprep.subr.bf16.mxu0 %v2913
        %4833 = vmatpush1.bf16.msra.mxu0 %v2912
        %4834 = vmatprep.subr.bf16.mxu0 %v2915
        %4835 = vmatpush1.bf16.msra.mxu0 %v2914
        %4836 = vmatprep.subr.bf16.mxu0 %v2917
        %4837 = vmatpush1.bf16.msra.mxu0 %v2916
        %4838 = vmatprep.subr.bf16.mxu0 %v2919
        %4839 = vmatpush1.bf16.msra.mxu0 %v2918
        %4840 = vmatprep.subr.bf16.mxu0 %v2921
        %4841 = vmatpush1.bf16.msra.mxu0 %v2920
        %4842 = vmatprep.mubr.bf16.mxu0 %v4462
        %4843 = vmatmul.mubr.bf16.gmra.mrb[0].mxu0 %v4454
        %v4844 = vpop.f32.mrb[0].mxu0
        %v4845 = vadd.f32 %v4804, %v4844
        %v4846 = vpop.f32.mrb[0].mxu0
        %v4847 = vadd.f32 %v4806, %v4846
        %v4848 = vpop.f32.mrb[0].mxu0
        %v4849 = vpop.f32.mrb[0].mxu0
        %4850 = vdwg.mxu0
        %4851 = vmatprep.subr.bf16.mxu0 %v2923
        %4852 = vmatpush1.bf16.msra.mxu0 %v2922
        %4853 = vmatprep.subr.bf16.mxu0 %v2925
        %4854 = vmatpush1.bf16.msra.mxu0 %v2924
        %4855 = vmatprep.subr.bf16.mxu0 %v2927
        %4856 = vmatpush1.bf16.msra.mxu0 %v2926
        %4857 = vmatprep.subr.bf16.mxu0 %v2929
        %4858 = vmatpush1.bf16.msra.mxu0 %v2928
        %4859 = vmatprep.subr.bf16.mxu0 %v2931
        %4860 = vmatpush1.bf16.msra.mxu0 %v2930
        %4861 = vmatprep.subr.bf16.mxu0 %v2933
        %4862 = vmatpush1.bf16.msra.mxu0 %v2932
        %4863 = vmatprep.subr.bf16.mxu0 %v2935
        %4864 = vmatpush1.bf16.msra.mxu0 %v2934
        %4865 = vmatprep.subr.bf16.mxu0 %v2937
        %4866 = vmatpush1.bf16.msra.mxu0 %v2936
        %4867 = vmatprep.subr.bf16.mxu0 %v2939
        %4868 = vmatpush1.bf16.msra.mxu0 %v2938
        %4869 = vmatprep.subr.bf16.mxu0 %v2941
        %4870 = vmatpush1.bf16.msra.mxu0 %v2940
        %4871 = vmatprep.subr.bf16.mxu0 %v2943
        %4872 = vmatpush1.bf16.msra.mxu0 %v2942
        %4873 = vmatprep.subr.bf16.mxu0 %v2945
        %4874 = vmatpush1.bf16.msra.mxu0 %v2944
        %4875 = vmatprep.subr.bf16.mxu0 %v2947
        %4876 = vmatpush1.bf16.msra.mxu0 %v2946
        %4877 = vmatprep.subr.bf16.mxu0 %v2949
        %4878 = vmatpush1.bf16.msra.mxu0 %v2948
        %4879 = vmatprep.subr.bf16.mxu0 %v2951
        %4880 = vmatpush1.bf16.msra.mxu0 %v2950
        %4881 = vmatprep.subr.bf16.mxu0 %v2953
        %4882 = vmatpush1.bf16.msra.mxu0 %v2952
        %4883 = vmatprep.mubr.bf16.mxu0 %v4463
        %4884 = vmatmul.mubr.bf16.gmra.mrb[0].mxu0 %v4461
        %v4885 = vpop.f32.mrb[0].mxu0
        %v4886 = vadd.f32 %v4845, %v4885
        %v4887 = vpop.f32.mrb[0].mxu0
        %v4888 = vadd.f32 %v4847, %v4887
        %v4889 = vpop.f32.mrb[0].mxu0
        %v4890 = vpop.f32.mrb[0].mxu0
        %4891 = vdwg.mxu0
        %4892 = vmatprep.subr.bf16.mxu0 %v2955
        %4893 = vmatpush1.bf16.msra.mxu0 %v2954
        %4894 = vmatprep.subr.bf16.mxu0 %v2957
        %4895 = vmatpush1.bf16.msra.mxu0 %v2956
        %4896 = vmatprep.subr.bf16.mxu0 %v2959
        %4897 = vmatpush1.bf16.msra.mxu0 %v2958
        %4898 = vmatprep.subr.bf16.mxu0 %v2961
        %4899 = vmatpush1.bf16.msra.mxu0 %v2960
        %4900 = vmatprep.subr.bf16.mxu0 %v2963
        %4901 = vmatpush1.bf16.msra.mxu0 %v2962
        %4902 = vmatprep.subr.bf16.mxu0 %v2965
        %4903 = vmatpush1.bf16.msra.mxu0 %v2964
        %4904 = vmatprep.subr.bf16.mxu0 %v2967
        %4905 = vmatpush1.bf16.msra.mxu0 %v2966
        %4906 = vmatprep.subr.bf16.mxu0 %v2969
        %4907 = vmatpush1.bf16.msra.mxu0 %v2968
        %4908 = vmatprep.subr.bf16.mxu0 %v2971
        %4909 = vmatpush1.bf16.msra.mxu0 %v2970
        %4910 = vmatprep.subr.bf16.mxu0 %v2973
        %4911 = vmatpush1.bf16.msra.mxu0 %v2972
        %4912 = vmatprep.subr.bf16.mxu0 %v2975
        %4913 = vmatpush1.bf16.msra.mxu0 %v2974
        %4914 = vmatprep.subr.bf16.mxu0 %v2977
        %4915 = vmatpush1.bf16.msra.mxu0 %v2976
        %4916 = vmatprep.subr.bf16.mxu0 %v2979
        %4917 = vmatpush1.bf16.msra.mxu0 %v2978
        %4918 = vmatprep.subr.bf16.mxu0 %v2981
        %4919 = vmatpush1.bf16.msra.mxu0 %v2980
        %4920 = vmatprep.subr.bf16.mxu0 %v2983
        %4921 = vmatpush1.bf16.msra.mxu0 %v2982
        %4922 = vmatprep.subr.bf16.mxu0 %v2985
        %4923 = vmatpush1.bf16.msra.mxu0 %v2984
        %4924 = vmatprep.mubr.bf16.mxu0 %v4479
        %4925 = vmatmul.mubr.bf16.gmra.mrb[0].mxu0 %v4471
        %v4926 = vpop.f32.mrb[0].mxu0
        %v4927 = vadd.f32 %v4886, %v4926
        %v4928 = vpop.f32.mrb[0].mxu0
        %v4929 = vadd.f32 %v4888, %v4928
        %v4930 = vpop.f32.mrb[0].mxu0
        %v4931 = vpop.f32.mrb[0].mxu0
        %4932 = vdwg.mxu0
        %4933 = vmatprep.subr.bf16.mxu0 %v2987
        %4934 = vmatpush1.bf16.msra.mxu0 %v2986
        %4935 = vmatprep.subr.bf16.mxu0 %v2989
        %4936 = vmatpush1.bf16.msra.mxu0 %v2988
        %4937 = vmatprep.subr.bf16.mxu0 %v2991
        %4938 = vmatpush1.bf16.msra.mxu0 %v2990
        %4939 = vmatprep.subr.bf16.mxu0 %v2993
        %4940 = vmatpush1.bf16.msra.mxu0 %v2992
        %4941 = vmatprep.subr.bf16.mxu0 %v2995
        %4942 = vmatpush1.bf16.msra.mxu0 %v2994
        %4943 = vmatprep.subr.bf16.mxu0 %v2997
        %4944 = vmatpush1.bf16.msra.mxu0 %v2996
        %4945 = vmatprep.subr.bf16.mxu0 %v2999
        %4946 = vmatpush1.bf16.msra.mxu0 %v2998
        %4947 = vmatprep.subr.bf16.mxu0 %v3001
        %4948 = vmatpush1.bf16.msra.mxu0 %v3000
        %4949 = vmatprep.subr.bf16.mxu0 %v3003
        %4950 = vmatpush1.bf16.msra.mxu0 %v3002
        %4951 = vmatprep.subr.bf16.mxu0 %v3005
        %4952 = vmatpush1.bf16.msra.mxu0 %v3004
        %4953 = vmatprep.subr.bf16.mxu0 %v3007
        %4954 = vmatpush1.bf16.msra.mxu0 %v3006
        %4955 = vmatprep.subr.bf16.mxu0 %v3009
        %4956 = vmatpush1.bf16.msra.mxu0 %v3008
        %4957 = vmatprep.subr.bf16.mxu0 %v3011
        %4958 = vmatpush1.bf16.msra.mxu0 %v3010
        %4959 = vmatprep.subr.bf16.mxu0 %v3013
        %4960 = vmatpush1.bf16.msra.mxu0 %v3012
        %4961 = vmatprep.subr.bf16.mxu0 %v3015
        %4962 = vmatpush1.bf16.msra.mxu0 %v3014
        %4963 = vmatprep.subr.bf16.mxu0 %v3017
        %4964 = vmatpush1.bf16.msra.mxu0 %v3016
        %4965 = vmatprep.mubr.bf16.mxu0 %v4480
        %4966 = vmatmul.mubr.bf16.gmra.mrb[0].mxu0 %v4478
        %v4967 = vpop.f32.mrb[0].mxu0
        %v4968 = vadd.f32 %v4927, %v4967
        %v4969 = vpop.f32.mrb[0].mxu0
        %v4970 = vadd.f32 %v4929, %v4969
        %v4971 = vpop.f32.mrb[0].mxu0
        %v4972 = vpop.f32.mrb[0].mxu0
        %4973 = vdwg.mxu0
        %4974 = vmatprep.subr.bf16.mxu0 %v3019
        %4975 = vmatpush1.bf16.msra.mxu0 %v3018
        %4976 = vmatprep.subr.bf16.mxu0 %v3021
        %4977 = vmatpush1.bf16.msra.mxu0 %v3020
        %4978 = vmatprep.subr.bf16.mxu0 %v3023
        %4979 = vmatpush1.bf16.msra.mxu0 %v3022
        %4980 = vmatprep.subr.bf16.mxu0 %v3025
        %4981 = vmatpush1.bf16.msra.mxu0 %v3024
        %4982 = vmatprep.subr.bf16.mxu0 %v3027
        %4983 = vmatpush1.bf16.msra.mxu0 %v3026
        %4984 = vmatprep.subr.bf16.mxu0 %v3029
        %4985 = vmatpush1.bf16.msra.mxu0 %v3028
        %4986 = vmatprep.subr.bf16.mxu0 %v3031
        %4987 = vmatpush1.bf16.msra.mxu0 %v3030
        %4988 = vmatprep.subr.bf16.mxu0 %v3033
        %4989 = vmatpush1.bf16.msra.mxu0 %v3032
        %4990 = vmatprep.subr.bf16.mxu0 %v3035
        %4991 = vmatpush1.bf16.msra.mxu0 %v3034
        %4992 = vmatprep.subr.bf16.mxu0 %v3037
        %4993 = vmatpush1.bf16.msra.mxu0 %v3036
        %4994 = vmatprep.subr.bf16.mxu0 %v3039
        %4995 = vmatpush1.bf16.msra.mxu0 %v3038
        %4996 = vmatprep.subr.bf16.mxu0 %v3041
        %4997 = vmatpush1.bf16.msra.mxu0 %v3040
        %4998 = vmatprep.subr.bf16.mxu0 %v3043
        %4999 = vmatpush1.bf16.msra.mxu0 %v3042
        %5000 = vmatprep.subr.bf16.mxu0 %v3045
        %5001 = vmatpush1.bf16.msra.mxu0 %v3044
        %5002 = vmatprep.subr.bf16.mxu0 %v3047
        %5003 = vmatpush1.bf16.msra.mxu0 %v3046
        %5004 = vmatprep.subr.bf16.mxu0 %v3049
        %5005 = vmatpush1.bf16.msra.mxu0 %v3048
        %5006 = vmatprep.mubr.bf16.mxu0 %v4496
        %5007 = vmatmul.mubr.bf16.gmra.mrb[0].mxu0 %v4488
        %v5008 = vpop.f32.mrb[0].mxu0
        %v5009 = vadd.f32 %v4968, %v5008
        %v5010 = vpop.f32.mrb[0].mxu0
        %v5011 = vadd.f32 %v4970, %v5010
        %v5012 = vpop.f32.mrb[0].mxu0
        %v5013 = vpop.f32.mrb[0].mxu0
        %5014 = vdwg.mxu0
        %5015 = vmatprep.subr.bf16.mxu0 %v3051
        %5016 = vmatpush1.bf16.msra.mxu0 %v3050
        %5017 = vmatprep.subr.bf16.mxu0 %v3053
        %5018 = vmatpush1.bf16.msra.mxu0 %v3052
        %5019 = vmatprep.subr.bf16.mxu0 %v3055
        %5020 = vmatpush1.bf16.msra.mxu0 %v3054
        %5021 = vmatprep.subr.bf16.mxu0 %v3057
        %5022 = vmatpush1.bf16.msra.mxu0 %v3056
        %5023 = vmatprep.subr.bf16.mxu0 %v3059
        %5024 = vmatpush1.bf16.msra.mxu0 %v3058
        %5025 = vmatprep.subr.bf16.mxu0 %v3061
        %5026 = vmatpush1.bf16.msra.mxu0 %v3060
        %5027 = vmatprep.subr.bf16.mxu0 %v3063
        %5028 = vmatpush1.bf16.msra.mxu0 %v3062
        %5029 = vmatprep.subr.bf16.mxu0 %v3065
        %5030 = vmatpush1.bf16.msra.mxu0 %v3064
        %5031 = vmatprep.subr.bf16.mxu0 %v3067
        %5032 = vmatpush1.bf16.msra.mxu0 %v3066
        %5033 = vmatprep.subr.bf16.mxu0 %v3069
        %5034 = vmatpush1.bf16.msra.mxu0 %v3068
        %5035 = vmatprep.subr.bf16.mxu0 %v3071
        %5036 = vmatpush1.bf16.msra.mxu0 %v3070
        %5037 = vmatprep.subr.bf16.mxu0 %v3073
        %5038 = vmatpush1.bf16.msra.mxu0 %v3072
        %5039 = vmatprep.subr.bf16.mxu0 %v3075
        %5040 = vmatpush1.bf16.msra.mxu0 %v3074
        %5041 = vmatprep.subr.bf16.mxu0 %v3077
        %5042 = vmatpush1.bf16.msra.mxu0 %v3076
        %5043 = vmatprep.subr.bf16.mxu0 %v3079
        %5044 = vmatpush1.bf16.msra.mxu0 %v3078
        %5045 = vmatprep.subr.bf16.mxu0 %v3081
        %5046 = vmatpush1.bf16.msra.mxu0 %v3080
        %5047 = vmatprep.mubr.bf16.mxu0 %v4497
        %5048 = vmatmul.mubr.bf16.gmra.mrb[0].mxu0 %v4495
        %v5049 = vpop.f32.mrb[0].mxu0
        %v5050 = vadd.f32 %v5009, %v5049
        %v5051 = vpop.f32.mrb[0].mxu0
        %v5052 = vadd.f32 %v5011, %v5051
        %v5053 = vpop.f32.mrb[0].mxu0
        %v5054 = vpop.f32.mrb[0].mxu0
        %5055 = vdwg.mxu0
        %5056 = vmatprep.subr.bf16.mxu0 %v3083
        %5057 = vmatpush1.bf16.msra.mxu0 %v3082
        %5058 = vmatprep.subr.bf16.mxu0 %v3085
        %5059 = vmatpush1.bf16.msra.mxu0 %v3084
        %5060 = vmatprep.subr.bf16.mxu0 %v3087
        %5061 = vmatpush1.bf16.msra.mxu0 %v3086
        %5062 = vmatprep.subr.bf16.mxu0 %v3089
        %5063 = vmatpush1.bf16.msra.mxu0 %v3088
        %5064 = vmatprep.subr.bf16.mxu0 %v3091
        %5065 = vmatpush1.bf16.msra.mxu0 %v3090
        %5066 = vmatprep.subr.bf16.mxu0 %v3093
        %5067 = vmatpush1.bf16.msra.mxu0 %v3092
        %5068 = vmatprep.subr.bf16.mxu0 %v3095
        %5069 = vmatpush1.bf16.msra.mxu0 %v3094
        %5070 = vmatprep.subr.bf16.mxu0 %v3097
        %5071 = vmatpush1.bf16.msra.mxu0 %v3096
        %5072 = vmatprep.subr.bf16.mxu0 %v3099
        %5073 = vmatpush1.bf16.msra.mxu0 %v3098
        %5074 = vmatprep.subr.bf16.mxu0 %v3101
        %5075 = vmatpush1.bf16.msra.mxu0 %v3100
        %5076 = vmatprep.subr.bf16.mxu0 %v3103
        %5077 = vmatpush1.bf16.msra.mxu0 %v3102
        %5078 = vmatprep.subr.bf16.mxu0 %v3105
        %5079 = vmatpush1.bf16.msra.mxu0 %v3104
        %5080 = vmatprep.subr.bf16.mxu0 %v3107
        %5081 = vmatpush1.bf16.msra.mxu0 %v3106
        %5082 = vmatprep.subr.bf16.mxu0 %v3109
        %5083 = vmatpush1.bf16.msra.mxu0 %v3108
        %5084 = vmatprep.subr.bf16.mxu0 %v3111
        %5085 = vmatpush1.bf16.msra.mxu0 %v3110
        %5086 = vmatprep.subr.bf16.mxu0 %v3113
        %5087 = vmatpush1.bf16.msra.mxu0 %v3112
        %5088 = vmatprep.mubr.bf16.mxu0 %v4513
        %5089 = vmatmul.mubr.bf16.gmra.mrb[0].mxu0 %v4505
        %v5090 = vpop.f32.mrb[0].mxu0
        %v5091 = vadd.f32 %v5050, %v5090
        %v5092 = vpop.f32.mrb[0].mxu0
        %v5093 = vadd.f32 %v5052, %v5092
        %v5094 = vpop.f32.mrb[0].mxu0
        %v5095 = vpop.f32.mrb[0].mxu0
        %5096 = vdwg.mxu0
        %5097 = vmatprep.subr.bf16.mxu0 %v3115
        %5098 = vmatpush1.bf16.msra.mxu0 %v3114
        %5099 = vmatprep.subr.bf16.mxu0 %v3117
        %5100 = vmatpush1.bf16.msra.mxu0 %v3116
        %5101 = vmatprep.subr.bf16.mxu0 %v3119
        %5102 = vmatpush1.bf16.msra.mxu0 %v3118
        %5103 = vmatprep.subr.bf16.mxu0 %v3121
        %5104 = vmatpush1.bf16.msra.mxu0 %v3120
        %5105 = vmatprep.subr.bf16.mxu0 %v3123
        %5106 = vmatpush1.bf16.msra.mxu0 %v3122
        %5107 = vmatprep.subr.bf16.mxu0 %v3125
        %5108 = vmatpush1.bf16.msra.mxu0 %v3124
        %5109 = vmatprep.subr.bf16.mxu0 %v3127
        %5110 = vmatpush1.bf16.msra.mxu0 %v3126
        %5111 = vmatprep.subr.bf16.mxu0 %v3129
        %5112 = vmatpush1.bf16.msra.mxu0 %v3128
        %5113 = vmatprep.subr.bf16.mxu0 %v3131
        %5114 = vmatpush1.bf16.msra.mxu0 %v3130
        %5115 = vmatprep.subr.bf16.mxu0 %v3133
        %5116 = vmatpush1.bf16.msra.mxu0 %v3132
        %5117 = vmatprep.subr.bf16.mxu0 %v3135
        %5118 = vmatpush1.bf16.msra.mxu0 %v3134
        %5119 = vmatprep.subr.bf16.mxu0 %v3137
        %5120 = vmatpush1.bf16.msra.mxu0 %v3136
        %5121 = vmatprep.subr.bf16.mxu0 %v3139
        %5122 = vmatpush1.bf16.msra.mxu0 %v3138
        %5123 = vmatprep.subr.bf16.mxu0 %v3141
        %5124 = vmatpush1.bf16.msra.mxu0 %v3140
        %5125 = vmatprep.subr.bf16.mxu0 %v3143
        %5126 = vmatpush1.bf16.msra.mxu0 %v3142
        %5127 = vmatprep.subr.bf16.mxu0 %v3145
        %5128 = vmatpush1.bf16.msra.mxu0 %v3144
        %5129 = vmatprep.mubr.bf16.mxu0 %v4514
        %5130 = vmatmul.mubr.bf16.gmra.mrb[0].mxu0 %v4512
        %v5131 = vpop.f32.mrb[0].mxu0
        %v5132 = vadd.f32 %v5091, %v5131
        %v5133 = vpop.f32.mrb[0].mxu0
        %v5134 = vadd.f32 %v5093, %v5133
        %v5135 = vpop.f32.mrb[0].mxu0
        %v5136 = vpop.f32.mrb[0].mxu0
        %5137 = vdwg.mxu0
        %5138 = vmatprep.subr.bf16.mxu0 %v3147
        %5139 = vmatpush1.bf16.msra.mxu0 %v3146
        %5140 = vmatprep.subr.bf16.mxu0 %v3149
        %5141 = vmatpush1.bf16.msra.mxu0 %v3148
        %5142 = vmatprep.subr.bf16.mxu0 %v3151
        %5143 = vmatpush1.bf16.msra.mxu0 %v3150
        %5144 = vmatprep.subr.bf16.mxu0 %v3153
        %5145 = vmatpush1.bf16.msra.mxu0 %v3152
        %5146 = vmatprep.subr.bf16.mxu0 %v3155
        %5147 = vmatpush1.bf16.msra.mxu0 %v3154
        %5148 = vmatprep.subr.bf16.mxu0 %v3157
        %5149 = vmatpush1.bf16.msra.mxu0 %v3156
        %5150 = vmatprep.subr.bf16.mxu0 %v3159
        %5151 = vmatpush1.bf16.msra.mxu0 %v3158
        %5152 = vmatprep.subr.bf16.mxu0 %v3161
        %5153 = vmatpush1.bf16.msra.mxu0 %v3160
        %5154 = vmatprep.subr.bf16.mxu0 %v3163
        %5155 = vmatpush1.bf16.msra.mxu0 %v3162
        %5156 = vmatprep.subr.bf16.mxu0 %v3165
        %5157 = vmatpush1.bf16.msra.mxu0 %v3164
        %5158 = vmatprep.subr.bf16.mxu0 %v3167
        %5159 = vmatpush1.bf16.msra.mxu0 %v3166
        %5160 = vmatprep.subr.bf16.mxu0 %v3169
        %5161 = vmatpush1.bf16.msra.mxu0 %v3168
        %5162 = vmatprep.subr.bf16.mxu0 %v3171
        %5163 = vmatpush1.bf16.msra.mxu0 %v3170
        %5164 = vmatprep.subr.bf16.mxu0 %v3173
        %5165 = vmatpush1.bf16.msra.mxu0 %v3172
        %5166 = vmatprep.subr.bf16.mxu0 %v3175
        %5167 = vmatpush1.bf16.msra.mxu0 %v3174
        %5168 = vmatprep.subr.bf16.mxu0 %v3177
        %5169 = vmatpush1.bf16.msra.mxu0 %v3176
        %5170 = vmatprep.mubr.bf16.mxu0 %v4530
        %5171 = vmatmul.mubr.bf16.gmra.mrb[0].mxu0 %v4522
        %v5172 = vpop.f32.mrb[0].mxu0
        %v5173 = vadd.f32 %v5132, %v5172
        %v5174 = vpop.f32.mrb[0].mxu0
        %v5175 = vadd.f32 %v5134, %v5174
        %v5176 = vpop.f32.mrb[0].mxu0
        %v5177 = vpop.f32.mrb[0].mxu0
        %5178 = vdwg.mxu0
        %5179 = vmatprep.subr.bf16.mxu0 %v3179
        %5180 = vmatpush1.bf16.msra.mxu0 %v3178
        %5181 = vmatprep.subr.bf16.mxu0 %v3181
        %5182 = vmatpush1.bf16.msra.mxu0 %v3180
        %5183 = vmatprep.subr.bf16.mxu0 %v3183
        %5184 = vmatpush1.bf16.msra.mxu0 %v3182
        %5185 = vmatprep.subr.bf16.mxu0 %v3185
        %5186 = vmatpush1.bf16.msra.mxu0 %v3184
        %5187 = vmatprep.subr.bf16.mxu0 %v3187
        %5188 = vmatpush1.bf16.msra.mxu0 %v3186
        %5189 = vmatprep.subr.bf16.mxu0 %v3189
        %5190 = vmatpush1.bf16.msra.mxu0 %v3188
        %5191 = vmatprep.subr.bf16.mxu0 %v3191
        %5192 = vmatpush1.bf16.msra.mxu0 %v3190
        %5193 = vmatprep.subr.bf16.mxu0 %v3193
        %5194 = vmatpush1.bf16.msra.mxu0 %v3192
        %5195 = vmatprep.subr.bf16.mxu0 %v3195
        %5196 = vmatpush1.bf16.msra.mxu0 %v3194
        %5197 = vmatprep.subr.bf16.mxu0 %v3197
        %5198 = vmatpush1.bf16.msra.mxu0 %v3196
        %5199 = vmatprep.subr.bf16.mxu0 %v3199
        %5200 = vmatpush1.bf16.msra.mxu0 %v3198
        %5201 = vmatprep.subr.bf16.mxu0 %v3201
        %5202 = vmatpush1.bf16.msra.mxu0 %v3200
        %5203 = vmatprep.subr.bf16.mxu0 %v3203
        %5204 = vmatpush1.bf16.msra.mxu0 %v3202
        %5205 = vmatprep.subr.bf16.mxu0 %v3205
        %5206 = vmatpush1.bf16.msra.mxu0 %v3204
        %5207 = vmatprep.subr.bf16.mxu0 %v3207
        %5208 = vmatpush1.bf16.msra.mxu0 %v3206
        %5209 = vmatprep.subr.bf16.mxu0 %v3209
        %5210 = vmatpush1.bf16.msra.mxu0 %v3208
        %5211 = vmatprep.mubr.bf16.mxu0 %v4531
        %5212 = vmatmul.mubr.bf16.gmra.mrb[0].mxu0 %v4529
        %v5213 = vpop.f32.mrb[0].mxu0
        %v5214 = vadd.f32 %v5173, %v5213
        %v5215 = vpop.f32.mrb[0].mxu0
        %v5216 = vadd.f32 %v5175, %v5215
        %v5217 = vpop.f32.mrb[0].mxu0
        %v5218 = vpop.f32.mrb[0].mxu0
        %5219 = vdwg.mxu0
        %v5220 = vpack.c.bf16 %v5214, %v5214
        %v5221 = vpack.c.bf16 %v5216, %v5216
        %v5222 = vld [vmem:[%s455 + $0x40] sm:$0xff]
        %v5223 = vld [vmem:[%s455 + $0x48] sm:$0xff]
        %v5224 = vld [vmem:[%s455 + $0x50] sm:$0xff]
        %v5225 = vld [vmem:[%s455 + $0x58] sm:$0xff]
        %v5226 = vld [vmem:[%s455 + $0x60] sm:$0xff]
        %v5227 = vld [vmem:[%s455 + $0x68] sm:$0xff]
        %v5228 = vld [vmem:[%s455 + $0x70] sm:$0xff]
        %v5229 = vld [vmem:[%s455 + $0x78] sm:$0xff]
        %v5238 = vcombine.high %v5222, %v5222
        %v5240 = vunpack.c.l.s4 1983009808
        %v5241 = vunpack.c.0.s8 %v5240
        %v5242 = vlaneseq
        %v5243 = vshrl.u32 %v5242, 7
        %v5244 = vsub.s32 %v5241, %v5243
        %v5245 = vrot.slane %v5222, %v5244
        %v5247 = vunpack.c.l.s4 1983009808
        %v5248 = vunpack.c.0.s8 %v5247
        %v5249 = vlaneseq
        %v5250 = vshrl.u32 %v5249, 7
        %v5251 = vsub.s32 %v5248, %v5250
        %v5252 = vrot.slane %v5238, %v5251
        %v5253 = vcombine.high %v5245, %v5245
        %v5254 = vcombine.high %v5252, %v5252
        %v5255 = vcombine.high %v5223, %v5223
        %v5257 = vunpack.c.l.s4 1983009808
        %v5258 = vunpack.c.0.s8 %v5257
        %v5259 = vlaneseq
        %v5260 = vshrl.u32 %v5259, 7
        %v5261 = vsub.s32 %v5258, %v5260
        %v5262 = vrot.slane %v5223, %v5261
        %v5264 = vunpack.c.l.s4 1983009808
        %v5265 = vunpack.c.0.s8 %v5264
        %v5266 = vlaneseq
        %v5267 = vshrl.u32 %v5266, 7
        %v5268 = vsub.s32 %v5265, %v5267
        %v5269 = vrot.slane %v5255, %v5268
        %v5270 = vcombine.high %v5262, %v5262
        %v5271 = vcombine.high %v5269, %v5269
        %v5272 = vcombine.high %v5224, %v5224
        %v5274 = vunpack.c.l.s4 1983009808
        %v5275 = vunpack.c.0.s8 %v5274
        %v5276 = vlaneseq
        %v5277 = vshrl.u32 %v5276, 7
        %v5278 = vsub.s32 %v5275, %v5277
        %v5279 = vrot.slane %v5224, %v5278
        %v5281 = vunpack.c.l.s4 1983009808
        %v5282 = vunpack.c.0.s8 %v5281
        %v5283 = vlaneseq
        %v5284 = vshrl.u32 %v5283, 7
        %v5285 = vsub.s32 %v5282, %v5284
        %v5286 = vrot.slane %v5272, %v5285
        %v5287 = vcombine.high %v5279, %v5279
        %v5288 = vcombine.high %v5286, %v5286
        %v5289 = vcombine.high %v5225, %v5225
        %v5291 = vunpack.c.l.s4 1983009808
        %v5292 = vunpack.c.0.s8 %v5291
        %v5293 = vlaneseq
        %v5294 = vshrl.u32 %v5293, 7
        %v5295 = vsub.s32 %v5292, %v5294
        %v5296 = vrot.slane %v5225, %v5295
        %v5298 = vunpack.c.l.s4 1983009808
        %v5299 = vunpack.c.0.s8 %v5298
        %v5300 = vlaneseq
        %v5301 = vshrl.u32 %v5300, 7
        %v5302 = vsub.s32 %v5299, %v5301
        %v5303 = vrot.slane %v5289, %v5302
        %v5304 = vcombine.high %v5296, %v5296
        %v5305 = vcombine.high %v5303, %v5303
        %v5306 = vcombine.high %v5226, %v5226
        %v5308 = vunpack.c.l.s4 1983009808
        %v5309 = vunpack.c.0.s8 %v5308
        %v5310 = vlaneseq
        %v5311 = vshrl.u32 %v5310, 7
        %v5312 = vsub.s32 %v5309, %v5311
        %v5313 = vrot.slane %v5226, %v5312
        %v5315 = vunpack.c.l.s4 1983009808
        %v5316 = vunpack.c.0.s8 %v5315
        %v5317 = vlaneseq
        %v5318 = vshrl.u32 %v5317, 7
        %v5319 = vsub.s32 %v5316, %v5318
        %v5320 = vrot.slane %v5306, %v5319
        %v5321 = vcombine.high %v5313, %v5313
        %v5322 = vcombine.high %v5320, %v5320
        %v5323 = vcombine.high %v5227, %v5227
        %v5325 = vunpack.c.l.s4 1983009808
        %v5326 = vunpack.c.0.s8 %v5325
        %v5327 = vlaneseq
        %v5328 = vshrl.u32 %v5327, 7
        %v5329 = vsub.s32 %v5326, %v5328
        %v5330 = vrot.slane %v5227, %v5329
        %v5332 = vunpack.c.l.s4 1983009808
        %v5333 = vunpack.c.0.s8 %v5332
        %v5334 = vlaneseq
        %v5335 = vshrl.u32 %v5334, 7
        %v5336 = vsub.s32 %v5333, %v5335
        %v5337 = vrot.slane %v5323, %v5336
        %v5338 = vcombine.high %v5330, %v5330
        %v5339 = vcombine.high %v5337, %v5337
        %v5340 = vcombine.high %v5228, %v5228
        %v5342 = vunpack.c.l.s4 1983009808
        %v5343 = vunpack.c.0.s8 %v5342
        %v5344 = vlaneseq
        %v5345 = vshrl.u32 %v5344, 7
        %v5346 = vsub.s32 %v5343, %v5345
        %v5347 = vrot.slane %v5228, %v5346
        %v5349 = vunpack.c.l.s4 1983009808
        %v5350 = vunpack.c.0.s8 %v5349
        %v5351 = vlaneseq
        %v5352 = vshrl.u32 %v5351, 7
        %v5353 = vsub.s32 %v5350, %v5352
        %v5354 = vrot.slane %v5340, %v5353
        %v5355 = vcombine.high %v5347, %v5347
        %v5356 = vcombine.high %v5354, %v5354
        %v5357 = vcombine.high %v5229, %v5229
        %v5359 = vunpack.c.l.s4 1983009808
        %v5360 = vunpack.c.0.s8 %v5359
        %v5361 = vlaneseq
        %v5362 = vshrl.u32 %v5361, 7
        %v5363 = vsub.s32 %v5360, %v5362
        %v5364 = vrot.slane %v5229, %v5363
        %v5366 = vunpack.c.l.s4 1983009808
        %v5367 = vunpack.c.0.s8 %v5366
        %v5368 = vlaneseq
        %v5369 = vshrl.u32 %v5368, 7
        %v5370 = vsub.s32 %v5367, %v5369
        %v5371 = vrot.slane %v5357, %v5370
        %v5372 = vcombine.high %v5364, %v5364
        %v5373 = vcombine.high %v5371, %v5371
        %5406 = vmatprep.subr.bf16.mxu0 %v2699
        %5407 = vmatpush1.bf16.msra.mxu0 %v2698
        %5408 = vmatprep.subr.bf16.mxu0 %v2701
        %5409 = vmatpush1.bf16.msra.mxu0 %v2700
        %5410 = vmatprep.subr.bf16.mxu0 %v2703
        %5411 = vmatpush1.bf16.msra.mxu0 %v2702
        %5412 = vmatprep.subr.bf16.mxu0 %v2705
        %5413 = vmatpush1.bf16.msra.mxu0 %v2704
        %5414 = vmatprep.subr.bf16.mxu0 %v2707
        %5415 = vmatpush1.bf16.msra.mxu0 %v2706
        %5416 = vmatprep.subr.bf16.mxu0 %v2709
        %5417 = vmatpush1.bf16.msra.mxu0 %v2708
        %5418 = vmatprep.subr.bf16.mxu0 %v2711
        %5419 = vmatpush1.bf16.msra.mxu0 %v2710
        %5420 = vmatprep.subr.bf16.mxu0 %v2713
        %5421 = vmatpush1.bf16.msra.mxu0 %v2712
        %5422 = vmatprep.subr.bf16.mxu0 %v2715
        %5423 = vmatpush1.bf16.msra.mxu0 %v2714
        %5424 = vmatprep.subr.bf16.mxu0 %v2717
        %5425 = vmatpush1.bf16.msra.mxu0 %v2716
        %5426 = vmatprep.subr.bf16.mxu0 %v2719
        %5427 = vmatpush1.bf16.msra.mxu0 %v2718
        %5428 = vmatprep.subr.bf16.mxu0 %v2721
        %5429 = vmatpush1.bf16.msra.mxu0 %v2720
        %5430 = vmatprep.subr.bf16.mxu0 %v2723
        %5431 = vmatpush1.bf16.msra.mxu0 %v2722
        %5432 = vmatprep.subr.bf16.mxu0 %v2725
        %5433 = vmatpush1.bf16.msra.mxu0 %v2724
        %5434 = vmatprep.subr.bf16.mxu0 %v2727
        %5435 = vmatpush1.bf16.msra.mxu0 %v2726
        %5436 = vmatprep.subr.bf16.mxu0 %v2729
        %5437 = vmatpush1.bf16.msra.mxu0 %v2728
        %5438 = vmatprep.mubr.bf16.mxu0 %v5253
        %5439 = vmatmul.mubr.bf16.gmra.mrb[0].mxu0 %v5245
        %v5440 = vpop.f32.mrb[0].mxu0
        %v5441 = vadd.f32 0.0, %v5440
        %v5442 = vpop.f32.mrb[0].mxu0
        %v5443 = vadd.f32 0.0, %v5442
        %v5444 = vpop.f32.mrb[0].mxu0
        %v5445 = vpop.f32.mrb[0].mxu0
        %5446 = vdwg.mxu0
        %5447 = vmatprep.subr.bf16.mxu0 %v2731
        %5448 = vmatpush1.bf16.msra.mxu0 %v2730
        %5449 = vmatprep.subr.bf16.mxu0 %v2733
        %5450 = vmatpush1.bf16.msra.mxu0 %v2732
        %5451 = vmatprep.subr.bf16.mxu0 %v2735
        %5452 = vmatpush1.bf16.msra.mxu0 %v2734
        %5453 = vmatprep.subr.bf16.mxu0 %v2737
        %5454 = vmatpush1.bf16.msra.mxu0 %v2736
        %5455 = vmatprep.subr.bf16.mxu0 %v2739
        %5456 = vmatpush1.bf16.msra.mxu0 %v2738
        %5457 = vmatprep.subr.bf16.mxu0 %v2741
        %5458 = vmatpush1.bf16.msra.mxu0 %v2740
        %5459 = vmatprep.subr.bf16.mxu0 %v2743
        %5460 = vmatpush1.bf16.msra.mxu0 %v2742
        %5461 = vmatprep.subr.bf16.mxu0 %v2745
        %5462 = vmatpush1.bf16.msra.mxu0 %v2744
        %5463 = vmatprep.subr.bf16.mxu0 %v2747
        %5464 = vmatpush1.bf16.msra.mxu0 %v2746
        %5465 = vmatprep.subr.bf16.mxu0 %v2749
        %5466 = vmatpush1.bf16.msra.mxu0 %v2748
        %5467 = vmatprep.subr.bf16.mxu0 %v2751
        %5468 = vmatpush1.bf16.msra.mxu0 %v2750
        %5469 = vmatprep.subr.bf16.mxu0 %v2753
        %5470 = vmatpush1.bf16.msra.mxu0 %v2752
        %5471 = vmatprep.subr.bf16.mxu0 %v2755
        %5472 = vmatpush1.bf16.msra.mxu0 %v2754
        %5473 = vmatprep.subr.bf16.mxu0 %v2757
        %5474 = vmatpush1.bf16.msra.mxu0 %v2756
        %5475 = vmatprep.subr.bf16.mxu0 %v2759
        %5476 = vmatpush1.bf16.msra.mxu0 %v2758
        %5477 = vmatprep.subr.bf16.mxu0 %v2761
        %5478 = vmatpush1.bf16.msra.mxu0 %v2760
        %5479 = vmatprep.mubr.bf16.mxu0 %v5254
        %5480 = vmatmul.mubr.bf16.gmra.mrb[0].mxu0 %v5252
        %v5481 = vpop.f32.mrb[0].mxu0
        %v5482 = vadd.f32 %v5441, %v5481
        %v5483 = vpop.f32.mrb[0].mxu0
        %v5484 = vadd.f32 %v5443, %v5483
        %v5485 = vpop.f32.mrb[0].mxu0
        %v5486 = vpop.f32.mrb[0].mxu0
        %5487 = vdwg.mxu0
        %5488 = vmatprep.subr.bf16.mxu0 %v2763
        %5489 = vmatpush1.bf16.msra.mxu0 %v2762
        %5490 = vmatprep.subr.bf16.mxu0 %v2765
        %5491 = vmatpush1.bf16.msra.mxu0 %v2764
        %5492 = vmatprep.subr.bf16.mxu0 %v2767
        %5493 = vmatpush1.bf16.msra.mxu0 %v2766
        %5494 = vmatprep.subr.bf16.mxu0 %v2769
        %5495 = vmatpush1.bf16.msra.mxu0 %v2768
        %5496 = vmatprep.subr.bf16.mxu0 %v2771
        %5497 = vmatpush1.bf16.msra.mxu0 %v2770
        %5498 = vmatprep.subr.bf16.mxu0 %v2773
        %5499 = vmatpush1.bf16.msra.mxu0 %v2772
        %5500 = vmatprep.subr.bf16.mxu0 %v2775
        %5501 = vmatpush1.bf16.msra.mxu0 %v2774
        %5502 = vmatprep.subr.bf16.mxu0 %v2777
        %5503 = vmatpush1.bf16.msra.mxu0 %v2776
        %5504 = vmatprep.subr.bf16.mxu0 %v2779
        %5505 = vmatpush1.bf16.msra.mxu0 %v2778
        %5506 = vmatprep.subr.bf16.mxu0 %v2781
        %5507 = vmatpush1.bf16.msra.mxu0 %v2780
        %5508 = vmatprep.subr.bf16.mxu0 %v2783
        %5509 = vmatpush1.bf16.msra.mxu0 %v2782
        %5510 = vmatprep.subr.bf16.mxu0 %v2785
        %5511 = vmatpush1.bf16.msra.mxu0 %v2784
        %5512 = vmatprep.subr.bf16.mxu0 %v2787
        %5513 = vmatpush1.bf16.msra.mxu0 %v2786
        %5514 = vmatprep.subr.bf16.mxu0 %v2789
        %5515 = vmatpush1.bf16.msra.mxu0 %v2788
        %5516 = vmatprep.subr.bf16.mxu0 %v2791
        %5517 = vmatpush1.bf16.msra.mxu0 %v2790
        %5518 = vmatprep.subr.bf16.mxu0 %v2793
        %5519 = vmatpush1.bf16.msra.mxu0 %v2792
        %5520 = vmatprep.mubr.bf16.mxu0 %v5270
        %5521 = vmatmul.mubr.bf16.gmra.mrb[0].mxu0 %v5262
        %v5522 = vpop.f32.mrb[0].mxu0
        %v5523 = vadd.f32 %v5482, %v5522
        %v5524 = vpop.f32.mrb[0].mxu0
        %v5525 = vadd.f32 %v5484, %v5524
        %v5526 = vpop.f32.mrb[0].mxu0
        %v5527 = vpop.f32.mrb[0].mxu0
        %5528 = vdwg.mxu0
        %5529 = vmatprep.subr.bf16.mxu0 %v2795
        %5530 = vmatpush1.bf16.msra.mxu0 %v2794
        %5531 = vmatprep.subr.bf16.mxu0 %v2797
        %5532 = vmatpush1.bf16.msra.mxu0 %v2796
        %5533 = vmatprep.subr.bf16.mxu0 %v2799
        %5534 = vmatpush1.bf16.msra.mxu0 %v2798
        %5535 = vmatprep.subr.bf16.mxu0 %v2801
        %5536 = vmatpush1.bf16.msra.mxu0 %v2800
        %5537 = vmatprep.subr.bf16.mxu0 %v2803
        %5538 = vmatpush1.bf16.msra.mxu0 %v2802
        %5539 = vmatprep.subr.bf16.mxu0 %v2805
        %5540 = vmatpush1.bf16.msra.mxu0 %v2804
        %5541 = vmatprep.subr.bf16.mxu0 %v2807
        %5542 = vmatpush1.bf16.msra.mxu0 %v2806
        %5543 = vmatprep.subr.bf16.mxu0 %v2809
        %5544 = vmatpush1.bf16.msra.mxu0 %v2808
        %5545 = vmatprep.subr.bf16.mxu0 %v2811
        %5546 = vmatpush1.bf16.msra.mxu0 %v2810
        %5547 = vmatprep.subr.bf16.mxu0 %v2813
        %5548 = vmatpush1.bf16.msra.mxu0 %v2812
        %5549 = vmatprep.subr.bf16.mxu0 %v2815
        %5550 = vmatpush1.bf16.msra.mxu0 %v2814
        %5551 = vmatprep.subr.bf16.mxu0 %v2817
        %5552 = vmatpush1.bf16.msra.mxu0 %v2816
        %5553 = vmatprep.subr.bf16.mxu0 %v2819
        %5554 = vmatpush1.bf16.msra.mxu0 %v2818
        %5555 = vmatprep.subr.bf16.mxu0 %v2821
        %5556 = vmatpush1.bf16.msra.mxu0 %v2820
        %5557 = vmatprep.subr.bf16.mxu0 %v2823
        %5558 = vmatpush1.bf16.msra.mxu0 %v2822
        %5559 = vmatprep.subr.bf16.mxu0 %v2825
        %5560 = vmatpush1.bf16.msra.mxu0 %v2824
        %5561 = vmatprep.mubr.bf16.mxu0 %v5271
        %5562 = vmatmul.mubr.bf16.gmra.mrb[0].mxu0 %v5269
        %v5563 = vpop.f32.mrb[0].mxu0
        %v5564 = vadd.f32 %v5523, %v5563
        %v5565 = vpop.f32.mrb[0].mxu0
        %v5566 = vadd.f32 %v5525, %v5565
        %v5567 = vpop.f32.mrb[0].mxu0
        %v5568 = vpop.f32.mrb[0].mxu0
        %5569 = vdwg.mxu0
        %5570 = vmatprep.subr.bf16.mxu0 %v2827
        %5571 = vmatpush1.bf16.msra.mxu0 %v2826
        %5572 = vmatprep.subr.bf16.mxu0 %v2829
        %5573 = vmatpush1.bf16.msra.mxu0 %v2828
        %5574 = vmatprep.subr.bf16.mxu0 %v2831
        %5575 = vmatpush1.bf16.msra.mxu0 %v2830
        %5576 = vmatprep.subr.bf16.mxu0 %v2833
        %5577 = vmatpush1.bf16.msra.mxu0 %v2832
        %5578 = vmatprep.subr.bf16.mxu0 %v2835
        %5579 = vmatpush1.bf16.msra.mxu0 %v2834
        %5580 = vmatprep.subr.bf16.mxu0 %v2837
        %5581 = vmatpush1.bf16.msra.mxu0 %v2836
        %5582 = vmatprep.subr.bf16.mxu0 %v2839
        %5583 = vmatpush1.bf16.msra.mxu0 %v2838
        %5584 = vmatprep.subr.bf16.mxu0 %v2841
        %5585 = vmatpush1.bf16.msra.mxu0 %v2840
        %5586 = vmatprep.subr.bf16.mxu0 %v2843
        %5587 = vmatpush1.bf16.msra.mxu0 %v2842
        %5588 = vmatprep.subr.bf16.mxu0 %v2845
        %5589 = vmatpush1.bf16.msra.mxu0 %v2844
        %5590 = vmatprep.subr.bf16.mxu0 %v2847
        %5591 = vmatpush1.bf16.msra.mxu0 %v2846
        %5592 = vmatprep.subr.bf16.mxu0 %v2849
        %5593 = vmatpush1.bf16.msra.mxu0 %v2848
        %5594 = vmatprep.subr.bf16.mxu0 %v2851
        %5595 = vmatpush1.bf16.msra.mxu0 %v2850
        %5596 = vmatprep.subr.bf16.mxu0 %v2853
        %5597 = vmatpush1.bf16.msra.mxu0 %v2852
        %5598 = vmatprep.subr.bf16.mxu0 %v2855
        %5599 = vmatpush1.bf16.msra.mxu0 %v2854
        %5600 = vmatprep.subr.bf16.mxu0 %v2857
        %5601 = vmatpush1.bf16.msra.mxu0 %v2856
        %5602 = vmatprep.mubr.bf16.mxu0 %v5287
        %5603 = vmatmul.mubr.bf16.gmra.mrb[0].mxu0 %v5279
        %v5604 = vpop.f32.mrb[0].mxu0
        %v5605 = vadd.f32 %v5564, %v5604
        %v5606 = vpop.f32.mrb[0].mxu0
        %v5607 = vadd.f32 %v5566, %v5606
        %v5608 = vpop.f32.mrb[0].mxu0
        %v5609 = vpop.f32.mrb[0].mxu0
        %5610 = vdwg.mxu0
        %5611 = vmatprep.subr.bf16.mxu0 %v2859
        %5612 = vmatpush1.bf16.msra.mxu0 %v2858
        %5613 = vmatprep.subr.bf16.mxu0 %v2861
        %5614 = vmatpush1.bf16.msra.mxu0 %v2860
        %5615 = vmatprep.subr.bf16.mxu0 %v2863
        %5616 = vmatpush1.bf16.msra.mxu0 %v2862
        %5617 = vmatprep.subr.bf16.mxu0 %v2865
        %5618 = vmatpush1.bf16.msra.mxu0 %v2864
        %5619 = vmatprep.subr.bf16.mxu0 %v2867
        %5620 = vmatpush1.bf16.msra.mxu0 %v2866
        %5621 = vmatprep.subr.bf16.mxu0 %v2869
        %5622 = vmatpush1.bf16.msra.mxu0 %v2868
        %5623 = vmatprep.subr.bf16.mxu0 %v2871
        %5624 = vmatpush1.bf16.msra.mxu0 %v2870
        %5625 = vmatprep.subr.bf16.mxu0 %v2873
        %5626 = vmatpush1.bf16.msra.mxu0 %v2872
        %5627 = vmatprep.subr.bf16.mxu0 %v2875
        %5628 = vmatpush1.bf16.msra.mxu0 %v2874
        %5629 = vmatprep.subr.bf16.mxu0 %v2877
        %5630 = vmatpush1.bf16.msra.mxu0 %v2876
        %5631 = vmatprep.subr.bf16.mxu0 %v2879
        %5632 = vmatpush1.bf16.msra.mxu0 %v2878
        %5633 = vmatprep.subr.bf16.mxu0 %v2881
        %5634 = vmatpush1.bf16.msra.mxu0 %v2880
        %5635 = vmatprep.subr.bf16.mxu0 %v2883
        %5636 = vmatpush1.bf16.msra.mxu0 %v2882
        %5637 = vmatprep.subr.bf16.mxu0 %v2885
        %5638 = vmatpush1.bf16.msra.mxu0 %v2884
        %5639 = vmatprep.subr.bf16.mxu0 %v2887
        %5640 = vmatpush1.bf16.msra.mxu0 %v2886
        %5641 = vmatprep.subr.bf16.mxu0 %v2889
        %5642 = vmatpush1.bf16.msra.mxu0 %v2888
        %5643 = vmatprep.mubr.bf16.mxu0 %v5288
        %5644 = vmatmul.mubr.bf16.gmra.mrb[0].mxu0 %v5286
        %v5645 = vpop.f32.mrb[0].mxu0
        %v5646 = vadd.f32 %v5605, %v5645
        %v5647 = vpop.f32.mrb[0].mxu0
        %v5648 = vadd.f32 %v5607, %v5647
        %v5649 = vpop.f32.mrb[0].mxu0
        %v5650 = vpop.f32.mrb[0].mxu0
        %5651 = vdwg.mxu0
        %5652 = vmatprep.subr.bf16.mxu0 %v2891
        %5653 = vmatpush1.bf16.msra.mxu0 %v2890
        %5654 = vmatprep.subr.bf16.mxu0 %v2893
        %5655 = vmatpush1.bf16.msra.mxu0 %v2892
        %5656 = vmatprep.subr.bf16.mxu0 %v2895
        %5657 = vmatpush1.bf16.msra.mxu0 %v2894
        %5658 = vmatprep.subr.bf16.mxu0 %v2897
        %5659 = vmatpush1.bf16.msra.mxu0 %v2896
        %5660 = vmatprep.subr.bf16.mxu0 %v2899
        %5661 = vmatpush1.bf16.msra.mxu0 %v2898
        %5662 = vmatprep.subr.bf16.mxu0 %v2901
        %5663 = vmatpush1.bf16.msra.mxu0 %v2900
        %5664 = vmatprep.subr.bf16.mxu0 %v2903
        %5665 = vmatpush1.bf16.msra.mxu0 %v2902
        %5666 = vmatprep.subr.bf16.mxu0 %v2905
        %5667 = vmatpush1.bf16.msra.mxu0 %v2904
        %5668 = vmatprep.subr.bf16.mxu0 %v2907
        %5669 = vmatpush1.bf16.msra.mxu0 %v2906
        %5670 = vmatprep.subr.bf16.mxu0 %v2909
        %5671 = vmatpush1.bf16.msra.mxu0 %v2908
        %5672 = vmatprep.subr.bf16.mxu0 %v2911
        %5673 = vmatpush1.bf16.msra.mxu0 %v2910
        %5674 = vmatprep.subr.bf16.mxu0 %v2913
        %5675 = vmatpush1.bf16.msra.mxu0 %v2912
        %5676 = vmatprep.subr.bf16.mxu0 %v2915
        %5677 = vmatpush1.bf16.msra.mxu0 %v2914
        %5678 = vmatprep.subr.bf16.mxu0 %v2917
        %5679 = vmatpush1.bf16.msra.mxu0 %v2916
        %5680 = vmatprep.subr.bf16.mxu0 %v2919
        %5681 = vmatpush1.bf16.msra.mxu0 %v2918
        %5682 = vmatprep.subr.bf16.mxu0 %v2921
        %5683 = vmatpush1.bf16.msra.mxu0 %v2920
        %5684 = vmatprep.mubr.bf16.mxu0 %v5304
        %5685 = vmatmul.mubr.bf16.gmra.mrb[0].mxu0 %v5296
        %v5686 = vpop.f32.mrb[0].mxu0
        %v5687 = vadd.f32 %v5646, %v5686
        %v5688 = vpop.f32.mrb[0].mxu0
        %v5689 = vadd.f32 %v5648, %v5688
        %v5690 = vpop.f32.mrb[0].mxu0
        %v5691 = vpop.f32.mrb[0].mxu0
        %5692 = vdwg.mxu0
        %5693 = vmatprep.subr.bf16.mxu0 %v2923
        %5694 = vmatpush1.bf16.msra.mxu0 %v2922
        %5695 = vmatprep.subr.bf16.mxu0 %v2925
        %5696 = vmatpush1.bf16.msra.mxu0 %v2924
        %5697 = vmatprep.subr.bf16.mxu0 %v2927
        %5698 = vmatpush1.bf16.msra.mxu0 %v2926
        %5699 = vmatprep.subr.bf16.mxu0 %v2929
        %5700 = vmatpush1.bf16.msra.mxu0 %v2928
        %5701 = vmatprep.subr.bf16.mxu0 %v2931
        %5702 = vmatpush1.bf16.msra.mxu0 %v2930
        %5703 = vmatprep.subr.bf16.mxu0 %v2933
        %5704 = vmatpush1.bf16.msra.mxu0 %v2932
        %5705 = vmatprep.subr.bf16.mxu0 %v2935
        %5706 = vmatpush1.bf16.msra.mxu0 %v2934
        %5707 = vmatprep.subr.bf16.mxu0 %v2937
        %5708 = vmatpush1.bf16.msra.mxu0 %v2936
        %5709 = vmatprep.subr.bf16.mxu0 %v2939
        %5710 = vmatpush1.bf16.msra.mxu0 %v2938
        %5711 = vmatprep.subr.bf16.mxu0 %v2941
        %5712 = vmatpush1.bf16.msra.mxu0 %v2940
        %5713 = vmatprep.subr.bf16.mxu0 %v2943
        %5714 = vmatpush1.bf16.msra.mxu0 %v2942
        %5715 = vmatprep.subr.bf16.mxu0 %v2945
        %5716 = vmatpush1.bf16.msra.mxu0 %v2944
        %5717 = vmatprep.subr.bf16.mxu0 %v2947
        %5718 = vmatpush1.bf16.msra.mxu0 %v2946
        %5719 = vmatprep.subr.bf16.mxu0 %v2949
        %5720 = vmatpush1.bf16.msra.mxu0 %v2948
        %5721 = vmatprep.subr.bf16.mxu0 %v2951
        %5722 = vmatpush1.bf16.msra.mxu0 %v2950
        %5723 = vmatprep.subr.bf16.mxu0 %v2953
        %5724 = vmatpush1.bf16.msra.mxu0 %v2952
        %5725 = vmatprep.mubr.bf16.mxu0 %v5305
        %5726 = vmatmul.mubr.bf16.gmra.mrb[0].mxu0 %v5303
        %v5727 = vpop.f32.mrb[0].mxu0
        %v5728 = vadd.f32 %v5687, %v5727
        %v5729 = vpop.f32.mrb[0].mxu0
        %v5730 = vadd.f32 %v5689, %v5729
        %v5731 = vpop.f32.mrb[0].mxu0
        %v5732 = vpop.f32.mrb[0].mxu0
        %5733 = vdwg.mxu0
        %5734 = vmatprep.subr.bf16.mxu0 %v2955
        %5735 = vmatpush1.bf16.msra.mxu0 %v2954
        %5736 = vmatprep.subr.bf16.mxu0 %v2957
        %5737 = vmatpush1.bf16.msra.mxu0 %v2956
        %5738 = vmatprep.subr.bf16.mxu0 %v2959
        %5739 = vmatpush1.bf16.msra.mxu0 %v2958
        %5740 = vmatprep.subr.bf16.mxu0 %v2961
        %5741 = vmatpush1.bf16.msra.mxu0 %v2960
        %5742 = vmatprep.subr.bf16.mxu0 %v2963
        %5743 = vmatpush1.bf16.msra.mxu0 %v2962
        %5744 = vmatprep.subr.bf16.mxu0 %v2965
        %5745 = vmatpush1.bf16.msra.mxu0 %v2964
        %5746 = vmatprep.subr.bf16.mxu0 %v2967
        %5747 = vmatpush1.bf16.msra.mxu0 %v2966
        %5748 = vmatprep.subr.bf16.mxu0 %v2969
        %5749 = vmatpush1.bf16.msra.mxu0 %v2968
        %5750 = vmatprep.subr.bf16.mxu0 %v2971
        %5751 = vmatpush1.bf16.msra.mxu0 %v2970
        %5752 = vmatprep.subr.bf16.mxu0 %v2973
        %5753 = vmatpush1.bf16.msra.mxu0 %v2972
        %5754 = vmatprep.subr.bf16.mxu0 %v2975
        %5755 = vmatpush1.bf16.msra.mxu0 %v2974
        %5756 = vmatprep.subr.bf16.mxu0 %v2977
        %5757 = vmatpush1.bf16.msra.mxu0 %v2976
        %5758 = vmatprep.subr.bf16.mxu0 %v2979
        %5759 = vmatpush1.bf16.msra.mxu0 %v2978
        %5760 = vmatprep.subr.bf16.mxu0 %v2981
        %5761 = vmatpush1.bf16.msra.mxu0 %v2980
        %5762 = vmatprep.subr.bf16.mxu0 %v2983
        %5763 = vmatpush1.bf16.msra.mxu0 %v2982
        %5764 = vmatprep.subr.bf16.mxu0 %v2985
        %5765 = vmatpush1.bf16.msra.mxu0 %v2984
        %5766 = vmatprep.mubr.bf16.mxu0 %v5321
        %5767 = vmatmul.mubr.bf16.gmra.mrb[0].mxu0 %v5313
        %v5768 = vpop.f32.mrb[0].mxu0
        %v5769 = vadd.f32 %v5728, %v5768
        %v5770 = vpop.f32.mrb[0].mxu0
        %v5771 = vadd.f32 %v5730, %v5770
        %v5772 = vpop.f32.mrb[0].mxu0
        %v5773 = vpop.f32.mrb[0].mxu0
        %5774 = vdwg.mxu0
        %5775 = vmatprep.subr.bf16.mxu0 %v2987
        %5776 = vmatpush1.bf16.msra.mxu0 %v2986
        %5777 = vmatprep.subr.bf16.mxu0 %v2989
        %5778 = vmatpush1.bf16.msra.mxu0 %v2988
        %5779 = vmatprep.subr.bf16.mxu0 %v2991
        %5780 = vmatpush1.bf16.msra.mxu0 %v2990
        %5781 = vmatprep.subr.bf16.mxu0 %v2993
        %5782 = vmatpush1.bf16.msra.mxu0 %v2992
        %5783 = vmatprep.subr.bf16.mxu0 %v2995
        %5784 = vmatpush1.bf16.msra.mxu0 %v2994
        %5785 = vmatprep.subr.bf16.mxu0 %v2997
        %5786 = vmatpush1.bf16.msra.mxu0 %v2996
        %5787 = vmatprep.subr.bf16.mxu0 %v2999
        %5788 = vmatpush1.bf16.msra.mxu0 %v2998
        %5789 = vmatprep.subr.bf16.mxu0 %v3001
        %5790 = vmatpush1.bf16.msra.mxu0 %v3000
        %5791 = vmatprep.subr.bf16.mxu0 %v3003
        %5792 = vmatpush1.bf16.msra.mxu0 %v3002
        %5793 = vmatprep.subr.bf16.mxu0 %v3005
        %5794 = vmatpush1.bf16.msra.mxu0 %v3004
        %5795 = vmatprep.subr.bf16.mxu0 %v3007
        %5796 = vmatpush1.bf16.msra.mxu0 %v3006
        %5797 = vmatprep.subr.bf16.mxu0 %v3009
        %5798 = vmatpush1.bf16.msra.mxu0 %v3008
        %5799 = vmatprep.subr.bf16.mxu0 %v3011
        %5800 = vmatpush1.bf16.msra.mxu0 %v3010
        %5801 = vmatprep.subr.bf16.mxu0 %v3013
        %5802 = vmatpush1.bf16.msra.mxu0 %v3012
        %5803 = vmatprep.subr.bf16.mxu0 %v3015
        %5804 = vmatpush1.bf16.msra.mxu0 %v3014
        %5805 = vmatprep.subr.bf16.mxu0 %v3017
        %5806 = vmatpush1.bf16.msra.mxu0 %v3016
        %5807 = vmatprep.mubr.bf16.mxu0 %v5322
        %5808 = vmatmul.mubr.bf16.gmra.mrb[0].mxu0 %v5320
        %v5809 = vpop.f32.mrb[0].mxu0
        %v5810 = vadd.f32 %v5769, %v5809
        %v5811 = vpop.f32.mrb[0].mxu0
        %v5812 = vadd.f32 %v5771, %v5811
        %v5813 = vpop.f32.mrb[0].mxu0
        %v5814 = vpop.f32.mrb[0].mxu0
        %5815 = vdwg.mxu0
        %5816 = vmatprep.subr.bf16.mxu0 %v3019
        %5817 = vmatpush1.bf16.msra.mxu0 %v3018
        %5818 = vmatprep.subr.bf16.mxu0 %v3021
        %5819 = vmatpush1.bf16.msra.mxu0 %v3020
        %5820 = vmatprep.subr.bf16.mxu0 %v3023
        %5821 = vmatpush1.bf16.msra.mxu0 %v3022
        %5822 = vmatprep.subr.bf16.mxu0 %v3025
        %5823 = vmatpush1.bf16.msra.mxu0 %v3024
        %5824 = vmatprep.subr.bf16.mxu0 %v3027
        %5825 = vmatpush1.bf16.msra.mxu0 %v3026
        %5826 = vmatprep.subr.bf16.mxu0 %v3029
        %5827 = vmatpush1.bf16.msra.mxu0 %v3028
        %5828 = vmatprep.subr.bf16.mxu0 %v3031
        %5829 = vmatpush1.bf16.msra.mxu0 %v3030
        %5830 = vmatprep.subr.bf16.mxu0 %v3033
        %5831 = vmatpush1.bf16.msra.mxu0 %v3032
        %5832 = vmatprep.subr.bf16.mxu0 %v3035
        %5833 = vmatpush1.bf16.msra.mxu0 %v3034
        %5834 = vmatprep.subr.bf16.mxu0 %v3037
        %5835 = vmatpush1.bf16.msra.mxu0 %v3036
        %5836 = vmatprep.subr.bf16.mxu0 %v3039
        %5837 = vmatpush1.bf16.msra.mxu0 %v3038
        %5838 = vmatprep.subr.bf16.mxu0 %v3041
        %5839 = vmatpush1.bf16.msra.mxu0 %v3040
        %5840 = vmatprep.subr.bf16.mxu0 %v3043
        %5841 = vmatpush1.bf16.msra.mxu0 %v3042
        %5842 = vmatprep.subr.bf16.mxu0 %v3045
        %5843 = vmatpush1.bf16.msra.mxu0 %v3044
        %5844 = vmatprep.subr.bf16.mxu0 %v3047
        %5845 = vmatpush1.bf16.msra.mxu0 %v3046
        %5846 = vmatprep.subr.bf16.mxu0 %v3049
        %5847 = vmatpush1.bf16.msra.mxu0 %v3048
        %5848 = vmatprep.mubr.bf16.mxu0 %v5338
        %5849 = vmatmul.mubr.bf16.gmra.mrb[0].mxu0 %v5330
        %v5850 = vpop.f32.mrb[0].mxu0
        %v5851 = vadd.f32 %v5810, %v5850
        %v5852 = vpop.f32.mrb[0].mxu0
        %v5853 = vadd.f32 %v5812, %v5852
        %v5854 = vpop.f32.mrb[0].mxu0
        %v5855 = vpop.f32.mrb[0].mxu0
        %5856 = vdwg.mxu0
        %5857 = vmatprep.subr.bf16.mxu0 %v3051
        %5858 = vmatpush1.bf16.msra.mxu0 %v3050
        %5859 = vmatprep.subr.bf16.mxu0 %v3053
        %5860 = vmatpush1.bf16.msra.mxu0 %v3052
        %5861 = vmatprep.subr.bf16.mxu0 %v3055
        %5862 = vmatpush1.bf16.msra.mxu0 %v3054
        %5863 = vmatprep.subr.bf16.mxu0 %v3057
        %5864 = vmatpush1.bf16.msra.mxu0 %v3056
        %5865 = vmatprep.subr.bf16.mxu0 %v3059
        %5866 = vmatpush1.bf16.msra.mxu0 %v3058
        %5867 = vmatprep.subr.bf16.mxu0 %v3061
        %5868 = vmatpush1.bf16.msra.mxu0 %v3060
        %5869 = vmatprep.subr.bf16.mxu0 %v3063
        %5870 = vmatpush1.bf16.msra.mxu0 %v3062
        %5871 = vmatprep.subr.bf16.mxu0 %v3065
        %5872 = vmatpush1.bf16.msra.mxu0 %v3064
        %5873 = vmatprep.subr.bf16.mxu0 %v3067
        %5874 = vmatpush1.bf16.msra.mxu0 %v3066
        %5875 = vmatprep.subr.bf16.mxu0 %v3069
        %5876 = vmatpush1.bf16.msra.mxu0 %v3068
        %5877 = vmatprep.subr.bf16.mxu0 %v3071
        %5878 = vmatpush1.bf16.msra.mxu0 %v3070
        %5879 = vmatprep.subr.bf16.mxu0 %v3073
        %5880 = vmatpush1.bf16.msra.mxu0 %v3072
        %5881 = vmatprep.subr.bf16.mxu0 %v3075
        %5882 = vmatpush1.bf16.msra.mxu0 %v3074
        %5883 = vmatprep.subr.bf16.mxu0 %v3077
        %5884 = vmatpush1.bf16.msra.mxu0 %v3076
        %5885 = vmatprep.subr.bf16.mxu0 %v3079
        %5886 = vmatpush1.bf16.msra.mxu0 %v3078
        %5887 = vmatprep.subr.bf16.mxu0 %v3081
        %5888 = vmatpush1.bf16.msra.mxu0 %v3080
        %5889 = vmatprep.mubr.bf16.mxu0 %v5339
        %5890 = vmatmul.mubr.bf16.gmra.mrb[0].mxu0 %v5337
        %v5891 = vpop.f32.mrb[0].mxu0
        %v5892 = vadd.f32 %v5851, %v5891
        %v5893 = vpop.f32.mrb[0].mxu0
        %v5894 = vadd.f32 %v5853, %v5893
        %v5895 = vpop.f32.mrb[0].mxu0
        %v5896 = vpop.f32.mrb[0].mxu0
        %5897 = vdwg.mxu0
        %5898 = vmatprep.subr.bf16.mxu0 %v3083
        %5899 = vmatpush1.bf16.msra.mxu0 %v3082
        %5900 = vmatprep.subr.bf16.mxu0 %v3085
        %5901 = vmatpush1.bf16.msra.mxu0 %v3084
        %5902 = vmatprep.subr.bf16.mxu0 %v3087
        %5903 = vmatpush1.bf16.msra.mxu0 %v3086
        %5904 = vmatprep.subr.bf16.mxu0 %v3089
        %5905 = vmatpush1.bf16.msra.mxu0 %v3088
        %5906 = vmatprep.subr.bf16.mxu0 %v3091
        %5907 = vmatpush1.bf16.msra.mxu0 %v3090
        %5908 = vmatprep.subr.bf16.mxu0 %v3093
        %5909 = vmatpush1.bf16.msra.mxu0 %v3092
        %5910 = vmatprep.subr.bf16.mxu0 %v3095
        %5911 = vmatpush1.bf16.msra.mxu0 %v3094
        %5912 = vmatprep.subr.bf16.mxu0 %v3097
        %5913 = vmatpush1.bf16.msra.mxu0 %v3096
        %5914 = vmatprep.subr.bf16.mxu0 %v3099
        %5915 = vmatpush1.bf16.msra.mxu0 %v3098
        %5916 = vmatprep.subr.bf16.mxu0 %v3101
        %5917 = vmatpush1.bf16.msra.mxu0 %v3100
        %5918 = vmatprep.subr.bf16.mxu0 %v3103
        %5919 = vmatpush1.bf16.msra.mxu0 %v3102
        %5920 = vmatprep.subr.bf16.mxu0 %v3105
        %5921 = vmatpush1.bf16.msra.mxu0 %v3104
        %5922 = vmatprep.subr.bf16.mxu0 %v3107
        %5923 = vmatpush1.bf16.msra.mxu0 %v3106
        %5924 = vmatprep.subr.bf16.mxu0 %v3109
        %5925 = vmatpush1.bf16.msra.mxu0 %v3108
        %5926 = vmatprep.subr.bf16.mxu0 %v3111
        %5927 = vmatpush1.bf16.msra.mxu0 %v3110
        %5928 = vmatprep.subr.bf16.mxu0 %v3113
        %5929 = vmatpush1.bf16.msra.mxu0 %v3112
        %5930 = vmatprep.mubr.bf16.mxu0 %v5355
        %5931 = vmatmul.mubr.bf16.gmra.mrb[0].mxu0 %v5347
        %v5932 = vpop.f32.mrb[0].mxu0
        %v5933 = vadd.f32 %v5892, %v5932
        %v5934 = vpop.f32.mrb[0].mxu0
        %v5935 = vadd.f32 %v5894, %v5934
        %v5936 = vpop.f32.mrb[0].mxu0
        %v5937 = vpop.f32.mrb[0].mxu0
        %5938 = vdwg.mxu0
        %5939 = vmatprep.subr.bf16.mxu0 %v3115
        %5940 = vmatpush1.bf16.msra.mxu0 %v3114
        %5941 = vmatprep.subr.bf16.mxu0 %v3117
        %5942 = vmatpush1.bf16.msra.mxu0 %v3116
        %5943 = vmatprep.subr.bf16.mxu0 %v3119
        %5944 = vmatpush1.bf16.msra.mxu0 %v3118
        %5945 = vmatprep.subr.bf16.mxu0 %v3121
        %5946 = vmatpush1.bf16.msra.mxu0 %v3120
        %5947 = vmatprep.subr.bf16.mxu0 %v3123
        %5948 = vmatpush1.bf16.msra.mxu0 %v3122
        %5949 = vmatprep.subr.bf16.mxu0 %v3125
        %5950 = vmatpush1.bf16.msra.mxu0 %v3124
        %5951 = vmatprep.subr.bf16.mxu0 %v3127
        %5952 = vmatpush1.bf16.msra.mxu0 %v3126
        %5953 = vmatprep.subr.bf16.mxu0 %v3129
        %5954 = vmatpush1.bf16.msra.mxu0 %v3128
        %5955 = vmatprep.subr.bf16.mxu0 %v3131
        %5956 = vmatpush1.bf16.msra.mxu0 %v3130
        %5957 = vmatprep.subr.bf16.mxu0 %v3133
        %5958 = vmatpush1.bf16.msra.mxu0 %v3132
        %5959 = vmatprep.subr.bf16.mxu0 %v3135
        %5960 = vmatpush1.bf16.msra.mxu0 %v3134
        %5961 = vmatprep.subr.bf16.mxu0 %v3137
        %5962 = vmatpush1.bf16.msra.mxu0 %v3136
        %5963 = vmatprep.subr.bf16.mxu0 %v3139
        %5964 = vmatpush1.bf16.msra.mxu0 %v3138
        %5965 = vmatprep.subr.bf16.mxu0 %v3141
        %5966 = vmatpush1.bf16.msra.mxu0 %v3140
        %5967 = vmatprep.subr.bf16.mxu0 %v3143
        %5968 = vmatpush1.bf16.msra.mxu0 %v3142
        %5969 = vmatprep.subr.bf16.mxu0 %v3145
        %5970 = vmatpush1.bf16.msra.mxu0 %v3144
        %5971 = vmatprep.mubr.bf16.mxu0 %v5356
        %5972 = vmatmul.mubr.bf16.gmra.mrb[0].mxu0 %v5354
        %v5973 = vpop.f32.mrb[0].mxu0
        %v5974 = vadd.f32 %v5933, %v5973
        %v5975 = vpop.f32.mrb[0].mxu0
        %v5976 = vadd.f32 %v5935, %v5975
        %v5977 = vpop.f32.mrb[0].mxu0
        %v5978 = vpop.f32.mrb[0].mxu0
        %5979 = vdwg.mxu0
        %5980 = vmatprep.subr.bf16.mxu0 %v3147
        %5981 = vmatpush1.bf16.msra.mxu0 %v3146
        %5982 = vmatprep.subr.bf16.mxu0 %v3149
        %5983 = vmatpush1.bf16.msra.mxu0 %v3148
        %5984 = vmatprep.subr.bf16.mxu0 %v3151
        %5985 = vmatpush1.bf16.msra.mxu0 %v3150
        %5986 = vmatprep.subr.bf16.mxu0 %v3153
        %5987 = vmatpush1.bf16.msra.mxu0 %v3152
        %5988 = vmatprep.subr.bf16.mxu0 %v3155
        %5989 = vmatpush1.bf16.msra.mxu0 %v3154
        %5990 = vmatprep.subr.bf16.mxu0 %v3157
        %5991 = vmatpush1.bf16.msra.mxu0 %v3156
        %5992 = vmatprep.subr.bf16.mxu0 %v3159
        %5993 = vmatpush1.bf16.msra.mxu0 %v3158
        %5994 = vmatprep.subr.bf16.mxu0 %v3161
        %5995 = vmatpush1.bf16.msra.mxu0 %v3160
        %5996 = vmatprep.subr.bf16.mxu0 %v3163
        %5997 = vmatpush1.bf16.msra.mxu0 %v3162
        %5998 = vmatprep.subr.bf16.mxu0 %v3165
        %5999 = vmatpush1.bf16.msra.mxu0 %v3164
        %6000 = vmatprep.subr.bf16.mxu0 %v3167
        %6001 = vmatpush1.bf16.msra.mxu0 %v3166
        %6002 = vmatprep.subr.bf16.mxu0 %v3169
        %6003 = vmatpush1.bf16.msra.mxu0 %v3168
        %6004 = vmatprep.subr.bf16.mxu0 %v3171
        %6005 = vmatpush1.bf16.msra.mxu0 %v3170
        %6006 = vmatprep.subr.bf16.mxu0 %v3173
        %6007 = vmatpush1.bf16.msra.mxu0 %v3172
        %6008 = vmatprep.subr.bf16.mxu0 %v3175
        %6009 = vmatpush1.bf16.msra.mxu0 %v3174
        %6010 = vmatprep.subr.bf16.mxu0 %v3177
        %6011 = vmatpush1.bf16.msra.mxu0 %v3176
        %6012 = vmatprep.mubr.bf16.mxu0 %v5372
        %6013 = vmatmul.mubr.bf16.gmra.mrb[0].mxu0 %v5364
        %v6014 = vpop.f32.mrb[0].mxu0
        %v6015 = vadd.f32 %v5974, %v6014
        %v6016 = vpop.f32.mrb[0].mxu0
        %v6017 = vadd.f32 %v5976, %v6016
        %v6018 = vpop.f32.mrb[0].mxu0
        %v6019 = vpop.f32.mrb[0].mxu0
        %6020 = vdwg.mxu0
        %6021 = vmatprep.subr.bf16.mxu0 %v3179
        %6022 = vmatpush1.bf16.msra.mxu0 %v3178
        %6023 = vmatprep.subr.bf16.mxu0 %v3181
        %6024 = vmatpush1.bf16.msra.mxu0 %v3180
        %6025 = vmatprep.subr.bf16.mxu0 %v3183
        %6026 = vmatpush1.bf16.msra.mxu0 %v3182
        %6027 = vmatprep.subr.bf16.mxu0 %v3185
        %6028 = vmatpush1.bf16.msra.mxu0 %v3184
        %6029 = vmatprep.subr.bf16.mxu0 %v3187
        %6030 = vmatpush1.bf16.msra.mxu0 %v3186
        %6031 = vmatprep.subr.bf16.mxu0 %v3189
        %6032 = vmatpush1.bf16.msra.mxu0 %v3188
        %6033 = vmatprep.subr.bf16.mxu0 %v3191
        %6034 = vmatpush1.bf16.msra.mxu0 %v3190
        %6035 = vmatprep.subr.bf16.mxu0 %v3193
        %6036 = vmatpush1.bf16.msra.mxu0 %v3192
        %6037 = vmatprep.subr.bf16.mxu0 %v3195
        %6038 = vmatpush1.bf16.msra.mxu0 %v3194
        %6039 = vmatprep.subr.bf16.mxu0 %v3197
        %6040 = vmatpush1.bf16.msra.mxu0 %v3196
        %6041 = vmatprep.subr.bf16.mxu0 %v3199
        %6042 = vmatpush1.bf16.msra.mxu0 %v3198
        %6043 = vmatprep.subr.bf16.mxu0 %v3201
        %6044 = vmatpush1.bf16.msra.mxu0 %v3200
        %6045 = vmatprep.subr.bf16.mxu0 %v3203
        %6046 = vmatpush1.bf16.msra.mxu0 %v3202
        %6047 = vmatprep.subr.bf16.mxu0 %v3205
        %6048 = vmatpush1.bf16.msra.mxu0 %v3204
        %6049 = vmatprep.subr.bf16.mxu0 %v3207
        %6050 = vmatpush1.bf16.msra.mxu0 %v3206
        %6051 = vmatprep.subr.bf16.mxu0 %v3209
        %6052 = vmatpush1.bf16.msra.mxu0 %v3208
        %6053 = vmatprep.mubr.bf16.mxu0 %v5373
        %6054 = vmatmul.mubr.bf16.gmra.mrb[0].mxu0 %v5371
        %v6055 = vpop.f32.mrb[0].mxu0
        %v6056 = vadd.f32 %v6015, %v6055
        %v6057 = vpop.f32.mrb[0].mxu0
        %v6058 = vadd.f32 %v6017, %v6057
        %v6059 = vpop.f32.mrb[0].mxu0
        %v6060 = vpop.f32.mrb[0].mxu0
        %6061 = vdwg.mxu0
        %v6062 = vpack.c.bf16 %v6056, %v6056
        %v6063 = vpack.c.bf16 %v6058, %v6058
        %v6064 = vld [vmem:[%s455 + $0x80] sm:$0xff]
        %v6065 = vld [vmem:[%s455 + $0x88] sm:$0xff]
        %v6066 = vld [vmem:[%s455 + $0x90] sm:$0xff]
        %v6067 = vld [vmem:[%s455 + $0x98] sm:$0xff]
        %v6068 = vld [vmem:[%s455 + $0xa0] sm:$0xff]
        %v6069 = vld [vmem:[%s455 + $0xa8] sm:$0xff]
        %v6070 = vld [vmem:[%s455 + $0xb0] sm:$0xff]
        %v6071 = vld [vmem:[%s455 + $0xb8] sm:$0xff]
        %v6080 = vcombine.high %v6064, %v6064
        %v6082 = vunpack.c.l.s4 1983009808
        %v6083 = vunpack.c.0.s8 %v6082
        %v6084 = vlaneseq
        %v6085 = vshrl.u32 %v6084, 7
        %v6086 = vsub.s32 %v6083, %v6085
        %v6087 = vrot.slane %v6064, %v6086
        %v6089 = vunpack.c.l.s4 1983009808
        %v6090 = vunpack.c.0.s8 %v6089
        %v6091 = vlaneseq
        %v6092 = vshrl.u32 %v6091, 7
        %v6093 = vsub.s32 %v6090, %v6092
        %v6094 = vrot.slane %v6080, %v6093
        %v6095 = vcombine.high %v6087, %v6087
        %v6096 = vcombine.high %v6094, %v6094
        %v6097 = vcombine.high %v6065, %v6065
        %v6099 = vunpack.c.l.s4 1983009808
        %v6100 = vunpack.c.0.s8 %v6099
        %v6101 = vlaneseq
        %v6102 = vshrl.u32 %v6101, 7
        %v6103 = vsub.s32 %v6100, %v6102
        %v6104 = vrot.slane %v6065, %v6103
        %v6106 = vunpack.c.l.s4 1983009808
        %v6107 = vunpack.c.0.s8 %v6106
        %v6108 = vlaneseq
        %v6109 = vshrl.u32 %v6108, 7
        %v6110 = vsub.s32 %v6107, %v6109
        %v6111 = vrot.slane %v6097, %v6110
        %v6112 = vcombine.high %v6104, %v6104
        %v6113 = vcombine.high %v6111, %v6111
        %v6114 = vcombine.high %v6066, %v6066
        %v6116 = vunpack.c.l.s4 1983009808
        %v6117 = vunpack.c.0.s8 %v6116
        %v6118 = vlaneseq
        %v6119 = vshrl.u32 %v6118, 7
        %v6120 = vsub.s32 %v6117, %v6119
        %v6121 = vrot.slane %v6066, %v6120
        %v6123 = vunpack.c.l.s4 1983009808
        %v6124 = vunpack.c.0.s8 %v6123
        %v6125 = vlaneseq
        %v6126 = vshrl.u32 %v6125, 7
        %v6127 = vsub.s32 %v6124, %v6126
        %v6128 = vrot.slane %v6114, %v6127
        %v6129 = vcombine.high %v6121, %v6121
        %v6130 = vcombine.high %v6128, %v6128
        %v6131 = vcombine.high %v6067, %v6067
        %v6133 = vunpack.c.l.s4 1983009808
        %v6134 = vunpack.c.0.s8 %v6133
        %v6135 = vlaneseq
        %v6136 = vshrl.u32 %v6135, 7
        %v6137 = vsub.s32 %v6134, %v6136
        %v6138 = vrot.slane %v6067, %v6137
        %v6140 = vunpack.c.l.s4 1983009808
        %v6141 = vunpack.c.0.s8 %v6140
        %v6142 = vlaneseq
        %v6143 = vshrl.u32 %v6142, 7
        %v6144 = vsub.s32 %v6141, %v6143
        %v6145 = vrot.slane %v6131, %v6144
        %v6146 = vcombine.high %v6138, %v6138
        %v6147 = vcombine.high %v6145, %v6145
        %v6148 = vcombine.high %v6068, %v6068
        %v6150 = vunpack.c.l.s4 1983009808
        %v6151 = vunpack.c.0.s8 %v6150
        %v6152 = vlaneseq
        %v6153 = vshrl.u32 %v6152, 7
        %v6154 = vsub.s32 %v6151, %v6153
        %v6155 = vrot.slane %v6068, %v6154
        %v6157 = vunpack.c.l.s4 1983009808
        %v6158 = vunpack.c.0.s8 %v6157
        %v6159 = vlaneseq
        %v6160 = vshrl.u32 %v6159, 7
        %v6161 = vsub.s32 %v6158, %v6160
        %v6162 = vrot.slane %v6148, %v6161
        %v6163 = vcombine.high %v6155, %v6155
        %v6164 = vcombine.high %v6162, %v6162
        %v6165 = vcombine.high %v6069, %v6069
        %v6167 = vunpack.c.l.s4 1983009808
        %v6168 = vunpack.c.0.s8 %v6167
        %v6169 = vlaneseq
        %v6170 = vshrl.u32 %v6169, 7
        %v6171 = vsub.s32 %v6168, %v6170
        %v6172 = vrot.slane %v6069, %v6171
        %v6174 = vunpack.c.l.s4 1983009808
        %v6175 = vunpack.c.0.s8 %v6174
        %v6176 = vlaneseq
        %v6177 = vshrl.u32 %v6176, 7
        %v6178 = vsub.s32 %v6175, %v6177
        %v6179 = vrot.slane %v6165, %v6178
        %v6180 = vcombine.high %v6172, %v6172
        %v6181 = vcombine.high %v6179, %v6179
        %v6182 = vcombine.high %v6070, %v6070
        %v6184 = vunpack.c.l.s4 1983009808
        %v6185 = vunpack.c.0.s8 %v6184
        %v6186 = vlaneseq
        %v6187 = vshrl.u32 %v6186, 7
        %v6188 = vsub.s32 %v6185, %v6187
        %v6189 = vrot.slane %v6070, %v6188
        %v6191 = vunpack.c.l.s4 1983009808
        %v6192 = vunpack.c.0.s8 %v6191
        %v6193 = vlaneseq
        %v6194 = vshrl.u32 %v6193, 7
        %v6195 = vsub.s32 %v6192, %v6194
        %v6196 = vrot.slane %v6182, %v6195
        %v6197 = vcombine.high %v6189, %v6189
        %v6198 = vcombine.high %v6196, %v6196
        %v6199 = vcombine.high %v6071, %v6071
        %v6201 = vunpack.c.l.s4 1983009808
        %v6202 = vunpack.c.0.s8 %v6201
        %v6203 = vlaneseq
        %v6204 = vshrl.u32 %v6203, 7
        %v6205 = vsub.s32 %v6202, %v6204
        %v6206 = vrot.slane %v6071, %v6205
        %v6208 = vunpack.c.l.s4 1983009808
        %v6209 = vunpack.c.0.s8 %v6208
        %v6210 = vlaneseq
        %v6211 = vshrl.u32 %v6210, 7
        %v6212 = vsub.s32 %v6209, %v6211
        %v6213 = vrot.slane %v6199, %v6212
        %v6214 = vcombine.high %v6206, %v6206
        %v6215 = vcombine.high %v6213, %v6213
        %6248 = vmatprep.subr.bf16.mxu0 %v2699
        %6249 = vmatpush1.bf16.msra.mxu0 %v2698
        %6250 = vmatprep.subr.bf16.mxu0 %v2701
        %6251 = vmatpush1.bf16.msra.mxu0 %v2700
        %6252 = vmatprep.subr.bf16.mxu0 %v2703
        %6253 = vmatpush1.bf16.msra.mxu0 %v2702
        %6254 = vmatprep.subr.bf16.mxu0 %v2705
        %6255 = vmatpush1.bf16.msra.mxu0 %v2704
        %6256 = vmatprep.subr.bf16.mxu0 %v2707
        %6257 = vmatpush1.bf16.msra.mxu0 %v2706
        %6258 = vmatprep.subr.bf16.mxu0 %v2709
        %6259 = vmatpush1.bf16.msra.mxu0 %v2708
        %6260 = vmatprep.subr.bf16.mxu0 %v2711
        %6261 = vmatpush1.bf16.msra.mxu0 %v2710
        %6262 = vmatprep.subr.bf16.mxu0 %v2713
        %6263 = vmatpush1.bf16.msra.mxu0 %v2712
        %6264 = vmatprep.subr.bf16.mxu0 %v2715
        %6265 = vmatpush1.bf16.msra.mxu0 %v2714
        %6266 = vmatprep.subr.bf16.mxu0 %v2717
        %6267 = vmatpush1.bf16.msra.mxu0 %v2716
        %6268 = vmatprep.subr.bf16.mxu0 %v2719
        %6269 = vmatpush1.bf16.msra.mxu0 %v2718
        %6270 = vmatprep.subr.bf16.mxu0 %v2721
        %6271 = vmatpush1.bf16.msra.mxu0 %v2720
        %6272 = vmatprep.subr.bf16.mxu0 %v2723
        %6273 = vmatpush1.bf16.msra.mxu0 %v2722
        %6274 = vmatprep.subr.bf16.mxu0 %v2725
        %6275 = vmatpush1.bf16.msra.mxu0 %v2724
        %6276 = vmatprep.subr.bf16.mxu0 %v2727
        %6277 = vmatpush1.bf16.msra.mxu0 %v2726
        %6278 = vmatprep.subr.bf16.mxu0 %v2729
        %6279 = vmatpush1.bf16.msra.mxu0 %v2728
        %6280 = vmatprep.mubr.bf16.mxu0 %v6095
        %6281 = vmatmul.mubr.bf16.gmra.mrb[0].mxu0 %v6087
        %v6282 = vpop.f32.mrb[0].mxu0
        %v6283 = vadd.f32 0.0, %v6282
        %v6284 = vpop.f32.mrb[0].mxu0
        %v6285 = vadd.f32 0.0, %v6284
        %v6286 = vpop.f32.mrb[0].mxu0
        %v6287 = vpop.f32.mrb[0].mxu0
        %6288 = vdwg.mxu0
        %6289 = vmatprep.subr.bf16.mxu0 %v2731
        %6290 = vmatpush1.bf16.msra.mxu0 %v2730
        %6291 = vmatprep.subr.bf16.mxu0 %v2733
        %6292 = vmatpush1.bf16.msra.mxu0 %v2732
        %6293 = vmatprep.subr.bf16.mxu0 %v2735
        %6294 = vmatpush1.bf16.msra.mxu0 %v2734
        %6295 = vmatprep.subr.bf16.mxu0 %v2737
        %6296 = vmatpush1.bf16.msra.mxu0 %v2736
        %6297 = vmatprep.subr.bf16.mxu0 %v2739
        %6298 = vmatpush1.bf16.msra.mxu0 %v2738
        %6299 = vmatprep.subr.bf16.mxu0 %v2741
        %6300 = vmatpush1.bf16.msra.mxu0 %v2740
        %6301 = vmatprep.subr.bf16.mxu0 %v2743
        %6302 = vmatpush1.bf16.msra.mxu0 %v2742
        %6303 = vmatprep.subr.bf16.mxu0 %v2745
        %6304 = vmatpush1.bf16.msra.mxu0 %v2744
        %6305 = vmatprep.subr.bf16.mxu0 %v2747
        %6306 = vmatpush1.bf16.msra.mxu0 %v2746
        %6307 = vmatprep.subr.bf16.mxu0 %v2749
        %6308 = vmatpush1.bf16.msra.mxu0 %v2748
        %6309 = vmatprep.subr.bf16.mxu0 %v2751
        %6310 = vmatpush1.bf16.msra.mxu0 %v2750
        %6311 = vmatprep.subr.bf16.mxu0 %v2753
        %6312 = vmatpush1.bf16.msra.mxu0 %v2752
        %6313 = vmatprep.subr.bf16.mxu0 %v2755
        %6314 = vmatpush1.bf16.msra.mxu0 %v2754
        %6315 = vmatprep.subr.bf16.mxu0 %v2757
        %6316 = vmatpush1.bf16.msra.mxu0 %v2756
        %6317 = vmatprep.subr.bf16.mxu0 %v2759
        %6318 = vmatpush1.bf16.msra.mxu0 %v2758
        %6319 = vmatprep.subr.bf16.mxu0 %v2761
        %6320 = vmatpush1.bf16.msra.mxu0 %v2760
        %6321 = vmatprep.mubr.bf16.mxu0 %v6096
        %6322 = vmatmul.mubr.bf16.gmra.mrb[0].mxu0 %v6094
        %v6323 = vpop.f32.mrb[0].mxu0
        %v6324 = vadd.f32 %v6283, %v6323
        %v6325 = vpop.f32.mrb[0].mxu0
        %v6326 = vadd.f32 %v6285, %v6325
        %v6327 = vpop.f32.mrb[0].mxu0
        %v6328 = vpop.f32.mrb[0].mxu0
        %6329 = vdwg.mxu0
        %6330 = vmatprep.subr.bf16.mxu0 %v2763
        %6331 = vmatpush1.bf16.msra.mxu0 %v2762
        %6332 = vmatprep.subr.bf16.mxu0 %v2765
        %6333 = vmatpush1.bf16.msra.mxu0 %v2764
        %6334 = vmatprep.subr.bf16.mxu0 %v2767
        %6335 = vmatpush1.bf16.msra.mxu0 %v2766
        %6336 = vmatprep.subr.bf16.mxu0 %v2769
        %6337 = vmatpush1.bf16.msra.mxu0 %v2768
        %6338 = vmatprep.subr.bf16.mxu0 %v2771
        %6339 = vmatpush1.bf16.msra.mxu0 %v2770
        %6340 = vmatprep.subr.bf16.mxu0 %v2773
        %6341 = vmatpush1.bf16.msra.mxu0 %v2772
        %6342 = vmatprep.subr.bf16.mxu0 %v2775
        %6343 = vmatpush1.bf16.msra.mxu0 %v2774
        %6344 = vmatprep.subr.bf16.mxu0 %v2777
        %6345 = vmatpush1.bf16.msra.mxu0 %v2776
        %6346 = vmatprep.subr.bf16.mxu0 %v2779
        %6347 = vmatpush1.bf16.msra.mxu0 %v2778
        %6348 = vmatprep.subr.bf16.mxu0 %v2781
        %6349 = vmatpush1.bf16.msra.mxu0 %v2780
        %6350 = vmatprep.subr.bf16.mxu0 %v2783
        %6351 = vmatpush1.bf16.msra.mxu0 %v2782
        %6352 = vmatprep.subr.bf16.mxu0 %v2785
        %6353 = vmatpush1.bf16.msra.mxu0 %v2784
        %6354 = vmatprep.subr.bf16.mxu0 %v2787
        %6355 = vmatpush1.bf16.msra.mxu0 %v2786
        %6356 = vmatprep.subr.bf16.mxu0 %v2789
        %6357 = vmatpush1.bf16.msra.mxu0 %v2788
        %6358 = vmatprep.subr.bf16.mxu0 %v2791
        %6359 = vmatpush1.bf16.msra.mxu0 %v2790
        %6360 = vmatprep.subr.bf16.mxu0 %v2793
        %6361 = vmatpush1.bf16.msra.mxu0 %v2792
        %6362 = vmatprep.mubr.bf16.mxu0 %v6112
        %6363 = vmatmul.mubr.bf16.gmra.mrb[0].mxu0 %v6104
        %v6364 = vpop.f32.mrb[0].mxu0
        %v6365 = vadd.f32 %v6324, %v6364
        %v6366 = vpop.f32.mrb[0].mxu0
        %v6367 = vadd.f32 %v6326, %v6366
        %v6368 = vpop.f32.mrb[0].mxu0
        %v6369 = vpop.f32.mrb[0].mxu0
        %6370 = vdwg.mxu0
        %6371 = vmatprep.subr.bf16.mxu0 %v2795
        %6372 = vmatpush1.bf16.msra.mxu0 %v2794
        %6373 = vmatprep.subr.bf16.mxu0 %v2797
        %6374 = vmatpush1.bf16.msra.mxu0 %v2796
        %6375 = vmatprep.subr.bf16.mxu0 %v2799
        %6376 = vmatpush1.bf16.msra.mxu0 %v2798
        %6377 = vmatprep.subr.bf16.mxu0 %v2801
        %6378 = vmatpush1.bf16.msra.mxu0 %v2800
        %6379 = vmatprep.subr.bf16.mxu0 %v2803
        %6380 = vmatpush1.bf16.msra.mxu0 %v2802
        %6381 = vmatprep.subr.bf16.mxu0 %v2805
        %6382 = vmatpush1.bf16.msra.mxu0 %v2804
        %6383 = vmatprep.subr.bf16.mxu0 %v2807
        %6384 = vmatpush1.bf16.msra.mxu0 %v2806
        %6385 = vmatprep.subr.bf16.mxu0 %v2809
        %6386 = vmatpush1.bf16.msra.mxu0 %v2808
        %6387 = vmatprep.subr.bf16.mxu0 %v2811
        %6388 = vmatpush1.bf16.msra.mxu0 %v2810
        %6389 = vmatprep.subr.bf16.mxu0 %v2813
        %6390 = vmatpush1.bf16.msra.mxu0 %v2812
        %6391 = vmatprep.subr.bf16.mxu0 %v2815
        %6392 = vmatpush1.bf16.msra.mxu0 %v2814
        %6393 = vmatprep.subr.bf16.mxu0 %v2817
        %6394 = vmatpush1.bf16.msra.mxu0 %v2816
        %6395 = vmatprep.subr.bf16.mxu0 %v2819
        %6396 = vmatpush1.bf16.msra.mxu0 %v2818
        %6397 = vmatprep.subr.bf16.mxu0 %v2821
        %6398 = vmatpush1.bf16.msra.mxu0 %v2820
        %6399 = vmatprep.subr.bf16.mxu0 %v2823
        %6400 = vmatpush1.bf16.msra.mxu0 %v2822
        %6401 = vmatprep.subr.bf16.mxu0 %v2825
        %6402 = vmatpush1.bf16.msra.mxu0 %v2824
        %6403 = vmatprep.mubr.bf16.mxu0 %v6113
        %6404 = vmatmul.mubr.bf16.gmra.mrb[0].mxu0 %v6111
        %v6405 = vpop.f32.mrb[0].mxu0
        %v6406 = vadd.f32 %v6365, %v6405
        %v6407 = vpop.f32.mrb[0].mxu0
        %v6408 = vadd.f32 %v6367, %v6407
        %v6409 = vpop.f32.mrb[0].mxu0
        %v6410 = vpop.f32.mrb[0].mxu0
        %6411 = vdwg.mxu0
        %6412 = vmatprep.subr.bf16.mxu0 %v2827
        %6413 = vmatpush1.bf16.msra.mxu0 %v2826
        %6414 = vmatprep.subr.bf16.mxu0 %v2829
        %6415 = vmatpush1.bf16.msra.mxu0 %v2828
        %6416 = vmatprep.subr.bf16.mxu0 %v2831
        %6417 = vmatpush1.bf16.msra.mxu0 %v2830
        %6418 = vmatprep.subr.bf16.mxu0 %v2833
        %6419 = vmatpush1.bf16.msra.mxu0 %v2832
        %6420 = vmatprep.subr.bf16.mxu0 %v2835
        %6421 = vmatpush1.bf16.msra.mxu0 %v2834
        %6422 = vmatprep.subr.bf16.mxu0 %v2837
        %6423 = vmatpush1.bf16.msra.mxu0 %v2836
        %6424 = vmatprep.subr.bf16.mxu0 %v2839
        %6425 = vmatpush1.bf16.msra.mxu0 %v2838
        %6426 = vmatprep.subr.bf16.mxu0 %v2841
        %6427 = vmatpush1.bf16.msra.mxu0 %v2840
        %6428 = vmatprep.subr.bf16.mxu0 %v2843
        %6429 = vmatpush1.bf16.msra.mxu0 %v2842
        %6430 = vmatprep.subr.bf16.mxu0 %v2845
        %6431 = vmatpush1.bf16.msra.mxu0 %v2844
        %6432 = vmatprep.subr.bf16.mxu0 %v2847
        %6433 = vmatpush1.bf16.msra.mxu0 %v2846
        %6434 = vmatprep.subr.bf16.mxu0 %v2849
        %6435 = vmatpush1.bf16.msra.mxu0 %v2848
        %6436 = vmatprep.subr.bf16.mxu0 %v2851
        %6437 = vmatpush1.bf16.msra.mxu0 %v2850
        %6438 = vmatprep.subr.bf16.mxu0 %v2853
        %6439 = vmatpush1.bf16.msra.mxu0 %v2852
        %6440 = vmatprep.subr.bf16.mxu0 %v2855
        %6441 = vmatpush1.bf16.msra.mxu0 %v2854
        %6442 = vmatprep.subr.bf16.mxu0 %v2857
        %6443 = vmatpush1.bf16.msra.mxu0 %v2856
        %6444 = vmatprep.mubr.bf16.mxu0 %v6129
        %6445 = vmatmul.mubr.bf16.gmra.mrb[0].mxu0 %v6121
        %v6446 = vpop.f32.mrb[0].mxu0
        %v6447 = vadd.f32 %v6406, %v6446
        %v6448 = vpop.f32.mrb[0].mxu0
        %v6449 = vadd.f32 %v6408, %v6448
        %v6450 = vpop.f32.mrb[0].mxu0
        %v6451 = vpop.f32.mrb[0].mxu0
        %6452 = vdwg.mxu0
        %6453 = vmatprep.subr.bf16.mxu0 %v2859
        %6454 = vmatpush1.bf16.msra.mxu0 %v2858
        %6455 = vmatprep.subr.bf16.mxu0 %v2861
        %6456 = vmatpush1.bf16.msra.mxu0 %v2860
        %6457 = vmatprep.subr.bf16.mxu0 %v2863
        %6458 = vmatpush1.bf16.msra.mxu0 %v2862
        %6459 = vmatprep.subr.bf16.mxu0 %v2865
        %6460 = vmatpush1.bf16.msra.mxu0 %v2864
        %6461 = vmatprep.subr.bf16.mxu0 %v2867
        %6462 = vmatpush1.bf16.msra.mxu0 %v2866
        %6463 = vmatprep.subr.bf16.mxu0 %v2869
        %6464 = vmatpush1.bf16.msra.mxu0 %v2868
        %6465 = vmatprep.subr.bf16.mxu0 %v2871
        %6466 = vmatpush1.bf16.msra.mxu0 %v2870
        %6467 = vmatprep.subr.bf16.mxu0 %v2873
        %6468 = vmatpush1.bf16.msra.mxu0 %v2872
        %6469 = vmatprep.subr.bf16.mxu0 %v2875
        %6470 = vmatpush1.bf16.msra.mxu0 %v2874
        %6471 = vmatprep.subr.bf16.mxu0 %v2877
        %6472 = vmatpush1.bf16.msra.mxu0 %v2876
        %6473 = vmatprep.subr.bf16.mxu0 %v2879
        %6474 = vmatpush1.bf16.msra.mxu0 %v2878
        %6475 = vmatprep.subr.bf16.mxu0 %v2881
        %6476 = vmatpush1.bf16.msra.mxu0 %v2880
        %6477 = vmatprep.subr.bf16.mxu0 %v2883
        %6478 = vmatpush1.bf16.msra.mxu0 %v2882
        %6479 = vmatprep.subr.bf16.mxu0 %v2885
        %6480 = vmatpush1.bf16.msra.mxu0 %v2884
        %6481 = vmatprep.subr.bf16.mxu0 %v2887
        %6482 = vmatpush1.bf16.msra.mxu0 %v2886
        %6483 = vmatprep.subr.bf16.mxu0 %v2889
        %6484 = vmatpush1.bf16.msra.mxu0 %v2888
        %6485 = vmatprep.mubr.bf16.mxu0 %v6130
        %6486 = vmatmul.mubr.bf16.gmra.mrb[0].mxu0 %v6128
        %v6487 = vpop.f32.mrb[0].mxu0
        %v6488 = vadd.f32 %v6447, %v6487
        %v6489 = vpop.f32.mrb[0].mxu0
        %v6490 = vadd.f32 %v6449, %v6489
        %v6491 = vpop.f32.mrb[0].mxu0
        %v6492 = vpop.f32.mrb[0].mxu0
        %6493 = vdwg.mxu0
        %6494 = vmatprep.subr.bf16.mxu0 %v2891
        %6495 = vmatpush1.bf16.msra.mxu0 %v2890
        %6496 = vmatprep.subr.bf16.mxu0 %v2893
        %6497 = vmatpush1.bf16.msra.mxu0 %v2892
        %6498 = vmatprep.subr.bf16.mxu0 %v2895
        %6499 = vmatpush1.bf16.msra.mxu0 %v2894
        %6500 = vmatprep.subr.bf16.mxu0 %v2897
        %6501 = vmatpush1.bf16.msra.mxu0 %v2896
        %6502 = vmatprep.subr.bf16.mxu0 %v2899
        %6503 = vmatpush1.bf16.msra.mxu0 %v2898
        %6504 = vmatprep.subr.bf16.mxu0 %v2901
        %6505 = vmatpush1.bf16.msra.mxu0 %v2900
        %6506 = vmatprep.subr.bf16.mxu0 %v2903
        %6507 = vmatpush1.bf16.msra.mxu0 %v2902
        %6508 = vmatprep.subr.bf16.mxu0 %v2905
        %6509 = vmatpush1.bf16.msra.mxu0 %v2904
        %6510 = vmatprep.subr.bf16.mxu0 %v2907
        %6511 = vmatpush1.bf16.msra.mxu0 %v2906
        %6512 = vmatprep.subr.bf16.mxu0 %v2909
        %6513 = vmatpush1.bf16.msra.mxu0 %v2908
        %6514 = vmatprep.subr.bf16.mxu0 %v2911
        %6515 = vmatpush1.bf16.msra.mxu0 %v2910
        %6516 = vmatprep.subr.bf16.mxu0 %v2913
        %6517 = vmatpush1.bf16.msra.mxu0 %v2912
        %6518 = vmatprep.subr.bf16.mxu0 %v2915
        %6519 = vmatpush1.bf16.msra.mxu0 %v2914
        %6520 = vmatprep.subr.bf16.mxu0 %v2917
        %6521 = vmatpush1.bf16.msra.mxu0 %v2916
        %6522 = vmatprep.subr.bf16.mxu0 %v2919
        %6523 = vmatpush1.bf16.msra.mxu0 %v2918
        %6524 = vmatprep.subr.bf16.mxu0 %v2921
        %6525 = vmatpush1.bf16.msra.mxu0 %v2920
        %6526 = vmatprep.mubr.bf16.mxu0 %v6146
        %6527 = vmatmul.mubr.bf16.gmra.mrb[0].mxu0 %v6138
        %v6528 = vpop.f32.mrb[0].mxu0
        %v6529 = vadd.f32 %v6488, %v6528
        %v6530 = vpop.f32.mrb[0].mxu0
        %v6531 = vadd.f32 %v6490, %v6530
        %v6532 = vpop.f32.mrb[0].mxu0
        %v6533 = vpop.f32.mrb[0].mxu0
        %6534 = vdwg.mxu0
        %6535 = vmatprep.subr.bf16.mxu0 %v2923
        %6536 = vmatpush1.bf16.msra.mxu0 %v2922
        %6537 = vmatprep.subr.bf16.mxu0 %v2925
        %6538 = vmatpush1.bf16.msra.mxu0 %v2924
        %6539 = vmatprep.subr.bf16.mxu0 %v2927
        %6540 = vmatpush1.bf16.msra.mxu0 %v2926
        %6541 = vmatprep.subr.bf16.mxu0 %v2929
        %6542 = vmatpush1.bf16.msra.mxu0 %v2928
        %6543 = vmatprep.subr.bf16.mxu0 %v2931
        %6544 = vmatpush1.bf16.msra.mxu0 %v2930
        %6545 = vmatprep.subr.bf16.mxu0 %v2933
        %6546 = vmatpush1.bf16.msra.mxu0 %v2932
        %6547 = vmatprep.subr.bf16.mxu0 %v2935
        %6548 = vmatpush1.bf16.msra.mxu0 %v2934
        %6549 = vmatprep.subr.bf16.mxu0 %v2937
        %6550 = vmatpush1.bf16.msra.mxu0 %v2936
        %6551 = vmatprep.subr.bf16.mxu0 %v2939
        %6552 = vmatpush1.bf16.msra.mxu0 %v2938
        %6553 = vmatprep.subr.bf16.mxu0 %v2941
        %6554 = vmatpush1.bf16.msra.mxu0 %v2940
        %6555 = vmatprep.subr.bf16.mxu0 %v2943
        %6556 = vmatpush1.bf16.msra.mxu0 %v2942
        %6557 = vmatprep.subr.bf16.mxu0 %v2945
        %6558 = vmatpush1.bf16.msra.mxu0 %v2944
        %6559 = vmatprep.subr.bf16.mxu0 %v2947
        %6560 = vmatpush1.bf16.msra.mxu0 %v2946
        %6561 = vmatprep.subr.bf16.mxu0 %v2949
        %6562 = vmatpush1.bf16.msra.mxu0 %v2948
        %6563 = vmatprep.subr.bf16.mxu0 %v2951
        %6564 = vmatpush1.bf16.msra.mxu0 %v2950
        %6565 = vmatprep.subr.bf16.mxu0 %v2953
        %6566 = vmatpush1.bf16.msra.mxu0 %v2952
        %6567 = vmatprep.mubr.bf16.mxu0 %v6147
        %6568 = vmatmul.mubr.bf16.gmra.mrb[0].mxu0 %v6145
        %v6569 = vpop.f32.mrb[0].mxu0
        %v6570 = vadd.f32 %v6529, %v6569
        %v6571 = vpop.f32.mrb[0].mxu0
        %v6572 = vadd.f32 %v6531, %v6571
        %v6573 = vpop.f32.mrb[0].mxu0
        %v6574 = vpop.f32.mrb[0].mxu0
        %6575 = vdwg.mxu0
        %6576 = vmatprep.subr.bf16.mxu0 %v2955
        %6577 = vmatpush1.bf16.msra.mxu0 %v2954
        %6578 = vmatprep.subr.bf16.mxu0 %v2957
        %6579 = vmatpush1.bf16.msra.mxu0 %v2956
        %6580 = vmatprep.subr.bf16.mxu0 %v2959
        %6581 = vmatpush1.bf16.msra.mxu0 %v2958
        %6582 = vmatprep.subr.bf16.mxu0 %v2961
        %6583 = vmatpush1.bf16.msra.mxu0 %v2960
        %6584 = vmatprep.subr.bf16.mxu0 %v2963
        %6585 = vmatpush1.bf16.msra.mxu0 %v2962
        %6586 = vmatprep.subr.bf16.mxu0 %v2965
        %6587 = vmatpush1.bf16.msra.mxu0 %v2964
        %6588 = vmatprep.subr.bf16.mxu0 %v2967
        %6589 = vmatpush1.bf16.msra.mxu0 %v2966
        %6590 = vmatprep.subr.bf16.mxu0 %v2969
        %6591 = vmatpush1.bf16.msra.mxu0 %v2968
        %6592 = vmatprep.subr.bf16.mxu0 %v2971
        %6593 = vmatpush1.bf16.msra.mxu0 %v2970
        %6594 = vmatprep.subr.bf16.mxu0 %v2973
        %6595 = vmatpush1.bf16.msra.mxu0 %v2972
        %6596 = vmatprep.subr.bf16.mxu0 %v2975
        %6597 = vmatpush1.bf16.msra.mxu0 %v2974
        %6598 = vmatprep.subr.bf16.mxu0 %v2977
        %6599 = vmatpush1.bf16.msra.mxu0 %v2976
        %6600 = vmatprep.subr.bf16.mxu0 %v2979
        %6601 = vmatpush1.bf16.msra.mxu0 %v2978
        %6602 = vmatprep.subr.bf16.mxu0 %v2981
        %6603 = vmatpush1.bf16.msra.mxu0 %v2980
        %6604 = vmatprep.subr.bf16.mxu0 %v2983
        %6605 = vmatpush1.bf16.msra.mxu0 %v2982
        %6606 = vmatprep.subr.bf16.mxu0 %v2985
        %6607 = vmatpush1.bf16.msra.mxu0 %v2984
        %6608 = vmatprep.mubr.bf16.mxu0 %v6163
        %6609 = vmatmul.mubr.bf16.gmra.mrb[0].mxu0 %v6155
        %v6610 = vpop.f32.mrb[0].mxu0
        %v6611 = vadd.f32 %v6570, %v6610
        %v6612 = vpop.f32.mrb[0].mxu0
        %v6613 = vadd.f32 %v6572, %v6612
        %v6614 = vpop.f32.mrb[0].mxu0
        %v6615 = vpop.f32.mrb[0].mxu0
        %6616 = vdwg.mxu0
        %6617 = vmatprep.subr.bf16.mxu0 %v2987
        %6618 = vmatpush1.bf16.msra.mxu0 %v2986
        %6619 = vmatprep.subr.bf16.mxu0 %v2989
        %6620 = vmatpush1.bf16.msra.mxu0 %v2988
        %6621 = vmatprep.subr.bf16.mxu0 %v2991
        %6622 = vmatpush1.bf16.msra.mxu0 %v2990
        %6623 = vmatprep.subr.bf16.mxu0 %v2993
        %6624 = vmatpush1.bf16.msra.mxu0 %v2992
        %6625 = vmatprep.subr.bf16.mxu0 %v2995
        %6626 = vmatpush1.bf16.msra.mxu0 %v2994
        %6627 = vmatprep.subr.bf16.mxu0 %v2997
        %6628 = vmatpush1.bf16.msra.mxu0 %v2996
        %6629 = vmatprep.subr.bf16.mxu0 %v2999
        %6630 = vmatpush1.bf16.msra.mxu0 %v2998
        %6631 = vmatprep.subr.bf16.mxu0 %v3001
        %6632 = vmatpush1.bf16.msra.mxu0 %v3000
        %6633 = vmatprep.subr.bf16.mxu0 %v3003
        %6634 = vmatpush1.bf16.msra.mxu0 %v3002
        %6635 = vmatprep.subr.bf16.mxu0 %v3005
        %6636 = vmatpush1.bf16.msra.mxu0 %v3004
        %6637 = vmatprep.subr.bf16.mxu0 %v3007
        %6638 = vmatpush1.bf16.msra.mxu0 %v3006
        %6639 = vmatprep.subr.bf16.mxu0 %v3009
        %6640 = vmatpush1.bf16.msra.mxu0 %v3008
        %6641 = vmatprep.subr.bf16.mxu0 %v3011
        %6642 = vmatpush1.bf16.msra.mxu0 %v3010
        %6643 = vmatprep.subr.bf16.mxu0 %v3013
        %6644 = vmatpush1.bf16.msra.mxu0 %v3012
        %6645 = vmatprep.subr.bf16.mxu0 %v3015
        %6646 = vmatpush1.bf16.msra.mxu0 %v3014
        %6647 = vmatprep.subr.bf16.mxu0 %v3017
        %6648 = vmatpush1.bf16.msra.mxu0 %v3016
        %6649 = vmatprep.mubr.bf16.mxu0 %v6164
        %6650 = vmatmul.mubr.bf16.gmra.mrb[0].mxu0 %v6162
        %v6651 = vpop.f32.mrb[0].mxu0
        %v6652 = vadd.f32 %v6611, %v6651
        %v6653 = vpop.f32.mrb[0].mxu0
        %v6654 = vadd.f32 %v6613, %v6653
        %v6655 = vpop.f32.mrb[0].mxu0
        %v6656 = vpop.f32.mrb[0].mxu0
        %6657 = vdwg.mxu0
        %6658 = vmatprep.subr.bf16.mxu0 %v3019
        %6659 = vmatpush1.bf16.msra.mxu0 %v3018
        %6660 = vmatprep.subr.bf16.mxu0 %v3021
        %6661 = vmatpush1.bf16.msra.mxu0 %v3020
        %6662 = vmatprep.subr.bf16.mxu0 %v3023
        %6663 = vmatpush1.bf16.msra.mxu0 %v3022
        %6664 = vmatprep.subr.bf16.mxu0 %v3025
        %6665 = vmatpush1.bf16.msra.mxu0 %v3024
        %6666 = vmatprep.subr.bf16.mxu0 %v3027
        %6667 = vmatpush1.bf16.msra.mxu0 %v3026
        %6668 = vmatprep.subr.bf16.mxu0 %v3029
        %6669 = vmatpush1.bf16.msra.mxu0 %v3028
        %6670 = vmatprep.subr.bf16.mxu0 %v3031
        %6671 = vmatpush1.bf16.msra.mxu0 %v3030
        %6672 = vmatprep.subr.bf16.mxu0 %v3033
        %6673 = vmatpush1.bf16.msra.mxu0 %v3032
        %6674 = vmatprep.subr.bf16.mxu0 %v3035
        %6675 = vmatpush1.bf16.msra.mxu0 %v3034
        %6676 = vmatprep.subr.bf16.mxu0 %v3037
        %6677 = vmatpush1.bf16.msra.mxu0 %v3036
        %6678 = vmatprep.subr.bf16.mxu0 %v3039
        %6679 = vmatpush1.bf16.msra.mxu0 %v3038
        %6680 = vmatprep.subr.bf16.mxu0 %v3041
        %6681 = vmatpush1.bf16.msra.mxu0 %v3040
        %6682 = vmatprep.subr.bf16.mxu0 %v3043
        %6683 = vmatpush1.bf16.msra.mxu0 %v3042
        %6684 = vmatprep.subr.bf16.mxu0 %v3045
        %6685 = vmatpush1.bf16.msra.mxu0 %v3044
        %6686 = vmatprep.subr.bf16.mxu0 %v3047
        %6687 = vmatpush1.bf16.msra.mxu0 %v3046
        %6688 = vmatprep.subr.bf16.mxu0 %v3049
        %6689 = vmatpush1.bf16.msra.mxu0 %v3048
        %6690 = vmatprep.mubr.bf16.mxu0 %v6180
        %6691 = vmatmul.mubr.bf16.gmra.mrb[0].mxu0 %v6172
        %v6692 = vpop.f32.mrb[0].mxu0
        %v6693 = vadd.f32 %v6652, %v6692
        %v6694 = vpop.f32.mrb[0].mxu0
        %v6695 = vadd.f32 %v6654, %v6694
        %v6696 = vpop.f32.mrb[0].mxu0
        %v6697 = vpop.f32.mrb[0].mxu0
        %6698 = vdwg.mxu0
        %6699 = vmatprep.subr.bf16.mxu0 %v3051
        %6700 = vmatpush1.bf16.msra.mxu0 %v3050
        %6701 = vmatprep.subr.bf16.mxu0 %v3053
        %6702 = vmatpush1.bf16.msra.mxu0 %v3052
        %6703 = vmatprep.subr.bf16.mxu0 %v3055
        %6704 = vmatpush1.bf16.msra.mxu0 %v3054
        %6705 = vmatprep.subr.bf16.mxu0 %v3057
        %6706 = vmatpush1.bf16.msra.mxu0 %v3056
        %6707 = vmatprep.subr.bf16.mxu0 %v3059
        %6708 = vmatpush1.bf16.msra.mxu0 %v3058
        %6709 = vmatprep.subr.bf16.mxu0 %v3061
        %6710 = vmatpush1.bf16.msra.mxu0 %v3060
        %6711 = vmatprep.subr.bf16.mxu0 %v3063
        %6712 = vmatpush1.bf16.msra.mxu0 %v3062
        %6713 = vmatprep.subr.bf16.mxu0 %v3065
        %6714 = vmatpush1.bf16.msra.mxu0 %v3064
        %6715 = vmatprep.subr.bf16.mxu0 %v3067
        %6716 = vmatpush1.bf16.msra.mxu0 %v3066
        %6717 = vmatprep.subr.bf16.mxu0 %v3069
        %6718 = vmatpush1.bf16.msra.mxu0 %v3068
        %6719 = vmatprep.subr.bf16.mxu0 %v3071
        %6720 = vmatpush1.bf16.msra.mxu0 %v3070
        %6721 = vmatprep.subr.bf16.mxu0 %v3073
        %6722 = vmatpush1.bf16.msra.mxu0 %v3072
        %6723 = vmatprep.subr.bf16.mxu0 %v3075
        %6724 = vmatpush1.bf16.msra.mxu0 %v3074
        %6725 = vmatprep.subr.bf16.mxu0 %v3077
        %6726 = vmatpush1.bf16.msra.mxu0 %v3076
        %6727 = vmatprep.subr.bf16.mxu0 %v3079
        %6728 = vmatpush1.bf16.msra.mxu0 %v3078
        %6729 = vmatprep.subr.bf16.mxu0 %v3081
        %6730 = vmatpush1.bf16.msra.mxu0 %v3080
        %6731 = vmatprep.mubr.bf16.mxu0 %v6181
        %6732 = vmatmul.mubr.bf16.gmra.mrb[0].mxu0 %v6179
        %v6733 = vpop.f32.mrb[0].mxu0
        %v6734 = vadd.f32 %v6693, %v6733
        %v6735 = vpop.f32.mrb[0].mxu0
        %v6736 = vadd.f32 %v6695, %v6735
        %v6737 = vpop.f32.mrb[0].mxu0
        %v6738 = vpop.f32.mrb[0].mxu0
        %6739 = vdwg.mxu0
        %6740 = vmatprep.subr.bf16.mxu0 %v3083
        %6741 = vmatpush1.bf16.msra.mxu0 %v3082
        %6742 = vmatprep.subr.bf16.mxu0 %v3085
        %6743 = vmatpush1.bf16.msra.mxu0 %v3084
        %6744 = vmatprep.subr.bf16.mxu0 %v3087
        %6745 = vmatpush1.bf16.msra.mxu0 %v3086
        %6746 = vmatprep.subr.bf16.mxu0 %v3089
        %6747 = vmatpush1.bf16.msra.mxu0 %v3088
        %6748 = vmatprep.subr.bf16.mxu0 %v3091
        %6749 = vmatpush1.bf16.msra.mxu0 %v3090
        %6750 = vmatprep.subr.bf16.mxu0 %v3093
        %6751 = vmatpush1.bf16.msra.mxu0 %v3092
        %6752 = vmatprep.subr.bf16.mxu0 %v3095
        %6753 = vmatpush1.bf16.msra.mxu0 %v3094
        %6754 = vmatprep.subr.bf16.mxu0 %v3097
        %6755 = vmatpush1.bf16.msra.mxu0 %v3096
        %6756 = vmatprep.subr.bf16.mxu0 %v3099
        %6757 = vmatpush1.bf16.msra.mxu0 %v3098
        %6758 = vmatprep.subr.bf16.mxu0 %v3101
        %6759 = vmatpush1.bf16.msra.mxu0 %v3100
        %6760 = vmatprep.subr.bf16.mxu0 %v3103
        %6761 = vmatpush1.bf16.msra.mxu0 %v3102
        %6762 = vmatprep.subr.bf16.mxu0 %v3105
        %6763 = vmatpush1.bf16.msra.mxu0 %v3104
        %6764 = vmatprep.subr.bf16.mxu0 %v3107
        %6765 = vmatpush1.bf16.msra.mxu0 %v3106
        %6766 = vmatprep.subr.bf16.mxu0 %v3109
        %6767 = vmatpush1.bf16.msra.mxu0 %v3108
        %6768 = vmatprep.subr.bf16.mxu0 %v3111
        %6769 = vmatpush1.bf16.msra.mxu0 %v3110
        %6770 = vmatprep.subr.bf16.mxu0 %v3113
        %6771 = vmatpush1.bf16.msra.mxu0 %v3112
        %6772 = vmatprep.mubr.bf16.mxu0 %v6197
        %6773 = vmatmul.mubr.bf16.gmra.mrb[0].mxu0 %v6189
        %v6774 = vpop.f32.mrb[0].mxu0
        %v6775 = vadd.f32 %v6734, %v6774
        %v6776 = vpop.f32.mrb[0].mxu0
        %v6777 = vadd.f32 %v6736, %v6776
        %v6778 = vpop.f32.mrb[0].mxu0
        %v6779 = vpop.f32.mrb[0].mxu0
        %6780 = vdwg.mxu0
        %6781 = vmatprep.subr.bf16.mxu0 %v3115
        %6782 = vmatpush1.bf16.msra.mxu0 %v3114
        %6783 = vmatprep.subr.bf16.mxu0 %v3117
        %6784 = vmatpush1.bf16.msra.mxu0 %v3116
        %6785 = vmatprep.subr.bf16.mxu0 %v3119
        %6786 = vmatpush1.bf16.msra.mxu0 %v3118
        %6787 = vmatprep.subr.bf16.mxu0 %v3121
        %6788 = vmatpush1.bf16.msra.mxu0 %v3120
        %6789 = vmatprep.subr.bf16.mxu0 %v3123
        %6790 = vmatpush1.bf16.msra.mxu0 %v3122
        %6791 = vmatprep.subr.bf16.mxu0 %v3125
        %6792 = vmatpush1.bf16.msra.mxu0 %v3124
        %6793 = vmatprep.subr.bf16.mxu0 %v3127
        %6794 = vmatpush1.bf16.msra.mxu0 %v3126
        %6795 = vmatprep.subr.bf16.mxu0 %v3129
        %6796 = vmatpush1.bf16.msra.mxu0 %v3128
        %6797 = vmatprep.subr.bf16.mxu0 %v3131
        %6798 = vmatpush1.bf16.msra.mxu0 %v3130
        %6799 = vmatprep.subr.bf16.mxu0 %v3133
        %6800 = vmatpush1.bf16.msra.mxu0 %v3132
        %6801 = vmatprep.subr.bf16.mxu0 %v3135
        %6802 = vmatpush1.bf16.msra.mxu0 %v3134
        %6803 = vmatprep.subr.bf16.mxu0 %v3137
        %6804 = vmatpush1.bf16.msra.mxu0 %v3136
        %6805 = vmatprep.subr.bf16.mxu0 %v3139
        %6806 = vmatpush1.bf16.msra.mxu0 %v3138
        %6807 = vmatprep.subr.bf16.mxu0 %v3141
        %6808 = vmatpush1.bf16.msra.mxu0 %v3140
        %6809 = vmatprep.subr.bf16.mxu0 %v3143
        %6810 = vmatpush1.bf16.msra.mxu0 %v3142
        %6811 = vmatprep.subr.bf16.mxu0 %v3145
        %6812 = vmatpush1.bf16.msra.mxu0 %v3144
        %6813 = vmatprep.mubr.bf16.mxu0 %v6198
        %6814 = vmatmul.mubr.bf16.gmra.mrb[0].mxu0 %v6196
        %v6815 = vpop.f32.mrb[0].mxu0
        %v6816 = vadd.f32 %v6775, %v6815
        %v6817 = vpop.f32.mrb[0].mxu0
        %v6818 = vadd.f32 %v6777, %v6817
        %v6819 = vpop.f32.mrb[0].mxu0
        %v6820 = vpop.f32.mrb[0].mxu0
        %6821 = vdwg.mxu0
        %6822 = vmatprep.subr.bf16.mxu0 %v3147
        %6823 = vmatpush1.bf16.msra.mxu0 %v3146
        %6824 = vmatprep.subr.bf16.mxu0 %v3149
        %6825 = vmatpush1.bf16.msra.mxu0 %v3148
        %6826 = vmatprep.subr.bf16.mxu0 %v3151
        %6827 = vmatpush1.bf16.msra.mxu0 %v3150
        %6828 = vmatprep.subr.bf16.mxu0 %v3153
        %6829 = vmatpush1.bf16.msra.mxu0 %v3152
        %6830 = vmatprep.subr.bf16.mxu0 %v3155
        %6831 = vmatpush1.bf16.msra.mxu0 %v3154
        %6832 = vmatprep.subr.bf16.mxu0 %v3157
        %6833 = vmatpush1.bf16.msra.mxu0 %v3156
        %6834 = vmatprep.subr.bf16.mxu0 %v3159
        %6835 = vmatpush1.bf16.msra.mxu0 %v3158
        %6836 = vmatprep.subr.bf16.mxu0 %v3161
        %6837 = vmatpush1.bf16.msra.mxu0 %v3160
        %6838 = vmatprep.subr.bf16.mxu0 %v3163
        %6839 = vmatpush1.bf16.msra.mxu0 %v3162
        %6840 = vmatprep.subr.bf16.mxu0 %v3165
        %6841 = vmatpush1.bf16.msra.mxu0 %v3164
        %6842 = vmatprep.subr.bf16.mxu0 %v3167
        %6843 = vmatpush1.bf16.msra.mxu0 %v3166
        %6844 = vmatprep.subr.bf16.mxu0 %v3169
        %6845 = vmatpush1.bf16.msra.mxu0 %v3168
        %6846 = vmatprep.subr.bf16.mxu0 %v3171
        %6847 = vmatpush1.bf16.msra.mxu0 %v3170
        %6848 = vmatprep.subr.bf16.mxu0 %v3173
        %6849 = vmatpush1.bf16.msra.mxu0 %v3172
        %6850 = vmatprep.subr.bf16.mxu0 %v3175
        %6851 = vmatpush1.bf16.msra.mxu0 %v3174
        %6852 = vmatprep.subr.bf16.mxu0 %v3177
        %6853 = vmatpush1.bf16.msra.mxu0 %v3176
        %6854 = vmatprep.mubr.bf16.mxu0 %v6214
        %6855 = vmatmul.mubr.bf16.gmra.mrb[0].mxu0 %v6206
        %v6856 = vpop.f32.mrb[0].mxu0
        %v6857 = vadd.f32 %v6816, %v6856
        %v6858 = vpop.f32.mrb[0].mxu0
        %v6859 = vadd.f32 %v6818, %v6858
        %v6860 = vpop.f32.mrb[0].mxu0
        %v6861 = vpop.f32.mrb[0].mxu0
        %6862 = vdwg.mxu0
        %6863 = vmatprep.subr.bf16.mxu0 %v3179
        %6864 = vmatpush1.bf16.msra.mxu0 %v3178
        %6865 = vmatprep.subr.bf16.mxu0 %v3181
        %6866 = vmatpush1.bf16.msra.mxu0 %v3180
        %6867 = vmatprep.subr.bf16.mxu0 %v3183
        %6868 = vmatpush1.bf16.msra.mxu0 %v3182
        %6869 = vmatprep.subr.bf16.mxu0 %v3185
        %6870 = vmatpush1.bf16.msra.mxu0 %v3184
        %6871 = vmatprep.subr.bf16.mxu0 %v3187
        %6872 = vmatpush1.bf16.msra.mxu0 %v3186
        %6873 = vmatprep.subr.bf16.mxu0 %v3189
        %6874 = vmatpush1.bf16.msra.mxu0 %v3188
        %6875 = vmatprep.subr.bf16.mxu0 %v3191
        %6876 = vmatpush1.bf16.msra.mxu0 %v3190
        %6877 = vmatprep.subr.bf16.mxu0 %v3193
        %6878 = vmatpush1.bf16.msra.mxu0 %v3192
        %6879 = vmatprep.subr.bf16.mxu0 %v3195
        %6880 = vmatpush1.bf16.msra.mxu0 %v3194
        %6881 = vmatprep.subr.bf16.mxu0 %v3197
        %6882 = vmatpush1.bf16.msra.mxu0 %v3196
        %6883 = vmatprep.subr.bf16.mxu0 %v3199
        %6884 = vmatpush1.bf16.msra.mxu0 %v3198
        %6885 = vmatprep.subr.bf16.mxu0 %v3201
        %6886 = vmatpush1.bf16.msra.mxu0 %v3200
        %6887 = vmatprep.subr.bf16.mxu0 %v3203
        %6888 = vmatpush1.bf16.msra.mxu0 %v3202
        %6889 = vmatprep.subr.bf16.mxu0 %v3205
        %6890 = vmatpush1.bf16.msra.mxu0 %v3204
        %6891 = vmatprep.subr.bf16.mxu0 %v3207
        %6892 = vmatpush1.bf16.msra.mxu0 %v3206
        %6893 = vmatprep.subr.bf16.mxu0 %v3209
        %6894 = vmatpush1.bf16.msra.mxu0 %v3208
        %6895 = vmatprep.mubr.bf16.mxu0 %v6215
        %6896 = vmatmul.mubr.bf16.gmra.mrb[0].mxu0 %v6213
        %v6897 = vpop.f32.mrb[0].mxu0
        %v6898 = vadd.f32 %v6857, %v6897
        %v6899 = vpop.f32.mrb[0].mxu0
        %v6900 = vadd.f32 %v6859, %v6899
        %v6901 = vpop.f32.mrb[0].mxu0
        %v6902 = vpop.f32.mrb[0].mxu0
        %6903 = vdwg.mxu0
        %v6904 = vpack.c.bf16 %v6898, %v6898
        %v6905 = vpack.c.bf16 %v6900, %v6900
        %v6906 = vld [vmem:[%s455 + $0xc0] sm:$0xff]
        %v6907 = vld [vmem:[%s455 + $0xc8] sm:$0xff]
        %v6908 = vld [vmem:[%s455 + $0xd0] sm:$0xff]
        %v6909 = vld [vmem:[%s455 + $0xd8] sm:$0xff]
        %v6910 = vld [vmem:[%s455 + $0xe0] sm:$0xff]
        %v6911 = vld [vmem:[%s455 + $0xe8] sm:$0xff]
        %v6912 = vld [vmem:[%s455 + $0xf0] sm:$0xff]
        %v6913 = vld [vmem:[%s455 + $0xf8] sm:$0xff]
        %v6922 = vcombine.high %v6906, %v6906
        %v6924 = vunpack.c.l.s4 1983009808
        %v6925 = vunpack.c.0.s8 %v6924
        %v6926 = vlaneseq
        %v6927 = vshrl.u32 %v6926, 7
        %v6928 = vsub.s32 %v6925, %v6927
        %v6929 = vrot.slane %v6906, %v6928
        %v6931 = vunpack.c.l.s4 1983009808
        %v6932 = vunpack.c.0.s8 %v6931
        %v6933 = vlaneseq
        %v6934 = vshrl.u32 %v6933, 7
        %v6935 = vsub.s32 %v6932, %v6934
        %v6936 = vrot.slane %v6922, %v6935
        %v6937 = vcombine.high %v6929, %v6929
        %v6938 = vcombine.high %v6936, %v6936
        %v6939 = vcombine.high %v6907, %v6907
        %v6941 = vunpack.c.l.s4 1983009808
        %v6942 = vunpack.c.0.s8 %v6941
        %v6943 = vlaneseq
        %v6944 = vshrl.u32 %v6943, 7
        %v6945 = vsub.s32 %v6942, %v6944
        %v6946 = vrot.slane %v6907, %v6945
        %v6948 = vunpack.c.l.s4 1983009808
        %v6949 = vunpack.c.0.s8 %v6948
        %v6950 = vlaneseq
        %v6951 = vshrl.u32 %v6950, 7
        %v6952 = vsub.s32 %v6949, %v6951
        %v6953 = vrot.slane %v6939, %v6952
        %v6954 = vcombine.high %v6946, %v6946
        %v6955 = vcombine.high %v6953, %v6953
        %v6956 = vcombine.high %v6908, %v6908
        %v6958 = vunpack.c.l.s4 1983009808
        %v6959 = vunpack.c.0.s8 %v6958
        %v6960 = vlaneseq
        %v6961 = vshrl.u32 %v6960, 7
        %v6962 = vsub.s32 %v6959, %v6961
        %v6963 = vrot.slane %v6908, %v6962
        %v6965 = vunpack.c.l.s4 1983009808
        %v6966 = vunpack.c.0.s8 %v6965
        %v6967 = vlaneseq
        %v6968 = vshrl.u32 %v6967, 7
        %v6969 = vsub.s32 %v6966, %v6968
        %v6970 = vrot.slane %v6956, %v6969
        %v6971 = vcombine.high %v6963, %v6963
        %v6972 = vcombine.high %v6970, %v6970
        %v6973 = vcombine.high %v6909, %v6909
        %v6975 = vunpack.c.l.s4 1983009808
        %v6976 = vunpack.c.0.s8 %v6975
        %v6977 = vlaneseq
        %v6978 = vshrl.u32 %v6977, 7
        %v6979 = vsub.s32 %v6976, %v6978
        %v6980 = vrot.slane %v6909, %v6979
        %v6982 = vunpack.c.l.s4 1983009808
        %v6983 = vunpack.c.0.s8 %v6982
        %v6984 = vlaneseq
        %v6985 = vshrl.u32 %v6984, 7
        %v6986 = vsub.s32 %v6983, %v6985
        %v6987 = vrot.slane %v6973, %v6986
        %v6988 = vcombine.high %v6980, %v6980
        %v6989 = vcombine.high %v6987, %v6987
        %v6990 = vcombine.high %v6910, %v6910
        %v6992 = vunpack.c.l.s4 1983009808
        %v6993 = vunpack.c.0.s8 %v6992
        %v6994 = vlaneseq
        %v6995 = vshrl.u32 %v6994, 7
        %v6996 = vsub.s32 %v6993, %v6995
        %v6997 = vrot.slane %v6910, %v6996
        %v6999 = vunpack.c.l.s4 1983009808
        %v7000 = vunpack.c.0.s8 %v6999
        %v7001 = vlaneseq
        %v7002 = vshrl.u32 %v7001, 7
        %v7003 = vsub.s32 %v7000, %v7002
        %v7004 = vrot.slane %v6990, %v7003
        %v7005 = vcombine.high %v6997, %v6997
        %v7006 = vcombine.high %v7004, %v7004
        %v7007 = vcombine.high %v6911, %v6911
        %v7009 = vunpack.c.l.s4 1983009808
        %v7010 = vunpack.c.0.s8 %v7009
        %v7011 = vlaneseq
        %v7012 = vshrl.u32 %v7011, 7
        %v7013 = vsub.s32 %v7010, %v7012
        %v7014 = vrot.slane %v6911, %v7013
        %v7016 = vunpack.c.l.s4 1983009808
        %v7017 = vunpack.c.0.s8 %v7016
        %v7018 = vlaneseq
        %v7019 = vshrl.u32 %v7018, 7
        %v7020 = vsub.s32 %v7017, %v7019
        %v7021 = vrot.slane %v7007, %v7020
        %v7022 = vcombine.high %v7014, %v7014
        %v7023 = vcombine.high %v7021, %v7021
        %v7024 = vcombine.high %v6912, %v6912
        %v7026 = vunpack.c.l.s4 1983009808
        %v7027 = vunpack.c.0.s8 %v7026
        %v7028 = vlaneseq
        %v7029 = vshrl.u32 %v7028, 7
        %v7030 = vsub.s32 %v7027, %v7029
        %v7031 = vrot.slane %v6912, %v7030
        %v7033 = vunpack.c.l.s4 1983009808
        %v7034 = vunpack.c.0.s8 %v7033
        %v7035 = vlaneseq
        %v7036 = vshrl.u32 %v7035, 7
        %v7037 = vsub.s32 %v7034, %v7036
        %v7038 = vrot.slane %v7024, %v7037
        %v7039 = vcombine.high %v7031, %v7031
        %v7040 = vcombine.high %v7038, %v7038
        %v7041 = vcombine.high %v6913, %v6913
        %v7043 = vunpack.c.l.s4 1983009808
        %v7044 = vunpack.c.0.s8 %v7043
        %v7045 = vlaneseq
        %v7046 = vshrl.u32 %v7045, 7
        %v7047 = vsub.s32 %v7044, %v7046
        %v7048 = vrot.slane %v6913, %v7047
        %v7050 = vunpack.c.l.s4 1983009808
        %v7051 = vunpack.c.0.s8 %v7050
        %v7052 = vlaneseq
        %v7053 = vshrl.u32 %v7052, 7
        %v7054 = vsub.s32 %v7051, %v7053
        %v7055 = vrot.slane %v7041, %v7054
        %v7056 = vcombine.high %v7048, %v7048
        %v7057 = vcombine.high %v7055, %v7055
        %7090 = vmatprep.subr.bf16.mxu0 %v2699
        %7091 = vmatpush1.bf16.msra.mxu0 %v2698
        %7092 = vmatprep.subr.bf16.mxu0 %v2701
        %7093 = vmatpush1.bf16.msra.mxu0 %v2700
        %7094 = vmatprep.subr.bf16.mxu0 %v2703
        %7095 = vmatpush1.bf16.msra.mxu0 %v2702
        %7096 = vmatprep.subr.bf16.mxu0 %v2705
        %7097 = vmatpush1.bf16.msra.mxu0 %v2704
        %7098 = vmatprep.subr.bf16.mxu0 %v2707
        %7099 = vmatpush1.bf16.msra.mxu0 %v2706
        %7100 = vmatprep.subr.bf16.mxu0 %v2709
        %7101 = vmatpush1.bf16.msra.mxu0 %v2708
        %7102 = vmatprep.subr.bf16.mxu0 %v2711
        %7103 = vmatpush1.bf16.msra.mxu0 %v2710
        %7104 = vmatprep.subr.bf16.mxu0 %v2713
        %7105 = vmatpush1.bf16.msra.mxu0 %v2712
        %7106 = vmatprep.subr.bf16.mxu0 %v2715
        %7107 = vmatpush1.bf16.msra.mxu0 %v2714
        %7108 = vmatprep.subr.bf16.mxu0 %v2717
        %7109 = vmatpush1.bf16.msra.mxu0 %v2716
        %7110 = vmatprep.subr.bf16.mxu0 %v2719
        %7111 = vmatpush1.bf16.msra.mxu0 %v2718
        %7112 = vmatprep.subr.bf16.mxu0 %v2721
        %7113 = vmatpush1.bf16.msra.mxu0 %v2720
        %7114 = vmatprep.subr.bf16.mxu0 %v2723
        %7115 = vmatpush1.bf16.msra.mxu0 %v2722
        %7116 = vmatprep.subr.bf16.mxu0 %v2725
        %7117 = vmatpush1.bf16.msra.mxu0 %v2724
        %7118 = vmatprep.subr.bf16.mxu0 %v2727
        %7119 = vmatpush1.bf16.msra.mxu0 %v2726
        %7120 = vmatprep.subr.bf16.mxu0 %v2729
        %7121 = vmatpush1.bf16.msra.mxu0 %v2728
        %7122 = vmatprep.mubr.bf16.mxu0 %v6937
        %7123 = vmatmul.mubr.bf16.gmra.mrb[0].mxu0 %v6929
        %v7124 = vpop.f32.mrb[0].mxu0
        %v7125 = vadd.f32 0.0, %v7124
        %v7126 = vpop.f32.mrb[0].mxu0
        %v7127 = vadd.f32 0.0, %v7126
        %v7128 = vpop.f32.mrb[0].mxu0
        %v7129 = vpop.f32.mrb[0].mxu0
        %7130 = vdwg.mxu0
        %7131 = vmatprep.subr.bf16.mxu0 %v2731
        %7132 = vmatpush1.bf16.msra.mxu0 %v2730
        %7133 = vmatprep.subr.bf16.mxu0 %v2733
        %7134 = vmatpush1.bf16.msra.mxu0 %v2732
        %7135 = vmatprep.subr.bf16.mxu0 %v2735
        %7136 = vmatpush1.bf16.msra.mxu0 %v2734
        %7137 = vmatprep.subr.bf16.mxu0 %v2737
        %7138 = vmatpush1.bf16.msra.mxu0 %v2736
        %7139 = vmatprep.subr.bf16.mxu0 %v2739
        %7140 = vmatpush1.bf16.msra.mxu0 %v2738
        %7141 = vmatprep.subr.bf16.mxu0 %v2741
        %7142 = vmatpush1.bf16.msra.mxu0 %v2740
        %7143 = vmatprep.subr.bf16.mxu0 %v2743
        %7144 = vmatpush1.bf16.msra.mxu0 %v2742
        %7145 = vmatprep.subr.bf16.mxu0 %v2745
        %7146 = vmatpush1.bf16.msra.mxu0 %v2744
        %7147 = vmatprep.subr.bf16.mxu0 %v2747
        %7148 = vmatpush1.bf16.msra.mxu0 %v2746
        %7149 = vmatprep.subr.bf16.mxu0 %v2749
        %7150 = vmatpush1.bf16.msra.mxu0 %v2748
        %7151 = vmatprep.subr.bf16.mxu0 %v2751
        %7152 = vmatpush1.bf16.msra.mxu0 %v2750
        %7153 = vmatprep.subr.bf16.mxu0 %v2753
        %7154 = vmatpush1.bf16.msra.mxu0 %v2752
        %7155 = vmatprep.subr.bf16.mxu0 %v2755
        %7156 = vmatpush1.bf16.msra.mxu0 %v2754
        %7157 = vmatprep.subr.bf16.mxu0 %v2757
        %7158 = vmatpush1.bf16.msra.mxu0 %v2756
        %7159 = vmatprep.subr.bf16.mxu0 %v2759
        %7160 = vmatpush1.bf16.msra.mxu0 %v2758
        %7161 = vmatprep.subr.bf16.mxu0 %v2761
        %7162 = vmatpush1.bf16.msra.mxu0 %v2760
        %7163 = vmatprep.mubr.bf16.mxu0 %v6938
        %7164 = vmatmul.mubr.bf16.gmra.mrb[0].mxu0 %v6936
        %v7165 = vpop.f32.mrb[0].mxu0
        %v7166 = vadd.f32 %v7125, %v7165
        %v7167 = vpop.f32.mrb[0].mxu0
        %v7168 = vadd.f32 %v7127, %v7167
        %v7169 = vpop.f32.mrb[0].mxu0
        %v7170 = vpop.f32.mrb[0].mxu0
        %7171 = vdwg.mxu0
        %7172 = vmatprep.subr.bf16.mxu0 %v2763
        %7173 = vmatpush1.bf16.msra.mxu0 %v2762
        %7174 = vmatprep.subr.bf16.mxu0 %v2765
        %7175 = vmatpush1.bf16.msra.mxu0 %v2764
        %7176 = vmatprep.subr.bf16.mxu0 %v2767
        %7177 = vmatpush1.bf16.msra.mxu0 %v2766
        %7178 = vmatprep.subr.bf16.mxu0 %v2769
        %7179 = vmatpush1.bf16.msra.mxu0 %v2768
        %7180 = vmatprep.subr.bf16.mxu0 %v2771
        %7181 = vmatpush1.bf16.msra.mxu0 %v2770
        %7182 = vmatprep.subr.bf16.mxu0 %v2773
        %7183 = vmatpush1.bf16.msra.mxu0 %v2772
        %7184 = vmatprep.subr.bf16.mxu0 %v2775
        %7185 = vmatpush1.bf16.msra.mxu0 %v2774
        %7186 = vmatprep.subr.bf16.mxu0 %v2777
        %7187 = vmatpush1.bf16.msra.mxu0 %v2776
        %7188 = vmatprep.subr.bf16.mxu0 %v2779
        %7189 = vmatpush1.bf16.msra.mxu0 %v2778
        %7190 = vmatprep.subr.bf16.mxu0 %v2781
        %7191 = vmatpush1.bf16.msra.mxu0 %v2780
        %7192 = vmatprep.subr.bf16.mxu0 %v2783
        %7193 = vmatpush1.bf16.msra.mxu0 %v2782
        %7194 = vmatprep.subr.bf16.mxu0 %v2785
        %7195 = vmatpush1.bf16.msra.mxu0 %v2784
        %7196 = vmatprep.subr.bf16.mxu0 %v2787
        %7197 = vmatpush1.bf16.msra.mxu0 %v2786
        %7198 = vmatprep.subr.bf16.mxu0 %v2789
        %7199 = vmatpush1.bf16.msra.mxu0 %v2788
        %7200 = vmatprep.subr.bf16.mxu0 %v2791
        %7201 = vmatpush1.bf16.msra.mxu0 %v2790
        %7202 = vmatprep.subr.bf16.mxu0 %v2793
        %7203 = vmatpush1.bf16.msra.mxu0 %v2792
        %7204 = vmatprep.mubr.bf16.mxu0 %v6954
        %7205 = vmatmul.mubr.bf16.gmra.mrb[0].mxu0 %v6946
        %v7206 = vpop.f32.mrb[0].mxu0
        %v7207 = vadd.f32 %v7166, %v7206
        %v7208 = vpop.f32.mrb[0].mxu0
        %v7209 = vadd.f32 %v7168, %v7208
        %v7210 = vpop.f32.mrb[0].mxu0
        %v7211 = vpop.f32.mrb[0].mxu0
        %7212 = vdwg.mxu0
        %7213 = vmatprep.subr.bf16.mxu0 %v2795
        %7214 = vmatpush1.bf16.msra.mxu0 %v2794
        %7215 = vmatprep.subr.bf16.mxu0 %v2797
        %7216 = vmatpush1.bf16.msra.mxu0 %v2796
        %7217 = vmatprep.subr.bf16.mxu0 %v2799
        %7218 = vmatpush1.bf16.msra.mxu0 %v2798
        %7219 = vmatprep.subr.bf16.mxu0 %v2801
        %7220 = vmatpush1.bf16.msra.mxu0 %v2800
        %7221 = vmatprep.subr.bf16.mxu0 %v2803
        %7222 = vmatpush1.bf16.msra.mxu0 %v2802
        %7223 = vmatprep.subr.bf16.mxu0 %v2805
        %7224 = vmatpush1.bf16.msra.mxu0 %v2804
        %7225 = vmatprep.subr.bf16.mxu0 %v2807
        %7226 = vmatpush1.bf16.msra.mxu0 %v2806
        %7227 = vmatprep.subr.bf16.mxu0 %v2809
        %7228 = vmatpush1.bf16.msra.mxu0 %v2808
        %7229 = vmatprep.subr.bf16.mxu0 %v2811
        %7230 = vmatpush1.bf16.msra.mxu0 %v2810
        %7231 = vmatprep.subr.bf16.mxu0 %v2813
        %7232 = vmatpush1.bf16.msra.mxu0 %v2812
        %7233 = vmatprep.subr.bf16.mxu0 %v2815
        %7234 = vmatpush1.bf16.msra.mxu0 %v2814
        %7235 = vmatprep.subr.bf16.mxu0 %v2817
        %7236 = vmatpush1.bf16.msra.mxu0 %v2816
        %7237 = vmatprep.subr.bf16.mxu0 %v2819
        %7238 = vmatpush1.bf16.msra.mxu0 %v2818
        %7239 = vmatprep.subr.bf16.mxu0 %v2821
        %7240 = vmatpush1.bf16.msra.mxu0 %v2820
        %7241 = vmatprep.subr.bf16.mxu0 %v2823
        %7242 = vmatpush1.bf16.msra.mxu0 %v2822
        %7243 = vmatprep.subr.bf16.mxu0 %v2825
        %7244 = vmatpush1.bf16.msra.mxu0 %v2824
        %7245 = vmatprep.mubr.bf16.mxu0 %v6955
        %7246 = vmatmul.mubr.bf16.gmra.mrb[0].mxu0 %v6953
        %v7247 = vpop.f32.mrb[0].mxu0
        %v7248 = vadd.f32 %v7207, %v7247
        %v7249 = vpop.f32.mrb[0].mxu0
        %v7250 = vadd.f32 %v7209, %v7249
        %v7251 = vpop.f32.mrb[0].mxu0
        %v7252 = vpop.f32.mrb[0].mxu0
        %7253 = vdwg.mxu0
        %7254 = vmatprep.subr.bf16.mxu0 %v2827
        %7255 = vmatpush1.bf16.msra.mxu0 %v2826
        %7256 = vmatprep.subr.bf16.mxu0 %v2829
        %7257 = vmatpush1.bf16.msra.mxu0 %v2828
        %7258 = vmatprep.subr.bf16.mxu0 %v2831
        %7259 = vmatpush1.bf16.msra.mxu0 %v2830
        %7260 = vmatprep.subr.bf16.mxu0 %v2833
        %7261 = vmatpush1.bf16.msra.mxu0 %v2832
        %7262 = vmatprep.subr.bf16.mxu0 %v2835
        %7263 = vmatpush1.bf16.msra.mxu0 %v2834
        %7264 = vmatprep.subr.bf16.mxu0 %v2837
        %7265 = vmatpush1.bf16.msra.mxu0 %v2836
        %7266 = vmatprep.subr.bf16.mxu0 %v2839
        %7267 = vmatpush1.bf16.msra.mxu0 %v2838
        %7268 = vmatprep.subr.bf16.mxu0 %v2841
        %7269 = vmatpush1.bf16.msra.mxu0 %v2840
        %7270 = vmatprep.subr.bf16.mxu0 %v2843
        %7271 = vmatpush1.bf16.msra.mxu0 %v2842
        %7272 = vmatprep.subr.bf16.mxu0 %v2845
        %7273 = vmatpush1.bf16.msra.mxu0 %v2844
        %7274 = vmatprep.subr.bf16.mxu0 %v2847
        %7275 = vmatpush1.bf16.msra.mxu0 %v2846
        %7276 = vmatprep.subr.bf16.mxu0 %v2849
        %7277 = vmatpush1.bf16.msra.mxu0 %v2848
        %7278 = vmatprep.subr.bf16.mxu0 %v2851
        %7279 = vmatpush1.bf16.msra.mxu0 %v2850
        %7280 = vmatprep.subr.bf16.mxu0 %v2853
        %7281 = vmatpush1.bf16.msra.mxu0 %v2852
        %7282 = vmatprep.subr.bf16.mxu0 %v2855
        %7283 = vmatpush1.bf16.msra.mxu0 %v2854
        %7284 = vmatprep.subr.bf16.mxu0 %v2857
        %7285 = vmatpush1.bf16.msra.mxu0 %v2856
        %7286 = vmatprep.mubr.bf16.mxu0 %v6971
        %7287 = vmatmul.mubr.bf16.gmra.mrb[0].mxu0 %v6963
        %v7288 = vpop.f32.mrb[0].mxu0
        %v7289 = vadd.f32 %v7248, %v7288
        %v7290 = vpop.f32.mrb[0].mxu0
        %v7291 = vadd.f32 %v7250, %v7290
        %v7292 = vpop.f32.mrb[0].mxu0
        %v7293 = vpop.f32.mrb[0].mxu0
        %7294 = vdwg.mxu0
        %7295 = vmatprep.subr.bf16.mxu0 %v2859
        %7296 = vmatpush1.bf16.msra.mxu0 %v2858
        %7297 = vmatprep.subr.bf16.mxu0 %v2861
        %7298 = vmatpush1.bf16.msra.mxu0 %v2860
        %7299 = vmatprep.subr.bf16.mxu0 %v2863
        %7300 = vmatpush1.bf16.msra.mxu0 %v2862
        %7301 = vmatprep.subr.bf16.mxu0 %v2865
        %7302 = vmatpush1.bf16.msra.mxu0 %v2864
        %7303 = vmatprep.subr.bf16.mxu0 %v2867
        %7304 = vmatpush1.bf16.msra.mxu0 %v2866
        %7305 = vmatprep.subr.bf16.mxu0 %v2869
        %7306 = vmatpush1.bf16.msra.mxu0 %v2868
        %7307 = vmatprep.subr.bf16.mxu0 %v2871
        %7308 = vmatpush1.bf16.msra.mxu0 %v2870
        %7309 = vmatprep.subr.bf16.mxu0 %v2873
        %7310 = vmatpush1.bf16.msra.mxu0 %v2872
        %7311 = vmatprep.subr.bf16.mxu0 %v2875
        %7312 = vmatpush1.bf16.msra.mxu0 %v2874
        %7313 = vmatprep.subr.bf16.mxu0 %v2877
        %7314 = vmatpush1.bf16.msra.mxu0 %v2876
        %7315 = vmatprep.subr.bf16.mxu0 %v2879
        %7316 = vmatpush1.bf16.msra.mxu0 %v2878
        %7317 = vmatprep.subr.bf16.mxu0 %v2881
        %7318 = vmatpush1.bf16.msra.mxu0 %v2880
        %7319 = vmatprep.subr.bf16.mxu0 %v2883
        %7320 = vmatpush1.bf16.msra.mxu0 %v2882
        %7321 = vmatprep.subr.bf16.mxu0 %v2885
        %7322 = vmatpush1.bf16.msra.mxu0 %v2884
        %7323 = vmatprep.subr.bf16.mxu0 %v2887
        %7324 = vmatpush1.bf16.msra.mxu0 %v2886
        %7325 = vmatprep.subr.bf16.mxu0 %v2889
        %7326 = vmatpush1.bf16.msra.mxu0 %v2888
        %7327 = vmatprep.mubr.bf16.mxu0 %v6972
        %7328 = vmatmul.mubr.bf16.gmra.mrb[0].mxu0 %v6970
        %v7329 = vpop.f32.mrb[0].mxu0
        %v7330 = vadd.f32 %v7289, %v7329
        %v7331 = vpop.f32.mrb[0].mxu0
        %v7332 = vadd.f32 %v7291, %v7331
        %v7333 = vpop.f32.mrb[0].mxu0
        %v7334 = vpop.f32.mrb[0].mxu0
        %7335 = vdwg.mxu0
        %7336 = vmatprep.subr.bf16.mxu0 %v2891
        %7337 = vmatpush1.bf16.msra.mxu0 %v2890
        %7338 = vmatprep.subr.bf16.mxu0 %v2893
        %7339 = vmatpush1.bf16.msra.mxu0 %v2892
        %7340 = vmatprep.subr.bf16.mxu0 %v2895
        %7341 = vmatpush1.bf16.msra.mxu0 %v2894
        %7342 = vmatprep.subr.bf16.mxu0 %v2897
        %7343 = vmatpush1.bf16.msra.mxu0 %v2896
        %7344 = vmatprep.subr.bf16.mxu0 %v2899
        %7345 = vmatpush1.bf16.msra.mxu0 %v2898
        %7346 = vmatprep.subr.bf16.mxu0 %v2901
        %7347 = vmatpush1.bf16.msra.mxu0 %v2900
        %7348 = vmatprep.subr.bf16.mxu0 %v2903
        %7349 = vmatpush1.bf16.msra.mxu0 %v2902
        %7350 = vmatprep.subr.bf16.mxu0 %v2905
        %7351 = vmatpush1.bf16.msra.mxu0 %v2904
        %7352 = vmatprep.subr.bf16.mxu0 %v2907
        %7353 = vmatpush1.bf16.msra.mxu0 %v2906
        %7354 = vmatprep.subr.bf16.mxu0 %v2909
        %7355 = vmatpush1.bf16.msra.mxu0 %v2908
        %7356 = vmatprep.subr.bf16.mxu0 %v2911
        %7357 = vmatpush1.bf16.msra.mxu0 %v2910
        %7358 = vmatprep.subr.bf16.mxu0 %v2913
        %7359 = vmatpush1.bf16.msra.mxu0 %v2912
        %7360 = vmatprep.subr.bf16.mxu0 %v2915
        %7361 = vmatpush1.bf16.msra.mxu0 %v2914
        %7362 = vmatprep.subr.bf16.mxu0 %v2917
        %7363 = vmatpush1.bf16.msra.mxu0 %v2916
        %7364 = vmatprep.subr.bf16.mxu0 %v2919
        %7365 = vmatpush1.bf16.msra.mxu0 %v2918
        %7366 = vmatprep.subr.bf16.mxu0 %v2921
        %7367 = vmatpush1.bf16.msra.mxu0 %v2920
        %7368 = vmatprep.mubr.bf16.mxu0 %v6988
        %7369 = vmatmul.mubr.bf16.gmra.mrb[0].mxu0 %v6980
        %v7370 = vpop.f32.mrb[0].mxu0
        %v7371 = vadd.f32 %v7330, %v7370
        %v7372 = vpop.f32.mrb[0].mxu0
        %v7373 = vadd.f32 %v7332, %v7372
        %v7374 = vpop.f32.mrb[0].mxu0
        %v7375 = vpop.f32.mrb[0].mxu0
        %7376 = vdwg.mxu0
        %7377 = vmatprep.subr.bf16.mxu0 %v2923
        %7378 = vmatpush1.bf16.msra.mxu0 %v2922
        %7379 = vmatprep.subr.bf16.mxu0 %v2925
        %7380 = vmatpush1.bf16.msra.mxu0 %v2924
        %7381 = vmatprep.subr.bf16.mxu0 %v2927
        %7382 = vmatpush1.bf16.msra.mxu0 %v2926
        %7383 = vmatprep.subr.bf16.mxu0 %v2929
        %7384 = vmatpush1.bf16.msra.mxu0 %v2928
        %7385 = vmatprep.subr.bf16.mxu0 %v2931
        %7386 = vmatpush1.bf16.msra.mxu0 %v2930
        %7387 = vmatprep.subr.bf16.mxu0 %v2933
        %7388 = vmatpush1.bf16.msra.mxu0 %v2932
        %7389 = vmatprep.subr.bf16.mxu0 %v2935
        %7390 = vmatpush1.bf16.msra.mxu0 %v2934
        %7391 = vmatprep.subr.bf16.mxu0 %v2937
        %7392 = vmatpush1.bf16.msra.mxu0 %v2936
        %7393 = vmatprep.subr.bf16.mxu0 %v2939
        %7394 = vmatpush1.bf16.msra.mxu0 %v2938
        %7395 = vmatprep.subr.bf16.mxu0 %v2941
        %7396 = vmatpush1.bf16.msra.mxu0 %v2940
        %7397 = vmatprep.subr.bf16.mxu0 %v2943
        %7398 = vmatpush1.bf16.msra.mxu0 %v2942
        %7399 = vmatprep.subr.bf16.mxu0 %v2945
        %7400 = vmatpush1.bf16.msra.mxu0 %v2944
        %7401 = vmatprep.subr.bf16.mxu0 %v2947
        %7402 = vmatpush1.bf16.msra.mxu0 %v2946
        %7403 = vmatprep.subr.bf16.mxu0 %v2949
        %7404 = vmatpush1.bf16.msra.mxu0 %v2948
        %7405 = vmatprep.subr.bf16.mxu0 %v2951
        %7406 = vmatpush1.bf16.msra.mxu0 %v2950
        %7407 = vmatprep.subr.bf16.mxu0 %v2953
        %7408 = vmatpush1.bf16.msra.mxu0 %v2952
        %7409 = vmatprep.mubr.bf16.mxu0 %v6989
        %7410 = vmatmul.mubr.bf16.gmra.mrb[0].mxu0 %v6987
        %v7411 = vpop.f32.mrb[0].mxu0
        %v7412 = vadd.f32 %v7371, %v7411
        %v7413 = vpop.f32.mrb[0].mxu0
        %v7414 = vadd.f32 %v7373, %v7413
        %v7415 = vpop.f32.mrb[0].mxu0
        %v7416 = vpop.f32.mrb[0].mxu0
        %7417 = vdwg.mxu0
        %7418 = vmatprep.subr.bf16.mxu0 %v2955
        %7419 = vmatpush1.bf16.msra.mxu0 %v2954
        %7420 = vmatprep.subr.bf16.mxu0 %v2957
        %7421 = vmatpush1.bf16.msra.mxu0 %v2956
        %7422 = vmatprep.subr.bf16.mxu0 %v2959
        %7423 = vmatpush1.bf16.msra.mxu0 %v2958
        %7424 = vmatprep.subr.bf16.mxu0 %v2961
        %7425 = vmatpush1.bf16.msra.mxu0 %v2960
        %7426 = vmatprep.subr.bf16.mxu0 %v2963
        %7427 = vmatpush1.bf16.msra.mxu0 %v2962
        %7428 = vmatprep.subr.bf16.mxu0 %v2965
        %7429 = vmatpush1.bf16.msra.mxu0 %v2964
        %7430 = vmatprep.subr.bf16.mxu0 %v2967
        %7431 = vmatpush1.bf16.msra.mxu0 %v2966
        %7432 = vmatprep.subr.bf16.mxu0 %v2969
        %7433 = vmatpush1.bf16.msra.mxu0 %v2968
        %7434 = vmatprep.subr.bf16.mxu0 %v2971
        %7435 = vmatpush1.bf16.msra.mxu0 %v2970
        %7436 = vmatprep.subr.bf16.mxu0 %v2973
        %7437 = vmatpush1.bf16.msra.mxu0 %v2972
        %7438 = vmatprep.subr.bf16.mxu0 %v2975
        %7439 = vmatpush1.bf16.msra.mxu0 %v2974
        %7440 = vmatprep.subr.bf16.mxu0 %v2977
        %7441 = vmatpush1.bf16.msra.mxu0 %v2976
        %7442 = vmatprep.subr.bf16.mxu0 %v2979
        %7443 = vmatpush1.bf16.msra.mxu0 %v2978
        %7444 = vmatprep.subr.bf16.mxu0 %v2981
        %7445 = vmatpush1.bf16.msra.mxu0 %v2980
        %7446 = vmatprep.subr.bf16.mxu0 %v2983
        %7447 = vmatpush1.bf16.msra.mxu0 %v2982
        %7448 = vmatprep.subr.bf16.mxu0 %v2985
        %7449 = vmatpush1.bf16.msra.mxu0 %v2984
        %7450 = vmatprep.mubr.bf16.mxu0 %v7005
        %7451 = vmatmul.mubr.bf16.gmra.mrb[0].mxu0 %v6997
        %v7452 = vpop.f32.mrb[0].mxu0
        %v7453 = vadd.f32 %v7412, %v7452
        %v7454 = vpop.f32.mrb[0].mxu0
        %v7455 = vadd.f32 %v7414, %v7454
        %v7456 = vpop.f32.mrb[0].mxu0
        %v7457 = vpop.f32.mrb[0].mxu0
        %7458 = vdwg.mxu0
        %7459 = vmatprep.subr.bf16.mxu0 %v2987
        %7460 = vmatpush1.bf16.msra.mxu0 %v2986
        %7461 = vmatprep.subr.bf16.mxu0 %v2989
        %7462 = vmatpush1.bf16.msra.mxu0 %v2988
        %7463 = vmatprep.subr.bf16.mxu0 %v2991
        %7464 = vmatpush1.bf16.msra.mxu0 %v2990
        %7465 = vmatprep.subr.bf16.mxu0 %v2993
        %7466 = vmatpush1.bf16.msra.mxu0 %v2992
        %7467 = vmatprep.subr.bf16.mxu0 %v2995
        %7468 = vmatpush1.bf16.msra.mxu0 %v2994
        %7469 = vmatprep.subr.bf16.mxu0 %v2997
        %7470 = vmatpush1.bf16.msra.mxu0 %v2996
        %7471 = vmatprep.subr.bf16.mxu0 %v2999
        %7472 = vmatpush1.bf16.msra.mxu0 %v2998
        %7473 = vmatprep.subr.bf16.mxu0 %v3001
        %7474 = vmatpush1.bf16.msra.mxu0 %v3000
        %7475 = vmatprep.subr.bf16.mxu0 %v3003
        %7476 = vmatpush1.bf16.msra.mxu0 %v3002
        %7477 = vmatprep.subr.bf16.mxu0 %v3005
        %7478 = vmatpush1.bf16.msra.mxu0 %v3004
        %7479 = vmatprep.subr.bf16.mxu0 %v3007
        %7480 = vmatpush1.bf16.msra.mxu0 %v3006
        %7481 = vmatprep.subr.bf16.mxu0 %v3009
        %7482 = vmatpush1.bf16.msra.mxu0 %v3008
        %7483 = vmatprep.subr.bf16.mxu0 %v3011
        %7484 = vmatpush1.bf16.msra.mxu0 %v3010
        %7485 = vmatprep.subr.bf16.mxu0 %v3013
        %7486 = vmatpush1.bf16.msra.mxu0 %v3012
        %7487 = vmatprep.subr.bf16.mxu0 %v3015
        %7488 = vmatpush1.bf16.msra.mxu0 %v3014
        %7489 = vmatprep.subr.bf16.mxu0 %v3017
        %7490 = vmatpush1.bf16.msra.mxu0 %v3016
        %7491 = vmatprep.mubr.bf16.mxu0 %v7006
        %7492 = vmatmul.mubr.bf16.gmra.mrb[0].mxu0 %v7004
        %v7493 = vpop.f32.mrb[0].mxu0
        %v7494 = vadd.f32 %v7453, %v7493
        %v7495 = vpop.f32.mrb[0].mxu0
        %v7496 = vadd.f32 %v7455, %v7495
        %v7497 = vpop.f32.mrb[0].mxu0
        %v7498 = vpop.f32.mrb[0].mxu0
        %7499 = vdwg.mxu0
        %7500 = vmatprep.subr.bf16.mxu0 %v3019
        %7501 = vmatpush1.bf16.msra.mxu0 %v3018
        %7502 = vmatprep.subr.bf16.mxu0 %v3021
        %7503 = vmatpush1.bf16.msra.mxu0 %v3020
        %7504 = vmatprep.subr.bf16.mxu0 %v3023
        %7505 = vmatpush1.bf16.msra.mxu0 %v3022
        %7506 = vmatprep.subr.bf16.mxu0 %v3025
        %7507 = vmatpush1.bf16.msra.mxu0 %v3024
        %7508 = vmatprep.subr.bf16.mxu0 %v3027
        %7509 = vmatpush1.bf16.msra.mxu0 %v3026
        %7510 = vmatprep.subr.bf16.mxu0 %v3029
        %7511 = vmatpush1.bf16.msra.mxu0 %v3028
        %7512 = vmatprep.subr.bf16.mxu0 %v3031
        %7513 = vmatpush1.bf16.msra.mxu0 %v3030
        %7514 = vmatprep.subr.bf16.mxu0 %v3033
        %7515 = vmatpush1.bf16.msra.mxu0 %v3032
        %7516 = vmatprep.subr.bf16.mxu0 %v3035
        %7517 = vmatpush1.bf16.msra.mxu0 %v3034
        %7518 = vmatprep.subr.bf16.mxu0 %v3037
        %7519 = vmatpush1.bf16.msra.mxu0 %v3036
        %7520 = vmatprep.subr.bf16.mxu0 %v3039
        %7521 = vmatpush1.bf16.msra.mxu0 %v3038
        %7522 = vmatprep.subr.bf16.mxu0 %v3041
        %7523 = vmatpush1.bf16.msra.mxu0 %v3040
        %7524 = vmatprep.subr.bf16.mxu0 %v3043
        %7525 = vmatpush1.bf16.msra.mxu0 %v3042
        %7526 = vmatprep.subr.bf16.mxu0 %v3045
        %7527 = vmatpush1.bf16.msra.mxu0 %v3044
        %7528 = vmatprep.subr.bf16.mxu0 %v3047
        %7529 = vmatpush1.bf16.msra.mxu0 %v3046
        %7530 = vmatprep.subr.bf16.mxu0 %v3049
        %7531 = vmatpush1.bf16.msra.mxu0 %v3048
        %7532 = vmatprep.mubr.bf16.mxu0 %v7022
        %7533 = vmatmul.mubr.bf16.gmra.mrb[0].mxu0 %v7014
        %v7534 = vpop.f32.mrb[0].mxu0
        %v7535 = vadd.f32 %v7494, %v7534
        %v7536 = vpop.f32.mrb[0].mxu0
        %v7537 = vadd.f32 %v7496, %v7536
        %v7538 = vpop.f32.mrb[0].mxu0
        %v7539 = vpop.f32.mrb[0].mxu0
        %7540 = vdwg.mxu0
        %7541 = vmatprep.subr.bf16.mxu0 %v3051
        %7542 = vmatpush1.bf16.msra.mxu0 %v3050
        %7543 = vmatprep.subr.bf16.mxu0 %v3053
        %7544 = vmatpush1.bf16.msra.mxu0 %v3052
        %7545 = vmatprep.subr.bf16.mxu0 %v3055
        %7546 = vmatpush1.bf16.msra.mxu0 %v3054
        %7547 = vmatprep.subr.bf16.mxu0 %v3057
        %7548 = vmatpush1.bf16.msra.mxu0 %v3056
        %7549 = vmatprep.subr.bf16.mxu0 %v3059
        %7550 = vmatpush1.bf16.msra.mxu0 %v3058
        %7551 = vmatprep.subr.bf16.mxu0 %v3061
        %7552 = vmatpush1.bf16.msra.mxu0 %v3060
        %7553 = vmatprep.subr.bf16.mxu0 %v3063
        %7554 = vmatpush1.bf16.msra.mxu0 %v3062
        %7555 = vmatprep.subr.bf16.mxu0 %v3065
        %7556 = vmatpush1.bf16.msra.mxu0 %v3064
        %7557 = vmatprep.subr.bf16.mxu0 %v3067
        %7558 = vmatpush1.bf16.msra.mxu0 %v3066
        %7559 = vmatprep.subr.bf16.mxu0 %v3069
        %7560 = vmatpush1.bf16.msra.mxu0 %v3068
        %7561 = vmatprep.subr.bf16.mxu0 %v3071
        %7562 = vmatpush1.bf16.msra.mxu0 %v3070
        %7563 = vmatprep.subr.bf16.mxu0 %v3073
        %7564 = vmatpush1.bf16.msra.mxu0 %v3072
        %7565 = vmatprep.subr.bf16.mxu0 %v3075
        %7566 = vmatpush1.bf16.msra.mxu0 %v3074
        %7567 = vmatprep.subr.bf16.mxu0 %v3077
        %7568 = vmatpush1.bf16.msra.mxu0 %v3076
        %7569 = vmatprep.subr.bf16.mxu0 %v3079
        %7570 = vmatpush1.bf16.msra.mxu0 %v3078
        %7571 = vmatprep.subr.bf16.mxu0 %v3081
        %7572 = vmatpush1.bf16.msra.mxu0 %v3080
        %7573 = vmatprep.mubr.bf16.mxu0 %v7023
        %7574 = vmatmul.mubr.bf16.gmra.mrb[0].mxu0 %v7021
        %v7575 = vpop.f32.mrb[0].mxu0
        %v7576 = vadd.f32 %v7535, %v7575
        %v7577 = vpop.f32.mrb[0].mxu0
        %v7578 = vadd.f32 %v7537, %v7577
        %v7579 = vpop.f32.mrb[0].mxu0
        %v7580 = vpop.f32.mrb[0].mxu0
        %7581 = vdwg.mxu0
        %7582 = vmatprep.subr.bf16.mxu0 %v3083
        %7583 = vmatpush1.bf16.msra.mxu0 %v3082
        %7584 = vmatprep.subr.bf16.mxu0 %v3085
        %7585 = vmatpush1.bf16.msra.mxu0 %v3084
        %7586 = vmatprep.subr.bf16.mxu0 %v3087
        %7587 = vmatpush1.bf16.msra.mxu0 %v3086
        %7588 = vmatprep.subr.bf16.mxu0 %v3089
        %7589 = vmatpush1.bf16.msra.mxu0 %v3088
        %7590 = vmatprep.subr.bf16.mxu0 %v3091
        %7591 = vmatpush1.bf16.msra.mxu0 %v3090
        %7592 = vmatprep.subr.bf16.mxu0 %v3093
        %7593 = vmatpush1.bf16.msra.mxu0 %v3092
        %7594 = vmatprep.subr.bf16.mxu0 %v3095
        %7595 = vmatpush1.bf16.msra.mxu0 %v3094
        %7596 = vmatprep.subr.bf16.mxu0 %v3097
        %7597 = vmatpush1.bf16.msra.mxu0 %v3096
        %7598 = vmatprep.subr.bf16.mxu0 %v3099
        %7599 = vmatpush1.bf16.msra.mxu0 %v3098
        %7600 = vmatprep.subr.bf16.mxu0 %v3101
        %7601 = vmatpush1.bf16.msra.mxu0 %v3100
        %7602 = vmatprep.subr.bf16.mxu0 %v3103
        %7603 = vmatpush1.bf16.msra.mxu0 %v3102
        %7604 = vmatprep.subr.bf16.mxu0 %v3105
        %7605 = vmatpush1.bf16.msra.mxu0 %v3104
        %7606 = vmatprep.subr.bf16.mxu0 %v3107
        %7607 = vmatpush1.bf16.msra.mxu0 %v3106
        %7608 = vmatprep.subr.bf16.mxu0 %v3109
        %7609 = vmatpush1.bf16.msra.mxu0 %v3108
        %7610 = vmatprep.subr.bf16.mxu0 %v3111
        %7611 = vmatpush1.bf16.msra.mxu0 %v3110
        %7612 = vmatprep.subr.bf16.mxu0 %v3113
        %7613 = vmatpush1.bf16.msra.mxu0 %v3112
        %7614 = vmatprep.mubr.bf16.mxu0 %v7039
        %7615 = vmatmul.mubr.bf16.gmra.mrb[0].mxu0 %v7031
        %v7616 = vpop.f32.mrb[0].mxu0
        %v7617 = vadd.f32 %v7576, %v7616
        %v7618 = vpop.f32.mrb[0].mxu0
        %v7619 = vadd.f32 %v7578, %v7618
        %v7620 = vpop.f32.mrb[0].mxu0
        %v7621 = vpop.f32.mrb[0].mxu0
        %7622 = vdwg.mxu0
        %7623 = vmatprep.subr.bf16.mxu0 %v3115
        %7624 = vmatpush1.bf16.msra.mxu0 %v3114
        %7625 = vmatprep.subr.bf16.mxu0 %v3117
        %7626 = vmatpush1.bf16.msra.mxu0 %v3116
        %7627 = vmatprep.subr.bf16.mxu0 %v3119
        %7628 = vmatpush1.bf16.msra.mxu0 %v3118
        %7629 = vmatprep.subr.bf16.mxu0 %v3121
        %7630 = vmatpush1.bf16.msra.mxu0 %v3120
        %7631 = vmatprep.subr.bf16.mxu0 %v3123
        %7632 = vmatpush1.bf16.msra.mxu0 %v3122
        %7633 = vmatprep.subr.bf16.mxu0 %v3125
        %7634 = vmatpush1.bf16.msra.mxu0 %v3124
        %7635 = vmatprep.subr.bf16.mxu0 %v3127
        %7636 = vmatpush1.bf16.msra.mxu0 %v3126
        %7637 = vmatprep.subr.bf16.mxu0 %v3129
        %7638 = vmatpush1.bf16.msra.mxu0 %v3128
        %7639 = vmatprep.subr.bf16.mxu0 %v3131
        %7640 = vmatpush1.bf16.msra.mxu0 %v3130
        %7641 = vmatprep.subr.bf16.mxu0 %v3133
        %7642 = vmatpush1.bf16.msra.mxu0 %v3132
        %7643 = vmatprep.subr.bf16.mxu0 %v3135
        %7644 = vmatpush1.bf16.msra.mxu0 %v3134
        %7645 = vmatprep.subr.bf16.mxu0 %v3137
        %7646 = vmatpush1.bf16.msra.mxu0 %v3136
        %7647 = vmatprep.subr.bf16.mxu0 %v3139
        %7648 = vmatpush1.bf16.msra.mxu0 %v3138
        %7649 = vmatprep.subr.bf16.mxu0 %v3141
        %7650 = vmatpush1.bf16.msra.mxu0 %v3140
        %7651 = vmatprep.subr.bf16.mxu0 %v3143
        %7652 = vmatpush1.bf16.msra.mxu0 %v3142
        %7653 = vmatprep.subr.bf16.mxu0 %v3145
        %7654 = vmatpush1.bf16.msra.mxu0 %v3144
        %7655 = vmatprep.mubr.bf16.mxu0 %v7040
        %7656 = vmatmul.mubr.bf16.gmra.mrb[0].mxu0 %v7038
        %v7657 = vpop.f32.mrb[0].mxu0
        %v7658 = vadd.f32 %v7617, %v7657
        %v7659 = vpop.f32.mrb[0].mxu0
        %v7660 = vadd.f32 %v7619, %v7659
        %v7661 = vpop.f32.mrb[0].mxu0
        %v7662 = vpop.f32.mrb[0].mxu0
        %7663 = vdwg.mxu0
        %7664 = vmatprep.subr.bf16.mxu0 %v3147
        %7665 = vmatpush1.bf16.msra.mxu0 %v3146
        %7666 = vmatprep.subr.bf16.mxu0 %v3149
        %7667 = vmatpush1.bf16.msra.mxu0 %v3148
        %7668 = vmatprep.subr.bf16.mxu0 %v3151
        %7669 = vmatpush1.bf16.msra.mxu0 %v3150
        %7670 = vmatprep.subr.bf16.mxu0 %v3153
        %7671 = vmatpush1.bf16.msra.mxu0 %v3152
        %7672 = vmatprep.subr.bf16.mxu0 %v3155
        %7673 = vmatpush1.bf16.msra.mxu0 %v3154
        %7674 = vmatprep.subr.bf16.mxu0 %v3157
        %7675 = vmatpush1.bf16.msra.mxu0 %v3156
        %7676 = vmatprep.subr.bf16.mxu0 %v3159
        %7677 = vmatpush1.bf16.msra.mxu0 %v3158
        %7678 = vmatprep.subr.bf16.mxu0 %v3161
        %7679 = vmatpush1.bf16.msra.mxu0 %v3160
        %7680 = vmatprep.subr.bf16.mxu0 %v3163
        %7681 = vmatpush1.bf16.msra.mxu0 %v3162
        %7682 = vmatprep.subr.bf16.mxu0 %v3165
        %7683 = vmatpush1.bf16.msra.mxu0 %v3164
        %7684 = vmatprep.subr.bf16.mxu0 %v3167
        %7685 = vmatpush1.bf16.msra.mxu0 %v3166
        %7686 = vmatprep.subr.bf16.mxu0 %v3169
        %7687 = vmatpush1.bf16.msra.mxu0 %v3168
        %7688 = vmatprep.subr.bf16.mxu0 %v3171
        %7689 = vmatpush1.bf16.msra.mxu0 %v3170
        %7690 = vmatprep.subr.bf16.mxu0 %v3173
        %7691 = vmatpush1.bf16.msra.mxu0 %v3172
        %7692 = vmatprep.subr.bf16.mxu0 %v3175
        %7693 = vmatpush1.bf16.msra.mxu0 %v3174
        %7694 = vmatprep.subr.bf16.mxu0 %v3177
        %7695 = vmatpush1.bf16.msra.mxu0 %v3176
        %7696 = vmatprep.mubr.bf16.mxu0 %v7056
        %7697 = vmatmul.mubr.bf16.gmra.mrb[0].mxu0 %v7048
        %v7698 = vpop.f32.mrb[0].mxu0
        %v7699 = vadd.f32 %v7658, %v7698
        %v7700 = vpop.f32.mrb[0].mxu0
        %v7701 = vadd.f32 %v7660, %v7700
        %v7702 = vpop.f32.mrb[0].mxu0
        %v7703 = vpop.f32.mrb[0].mxu0
        %7704 = vdwg.mxu0
        %7705 = vmatprep.subr.bf16.mxu0 %v3179
        %7706 = vmatpush1.bf16.msra.mxu0 %v3178
        %7707 = vmatprep.subr.bf16.mxu0 %v3181
        %7708 = vmatpush1.bf16.msra.mxu0 %v3180
        %7709 = vmatprep.subr.bf16.mxu0 %v3183
        %7710 = vmatpush1.bf16.msra.mxu0 %v3182
        %7711 = vmatprep.subr.bf16.mxu0 %v3185
        %7712 = vmatpush1.bf16.msra.mxu0 %v3184
        %7713 = vmatprep.subr.bf16.mxu0 %v3187
        %7714 = vmatpush1.bf16.msra.mxu0 %v3186
        %7715 = vmatprep.subr.bf16.mxu0 %v3189
        %7716 = vmatpush1.bf16.msra.mxu0 %v3188
        %7717 = vmatprep.subr.bf16.mxu0 %v3191
        %7718 = vmatpush1.bf16.msra.mxu0 %v3190
        %7719 = vmatprep.subr.bf16.mxu0 %v3193
        %7720 = vmatpush1.bf16.msra.mxu0 %v3192
        %7721 = vmatprep.subr.bf16.mxu0 %v3195
        %7722 = vmatpush1.bf16.msra.mxu0 %v3194
        %7723 = vmatprep.subr.bf16.mxu0 %v3197
        %7724 = vmatpush1.bf16.msra.mxu0 %v3196
        %7725 = vmatprep.subr.bf16.mxu0 %v3199
        %7726 = vmatpush1.bf16.msra.mxu0 %v3198
        %7727 = vmatprep.subr.bf16.mxu0 %v3201
        %7728 = vmatpush1.bf16.msra.mxu0 %v3200
        %7729 = vmatprep.subr.bf16.mxu0 %v3203
        %7730 = vmatpush1.bf16.msra.mxu0 %v3202
        %7731 = vmatprep.subr.bf16.mxu0 %v3205
        %7732 = vmatpush1.bf16.msra.mxu0 %v3204
        %7733 = vmatprep.subr.bf16.mxu0 %v3207
        %7734 = vmatpush1.bf16.msra.mxu0 %v3206
        %7735 = vmatprep.subr.bf16.mxu0 %v3209
        %7736 = vmatpush1.bf16.msra.mxu0 %v3208
        %7737 = vmatprep.mubr.bf16.mxu0 %v7057
        %7738 = vmatmul.mubr.bf16.gmra.mrb[0].mxu0 %v7055
        %v7739 = vpop.f32.mrb[0].mxu0
        %v7740 = vadd.f32 %v7699, %v7739
        %v7741 = vpop.f32.mrb[0].mxu0
        %v7742 = vadd.f32 %v7701, %v7741
        %v7743 = vpop.f32.mrb[0].mxu0
        %v7744 = vpop.f32.mrb[0].mxu0
        %7745 = vdwg.mxu0
        %v7746 = vpack.c.bf16 %v7740, %v7740
        %v7747 = vpack.c.bf16 %v7742, %v7742
        %v7748 = vld [vmem:[%s3] sm:$0xf]
        %v7749 = vld [vmem:[%s3 + $0x4] sm:$0xf]
        %v7750 = vld [vmem:[%s4] sm:$0xff]
        %v7751 = vld [vmem:[%s4 + $0x8] sm:$0xff]
        %7753 = vset.pattern.permute.xlu0 0
        %7754 = vperm.xlu0 %7753, %v7750
        %v7755 = vpop.permute.xlu0 %7754
        %7758 = vset.pattern.permute.xlu0 0
        %7759 = vperm.xlu0 %7758, %v7751
        %v7760 = vpop.permute.xlu0 %7759
        %v7764 = vunpack.c.l.b16 %v7748
        %v7765 = vunpack.c.l.b16 %v7749
        %v7766 = vpack.c.b16 %v7765, %v7764
        %vm7767 = vcmask 23552
        %v7769 = vsel %vm7767, %v7766, 0
        %vm7771 = vcmask 1040384
        %vm7772 = vcmask 1041408
        %v7773 = vsel %vm7771, 4294967295, 65535
        %v7774 = vsel %vm7772, %v7773, 0
        %v7776 = vand.u32 %v4378, %v7774
        %v7779 = vand.u32 %v4379, %v7774
        %7781 = vmatprep.subr.bf16.mxu0 %v7779
        %7782 = vmatpush1.bf16.msra.mxu0 %v7776
        %7783 = vmatprep.subr.bf16.mxu0 0
        %7784 = vmatpush1.bf16.msra.mxu0 0
        %7785 = vmatprep.subr.bf16.mxu0 0
        %7786 = vmatpush1.bf16.msra.mxu0 0
        %7787 = vmatprep.subr.bf16.mxu0 0
        %7788 = vmatpush1.bf16.msra.mxu0 0
        %7789 = vmatprep.subr.bf16.mxu0 0
        %7790 = vmatpush1.bf16.msra.mxu0 0
        %7791 = vmatprep.subr.bf16.mxu0 0
        %7792 = vmatpush1.bf16.msra.mxu0 0
        %7793 = vmatprep.subr.bf16.mxu0 0
        %7794 = vmatpush1.bf16.msra.mxu0 0
        %7795 = vmatprep.subr.bf16.mxu0 0
        %7796 = vmatpush1.bf16.msra.mxu0 0
        %7797 = vmatprep.subr.bf16.mxu0 0
        %7798 = vmatpush1.bf16.msra.mxu0 0
        %7799 = vmatprep.subr.bf16.mxu0 0
        %7800 = vmatpush1.bf16.msra.mxu0 0
        %7801 = vmatprep.subr.bf16.mxu0 0
        %7802 = vmatpush1.bf16.msra.mxu0 0
        %7803 = vmatprep.subr.bf16.mxu0 0
        %7804 = vmatpush1.bf16.msra.mxu0 0
        %7805 = vmatprep.subr.bf16.mxu0 0
        %7806 = vmatpush1.bf16.msra.mxu0 0
        %7807 = vmatprep.subr.bf16.mxu0 0
        %7808 = vmatpush1.bf16.msra.mxu0 0
        %7809 = vmatprep.subr.bf16.mxu0 0
        %7810 = vmatpush1.bf16.msra.mxu0 0
        %7811 = vmatprep.subr.bf16.mxu0 0
        %7812 = vmatpush1.bf16.msra.mxu0 0
        %7813 = vmatprep.mubr.bf16.mxu0 0
        %7814 = vmatmul.mubr.bf16.gmra.mrb[0].mxu0 %v7769
        %v7815 = vpop.f32.mrb[0].mxu0
        %v7816 = vadd.f32 %v7755, %v7815
        %v7817 = vpop.f32.mrb[0].mxu0
        %v7818 = vadd.f32 %v7755, %v7817
        %v7819 = vpop.f32.mrb[0].mxu0
        %v7820 = vadd.f32 %v7760, %v7819
        %v7821 = vpop.f32.mrb[0].mxu0
        %v7822 = vadd.f32 %v7760, %v7821
        %7823 = vdwg.mxu0
        %v7824 = vmax.f32 %v7816, 0.0
        %v7825 = vmax.f32 %v7818, 0.0
        %v7826 = vmax.f32 %v7820, 0.0
        %v7827 = vmax.f32 %v7822, 0.0
        %v7828 = vpack.c.bf16 %v7826, %v7824
        %v7829 = vpack.c.bf16 %v7827, %v7825
        %v7830 = vld [vmem:[%s5] sm:$0x3]
        %v7831 = vld [vmem:[%s6] sm:$0xf]
        %7833 = vset.pattern.permute.xlu0 0
        %7834 = vperm.xlu0 %7833, %v7831
        %v7835 = vpop.permute.xlu0 %7834
        %v7838 = vsel %vm7767, %v7830, 0
        %v7841 = vand.u32 %v5220, %v7774
        %v7844 = vand.u32 %v5221, %v7774
        %v7847 = vand.u32 %v6062, %v7774
        %v7850 = vand.u32 %v6063, %v7774
        %v7853 = vand.u32 %v6904, %v7774
        %v7856 = vand.u32 %v6905, %v7774
        %v7859 = vand.u32 %v7746, %v7774
        %v7862 = vand.u32 %v7747, %v7774
        %7864 = vmatprep.subr.bf16.mxu0 %v7844
        %7865 = vmatpush1.bf16.msra.mxu0 %v7841
        %7866 = vmatprep.subr.bf16.mxu0 0
        %7867 = vmatpush1.bf16.msra.mxu0 0
        %7868 = vmatprep.subr.bf16.mxu0 0
        %7869 = vmatpush1.bf16.msra.mxu0 0
        %7870 = vmatprep.subr.bf16.mxu0 0
        %7871 = vmatpush1.bf16.msra.mxu0 0
        %7872 = vmatprep.subr.bf16.mxu0 0
        %7873 = vmatpush1.bf16.msra.mxu0 0
        %7874 = vmatprep.subr.bf16.mxu0 0
        %7875 = vmatpush1.bf16.msra.mxu0 0
        %7876 = vmatprep.subr.bf16.mxu0 0
        %7877 = vmatpush1.bf16.msra.mxu0 0
        %7878 = vmatprep.subr.bf16.mxu0 0
        %7879 = vmatpush1.bf16.msra.mxu0 0
        %7880 = vmatprep.subr.bf16.mxu0 0
        %7881 = vmatpush1.bf16.msra.mxu0 0
        %7882 = vmatprep.subr.bf16.mxu0 0
        %7883 = vmatpush1.bf16.msra.mxu0 0
        %7884 = vmatprep.subr.bf16.mxu0 0
        %7885 = vmatpush1.bf16.msra.mxu0 0
        %7886 = vmatprep.subr.bf16.mxu0 0
        %7887 = vmatpush1.bf16.msra.mxu0 0
        %7888 = vmatprep.subr.bf16.mxu0 0
        %7889 = vmatpush1.bf16.msra.mxu0 0
        %7890 = vmatprep.subr.bf16.mxu0 0
        %7891 = vmatpush1.bf16.msra.mxu0 0
        %7892 = vmatprep.subr.bf16.mxu0 0
        %7893 = vmatpush1.bf16.msra.mxu0 0
        %7894 = vmatprep.subr.bf16.mxu0 0
        %7895 = vmatpush1.bf16.msra.mxu0 0
        %7896 = vmatprep.mubr.bf16.mxu0 0
        %7897 = vmatmul.mubr.bf16.gmra.mrb[0].mxu0 %v7838
        %v7898 = vpop.f32.mrb[0].mxu0
        %v7899 = vadd.f32 %v7835, %v7898
        %v7900 = vpop.f32.mrb[0].mxu0
        %v7901 = vadd.f32 %v7835, %v7900
        %v7902 = vpop.f32.mrb[0].mxu0
        %v7903 = vpop.f32.mrb[0].mxu0
        %7904 = vdwg.mxu0
        %7905 = vmatprep.subr.bf16.mxu0 %v7850
        %7906 = vmatpush1.bf16.msra.mxu0 %v7847
        %7907 = vmatprep.subr.bf16.mxu0 0
        %7908 = vmatpush1.bf16.msra.mxu0 0
        %7909 = vmatprep.subr.bf16.mxu0 0
        %7910 = vmatpush1.bf16.msra.mxu0 0
        %7911 = vmatprep.subr.bf16.mxu0 0
        %7912 = vmatpush1.bf16.msra.mxu0 0
        %7913 = vmatprep.subr.bf16.mxu0 0
        %7914 = vmatpush1.bf16.msra.mxu0 0
        %7915 = vmatprep.subr.bf16.mxu0 0
        %7916 = vmatpush1.bf16.msra.mxu0 0
        %7917 = vmatprep.subr.bf16.mxu0 0
        %7918 = vmatpush1.bf16.msra.mxu0 0
        %7919 = vmatprep.subr.bf16.mxu0 0
        %7920 = vmatpush1.bf16.msra.mxu0 0
        %7921 = vmatprep.subr.bf16.mxu0 0
        %7922 = vmatpush1.bf16.msra.mxu0 0
        %7923 = vmatprep.subr.bf16.mxu0 0
        %7924 = vmatpush1.bf16.msra.mxu0 0
        %7925 = vmatprep.subr.bf16.mxu0 0
        %7926 = vmatpush1.bf16.msra.mxu0 0
        %7927 = vmatprep.subr.bf16.mxu0 0
        %7928 = vmatpush1.bf16.msra.mxu0 0
        %7929 = vmatprep.subr.bf16.mxu0 0
        %7930 = vmatpush1.bf16.msra.mxu0 0
        %7931 = vmatprep.subr.bf16.mxu0 0
        %7932 = vmatpush1.bf16.msra.mxu0 0
        %7933 = vmatprep.subr.bf16.mxu0 0
        %7934 = vmatpush1.bf16.msra.mxu0 0
        %7935 = vmatprep.subr.bf16.mxu0 0
        %7936 = vmatpush1.bf16.msra.mxu0 0
        %7937 = vmatprep.mubr.bf16.mxu0 0
        %7938 = vmatmul.mubr.bf16.gmra.mrb[0].mxu0 %v7838
        %v7939 = vpop.f32.mrb[0].mxu0
        %v7940 = vadd.f32 %v7835, %v7939
        %v7941 = vpop.f32.mrb[0].mxu0
        %v7942 = vadd.f32 %v7835, %v7941
        %v7943 = vpop.f32.mrb[0].mxu0
        %v7944 = vpop.f32.mrb[0].mxu0
        %7945 = vdwg.mxu0
        %7946 = vmatprep.subr.bf16.mxu0 %v7856
        %7947 = vmatpush1.bf16.msra.mxu0 %v7853
        %7948 = vmatprep.subr.bf16.mxu0 0
        %7949 = vmatpush1.bf16.msra.mxu0 0
        %7950 = vmatprep.subr.bf16.mxu0 0
        %7951 = vmatpush1.bf16.msra.mxu0 0
        %7952 = vmatprep.subr.bf16.mxu0 0
        %7953 = vmatpush1.bf16.msra.mxu0 0
        %7954 = vmatprep.subr.bf16.mxu0 0
        %7955 = vmatpush1.bf16.msra.mxu0 0
        %7956 = vmatprep.subr.bf16.mxu0 0
        %7957 = vmatpush1.bf16.msra.mxu0 0
        %7958 = vmatprep.subr.bf16.mxu0 0
        %7959 = vmatpush1.bf16.msra.mxu0 0
        %7960 = vmatprep.subr.bf16.mxu0 0
        %7961 = vmatpush1.bf16.msra.mxu0 0
        %7962 = vmatprep.subr.bf16.mxu0 0
        %7963 = vmatpush1.bf16.msra.mxu0 0
        %7964 = vmatprep.subr.bf16.mxu0 0
        %7965 = vmatpush1.bf16.msra.mxu0 0
        %7966 = vmatprep.subr.bf16.mxu0 0
        %7967 = vmatpush1.bf16.msra.mxu0 0
        %7968 = vmatprep.subr.bf16.mxu0 0
        %7969 = vmatpush1.bf16.msra.mxu0 0
        %7970 = vmatprep.subr.bf16.mxu0 0
        %7971 = vmatpush1.bf16.msra.mxu0 0
        %7972 = vmatprep.subr.bf16.mxu0 0
        %7973 = vmatpush1.bf16.msra.mxu0 0
        %7974 = vmatprep.subr.bf16.mxu0 0
        %7975 = vmatpush1.bf16.msra.mxu0 0
        %7976 = vmatprep.subr.bf16.mxu0 0
        %7977 = vmatpush1.bf16.msra.mxu0 0
        %7978 = vmatprep.mubr.bf16.mxu0 0
        %7979 = vmatmul.mubr.bf16.gmra.mrb[0].mxu0 %v7838
        %v7980 = vpop.f32.mrb[0].mxu0
        %v7981 = vadd.f32 %v7835, %v7980
        %v7982 = vpop.f32.mrb[0].mxu0
        %v7983 = vadd.f32 %v7835, %v7982
        %v7984 = vpop.f32.mrb[0].mxu0
        %v7985 = vpop.f32.mrb[0].mxu0
        %7986 = vdwg.mxu0
        %7987 = vmatprep.subr.bf16.mxu0 %v7862
        %7988 = vmatpush1.bf16.msra.mxu0 %v7859
        %7989 = vmatprep.subr.bf16.mxu0 0
        %7990 = vmatpush1.bf16.msra.mxu0 0
        %7991 = vmatprep.subr.bf16.mxu0 0
        %7992 = vmatpush1.bf16.msra.mxu0 0
        %7993 = vmatprep.subr.bf16.mxu0 0
        %7994 = vmatpush1.bf16.msra.mxu0 0
        %7995 = vmatprep.subr.bf16.mxu0 0
        %7996 = vmatpush1.bf16.msra.mxu0 0
        %7997 = vmatprep.subr.bf16.mxu0 0
        %7998 = vmatpush1.bf16.msra.mxu0 0
        %7999 = vmatprep.subr.bf16.mxu0 0
        %8000 = vmatpush1.bf16.msra.mxu0 0
        %8001 = vmatprep.subr.bf16.mxu0 0
        %8002 = vmatpush1.bf16.msra.mxu0 0
        %8003 = vmatprep.subr.bf16.mxu0 0
        %8004 = vmatpush1.bf16.msra.mxu0 0
        %8005 = vmatprep.subr.bf16.mxu0 0
        %8006 = vmatpush1.bf16.msra.mxu0 0
        %8007 = vmatprep.subr.bf16.mxu0 0
        %8008 = vmatpush1.bf16.msra.mxu0 0
        %8009 = vmatprep.subr.bf16.mxu0 0
        %8010 = vmatpush1.bf16.msra.mxu0 0
        %8011 = vmatprep.subr.bf16.mxu0 0
        %8012 = vmatpush1.bf16.msra.mxu0 0
        %8013 = vmatprep.subr.bf16.mxu0 0
        %8014 = vmatpush1.bf16.msra.mxu0 0
        %8015 = vmatprep.subr.bf16.mxu0 0
        %8016 = vmatpush1.bf16.msra.mxu0 0
        %8017 = vmatprep.subr.bf16.mxu0 0
        %8018 = vmatpush1.bf16.msra.mxu0 0
        %8019 = vmatprep.mubr.bf16.mxu0 0
        %8020 = vmatmul.mubr.bf16.gmra.mrb[0].mxu0 %v7838
        %v8021 = vpop.f32.mrb[0].mxu0
        %v8022 = vadd.f32 %v7835, %v8021
        %v8023 = vpop.f32.mrb[0].mxu0
        %v8024 = vadd.f32 %v7835, %v8023
        %v8025 = vpop.f32.mrb[0].mxu0
        %v8026 = vpop.f32.mrb[0].mxu0
        %8027 = vdwg.mxu0
        %v8028 = vmax.f32 %v7899, 0.0
        %v8029 = vmax.f32 %v7901, 0.0
        %v8030 = vmax.f32 %v7940, 0.0
        %v8031 = vmax.f32 %v7942, 0.0
        %v8032 = vmax.f32 %v7981, 0.0
        %v8033 = vmax.f32 %v7983, 0.0
        %v8034 = vmax.f32 %v8022, 0.0
        %v8035 = vmax.f32 %v8024, 0.0
        %v8036 = vpack.c.bf16 %v8028, %v8028
        %v8037 = vpack.c.bf16 %v8029, %v8029
        %v8038 = vpack.c.bf16 %v8030, %v8030
        %v8039 = vpack.c.bf16 %v8031, %v8031
        %v8040 = vpack.c.bf16 %v8032, %v8032
        %v8041 = vpack.c.bf16 %v8033, %v8033
        %v8042 = vpack.c.bf16 %v8034, %v8034
        %v8043 = vpack.c.bf16 %v8035, %v8035
        %v8052 = vcombine.low %v8036, %v8037
        %v8053 = vcombine.low %v8038, %v8039
        %v8055 = vunpack.c.l.s4 1983009808
        %v8056 = vunpack.c.0.s8 %v8055
        %v8057 = vlaneseq
        %v8058 = vshrl.u32 %v8057, 7
        %v8059 = vsub.s32 %v8056, %v8058
        %v8060 = vrot.slane %v8052, %v8059
        %v8062 = vunpack.c.l.s4 1983009808
        %v8063 = vunpack.c.0.s8 %v8062
        %v8064 = vlaneseq
        %v8065 = vshrl.u32 %v8064, 7
        %v8066 = vsub.s32 %v8063, %v8065
        %v8067 = vrot.slane %v8053, %v8066
        %v8068 = vcombine.low %v8060, %v8067
        %v8069 = vcombine.low %v8040, %v8041
        %v8070 = vcombine.low %v8042, %v8043
        %v8072 = vunpack.c.l.s4 1983009808
        %v8073 = vunpack.c.0.s8 %v8072
        %v8074 = vlaneseq
        %v8075 = vshrl.u32 %v8074, 7
        %v8076 = vsub.s32 %v8073, %v8075
        %v8077 = vrot.slane %v8069, %v8076
        %v8079 = vunpack.c.l.s4 1983009808
        %v8080 = vunpack.c.0.s8 %v8079
        %v8081 = vlaneseq
        %v8082 = vshrl.u32 %v8081, 7
        %v8083 = vsub.s32 %v8080, %v8082
        %v8084 = vrot.slane %v8070, %v8083
        %v8085 = vcombine.low %v8077, %v8084
        %8088 = vst [vmem:[%s432] sm:$0xff] %v8068
        %8089 = vst [vmem:[%s432 + $0x8] sm:$0xff] %v8085
        %v8090 = vld [vmem:[%s7] sm:$0xf]
        %v8091 = vld [vmem:[%s8] sm:$0xff]
        %8093 = vset.pattern.permute.xlu0 0
        %8094 = vperm.xlu0 %8093, %v8091
        %v8095 = vpop.permute.xlu0 %8094
        %vm8097 = vcmask 31744
        %v8099 = vsel %vm8097, %v8090, 0
        %v8102 = vsel %vm7772, %v8036, 0
        %v8105 = vsel %vm7772, %v8037, 0
        %8107 = vmatprep.subr.bf16.mxu0 %v8105
        %8108 = vmatpush1.bf16.msra.mxu0 %v8102
        %8109 = vmatprep.subr.bf16.mxu0 0
        %8110 = vmatpush1.bf16.msra.mxu0 0
        %8111 = vmatprep.subr.bf16.mxu0 0
        %8112 = vmatpush1.bf16.msra.mxu0 0
        %8113 = vmatprep.subr.bf16.mxu0 0
        %8114 = vmatpush1.bf16.msra.mxu0 0
        %8115 = vmatprep.subr.bf16.mxu0 0
        %8116 = vmatpush1.bf16.msra.mxu0 0
        %8117 = vmatprep.subr.bf16.mxu0 0
        %8118 = vmatpush1.bf16.msra.mxu0 0
        %8119 = vmatprep.subr.bf16.mxu0 0
        %8120 = vmatpush1.bf16.msra.mxu0 0
        %8121 = vmatprep.subr.bf16.mxu0 0
        %8122 = vmatpush1.bf16.msra.mxu0 0
        %8123 = vmatprep.subr.bf16.mxu0 0
        %8124 = vmatpush1.bf16.msra.mxu0 0
        %8125 = vmatprep.subr.bf16.mxu0 0
        %8126 = vmatpush1.bf16.msra.mxu0 0
        %8127 = vmatprep.subr.bf16.mxu0 0
        %8128 = vmatpush1.bf16.msra.mxu0 0
        %8129 = vmatprep.subr.bf16.mxu0 0
        %8130 = vmatpush1.bf16.msra.mxu0 0
        %8131 = vmatprep.subr.bf16.mxu0 0
        %8132 = vmatpush1.bf16.msra.mxu0 0
        %8133 = vmatprep.subr.bf16.mxu0 0
        %8134 = vmatpush1.bf16.msra.mxu0 0
        %8135 = vmatprep.subr.bf16.mxu0 0
        %8136 = vmatpush1.bf16.msra.mxu0 0
        %8137 = vmatprep.subr.bf16.mxu0 0
        %8138 = vmatpush1.bf16.msra.mxu0 0
        %8139 = vmatprep.mubr.bf16.mxu0 0
        %8140 = vmatmul.mubr.bf16.gmra.mrb[0].mxu0 %v8099
        %v8141 = vpop.f32.mrb[0].mxu0
        %v8142 = vadd.f32 %v8095, %v8141
        %v8143 = vpop.f32.mrb[0].mxu0
        %v8144 = vadd.f32 %v8095, %v8143
        %v8145 = vpop.f32.mrb[0].mxu0
        %v8146 = vpop.f32.mrb[0].mxu0
        %8147 = vdwg.mxu0
        %v8148 = vmax.f32 %v8142, 0.0
        %v8149 = vmax.f32 %v8144, 0.0
        %v8150 = vpack.c.bf16 %v8148, %v8148
        %v8151 = vpack.c.bf16 %v8149, %v8149
        %v8156 = vunpack.c.l.b16 %v7828
        %v8157 = vunpack.c.l.b16 %v7829
        %v8158 = vunpack.c.h.b16 %v7828
        %v8159 = vunpack.c.h.b16 %v7829
        %v8160 = vunpack.c.l.b16 %v8150
        %v8161 = vunpack.c.l.b16 %v8151
        %v8162 = vpack.c.b16 %v8157, %v8156
        %v8163 = vpack.c.b16 %v8159, %v8158
        %v8164 = vpack.c.b16 %v8161, %v8160
        %8168 = vst [vmem:[%s425] sm:$0xff] %v8162
        %8169 = vst [vmem:[%s425 + $0x8] sm:$0xff] %v8163
        %8170 = vst [vmem:[%s425 + $0x10] sm:$0xff] %v8164
        %v8171 = vunpack.c.l.bf16 %v7828
        %v8172 = vunpack.c.l.bf16 %v7829
        %v8173 = vunpack.c.h.bf16 %v7828
        %v8174 = vunpack.c.h.bf16 %v7829
        %v8175 = vunpack.c.l.bf16 %v8150
        %v8176 = vunpack.c.l.bf16 %v8151
        %v8177 = vadd.f32 %v8171, %v8172
        %8178 = vadd.xlane.f32.xlu0 %v8177
        %v8179 = vpop.xlane.xlu0 %8178
        %v8180 = vadd.f32 %v8173, %v8174
        %8181 = vadd.xlane.f32.xlu0 %v8180
        %v8182 = vpop.xlane.xlu0 %8181
        %v8183 = vadd.f32 %v8175, %v8176
        %8184 = vadd.xlane.f32.xlu0 %v8183
        %v8185 = vpop.xlane.xlu0 %8184
        %v8186 = vmul.f32 %v8179, 0.00390625
        %v8187 = vmul.f32 %v8182, 0.00390625
        %v8188 = vmul.f32 %v8185, 0.00390625
        %vm8189 = vcmask 7168
        %8190 = vst.msk [vmem:[%s460] sm:$0xff] %vm8189, %v8186
        %8191 = vst.msk [vmem:[%s460 + $0x8] sm:$0xff] %vm8189, %v8187
        %8192 = vst.msk [vmem:[%s460 + $0x10] sm:$0xff] %vm8189, %v8188
        %v8193 = vunpack.c.l.bf16 %v8036
        %v8194 = vunpack.c.l.bf16 %v8037
        %vm8195 = vcmask 1043456
        %v8196 = vsel %vm8195, %v8193, 0.0
        %v8197 = vsel %vm8195, %v8194, 0.0
        %v8198 = vadd.f32 %v8196, %v8197
        %8199 = vadd.xlane.f32.xlu0 %v8198
        %v8200 = vpop.xlane.xlu0 %8199
        %v8201 = vmul.f32 %v8200, 0.00390625
        %v8202 = vunpack.c.l.bf16 %v8038
        %v8203 = vunpack.c.l.bf16 %v8039
        %v8204 = vsel %vm8195, %v8202, 0.0
        %v8205 = vsel %vm8195, %v8203, 0.0
        %v8206 = vadd.f32 %v8204, %v8205
        %8207 = vadd.xlane.f32.xlu0 %v8206
        %v8208 = vpop.xlane.xlu0 %8207
        %v8209 = vmul.f32 %v8208, 0.00390625
        %v8210 = vunpack.c.l.bf16 %v8040
        %v8211 = vunpack.c.l.bf16 %v8041
        %v8212 = vsel %vm8195, %v8210, 0.0
        %v8213 = vsel %vm8195, %v8211, 0.0
        %v8214 = vadd.f32 %v8212, %v8213
        %8215 = vadd.xlane.f32.xlu0 %v8214
        %v8216 = vpop.xlane.xlu0 %8215
        %v8217 = vmul.f32 %v8216, 0.00390625
        %v8218 = vunpack.c.l.bf16 %v8042
        %v8219 = vunpack.c.l.bf16 %v8043
        %v8220 = vsel %vm8195, %v8218, 0.0
        %v8221 = vsel %vm8195, %v8219, 0.0
        %v8222 = vadd.f32 %v8220, %v8221
        %8223 = vadd.xlane.f32.xlu0 %v8222
        %v8224 = vpop.xlane.xlu0 %8223
        %v8225 = vmul.f32 %v8224, 0.00390625
        %v8226 = vsel %vm8189, %v8201, %v8209
        %vm8227 = vcmask 15360
        %v8228 = vsel %vm8227, %v8226, %v8217
        %v8229 = vsel %vm7767, %v8228, %v8225
        %vm8230 = vcmask 27648
        %8231 = vst.msk [vmem:[%s464] sm:$0xf] %vm8230, %v8229
        %s8232 = sand.u32 %s237, 1
        %s8233 = scalar_lea.sflag [#allocation3], %s8232
        %s8234 = sand.u32 %s237, 1
        %s8235 = smul.addr %s8234, 24
        %s8236 = scalar_lea.vmem [#allocation2], %s8235
        %s8237 = sand.u32 %s263, 1
        %s8238 = scalar_lea.sflag [#allocation5], %s8237
        %s8239 = sand.u32 %s263, 1
        %s8240 = smul.addr %s8239, 16
        %s8241 = scalar_lea.vmem [#allocation4], %s8240
        %p8242 = scmp.lt.s32.totalorder %s30, 7
        %s8243 = scalar_select %p8242, %s30, 7
        %s8244 = smul.addr %s8243, 3
        %s8245 = smul.addr %s8244, 8
        %s8246 = scalar_lea.vmem %s11, %s8245
        %p8247 = scmp.lt.s32.totalorder %s30, 7
        %s8248 = scalar_select %p8247, %s30, 7
        %s8249 = smul.addr %s8248, 4
        %s8250 = scalar_lea.vmem %s12, %s8249
        // Predicated region
        $region57: #{tpu_custom_call.1} parent=55 // pred_check
          %p8251 = pneg %p247
        $region58: #{tpu_custom_call.1} parent=55 // pred_check_branch
          %8253 = sbr.rel (%p8251) target = $region60
        $region59: #{tpu_custom_call.1} parent=55 // pred_region
          %s8255 = ssub.s32 384, 384
          %8256 = vsyncadd %s8233, %s8255
          %s8257 = smul.addr %s30, 6
          %s8258 = smul.addr %s8257, 64
          %s8259 = scalar_lea.hbm %s9, %s8258
          %s8260 = sshll.u32 %s8236, 4
          %s8261 = int_to_ptr.vmem [resolvable:$true] %s8260
          %8266 = dma.vmem_to_hbm [thread:$0]  %s8261, 384, %s8259, %s8233, 128, 128, 8
        $region60: #{tpu_custom_call.1} parent=55 // pred_fallthru
          _
        // Predicated region
        $region61: #{tpu_custom_call.1} parent=55 // pred_check
          %p8267 = pneg %p273
        $region62: #{tpu_custom_call.1} parent=55 // pred_check_branch
          %8269 = sbr.rel (%p8267) target = $region64
        $region63: #{tpu_custom_call.1} parent=55 // pred_region
          %s8271 = ssub.s32 256, 256
          %8272 = vsyncadd %s8238, %s8271
          %s8273 = smul.addr %s30, 8
          %s8274 = smul.addr %s8273, 32
          %s8275 = scalar_lea.hbm %s10, %s8274
          %s8277 = sshll.u32 %s8241, 4
          %s8278 = int_to_ptr.vmem [resolvable:$true] %s8277
          %8280 = dma.vmem_to_hbm [thread:$0]  %s8278, 256, %s8275, %s8238
        $region64: #{tpu_custom_call.1} parent=55 // pred_fallthru
          _
        // Predicated region
        $region65: #{tpu_custom_call.1} parent=55 // pred_check
          %p8281 = pneg %p299
        $region66: #{tpu_custom_call.1} parent=55 // pred_check_branch
          %8283 = sbr.rel (%p8281) target = $region68
        $region67: #{tpu_custom_call.1} parent=55 // pred_region
          _
        $region68: #{tpu_custom_call.1} parent=55 // pred_fallthru
          _
        // Predicated region
        $region69: #{tpu_custom_call.1} parent=55 // pred_check
          %p8284 = pneg %p325
        $region70: #{tpu_custom_call.1} parent=55 // pred_check_branch
          %8286 = sbr.rel (%p8284) target = $region72
        $region71: #{tpu_custom_call.1} parent=55 // pred_region
          _
        $region72: #{tpu_custom_call.1} parent=55 // pred_fallthru
          _
      $region56: #{tpu_custom_call.1} parent=5 // pred_fallthru
        _
      %p8287 = scmp.le.s32.totalorder 2, %s25
      // Predicated region
      $region73: #{tpu_custom_call.1} parent=5 // pred_check
        %p8288 = pneg %p8287
      $region74: #{tpu_custom_call.1} parent=5 // pred_check_branch
        %8290 = sbr.rel (%p8288) target = $region76
      $region75: #{tpu_custom_call.1} parent=5 // pred_region
        %s8291 = ssub.s32 %s25, 2
        // Predicated region
        $region77: #{tpu_custom_call.1} parent=75 // pred_check
          %p8292 = pneg %p253
        $region78: #{tpu_custom_call.1} parent=75 // pred_check_branch
          %8294 = sbr.rel (%p8292) target = $region80
        $region79: #{tpu_custom_call.1} parent=75 // pred_region
          %s8295 = sand.u32 %s238, 1
          %s8296 = scalar_lea.sflag [#allocation3], %s8295
          %s8297 = sand.u32 %s238, 1
          %s8298 = smul.addr %s8297, 24
          %s8299 = scalar_lea.vmem [#allocation2], %s8298
          %8300 = dma.done %s8296, 384
        $region80: #{tpu_custom_call.1} parent=75 // pred_fallthru
          _
        // Predicated region
        $region81: #{tpu_custom_call.1} parent=75 // pred_check
          %p8301 = pneg %p279
        $region82: #{tpu_custom_call.1} parent=75 // pred_check_branch
          %8303 = sbr.rel (%p8301) target = $region84
        $region83: #{tpu_custom_call.1} parent=75 // pred_region
          %s8304 = sand.u32 %s264, 1
          %s8305 = scalar_lea.sflag [#allocation5], %s8304
          %s8306 = sand.u32 %s264, 1
          %s8307 = smul.addr %s8306, 16
          %s8308 = scalar_lea.vmem [#allocation4], %s8307
          %8309 = dma.done %s8305, 256
        $region84: #{tpu_custom_call.1} parent=75 // pred_fallthru
          _
        // Predicated region
        $region85: #{tpu_custom_call.1} parent=75 // pred_check
          %p8310 = pneg %p305
        $region86: #{tpu_custom_call.1} parent=75 // pred_check_branch
          %8312 = sbr.rel (%p8310) target = $region88
        $region87: #{tpu_custom_call.1} parent=75 // pred_region
          %p8313 = scmp.lt.s32.totalorder %s31, 7
          %s8314 = scalar_select %p8313, %s31, 7
          %s8315 = smul.addr %s8314, 3
          %s8316 = smul.addr %s8315, 8
          %s8317 = scalar_lea.vmem %s11, %s8316
        $region88: #{tpu_custom_call.1} parent=75 // pred_fallthru
          _
        // Predicated region
        $region89: #{tpu_custom_call.1} parent=75 // pred_check
          %p8318 = pneg %p331
        $region90: #{tpu_custom_call.1} parent=75 // pred_check_branch
          %8320 = sbr.rel (%p8318) target = $region92
        $region91: #{tpu_custom_call.1} parent=75 // pred_region
          %p8321 = scmp.lt.s32.totalorder %s31, 7
          %s8322 = scalar_select %p8321, %s31, 7
          %s8323 = smul.addr %s8322, 4
          %s8324 = scalar_lea.vmem %s12, %s8323
        $region92: #{tpu_custom_call.1} parent=75 // pred_fallthru
          _
      $region76: #{tpu_custom_call.1} parent=5 // pred_fallthru
        _
    $region6: #{tpu_custom_call.1} parent=1 // loop_footer
      %s29 = sadd.s32 1, %s25
    $region7: #{tpu_custom_call.1} parent=1 // loop_footer_branch
      %24 = sbr.rel target = $region3
    $region8: #{tpu_custom_call.1} parent=1 // loop_exit
      _
    %8325 = vsyncpa [#allocation3], 1
    %s8326 = scalar_lea.sflag [#allocation3], 1
    %8327 = vsyncpa %s8326, 1
    %8328 = vsyncpa [#allocation5], 1
    %s8329 = scalar_lea.sflag [#allocation5], 1
    %8330 = vsyncpa %s8329, 1

</llo_original>
